<compile_context>
chip_gen: v7x
topology: tpu7x:2x2x1
jax: 0.10.0
libtpu: 0.0.40
codegen_flags: <defaults>
</compile_context>

<pallas_src>
import functools

import jax
import jax.numpy as jnp
from jax.experimental import pallas as pl
from jax.experimental.pallas import tpu as pltpu

_BN_EPS = 1e-5
_ACT_DTYPE = jnp.bfloat16  # intermediate activation storage (kernels accumulate in f32)


def _round_up(x, m):
    return ((x + m - 1) // m) * m


def _pick_tile(padded_dim, unit, cap):
    """Largest multiple of `unit` that divides `padded_dim` and is <= cap."""
    best = unit
    t = unit
    while t <= min(padded_dim, cap):
        if padded_dim % t == 0:
            best = t
        t += unit
    return best


# ----------------------------------------------------------------------------
# Tiled matmul Pallas kernels
# ----------------------------------------------------------------------------
def _mm_kernel(x_ref, w_ref, b_ref, o_ref, acc_ref, *, relu):
    @pl.when(pl.program_id(2) == 0)
    def _init():
        acc_ref[...] = jnp.zeros_like(acc_ref)

    acc_ref[...] += jnp.dot(x_ref[...], w_ref[...],
                            preferred_element_type=jnp.float32)

    @pl.when(pl.program_id(2) == pl.num_programs(2) - 1)
    def _epilogue():
        y = acc_ref[...] + b_ref[...]
        if relu:
            y = jnp.maximum(y, 0.0)
        o_ref[...] = y.astype(o_ref.dtype)


def _mm_cls_kernel(x_ref, w_ref, b_ref, w2_ref, b2_ref, o_ref, acc_ref):
    """acc = x@w over K; epilogue: out = ReLU(acc + b) @ w2 + b2 (f32 classifier)."""
    @pl.when(pl.program_id(2) == 0)
    def _init():
        acc_ref[...] = jnp.zeros_like(acc_ref)

    acc_ref[...] += jnp.dot(x_ref[...], w_ref[...],
                            preferred_element_type=jnp.float32)

    @pl.when(pl.program_id(2) == pl.num_programs(2) - 1)
    def _epilogue():
        h = jnp.maximum(acc_ref[...] + b_ref[...], 0.0)     # ReLU(up_conv1 tile)
        y = jnp.dot(h, w2_ref[...],
                    preferred_element_type=jnp.float32) + b2_ref[...]
        o_ref[...] = y.astype(o_ref.dtype)


def fused_matmul(x2d, w2d, b, *, relu, out_dtype, w2=None, b2=None):
    """out = act(x2d @ w2d + b) [ @ w2 + b2 ]   (tiled Pallas TPU matmul).

    x2d: (M, K), w2d: (K, N), b: (N,).  MXU operands bf16, accumulation f32.
    K is one full-depth reduction step whenever it fits; N is left unpadded
    when it is a multiple of 128 or < 128 (no pad/crop HBM pass).  If w2/b2
    are given, a second (block-diag classifier) matmul runs in f32 inside the
    final epilogue on the resident accumulator tile.
    """
    M, K = x2d.shape
    N = w2d.shape[1]

    # --- M (sublane) tiling: pad only to the 16-row bf16 sublane unit. ---
    Mp = _round_up(max(M, 16), 16)
    TM = _pick_tile(Mp, 16, 512)          # 512 cap keeps working sets v7x-safe

    # --- N (lane) tiling: avoid padding when legal. ---
    if N % 128 == 0:
        Np = N
        TN = _pick_tile(Np, 128, 512)
    elif N < 128:
        Np = N                             # full-dim lane block; no pad / crop
        TN = N
    else:
        Np = _round_up(N, 128)
        TN = _pick_tile(Np, 128, 512)

    # --- K: one full-depth 128-aligned reduction step when it fits. ---
    Kp = _round_up(K, 128)
    if Kp <= 4096:
        TK = Kp
    else:                                  # fallback for very deep K (unused here)
        Kp = _round_up(K, 512)
        TK = 512

    nM, nN, nK = Mp // TM, Np // TN, Kp // TK

    # Expose >= 2 programs on the parallel axes so a v7x megacore can shard.
    if nM * nN < 2:
        if TN >= 256:
            TN //= 2
        elif Mp // 16 >= 2:
            TM = _pick_tile(Mp, 16, max(16, Mp // 2))
        nM, nN = Mp // TM, Np // TN

    xp = x2d.astype(jnp.bfloat16)
    if (Mp, Kp) != (M, K):
        xp = jnp.pad(xp, ((0, Mp - M), (0, Kp - K)))
    wp = w2d.astype(jnp.bfloat16)
    if (Kp, Np) != (K, N):
        wp = jnp.pad(wp, ((0, Kp - K), (0, Np - N)))
    bp = b.astype(jnp.float32).reshape(1, -1)
    if Np != N:
        bp = jnp.pad(bp, ((0, 0), (0, Np - N)))

    grid = (nM, nN, nK)
    x_spec = pl.BlockSpec((TM, TK), lambda i, j, k: (i, k))
    w_spec = pl.BlockSpec((TK, TN), lambda i, j, k: (k, j))
    b_spec = pl.BlockSpec((1, TN), lambda i, j, k: (0, j))
    scratch = [pltpu.VMEM((TM, TN), jnp.float32)]

    # VMEM budget from the actual working set; capped so v7x (64 MiB) is safe.
    n2 = 0 if w2 is None else w2.shape[1]
    est = (2 * (TM * TK + TK * TN) * 2            # double-buffered bf16 inputs
           + 2 * TM * max(TN, max(n2, 1)) * 4     # output tiles (worst-case f32)
           + TM * TN * 4                          # f32 accumulator scratch
           + (Np * n2 + n2) * 4)                  # fused classifier weights
    vmem_limit = int(min(48 * 2 ** 20, max(32 * 2 ** 20, 2 * est)))
    cparams = pltpu.CompilerParams(
        dimension_semantics=("parallel", "parallel", "arbitrary"),
        vmem_limit_bytes=vmem_limit)

    if w2 is None:
        out = pl.pallas_call(
            functools.partial(_mm_kernel, relu=relu),
            out_shape=jax.ShapeDtypeStruct((Mp, Np), out_dtype),
            grid=grid,
            in_specs=[x_spec, w_spec, b_spec],
            out_specs=pl.BlockSpec((TM, TN), lambda i, j, k: (i, j)),
            scratch_shapes=scratch,
            compiler_params=cparams,
        )(xp, wp, bp)
        if (Mp, Np) != (M, N):
            out = out[:M, :N]
        return out

    # Fused block-diagonal classifier epilogue (needs a single resident N tile).
    assert relu and nN == 1 and Np == N, "fused classifier needs one resident N tile"
    w2p = w2.astype(jnp.float32)                  # f32: better logit accuracy
    b2p = b2.astype(jnp.float32).reshape(1, -1)
    out = pl.pallas_call(
        _mm_cls_kernel,
        out_shape=jax.ShapeDtypeStruct((Mp, n2), out_dtype),
        grid=grid,
        in_specs=[x_spec, w_spec, b_spec,
                  pl.BlockSpec((Np, n2), lambda i, j, k: (0, 0)),
                  pl.BlockSpec((1, n2), lambda i, j, k: (0, 0))],
        out_specs=pl.BlockSpec((TM, n2), lambda i, j, k: (i, 0)),
        scratch_shapes=scratch,
        compiler_params=cparams,
    )(xp, wp, bp, w2p, b2p)
    if Mp != M:
        out = out[:M]
    return out


# ----------------------------------------------------------------------------
# Conv layers = (fused BN) + im2col glue + tiled Pallas matmul
# ----------------------------------------------------------------------------
def conv2d_bn(x, w, b, stride, padding, *, relu=True, bn=None, out_dtype=_ACT_DTYPE):
    """Conv2d (NHWC) with an optional *preceding* eval-mode BatchNorm folded in.

    BN affine is applied to x before zero padding (exactly BN -> pad -> conv)
    and fuses into the XLA producer of the im2col operand.
    w: PyTorch Conv2d layout (Cout, Cin, kh, kw); b: (Cout,).
    """
    Cout, Cin, k, _ = w.shape
    if bn is not None:
        gamma, beta, mean, var = bn
        scale = gamma / jnp.sqrt(var + _BN_EPS)
        shift = beta - mean * scale
        x = x.astype(jnp.float32) * scale + shift
    x = x.astype(jnp.bfloat16)
    B, H, W, _ = x.shape
    xp = jnp.pad(x, ((0, 0), (padding, padding), (padding, padding), (0, 0)))
    Ho = (H + 2 * padding - k) // stride + 1
    Wo = (W + 2 * padding - k) // stride + 1
    cols = [xp[:, di:di + stride * Ho:stride, dj:dj + stride * Wo:stride, :]
            for di in range(k) for dj in range(k)]
    x2d = jnp.concatenate(cols, axis=-1).reshape(B * Ho * Wo, k * k * Cin)
    w2d = jnp.transpose(w, (2, 3, 1, 0)).reshape(k * k * Cin, Cout)  # (kh,kw,cin,cout)
    out = fused_matmul(x2d, w2d, b, relu=relu, out_dtype=out_dtype)
    return out.reshape(B, Ho, Wo, Cout)


def _subpixel_weight(w_t):
    """ConvTranspose2d(k=4,s=2,p=1) weight (Cin,Cout,4,4) -> (9*Cin, 4*Cout)
    weight of the equivalent stride-1 3x3-window conv whose 4*Cout output
    channels are the 4 output phases (sub-pixel / depth-to-space form)."""
    Cin, Cout, k, _ = w_t.shape
    w_c = jnp.transpose(w_t[:, :, ::-1, ::-1], (2, 3, 0, 1))      # (kh,kw,cin,cout)
    wbig = jnp.zeros((9, Cin, 4, Cout), w_t.dtype)
    for pu in range(2):
        for pv in range(2):
            p = 2 * pu + pv
            for ti in range(2):
                for tj in range(2):
                    g = 3 * (pu + ti) + (pv + tj)
                    wbig = wbig.at[g, :, p, :].set(w_c[2 * ti + pu, 2 * tj + pv])
    return wbig.reshape(9 * Cin, 4 * Cout)


def _blockdiag_classifier(cls_w, cls_b, cout):
    """1x1 classifier (n_cls, Cout, 1, 1) -> block-diag (4*Cout, 4*n_cls) weight
    applying the same classifier to each of the 4 sub-pixel phase blocks."""
    n_cls = cls_w.shape[0]
    wc = jnp.transpose(cls_w[:, :, 0, 0], (1, 0))                 # (Cout, n_cls)
    w2 = jnp.zeros((4 * cout, 4 * n_cls), wc.dtype)
    for p in range(4):
        w2 = w2.at[p * cout:(p + 1) * cout, p * n_cls:(p + 1) * n_cls].set(wc)
    return w2, jnp.tile(cls_b, 4)


def conv_transpose2d(x, w_t, b, *, out_dtype=_ACT_DTYPE, cls_w=None, cls_b=None):
    """ReLU(ConvTranspose2d(k=4, s=2, p=1)(x)) in ONE pallas_call.

    Sub-pixel formulation: all 4 output phases are the 4*Cout output channels
    of a single stride-1 conv over the 3x3 shifted windows of x padded by 1,
    followed by one depth-to-space interleave.  If cls_w/cls_b are given, the
    1x1 classifier is applied per phase block inside the matmul epilogue (the
    16-channel hidden activation never reaches HBM).
    x: NHWC; w_t: PyTorch ConvTranspose2d layout (Cin, Cout, 4, 4); b: (Cout,).
    """
    Cin, Cout, k, _ = w_t.shape
    assert k == 4
    B, H, W, _ = x.shape
    x = x.astype(jnp.bfloat16)
    xp = jnp.pad(x, ((0, 0), (1, 1), (1, 1), (0, 0)))
    cols = [xp[:, u:u + H, v:v + W, :] for u in range(3) for v in range(3)]
    x2d = jnp.concatenate(cols, axis=-1).reshape(B * H * W, 9 * Cin)
    w2d = _subpixel_weight(w_t)                                   # (9*Cin, 4*Cout)
    b4 = jnp.tile(b, 4)
    if cls_w is None:
        o = fused_matmul(x2d, w2d, b4, relu=True, out_dtype=out_dtype)
        C = Cout
    else:
        w2, b2 = _blockdiag_classifier(cls_w, cls_b, Cout)
        o = fused_matmul(x2d, w2d, b4, relu=True, out_dtype=out_dtype, w2=w2, b2=b2)
        C = cls_w.shape[0]
    o = o.reshape(B, H, W, 2, 2, C)
    o = jnp.transpose(o, (0, 1, 3, 2, 4, 5)).reshape(B, 2 * H, 2 * W, C)
    return o


# ----------------------------------------------------------------------------
# FCN forward (Pallas path)
# ----------------------------------------------------------------------------
def fcn_forward(params, x_nchw):
    x = jnp.transpose(x_nchw, (0, 2, 3, 1)).astype(jnp.float32)   # -> NHWC
    h, w = x.shape[1], x.shape[2]

    d1 = conv2d_bn(x, params["dc1_w"], params["dc1_b"], 2, 1, bn=params["bn0"])
    d2 = conv2d_bn(d1, params["dc2_w"], params["dc2_b"], 2, 1, bn=params["bn1"])
    d3 = conv2d_bn(d2, params["dc3_w"], params["dc3_b"], 2, 1, bn=params["bn2"])
    d4 = conv2d_bn(d3, params["dc4_w"], params["dc4_b"], 2, 1, bn=params["bn3"])

    u4 = conv_transpose2d(d4, params["uc4_w"], params["uc4_b"])
    u3 = conv_transpose2d(u4, params["uc3_w"], params["uc3_b"])
    u2 = conv_transpose2d(u3, params["uc2_w"], params["uc2_b"])
    # last up-conv + 1x1 classifier fused into a single pallas_call
    logits = conv_transpose2d(u2, params["uc1_w"], params["uc1_b"],
                              out_dtype=jnp.float32,
                              cls_w=params["cls_w"], cls_b=params["cls_b"])
    logits = logits[:, :h, :w, :]                                 # crop to input size
    return jnp.transpose(logits, (0, 3, 1, 2))                    # -> NCHW (B, 5, H, W)


# ----------------------------------------------------------------------------
# Pure-JAX f32 reference (mirrors the PyTorch module; for correctness check)
# ----------------------------------------------------------------------------
def _ref_conv2d(x, w, b, stride, pad):
    Cout, Cin, k, _ = w.shape
    B, H, W, _ = x.shape
    xp = jnp.pad(x, ((0, 0), (pad, pad), (pad, pad), (0, 0)))
    Ho = (H + 2 * pad - k) // stride + 1
    Wo = (W + 2 * pad - k) // stride + 1
    cols = [xp[:, di:di + stride * Ho:stride, dj:dj + stride * Wo:stride, :]
            for di in range(k) for dj in range(k)]
    x2d = jnp.concatenate(cols, axis=-1).reshape(B * Ho * Wo, k * k * Cin)
    w2d = jnp.transpose(w, (2, 3, 1, 0)).reshape(k * k * Cin, Cout)
    return (x2d @ w2d + b).reshape(B, Ho, Wo, Cout)


def _ref_convT(x, w_t, b):
    """Dilate-and-conv reference for ConvTranspose2d(k=4, s=2, p=1)."""
    Cin, Cout, k, _ = w_t.shape
    B, H, W, C = x.shape
    y = jnp.zeros((B, 2 * H - 1, 2 * W - 1, C), x.dtype).at[:, ::2, ::2, :].set(x)
    w_c = jnp.transpose(w_t, (1, 0, 2, 3))[:, :, ::-1, ::-1]
    return _ref_conv2d(y, w_c, b, 1, k - 1 - 1)


def _ref_bn(x, bn):
    g, be, m, v = bn
    s = g / jnp.sqrt(v + _BN_EPS)
    return x * s + (be - m * s)


def fcn_forward_ref(params, x_nchw):
    x = jnp.transpose(x_nchw, (0, 2, 3, 1)).astype(jnp.float32)
    h, w = x.shape[1], x.shape[2]
    r = lambda t: jnp.maximum(t, 0.0)
    d1 = r(_ref_conv2d(_ref_bn(x, params["bn0"]), params["dc1_w"], params["dc1_b"], 2, 1))
    d2 = r(_ref_conv2d(_ref_bn(d1, params["bn1"]), params["dc2_w"], params["dc2_b"], 2, 1))
    d3 = r(_ref_conv2d(_ref_bn(d2, params["bn2"]), params["dc3_w"], params["dc3_b"], 2, 1))
    d4 = r(_ref_conv2d(_ref_bn(d3, params["bn3"]), params["dc4_w"], params["dc4_b"], 2, 1))
    u4 = r(_ref_convT(d4, params["uc4_w"], params["uc4_b"]))
    u3 = r(_ref_convT(u4, params["uc3_w"], params["uc3_b"]))
    u2 = r(_ref_convT(u3, params["uc2_w"], params["uc2_b"]))
    u1 = r(_ref_convT(u2, params["uc1_w"], params["uc1_b"]))[:, :h, :w, :]
    out = _ref_conv2d(u1, params["cls_w"], params["cls_b"], 1, 0)
    return jnp.transpose(out, (0, 3, 1, 2))


# ----------------------------------------------------------------------------
# Deterministic parameter init (synthetic; shapes match the PyTorch module)
# ----------------------------------------------------------------------------
def init_params(key):
    ks = iter(jax.random.split(key, 40))

    def cw(shape):
        return jax.random.normal(next(ks), shape, jnp.float32) * 0.05

    def cb(n):
        return jax.random.normal(next(ks), (n,), jnp.float32) * 0.01

    def bn(c):
        gamma = 1.0 + 0.1 * jax.random.normal(next(ks), (c,), jnp.float32)
        beta = 0.1 * jax.random.normal(next(ks), (c,), jnp.float32)
        mean = 0.1 * jax.random.normal(next(ks), (c,), jnp.float32)
        var = 0.9 + 0.2 * jax.random.uniform(next(ks), (c,), jnp.float32)
        return (gamma, beta, mean, var)

    p = {}
    p["bn0"] = bn(3)
    p["dc1_w"], p["dc1_b"] = cw((32, 3, 3, 3)), cb(32)
    p["bn1"] = bn(32)
    p["dc2_w"], p["dc2_b"] = cw((64, 32, 3, 3)), cb(64)
    p["bn2"] = bn(64)
    p["dc3_w"], p["dc3_b"] = cw((128, 64, 3, 3)), cb(128)
    p["bn3"] = bn(128)
    p["dc4_w"], p["dc4_b"] = cw((256, 128, 3, 3)), cb(256)
    # ConvTranspose2d weights: (Cin, Cout, k, k)
    p["uc4_w"], p["uc4_b"] = cw((256, 128, 4, 4)), cb(128)
    p["uc3_w"], p["uc3_b"] = cw((128, 64, 4, 4)), cb(64)
    p["uc2_w"], p["uc2_b"] = cw((64, 32, 4, 4)), cb(32)
    p["uc1_w"], p["uc1_b"] = cw((32, 16, 4, 4)), cb(16)
    p["cls_w"], p["cls_b"] = cw((5, 16, 1, 1)), cb(5)
    return p


if __name__ == "__main__":
    key = jax.random.PRNGKey(0)
    pkey, xkey = jax.random.split(key)
    params = init_params(pkey)

    B, C, H, W = 2, 3, 16, 16
    x = jax.random.normal(xkey, (B, C, H, W), jnp.float32)

    fwd = jax.jit(lambda inp: fcn_forward(params, inp))
    out = jax.block_until_ready(fwd(x))

    assert out.shape == (B, 5, H, W), out.shape
    assert out.dtype == jnp.float32
    assert bool(jnp.all(jnp.isfinite(out)))

    # Correctness check vs a pure-JAX f32 reference of the same module
    # (bf16 MXU operands => small numeric drift is expected).
    ref = jax.block_until_ready(jax.jit(lambda inp: fcn_forward_ref(params, inp))(x))
    rel = float(jnp.linalg.norm(out - ref) / (jnp.linalg.norm(ref) + 1e-8))
    assert rel < 5e-2, f"relative error vs reference too large: {rel}"

    print("KERNEL_OK")
</pallas_src>

<mosaic_0001>
module attributes {stable_mosaic.version = 11 : i64} {
  func.func @_mm_kernel(%arg0: i32, %arg1: i32, %arg2: i32, %arg3: memref<64x128xbf16, #tpu.memory_space<vmem>>, %arg4: memref<128x32xbf16, #tpu.memory_space<vmem>>, %arg5: memref<1x32xf32, #tpu.memory_space<vmem>>, %arg6: memref<64x32xbf16, #tpu.memory_space<vmem>>, %arg7: memref<64x32xf32, #tpu.memory_space<vmem>>) attributes {dimension_semantics = [#tpu.dimension_semantics<parallel>, #tpu.dimension_semantics<parallel>, #tpu.dimension_semantics<arbitrary>], iteration_bounds = array<i64: 2, 1, 1>, scalar_prefetch = 0 : i64, scratch_operands = 1 : i64, tpu.core_type = #tpu.core_type<tc>, window_params = [{transform_indices = @transform_0, window_bounds = array<i64: 64, 128>}, {transform_indices = @transform_1, window_bounds = array<i64: 128, 32>}, {transform_indices = @transform_2, window_bounds = array<i64: 1, 32>}, {transform_indices = @transform_3, window_bounds = array<i64: 64, 32>}]} {
    %c0_i32 = arith.constant 0 : i32
    %0 = arith.cmpi eq, %arg2, %c0_i32 : i32
    %1 = arith.extui %0 : i1 to i32
    %c0_i32_0 = arith.constant 0 : i32
    %2 = arith.cmpi ne, %1, %c0_i32_0 : i32
    scf.if %2 {
      %cst_10 = arith.constant 0.000000e+00 : f32
      %12 = vector.broadcast %cst_10 : f32 to vector<64x32xf32>
      %c0_11 = arith.constant 0 : index
      %c0_12 = arith.constant 0 : index
      %13 = vector.load %arg7[%c0_11, %c0_12] : memref<64x32xf32, #tpu.memory_space<vmem>>, vector<64x32xf32>
      tpu.vector_store %arg7[%c0_11, %c0_12], %12 {strides = array<i32>} : memref<64x32xf32, #tpu.memory_space<vmem>>, vector<64x32xf32>,
    } else {
    }
    %c0 = arith.constant 0 : index
    %c0_1 = arith.constant 0 : index
    %3 = vector.load %arg7[%c0, %c0_1] : memref<64x32xf32, #tpu.memory_space<vmem>>, vector<64x32xf32>
    %c0_2 = arith.constant 0 : index
    %c0_3 = arith.constant 0 : index
    %4 = vector.load %arg3[%c0_2, %c0_3] : memref<64x128xbf16, #tpu.memory_space<vmem>>, vector<64x128xbf16>
    %c0_4 = arith.constant 0 : index
    %c0_5 = arith.constant 0 : index
    %5 = vector.load %arg4[%c0_4, %c0_5] : memref<128x32xbf16, #tpu.memory_space<vmem>>, vector<128x32xbf16>
    %cst = arith.constant dense<0.000000e+00> : vector<64x32xf32>
    %6 = tpu.matmul %4, %5, %cst {dimension_numbers = #tpu.dot_dimension_numbers<[1], [0], [0], [1], [0, 0, 1, 1], [], []>} : vector<64x128xbf16>, vector<128x32xbf16>, vector<64x32xf32> -> vector<64x32xf32>
    %7 = arith.addf %3, %6 : vector<64x32xf32>
    %c0_6 = arith.constant 0 : index
    %c0_7 = arith.constant 0 : index
    %8 = vector.load %arg7[%c0_6, %c0_7] : memref<64x32xf32, #tpu.memory_space<vmem>>, vector<64x32xf32>
    tpu.vector_store %arg7[%c0_6, %c0_7], %7 {strides = array<i32>} : memref<64x32xf32, #tpu.memory_space<vmem>>, vector<64x32xf32>,
    %c0_i32_8 = arith.constant 0 : i32
    %9 = arith.cmpi eq, %arg2, %c0_i32_8 : i32
    %10 = arith.extui %9 : i1 to i32
    %c0_i32_9 = arith.constant 0 : i32
    %11 = arith.cmpi ne, %10, %c0_i32_9 : i32
    scf.if %11 {
      %c0_10 = arith.constant 0 : index
      %c0_11 = arith.constant 0 : index
      %12 = vector.load %arg7[%c0_10, %c0_11] : memref<64x32xf32, #tpu.memory_space<vmem>>, vector<64x32xf32>
      %c0_12 = arith.constant 0 : index
      %c0_13 = arith.constant 0 : index
      %13 = vector.load %arg5[%c0_12, %c0_13] : memref<1x32xf32, #tpu.memory_space<vmem>>, vector<1x32xf32>
      %14 = vector.broadcast %13 : vector<1x32xf32> to vector<64x32xf32>
      %15 = arith.addf %12, %14 : vector<64x32xf32>
      %cst_14 = arith.constant 0.000000e+00 : f32
      %16 = vector.broadcast %cst_14 : f32 to vector<64x32xf32>
      %17 = arith.maximumf %15, %16 : vector<64x32xf32>
      %18 = arith.truncf %17 : vector<64x32xf32> to vector<64x32xbf16>
      %c0_15 = arith.constant 0 : index
      %c0_16 = arith.constant 0 : index
      %19 = vector.load %arg6[%c0_15, %c0_16] : memref<64x32xbf16, #tpu.memory_space<vmem>>, vector<64x32xbf16>
      tpu.vector_store %arg6[%c0_15, %c0_16], %18 {strides = array<i32>} : memref<64x32xbf16, #tpu.memory_space<vmem>>, vector<64x32xbf16>,
    } else {
    }
    return
  }
  func.func @transform_0(%arg0: i32, %arg1: i32, %arg2: i32) -> (i32, i32) {
    %c0_i32 = arith.constant 0 : i32
    return %arg0, %arg2 : i32, i32
  }
  func.func @transform_1(%arg0: i32, %arg1: i32, %arg2: i32) -> (i32, i32) {
    %c0_i32 = arith.constant 0 : i32
    return %arg2, %arg1 : i32, i32
  }
  func.func @transform_2(%arg0: i32, %arg1: i32, %arg2: i32) -> (i32, i32) {
    %c0_i32 = arith.constant 0 : i32
    %c0_i32_0 = arith.constant 0 : i32
    return %c0_i32, %arg1 : i32, i32
  }
  func.func @transform_3(%arg0: i32, %arg1: i32, %arg2: i32) -> (i32, i32) {
    %c0_i32 = arith.constant 0 : i32
    return %arg0, %arg1 : i32, i32
  }
}

module attributes {stable_mosaic.version = 11 : i64} {
  func.func @_mm_kernel(%arg0: i32, %arg1: i32, %arg2: i32, %arg3: memref<16x384xbf16, #tpu.memory_space<vmem>>, %arg4: memref<384x64xbf16, #tpu.memory_space<vmem>>, %arg5: memref<1x64xf32, #tpu.memory_space<vmem>>, %arg6: memref<16x64xbf16, #tpu.memory_space<vmem>>, %arg7: memref<16x64xf32, #tpu.memory_space<vmem>>) attributes {dimension_semantics = [#tpu.dimension_semantics<parallel>, #tpu.dimension_semantics<parallel>, #tpu.dimension_semantics<arbitrary>], iteration_bounds = array<i64: 2, 1, 1>, scalar_prefetch = 0 : i64, scratch_operands = 1 : i64, tpu.core_type = #tpu.core_type<tc>, window_params = [{transform_indices = @transform_0, window_bounds = array<i64: 16, 384>}, {transform_indices = @transform_1, window_bounds = array<i64: 384, 64>}, {transform_indices = @transform_2, window_bounds = array<i64: 1, 64>}, {transform_indices = @transform_3, window_bounds = array<i64: 16, 64>}]} {
    %c0_i32 = arith.constant 0 : i32
    %0 = arith.cmpi eq, %arg2, %c0_i32 : i32
    %1 = arith.extui %0 : i1 to i32
    %c0_i32_0 = arith.constant 0 : i32
    %2 = arith.cmpi ne, %1, %c0_i32_0 : i32
    scf.if %2 {
      %cst_10 = arith.constant 0.000000e+00 : f32
      %12 = vector.broadcast %cst_10 : f32 to vector<16x64xf32>
      %c0_11 = arith.constant 0 : index
      %c0_12 = arith.constant 0 : index
      %13 = vector.load %arg7[%c0_11, %c0_12] : memref<16x64xf32, #tpu.memory_space<vmem>>, vector<16x64xf32>
      tpu.vector_store %arg7[%c0_11, %c0_12], %12 {strides = array<i32>} : memref<16x64xf32, #tpu.memory_space<vmem>>, vector<16x64xf32>,
    } else {
    }
    %c0 = arith.constant 0 : index
    %c0_1 = arith.constant 0 : index
    %3 = vector.load %arg7[%c0, %c0_1] : memref<16x64xf32, #tpu.memory_space<vmem>>, vector<16x64xf32>
    %c0_2 = arith.constant 0 : index
    %c0_3 = arith.constant 0 : index
    %4 = vector.load %arg3[%c0_2, %c0_3] : memref<16x384xbf16, #tpu.memory_space<vmem>>, vector<16x384xbf16>
    %c0_4 = arith.constant 0 : index
    %c0_5 = arith.constant 0 : index
    %5 = vector.load %arg4[%c0_4, %c0_5] : memref<384x64xbf16, #tpu.memory_space<vmem>>, vector<384x64xbf16>
    %cst = arith.constant dense<0.000000e+00> : vector<16x64xf32>
    %6 = tpu.matmul %4, %5, %cst {dimension_numbers = #tpu.dot_dimension_numbers<[1], [0], [0], [1], [0, 0, 1, 1], [], []>} : vector<16x384xbf16>, vector<384x64xbf16>, vector<16x64xf32> -> vector<16x64xf32>
    %7 = arith.addf %3, %6 : vector<16x64xf32>
    %c0_6 = arith.constant 0 : index
    %c0_7 = arith.constant 0 : index
    %8 = vector.load %arg7[%c0_6, %c0_7] : memref<16x64xf32, #tpu.memory_space<vmem>>, vector<16x64xf32>
    tpu.vector_store %arg7[%c0_6, %c0_7], %7 {strides = array<i32>} : memref<16x64xf32, #tpu.memory_space<vmem>>, vector<16x64xf32>,
    %c0_i32_8 = arith.constant 0 : i32
    %9 = arith.cmpi eq, %arg2, %c0_i32_8 : i32
    %10 = arith.extui %9 : i1 to i32
    %c0_i32_9 = arith.constant 0 : i32
    %11 = arith.cmpi ne, %10, %c0_i32_9 : i32
    scf.if %11 {
      %c0_10 = arith.constant 0 : index
      %c0_11 = arith.constant 0 : index
      %12 = vector.load %arg7[%c0_10, %c0_11] : memref<16x64xf32, #tpu.memory_space<vmem>>, vector<16x64xf32>
      %c0_12 = arith.constant 0 : index
      %c0_13 = arith.constant 0 : index
      %13 = vector.load %arg5[%c0_12, %c0_13] : memref<1x64xf32, #tpu.memory_space<vmem>>, vector<1x64xf32>
      %14 = vector.broadcast %13 : vector<1x64xf32> to vector<16x64xf32>
      %15 = arith.addf %12, %14 : vector<16x64xf32>
      %cst_14 = arith.constant 0.000000e+00 : f32
      %16 = vector.broadcast %cst_14 : f32 to vector<16x64xf32>
      %17 = arith.maximumf %15, %16 : vector<16x64xf32>
      %18 = arith.truncf %17 : vector<16x64xf32> to vector<16x64xbf16>
      %c0_15 = arith.constant 0 : index
      %c0_16 = arith.constant 0 : index
      %19 = vector.load %arg6[%c0_15, %c0_16] : memref<16x64xbf16, #tpu.memory_space<vmem>>, vector<16x64xbf16>
      tpu.vector_store %arg6[%c0_15, %c0_16], %18 {strides = array<i32>} : memref<16x64xbf16, #tpu.memory_space<vmem>>, vector<16x64xbf16>,
    } else {
    }
    return
  }
  func.func @transform_0(%arg0: i32, %arg1: i32, %arg2: i32) -> (i32, i32) {
    %c0_i32 = arith.constant 0 : i32
    return %arg0, %arg2 : i32, i32
  }
  func.func @transform_1(%arg0: i32, %arg1: i32, %arg2: i32) -> (i32, i32) {
    %c0_i32 = arith.constant 0 : i32
    return %arg2, %arg1 : i32, i32
  }
  func.func @transform_2(%arg0: i32, %arg1: i32, %arg2: i32) -> (i32, i32) {
    %c0_i32 = arith.constant 0 : i32
    %c0_i32_0 = arith.constant 0 : i32
    return %c0_i32, %arg1 : i32, i32
  }
  func.func @transform_3(%arg0: i32, %arg1: i32, %arg2: i32) -> (i32, i32) {
    %c0_i32 = arith.constant 0 : i32
    return %arg0, %arg1 : i32, i32
  }
}

module attributes {stable_mosaic.version = 11 : i64} {
  func.func @_mm_kernel(%arg0: i32, %arg1: i32, %arg2: i32, %arg3: memref<16x640xbf16, #tpu.memory_space<vmem>>, %arg4: memref<640x128xbf16, #tpu.memory_space<vmem>>, %arg5: memref<1x128xf32, #tpu.memory_space<vmem>>, %arg6: memref<16x128xbf16, #tpu.memory_space<vmem>>, %arg7: memref<16x128xf32, #tpu.memory_space<vmem>>) attributes {dimension_semantics = [#tpu.dimension_semantics<parallel>, #tpu.dimension_semantics<parallel>, #tpu.dimension_semantics<arbitrary>], iteration_bounds = array<i64: 1, 1, 1>, scalar_prefetch = 0 : i64, scratch_operands = 1 : i64, tpu.core_type = #tpu.core_type<tc>, window_params = [{transform_indices = @transform_0, window_bounds = array<i64: 16, 640>}, {transform_indices = @transform_1, window_bounds = array<i64: 640, 128>}, {transform_indices = @transform_2, window_bounds = array<i64: 1, 128>}, {transform_indices = @transform_3, window_bounds = array<i64: 16, 128>}]} {
    %c0_i32 = arith.constant 0 : i32
    %0 = arith.cmpi eq, %arg2, %c0_i32 : i32
    %1 = arith.extui %0 : i1 to i32
    %c0_i32_0 = arith.constant 0 : i32
    %2 = arith.cmpi ne, %1, %c0_i32_0 : i32
    scf.if %2 {
      %cst_10 = arith.constant 0.000000e+00 : f32
      %12 = vector.broadcast %cst_10 : f32 to vector<16x128xf32>
      %c0_11 = arith.constant 0 : index
      %c0_12 = arith.constant 0 : index
      %13 = vector.load %arg7[%c0_11, %c0_12] : memref<16x128xf32, #tpu.memory_space<vmem>>, vector<16x128xf32>
      tpu.vector_store %arg7[%c0_11, %c0_12], %12 {strides = array<i32>} : memref<16x128xf32, #tpu.memory_space<vmem>>, vector<16x128xf32>,
    } else {
    }
    %c0 = arith.constant 0 : index
    %c0_1 = arith.constant 0 : index
    %3 = vector.load %arg7[%c0, %c0_1] : memref<16x128xf32, #tpu.memory_space<vmem>>, vector<16x128xf32>
    %c0_2 = arith.constant 0 : index
    %c0_3 = arith.constant 0 : index
    %4 = vector.load %arg3[%c0_2, %c0_3] : memref<16x640xbf16, #tpu.memory_space<vmem>>, vector<16x640xbf16>
    %c0_4 = arith.constant 0 : index
    %c0_5 = arith.constant 0 : index
    %5 = vector.load %arg4[%c0_4, %c0_5] : memref<640x128xbf16, #tpu.memory_space<vmem>>, vector<640x128xbf16>
    %cst = arith.constant dense<0.000000e+00> : vector<16x128xf32>
    %6 = tpu.matmul %4, %5, %cst {dimension_numbers = #tpu.dot_dimension_numbers<[1], [0], [0], [1], [0, 0, 1, 1], [], []>} : vector<16x640xbf16>, vector<640x128xbf16>, vector<16x128xf32> -> vector<16x128xf32>
    %7 = arith.addf %3, %6 : vector<16x128xf32>
    %c0_6 = arith.constant 0 : index
    %c0_7 = arith.constant 0 : index
    %8 = vector.load %arg7[%c0_6, %c0_7] : memref<16x128xf32, #tpu.memory_space<vmem>>, vector<16x128xf32>
    tpu.vector_store %arg7[%c0_6, %c0_7], %7 {strides = array<i32>} : memref<16x128xf32, #tpu.memory_space<vmem>>, vector<16x128xf32>,
    %c0_i32_8 = arith.constant 0 : i32
    %9 = arith.cmpi eq, %arg2, %c0_i32_8 : i32
    %10 = arith.extui %9 : i1 to i32
    %c0_i32_9 = arith.constant 0 : i32
    %11 = arith.cmpi ne, %10, %c0_i32_9 : i32
    scf.if %11 {
      %c0_10 = arith.constant 0 : index
      %c0_11 = arith.constant 0 : index
      %12 = vector.load %arg7[%c0_10, %c0_11] : memref<16x128xf32, #tpu.memory_space<vmem>>, vector<16x128xf32>
      %c0_12 = arith.constant 0 : index
      %c0_13 = arith.constant 0 : index
      %13 = vector.load %arg5[%c0_12, %c0_13] : memref<1x128xf32, #tpu.memory_space<vmem>>, vector<1x128xf32>
      %14 = vector.broadcast %13 : vector<1x128xf32> to vector<16x128xf32>
      %15 = arith.addf %12, %14 : vector<16x128xf32>
      %cst_14 = arith.constant 0.000000e+00 : f32
      %16 = vector.broadcast %cst_14 : f32 to vector<16x128xf32>
      %17 = arith.maximumf %15, %16 : vector<16x128xf32>
      %18 = arith.truncf %17 : vector<16x128xf32> to vector<16x128xbf16>
      %c0_15 = arith.constant 0 : index
      %c0_16 = arith.constant 0 : index
      %19 = vector.load %arg6[%c0_15, %c0_16] : memref<16x128xbf16, #tpu.memory_space<vmem>>, vector<16x128xbf16>
      tpu.vector_store %arg6[%c0_15, %c0_16], %18 {strides = array<i32>} : memref<16x128xbf16, #tpu.memory_space<vmem>>, vector<16x128xbf16>,
    } else {
    }
    return
  }
  func.func @transform_0(%arg0: i32, %arg1: i32, %arg2: i32) -> (i32, i32) {
    %c0_i32 = arith.constant 0 : i32
    return %arg0, %arg2 : i32, i32
  }
  func.func @transform_1(%arg0: i32, %arg1: i32, %arg2: i32) -> (i32, i32) {
    %c0_i32 = arith.constant 0 : i32
    return %arg2, %arg1 : i32, i32
  }
  func.func @transform_2(%arg0: i32, %arg1: i32, %arg2: i32) -> (i32, i32) {
    %c0_i32 = arith.constant 0 : i32
    %c0_i32_0 = arith.constant 0 : i32
    return %c0_i32, %arg1 : i32, i32
  }
  func.func @transform_3(%arg0: i32, %arg1: i32, %arg2: i32) -> (i32, i32) {
    %c0_i32 = arith.constant 0 : i32
    return %arg0, %arg1 : i32, i32
  }
}

module attributes {stable_mosaic.version = 11 : i64} {
  func.func @_mm_kernel(%arg0: i32, %arg1: i32, %arg2: i32, %arg3: memref<16x1152xbf16, #tpu.memory_space<vmem>>, %arg4: memref<1152x128xbf16, #tpu.memory_space<vmem>>, %arg5: memref<1x128xf32, #tpu.memory_space<vmem>>, %arg6: memref<16x128xbf16, #tpu.memory_space<vmem>>, %arg7: memref<16x128xf32, #tpu.memory_space<vmem>>) attributes {dimension_semantics = [#tpu.dimension_semantics<parallel>, #tpu.dimension_semantics<parallel>, #tpu.dimension_semantics<arbitrary>], iteration_bounds = array<i64: 1, 2, 1>, scalar_prefetch = 0 : i64, scratch_operands = 1 : i64, tpu.core_type = #tpu.core_type<tc>, window_params = [{transform_indices = @transform_0, window_bounds = array<i64: 16, 1152>}, {transform_indices = @transform_1, window_bounds = array<i64: 1152, 128>}, {transform_indices = @transform_2, window_bounds = array<i64: 1, 128>}, {transform_indices = @transform_3, window_bounds = array<i64: 16, 128>}]} {
    %c0_i32 = arith.constant 0 : i32
    %0 = arith.cmpi eq, %arg2, %c0_i32 : i32
    %1 = arith.extui %0 : i1 to i32
    %c0_i32_0 = arith.constant 0 : i32
    %2 = arith.cmpi ne, %1, %c0_i32_0 : i32
    scf.if %2 {
      %cst_10 = arith.constant 0.000000e+00 : f32
      %12 = vector.broadcast %cst_10 : f32 to vector<16x128xf32>
      %c0_11 = arith.constant 0 : index
      %c0_12 = arith.constant 0 : index
      %13 = vector.load %arg7[%c0_11, %c0_12] : memref<16x128xf32, #tpu.memory_space<vmem>>, vector<16x128xf32>
      tpu.vector_store %arg7[%c0_11, %c0_12], %12 {strides = array<i32>} : memref<16x128xf32, #tpu.memory_space<vmem>>, vector<16x128xf32>,
    } else {
    }
    %c0 = arith.constant 0 : index
    %c0_1 = arith.constant 0 : index
    %3 = vector.load %arg7[%c0, %c0_1] : memref<16x128xf32, #tpu.memory_space<vmem>>, vector<16x128xf32>
    %c0_2 = arith.constant 0 : index
    %c0_3 = arith.constant 0 : index
    %4 = vector.load %arg3[%c0_2, %c0_3] : memref<16x1152xbf16, #tpu.memory_space<vmem>>, vector<16x1152xbf16>
    %c0_4 = arith.constant 0 : index
    %c0_5 = arith.constant 0 : index
    %5 = vector.load %arg4[%c0_4, %c0_5] : memref<1152x128xbf16, #tpu.memory_space<vmem>>, vector<1152x128xbf16>
    %cst = arith.constant dense<0.000000e+00> : vector<16x128xf32>
    %6 = tpu.matmul %4, %5, %cst {dimension_numbers = #tpu.dot_dimension_numbers<[1], [0], [0], [1], [0, 0, 1, 1], [], []>} : vector<16x1152xbf16>, vector<1152x128xbf16>, vector<16x128xf32> -> vector<16x128xf32>
    %7 = arith.addf %3, %6 : vector<16x128xf32>
    %c0_6 = arith.constant 0 : index
    %c0_7 = arith.constant 0 : index
    %8 = vector.load %arg7[%c0_6, %c0_7] : memref<16x128xf32, #tpu.memory_space<vmem>>, vector<16x128xf32>
    tpu.vector_store %arg7[%c0_6, %c0_7], %7 {strides = array<i32>} : memref<16x128xf32, #tpu.memory_space<vmem>>, vector<16x128xf32>,
    %c0_i32_8 = arith.constant 0 : i32
    %9 = arith.cmpi eq, %arg2, %c0_i32_8 : i32
    %10 = arith.extui %9 : i1 to i32
    %c0_i32_9 = arith.constant 0 : i32
    %11 = arith.cmpi ne, %10, %c0_i32_9 : i32
    scf.if %11 {
      %c0_10 = arith.constant 0 : index
      %c0_11 = arith.constant 0 : index
      %12 = vector.load %arg7[%c0_10, %c0_11] : memref<16x128xf32, #tpu.memory_space<vmem>>, vector<16x128xf32>
      %c0_12 = arith.constant 0 : index
      %c0_13 = arith.constant 0 : index
      %13 = vector.load %arg5[%c0_12, %c0_13] : memref<1x128xf32, #tpu.memory_space<vmem>>, vector<1x128xf32>
      %14 = vector.broadcast %13 : vector<1x128xf32> to vector<16x128xf32>
      %15 = arith.addf %12, %14 : vector<16x128xf32>
      %cst_14 = arith.constant 0.000000e+00 : f32
      %16 = vector.broadcast %cst_14 : f32 to vector<16x128xf32>
      %17 = arith.maximumf %15, %16 : vector<16x128xf32>
      %18 = arith.truncf %17 : vector<16x128xf32> to vector<16x128xbf16>
      %c0_15 = arith.constant 0 : index
      %c0_16 = arith.constant 0 : index
      %19 = vector.load %arg6[%c0_15, %c0_16] : memref<16x128xbf16, #tpu.memory_space<vmem>>, vector<16x128xbf16>
      tpu.vector_store %arg6[%c0_15, %c0_16], %18 {strides = array<i32>} : memref<16x128xbf16, #tpu.memory_space<vmem>>, vector<16x128xbf16>,
    } else {
    }
    return
  }
  func.func @transform_0(%arg0: i32, %arg1: i32, %arg2: i32) -> (i32, i32) {
    %c0_i32 = arith.constant 0 : i32
    return %arg0, %arg2 : i32, i32
  }
  func.func @transform_1(%arg0: i32, %arg1: i32, %arg2: i32) -> (i32, i32) {
    %c0_i32 = arith.constant 0 : i32
    return %arg2, %arg1 : i32, i32
  }
  func.func @transform_2(%arg0: i32, %arg1: i32, %arg2: i32) -> (i32, i32) {
    %c0_i32 = arith.constant 0 : i32
    %c0_i32_0 = arith.constant 0 : i32
    return %c0_i32, %arg1 : i32, i32
  }
  func.func @transform_3(%arg0: i32, %arg1: i32, %arg2: i32) -> (i32, i32) {
    %c0_i32 = arith.constant 0 : i32
    return %arg0, %arg1 : i32, i32
  }
}

module attributes {stable_mosaic.version = 11 : i64} {
  func.func @_mm_kernel(%arg0: i32, %arg1: i32, %arg2: i32, %arg3: memref<16x2304xbf16, #tpu.memory_space<vmem>>, %arg4: memref<2304x256xbf16, #tpu.memory_space<vmem>>, %arg5: memref<1x256xf32, #tpu.memory_space<vmem>>, %arg6: memref<16x256xbf16, #tpu.memory_space<vmem>>, %arg7: memref<16x256xf32, #tpu.memory_space<vmem>>) attributes {dimension_semantics = [#tpu.dimension_semantics<parallel>, #tpu.dimension_semantics<parallel>, #tpu.dimension_semantics<arbitrary>], iteration_bounds = array<i64: 1, 2, 1>, scalar_prefetch = 0 : i64, scratch_operands = 1 : i64, tpu.core_type = #tpu.core_type<tc>, window_params = [{transform_indices = @transform_0, window_bounds = array<i64: 16, 2304>}, {transform_indices = @transform_1, window_bounds = array<i64: 2304, 256>}, {transform_indices = @transform_2, window_bounds = array<i64: 1, 256>}, {transform_indices = @transform_3, window_bounds = array<i64: 16, 256>}]} {
    %c0_i32 = arith.constant 0 : i32
    %0 = arith.cmpi eq, %arg2, %c0_i32 : i32
    %1 = arith.extui %0 : i1 to i32
    %c0_i32_0 = arith.constant 0 : i32
    %2 = arith.cmpi ne, %1, %c0_i32_0 : i32
    scf.if %2 {
      %cst_10 = arith.constant 0.000000e+00 : f32
      %12 = vector.broadcast %cst_10 : f32 to vector<16x256xf32>
      %c0_11 = arith.constant 0 : index
      %c0_12 = arith.constant 0 : index
      %13 = vector.load %arg7[%c0_11, %c0_12] : memref<16x256xf32, #tpu.memory_space<vmem>>, vector<16x256xf32>
      tpu.vector_store %arg7[%c0_11, %c0_12], %12 {strides = array<i32>} : memref<16x256xf32, #tpu.memory_space<vmem>>, vector<16x256xf32>,
    } else {
    }
    %c0 = arith.constant 0 : index
    %c0_1 = arith.constant 0 : index
    %3 = vector.load %arg7[%c0, %c0_1] : memref<16x256xf32, #tpu.memory_space<vmem>>, vector<16x256xf32>
    %c0_2 = arith.constant 0 : index
    %c0_3 = arith.constant 0 : index
    %4 = vector.load %arg3[%c0_2, %c0_3] : memref<16x2304xbf16, #tpu.memory_space<vmem>>, vector<16x2304xbf16>
    %c0_4 = arith.constant 0 : index
    %c0_5 = arith.constant 0 : index
    %5 = vector.load %arg4[%c0_4, %c0_5] : memref<2304x256xbf16, #tpu.memory_space<vmem>>, vector<2304x256xbf16>
    %cst = arith.constant dense<0.000000e+00> : vector<16x256xf32>
    %6 = tpu.matmul %4, %5, %cst {dimension_numbers = #tpu.dot_dimension_numbers<[1], [0], [0], [1], [0, 0, 1, 1], [], []>} : vector<16x2304xbf16>, vector<2304x256xbf16>, vector<16x256xf32> -> vector<16x256xf32>
    %7 = arith.addf %3, %6 : vector<16x256xf32>
    %c0_6 = arith.constant 0 : index
    %c0_7 = arith.constant 0 : index
    %8 = vector.load %arg7[%c0_6, %c0_7] : memref<16x256xf32, #tpu.memory_space<vmem>>, vector<16x256xf32>
    tpu.vector_store %arg7[%c0_6, %c0_7], %7 {strides = array<i32>} : memref<16x256xf32, #tpu.memory_space<vmem>>, vector<16x256xf32>,
    %c0_i32_8 = arith.constant 0 : i32
    %9 = arith.cmpi eq, %arg2, %c0_i32_8 : i32
    %10 = arith.extui %9 : i1 to i32
    %c0_i32_9 = arith.constant 0 : i32
    %11 = arith.cmpi ne, %10, %c0_i32_9 : i32
    scf.if %11 {
      %c0_10 = arith.constant 0 : index
      %c0_11 = arith.constant 0 : index
      %12 = vector.load %arg7[%c0_10, %c0_11] : memref<16x256xf32, #tpu.memory_space<vmem>>, vector<16x256xf32>
      %c0_12 = arith.constant 0 : index
      %c0_13 = arith.constant 0 : index
      %13 = vector.load %arg5[%c0_12, %c0_13] : memref<1x256xf32, #tpu.memory_space<vmem>>, vector<1x256xf32>
      %14 = vector.broadcast %13 : vector<1x256xf32> to vector<16x256xf32>
      %15 = arith.addf %12, %14 : vector<16x256xf32>
      %cst_14 = arith.constant 0.000000e+00 : f32
      %16 = vector.broadcast %cst_14 : f32 to vector<16x256xf32>
      %17 = arith.maximumf %15, %16 : vector<16x256xf32>
      %18 = arith.truncf %17 : vector<16x256xf32> to vector<16x256xbf16>
      %c0_15 = arith.constant 0 : index
      %c0_16 = arith.constant 0 : index
      %19 = vector.load %arg6[%c0_15, %c0_16] : memref<16x256xbf16, #tpu.memory_space<vmem>>, vector<16x256xbf16>
      tpu.vector_store %arg6[%c0_15, %c0_16], %18 {strides = array<i32>} : memref<16x256xbf16, #tpu.memory_space<vmem>>, vector<16x256xbf16>,
    } else {
    }
    return
  }
  func.func @transform_0(%arg0: i32, %arg1: i32, %arg2: i32) -> (i32, i32) {
    %c0_i32 = arith.constant 0 : i32
    return %arg0, %arg2 : i32, i32
  }
  func.func @transform_1(%arg0: i32, %arg1: i32, %arg2: i32) -> (i32, i32) {
    %c0_i32 = arith.constant 0 : i32
    return %arg2, %arg1 : i32, i32
  }
  func.func @transform_2(%arg0: i32, %arg1: i32, %arg2: i32) -> (i32, i32) {
    %c0_i32 = arith.constant 0 : i32
    %c0_i32_0 = arith.constant 0 : i32
    return %c0_i32, %arg1 : i32, i32
  }
  func.func @transform_3(%arg0: i32, %arg1: i32, %arg2: i32) -> (i32, i32) {
    %c0_i32 = arith.constant 0 : i32
    return %arg0, %arg1 : i32, i32
  }
}

module attributes {stable_mosaic.version = 11 : i64} {
  func.func @_mm_kernel(%arg0: i32, %arg1: i32, %arg2: i32, %arg3: memref<16x640xbf16, #tpu.memory_space<vmem>>, %arg4: memref<640x128xbf16, #tpu.memory_space<vmem>>, %arg5: memref<1x128xf32, #tpu.memory_space<vmem>>, %arg6: memref<16x128xbf16, #tpu.memory_space<vmem>>, %arg7: memref<16x128xf32, #tpu.memory_space<vmem>>) attributes {dimension_semantics = [#tpu.dimension_semantics<parallel>, #tpu.dimension_semantics<parallel>, #tpu.dimension_semantics<arbitrary>], iteration_bounds = array<i64: 2, 1, 1>, scalar_prefetch = 0 : i64, scratch_operands = 1 : i64, tpu.core_type = #tpu.core_type<tc>, window_params = [{transform_indices = @transform_0, window_bounds = array<i64: 16, 640>}, {transform_indices = @transform_1, window_bounds = array<i64: 640, 128>}, {transform_indices = @transform_2, window_bounds = array<i64: 1, 128>}, {transform_indices = @transform_3, window_bounds = array<i64: 16, 128>}]} {
    %c0_i32 = arith.constant 0 : i32
    %0 = arith.cmpi eq, %arg2, %c0_i32 : i32
    %1 = arith.extui %0 : i1 to i32
    %c0_i32_0 = arith.constant 0 : i32
    %2 = arith.cmpi ne, %1, %c0_i32_0 : i32
    scf.if %2 {
      %cst_10 = arith.constant 0.000000e+00 : f32
      %12 = vector.broadcast %cst_10 : f32 to vector<16x128xf32>
      %c0_11 = arith.constant 0 : index
      %c0_12 = arith.constant 0 : index
      %13 = vector.load %arg7[%c0_11, %c0_12] : memref<16x128xf32, #tpu.memory_space<vmem>>, vector<16x128xf32>
      tpu.vector_store %arg7[%c0_11, %c0_12], %12 {strides = array<i32>} : memref<16x128xf32, #tpu.memory_space<vmem>>, vector<16x128xf32>,
    } else {
    }
    %c0 = arith.constant 0 : index
    %c0_1 = arith.constant 0 : index
    %3 = vector.load %arg7[%c0, %c0_1] : memref<16x128xf32, #tpu.memory_space<vmem>>, vector<16x128xf32>
    %c0_2 = arith.constant 0 : index
    %c0_3 = arith.constant 0 : index
    %4 = vector.load %arg3[%c0_2, %c0_3] : memref<16x640xbf16, #tpu.memory_space<vmem>>, vector<16x640xbf16>
    %c0_4 = arith.constant 0 : index
    %c0_5 = arith.constant 0 : index
    %5 = vector.load %arg4[%c0_4, %c0_5] : memref<640x128xbf16, #tpu.memory_space<vmem>>, vector<640x128xbf16>
    %cst = arith.constant dense<0.000000e+00> : vector<16x128xf32>
    %6 = tpu.matmul %4, %5, %cst {dimension_numbers = #tpu.dot_dimension_numbers<[1], [0], [0], [1], [0, 0, 1, 1], [], []>} : vector<16x640xbf16>, vector<640x128xbf16>, vector<16x128xf32> -> vector<16x128xf32>
    %7 = arith.addf %3, %6 : vector<16x128xf32>
    %c0_6 = arith.constant 0 : index
    %c0_7 = arith.constant 0 : index
    %8 = vector.load %arg7[%c0_6, %c0_7] : memref<16x128xf32, #tpu.memory_space<vmem>>, vector<16x128xf32>
    tpu.vector_store %arg7[%c0_6, %c0_7], %7 {strides = array<i32>} : memref<16x128xf32, #tpu.memory_space<vmem>>, vector<16x128xf32>,
    %c0_i32_8 = arith.constant 0 : i32
    %9 = arith.cmpi eq, %arg2, %c0_i32_8 : i32
    %10 = arith.extui %9 : i1 to i32
    %c0_i32_9 = arith.constant 0 : i32
    %11 = arith.cmpi ne, %10, %c0_i32_9 : i32
    scf.if %11 {
      %c0_10 = arith.constant 0 : index
      %c0_11 = arith.constant 0 : index
      %12 = vector.load %arg7[%c0_10, %c0_11] : memref<16x128xf32, #tpu.memory_space<vmem>>, vector<16x128xf32>
      %c0_12 = arith.constant 0 : index
      %c0_13 = arith.constant 0 : index
      %13 = vector.load %arg5[%c0_12, %c0_13] : memref<1x128xf32, #tpu.memory_space<vmem>>, vector<1x128xf32>
      %14 = vector.broadcast %13 : vector<1x128xf32> to vector<16x128xf32>
      %15 = arith.addf %12, %14 : vector<16x128xf32>
      %cst_14 = arith.constant 0.000000e+00 : f32
      %16 = vector.broadcast %cst_14 : f32 to vector<16x128xf32>
      %17 = arith.maximumf %15, %16 : vector<16x128xf32>
      %18 = arith.truncf %17 : vector<16x128xf32> to vector<16x128xbf16>
      %c0_15 = arith.constant 0 : index
      %c0_16 = arith.constant 0 : index
      %19 = vector.load %arg6[%c0_15, %c0_16] : memref<16x128xbf16, #tpu.memory_space<vmem>>, vector<16x128xbf16>
      tpu.vector_store %arg6[%c0_15, %c0_16], %18 {strides = array<i32>} : memref<16x128xbf16, #tpu.memory_space<vmem>>, vector<16x128xbf16>,
    } else {
    }
    return
  }
  func.func @transform_0(%arg0: i32, %arg1: i32, %arg2: i32) -> (i32, i32) {
    %c0_i32 = arith.constant 0 : i32
    return %arg0, %arg2 : i32, i32
  }
  func.func @transform_1(%arg0: i32, %arg1: i32, %arg2: i32) -> (i32, i32) {
    %c0_i32 = arith.constant 0 : i32
    return %arg2, %arg1 : i32, i32
  }
  func.func @transform_2(%arg0: i32, %arg1: i32, %arg2: i32) -> (i32, i32) {
    %c0_i32 = arith.constant 0 : i32
    %c0_i32_0 = arith.constant 0 : i32
    return %c0_i32, %arg1 : i32, i32
  }
  func.func @transform_3(%arg0: i32, %arg1: i32, %arg2: i32) -> (i32, i32) {
    %c0_i32 = arith.constant 0 : i32
    return %arg0, %arg1 : i32, i32
  }
}

module attributes {stable_mosaic.version = 11 : i64} {
  func.func @_mm_cls_kernel(%arg0: i32, %arg1: i32, %arg2: i32, %arg3: memref<64x384xbf16, #tpu.memory_space<vmem>>, %arg4: memref<384x64xbf16, #tpu.memory_space<vmem>>, %arg5: memref<1x64xf32, #tpu.memory_space<vmem>>, %arg6: memref<64x20xf32, #tpu.memory_space<vmem>>, %arg7: memref<1x20xf32, #tpu.memory_space<vmem>>, %arg8: memref<64x20xf32, #tpu.memory_space<vmem>>, %arg9: memref<64x64xf32, #tpu.memory_space<vmem>>) attributes {dimension_semantics = [#tpu.dimension_semantics<parallel>, #tpu.dimension_semantics<parallel>, #tpu.dimension_semantics<arbitrary>], iteration_bounds = array<i64: 2, 1, 1>, scalar_prefetch = 0 : i64, scratch_operands = 1 : i64, tpu.core_type = #tpu.core_type<tc>, window_params = [{transform_indices = @transform_0, window_bounds = array<i64: 64, 384>}, {transform_indices = @transform_1, window_bounds = array<i64: 384, 64>}, {transform_indices = @transform_2, window_bounds = array<i64: 1, 64>}, {pipeline_mode = #tpu.pipeline_mode<synchronous>, transform_indices = @transform_3, window_bounds = array<i64: 64, 20>}, {pipeline_mode = #tpu.pipeline_mode<synchronous>, transform_indices = @transform_4, window_bounds = array<i64: 1, 20>}, {transform_indices = @transform_5, window_bounds = array<i64: 64, 20>}]} {
    %c0_i32 = arith.constant 0 : i32
    %0 = arith.cmpi eq, %arg2, %c0_i32 : i32
    %1 = arith.extui %0 : i1 to i32
    %c0_i32_0 = arith.constant 0 : i32
    %2 = arith.cmpi ne, %1, %c0_i32_0 : i32
    scf.if %2 {
      %cst_10 = arith.constant 0.000000e+00 : f32
      %12 = vector.broadcast %cst_10 : f32 to vector<64x64xf32>
      %c0_11 = arith.constant 0 : index
      %c0_12 = arith.constant 0 : index
      %13 = vector.load %arg9[%c0_11, %c0_12] : memref<64x64xf32, #tpu.memory_space<vmem>>, vector<64x64xf32>
      tpu.vector_store %arg9[%c0_11, %c0_12], %12 {strides = array<i32>} : memref<64x64xf32, #tpu.memory_space<vmem>>, vector<64x64xf32>,
    } else {
    }
    %c0 = arith.constant 0 : index
    %c0_1 = arith.constant 0 : index
    %3 = vector.load %arg9[%c0, %c0_1] : memref<64x64xf32, #tpu.memory_space<vmem>>, vector<64x64xf32>
    %c0_2 = arith.constant 0 : index
    %c0_3 = arith.constant 0 : index
    %4 = vector.load %arg3[%c0_2, %c0_3] : memref<64x384xbf16, #tpu.memory_space<vmem>>, vector<64x384xbf16>
    %c0_4 = arith.constant 0 : index
    %c0_5 = arith.constant 0 : index
    %5 = vector.load %arg4[%c0_4, %c0_5] : memref<384x64xbf16, #tpu.memory_space<vmem>>, vector<384x64xbf16>
    %cst = arith.constant dense<0.000000e+00> : vector<64x64xf32>
    %6 = tpu.matmul %4, %5, %cst {dimension_numbers = #tpu.dot_dimension_numbers<[1], [0], [0], [1], [0, 0, 1, 1], [], []>} : vector<64x384xbf16>, vector<384x64xbf16>, vector<64x64xf32> -> vector<64x64xf32>
    %7 = arith.addf %3, %6 : vector<64x64xf32>
    %c0_6 = arith.constant 0 : index
    %c0_7 = arith.constant 0 : index
    %8 = vector.load %arg9[%c0_6, %c0_7] : memref<64x64xf32, #tpu.memory_space<vmem>>, vector<64x64xf32>
    tpu.vector_store %arg9[%c0_6, %c0_7], %7 {strides = array<i32>} : memref<64x64xf32, #tpu.memory_space<vmem>>, vector<64x64xf32>,
    %c0_i32_8 = arith.constant 0 : i32
    %9 = arith.cmpi eq, %arg2, %c0_i32_8 : i32
    %10 = arith.extui %9 : i1 to i32
    %c0_i32_9 = arith.constant 0 : i32
    %11 = arith.cmpi ne, %10, %c0_i32_9 : i32
    scf.if %11 {
      %c0_10 = arith.constant 0 : index
      %c0_11 = arith.constant 0 : index
      %12 = vector.load %arg9[%c0_10, %c0_11] : memref<64x64xf32, #tpu.memory_space<vmem>>, vector<64x64xf32>
      %c0_12 = arith.constant 0 : index
      %c0_13 = arith.constant 0 : index
      %13 = vector.load %arg5[%c0_12, %c0_13] : memref<1x64xf32, #tpu.memory_space<vmem>>, vector<1x64xf32>
      %14 = vector.broadcast %13 : vector<1x64xf32> to vector<64x64xf32>
      %15 = arith.addf %12, %14 : vector<64x64xf32>
      %cst_14 = arith.constant 0.000000e+00 : f32
      %16 = vector.broadcast %cst_14 : f32 to vector<64x64xf32>
      %17 = arith.maximumf %15, %16 : vector<64x64xf32>
      %c0_15 = arith.constant 0 : index
      %c0_16 = arith.constant 0 : index
      %18 = vector.load %arg6[%c0_15, %c0_16] : memref<64x20xf32, #tpu.memory_space<vmem>>, vector<64x20xf32>
      %cst_17 = arith.constant dense<0.000000e+00> : vector<64x20xf32>
      %19 = tpu.matmul %17, %18, %cst_17 {dimension_numbers = #tpu.dot_dimension_numbers<[1], [0], [0], [1], [0, 0, 1, 1], [], []>} : vector<64x64xf32>, vector<64x20xf32>, vector<64x20xf32> -> vector<64x20xf32>
      %c0_18 = arith.constant 0 : index
      %c0_19 = arith.constant 0 : index
      %20 = vector.load %arg7[%c0_18, %c0_19] : memref<1x20xf32, #tpu.memory_space<vmem>>, vector<1x20xf32>
      %21 = vector.broadcast %20 : vector<1x20xf32> to vector<64x20xf32>
      %22 = arith.addf %19, %21 : vector<64x20xf32>
      %c0_20 = arith.constant 0 : index
      %c0_21 = arith.constant 0 : index
      %23 = vector.load %arg8[%c0_20, %c0_21] : memref<64x20xf32, #tpu.memory_space<vmem>>, vector<64x20xf32>
      tpu.vector_store %arg8[%c0_20, %c0_21], %22 {strides = array<i32>} : memref<64x20xf32, #tpu.memory_space<vmem>>, vector<64x20xf32>,
    } else {
    }
    return
  }
  func.func @transform_0(%arg0: i32, %arg1: i32, %arg2: i32) -> (i32, i32) {
    %c0_i32 = arith.constant 0 : i32
    return %arg0, %arg2 : i32, i32
  }
  func.func @transform_1(%arg0: i32, %arg1: i32, %arg2: i32) -> (i32, i32) {
    %c0_i32 = arith.constant 0 : i32
    return %arg2, %arg1 : i32, i32
  }
  func.func @transform_2(%arg0: i32, %arg1: i32, %arg2: i32) -> (i32, i32) {
    %c0_i32 = arith.constant 0 : i32
    %c0_i32_0 = arith.constant 0 : i32
    return %c0_i32, %arg1 : i32, i32
  }
  func.func @transform_3(%arg0: i32, %arg1: i32, %arg2: i32) -> (i32, i32) {
    %c0_i32 = arith.constant 0 : i32
    %c0_i32_0 = arith.constant 0 : i32
    %c0_i32_1 = arith.constant 0 : i32
    return %c0_i32, %c0_i32_0 : i32, i32
  }
  func.func @transform_4(%arg0: i32, %arg1: i32, %arg2: i32) -> (i32, i32) {
    %c0_i32 = arith.constant 0 : i32
    %c0_i32_0 = arith.constant 0 : i32
    %c0_i32_1 = arith.constant 0 : i32
    return %c0_i32, %c0_i32_0 : i32, i32
  }
  func.func @transform_5(%arg0: i32, %arg1: i32, %arg2: i32) -> (i32, i32) {
    %c0_i32 = arith.constant 0 : i32
    %c0_i32_0 = arith.constant 0 : i32
    return %arg0, %c0_i32 : i32, i32
  }
}

</mosaic_0001>

<llo_original>
// kernel: _lambda_.8
$region0: #{_lambda_.8}
  #allocation0 [shape = 'u32[]', space=smem, size = 0x4, offset = 0x4, fixed_abs, tag = 'smem constant byte address 0x4 - core index']
  #allocation1 [shape = 'u32[144,128]{1,0:T(1,128)}', space=vmem, size = 0x12000, scoped, tag = 'internal scratch']
  #allocation2 [shape = 'f32[64,32]{1,0:T(8,128)}', space=vmem, size = 0x8000, scoped, tag = 'scratch operand']
  %s0 = inlined_call_operand.vmem [shape: bf16[128,128], index: 0, kind: input, shape index: {}]
  %s1 = inlined_call_operand.hbm [shape: bf16[128,32], index: 1, kind: input, shape index: {}]
  %s2 = inlined_call_operand.hbm [shape: f32[1,32], index: 2, kind: input, shape index: {}]
  %s3 = inlined_call_operand.vmem [shape: bf16[128,32], index: 3, kind: output, shape index: {}]
  %s4 = sld [smem:[#allocation0]]
  $region61: #{_lambda_.8} parent=0
    _
  %s6 = ssub.s32 1, %s4
  %s7 = scalar_select 0, %s6, %s4
  $region1: #{_lambda_.8} parent=0
    #allocation3 [shape = 'u8[32768]{0}', space=vmem, size = 0x8000, scoped, tag = 'input window, operand 1, single buffered']
    #allocation4 [shape = 's32[2]{0}', space=sflag, size = 0x8, scoped, tag = 'scoped memory for _lambda_.8']
    #allocation5 [shape = 'u8[512]{0}', space=vmem, size = 0x400, scoped, tag = 'input window, operand 2, single buffered']
    #allocation6 [shape = 's32[1]{0}', space=sflag, size = 0x4, scoped, tag = 'scoped memory for _lambda_.8']
    %8 = vsyncpa [#allocation4], 0
    %9 = vsyncpa [#allocation6], 0
    loop: start=0, step=1, limit=4
    $region2: #{_lambda_.8} parent=1 // loop_pre_header
      _
    $region3: #{_lambda_.8} parent=1 // loop_header
      %s11 = sphi 0, %s15
      %p12 = scmp.ge.s32.totalorder %s11, 4
      %s18 = sphi 0, %s37
      %s19 = sphi 0, %s33
      %s20 = sphi 0, %s29
      %s21 = sphi 0, %s18
      %s22 = sphi 0, %s19
      %s23 = sphi 0, %s20
      %s24 = sphi 0, %s21
      %s25 = sphi 0, %s22
      %s26 = sphi 0, %s23
      %s42 = sphi 0, %s44
      %s45 = sphi 0, %s42
      %s46 = sphi 0, %s45
      %s62 = sphi 0, %s46
      %s70 = sphi 0, %s72
      %s73 = sphi 0, %s70
      %s74 = sphi 0, %s73
      %s90 = sphi 0, %s74
      %s96 = sphi 0, %s98
      %s99 = sphi 0, %s96
      %s100 = sphi 0, %s99
      %s116 = sphi 0, %s100
      %s124 = sphi 0, %s126
      %s127 = sphi 0, %s124
      %s128 = sphi 0, %s127
      %s144 = sphi 0, %s128
    $region4: #{_lambda_.8} parent=1 // loop_header_branch
      %14 = sbr.rel (%p12) target = $region8
    $region5: #{_lambda_.8} parent=1 // loop_body
      %s16 = ssub.s32 %s11, 1
      %s17 = ssub.s32 %s11, 2
      %s27 = sadd.s32 1, %s20
      %p28 = scmp.ge.s32.totalorder %s27, 1
      %s29 = scalar_select %p28, 0, %s27
      %s30 = sadd.s32 1, %s19
      %s31 = scalar_select %p28, %s30, %s19
      %p32 = scmp.ge.s32.totalorder %s31, 1
      %s33 = scalar_select %p32, 0, %s31
      %s34 = sadd.s32 1, %s18
      %s35 = scalar_select %p32, %s34, %s18
      %p36 = scmp.ge.s32.totalorder %s35, 2
      %s37 = scalar_select %p36, 0, %s35
      %s38 = ssub.s32 %s18, %s37
      %s39 = ssub.s32 %s20, %s29
      %s40 = sor.u32 %s38, %s39
      %p41 = scmp.eq.s32.totalorder %s40, 0
      %s43 = sadd.s32 %s42, 1
      %s44 = scalar_select %p41, %s42, %s43
      %p47 = pneg %p41
      %p48 = scmp.eq.s32.totalorder %s11, 1
      %p49 = por %p47, %p48
      %p50 = scmp.ne.s32.totalorder %s42, %s45
      %p51 = scmp.eq.s32.totalorder %s11, 0
      %p52 = por %p50, %p51
      %p53 = scmp.ne.s32.totalorder %s42, %s45
      %p54 = scmp.eq.s32.totalorder %s16, 1
      %p55 = por %p53, %p54
      %p56 = scmp.ne.s32.totalorder %s45, %s46
      %p57 = scmp.eq.s32.totalorder %s16, 0
      %p58 = por %p56, %p57
      %p59 = scmp.ne.s32.totalorder %s45, %s46
      %p60 = scmp.eq.s32.totalorder %s17, 1
      %p61 = por %p59, %p60
      %p63 = scmp.ne.s32.totalorder %s46, %s62
      %p64 = scmp.eq.s32.totalorder %s17, 0
      %p65 = por %p63, %p64
      %s66 = ssub.s32 %s20, %s29
      %s67 = ssub.s32 %s19, %s33
      %s68 = sor.u32 %s66, %s67
      %p69 = scmp.eq.s32.totalorder %s68, 0
      %s71 = sadd.s32 %s70, 1
      %s72 = scalar_select %p69, %s70, %s71
      %p75 = pneg %p69
      %p76 = scmp.eq.s32.totalorder %s11, 1
      %p77 = por %p75, %p76
      %p78 = scmp.ne.s32.totalorder %s70, %s73
      %p79 = scmp.eq.s32.totalorder %s11, 0
      %p80 = por %p78, %p79
      %p81 = scmp.ne.s32.totalorder %s70, %s73
      %p82 = scmp.eq.s32.totalorder %s16, 1
      %p83 = por %p81, %p82
      %p84 = scmp.ne.s32.totalorder %s73, %s74
      %p85 = scmp.eq.s32.totalorder %s16, 0
      %p86 = por %p84, %p85
      %p87 = scmp.ne.s32.totalorder %s73, %s74
      %p88 = scmp.eq.s32.totalorder %s17, 1
      %p89 = por %p87, %p88
      %p91 = scmp.ne.s32.totalorder %s74, %s90
      %p92 = scmp.eq.s32.totalorder %s17, 0
      %p93 = por %p91, %p92
      %s94 = ssub.s32 %s19, %s33
      %p95 = scmp.eq.s32.totalorder %s94, 0
      %s97 = sadd.s32 %s96, 1
      %s98 = scalar_select %p95, %s96, %s97
      %p101 = pneg %p95
      %p102 = scmp.eq.s32.totalorder %s11, 1
      %p103 = por %p101, %p102
      %p104 = scmp.ne.s32.totalorder %s96, %s99
      %p105 = scmp.eq.s32.totalorder %s11, 0
      %p106 = por %p104, %p105
      %p107 = scmp.ne.s32.totalorder %s96, %s99
      %p108 = scmp.eq.s32.totalorder %s16, 1
      %p109 = por %p107, %p108
      %p110 = scmp.ne.s32.totalorder %s99, %s100
      %p111 = scmp.eq.s32.totalorder %s16, 0
      %p112 = por %p110, %p111
      %p113 = scmp.ne.s32.totalorder %s99, %s100
      %p114 = scmp.eq.s32.totalorder %s17, 1
      %p115 = por %p113, %p114
      %p117 = scmp.ne.s32.totalorder %s100, %s116
      %p118 = scmp.eq.s32.totalorder %s17, 0
      %p119 = por %p117, %p118
      %s120 = ssub.s32 %s18, %s37
      %s121 = ssub.s32 %s19, %s33
      %s122 = sor.u32 %s120, %s121
      %p123 = scmp.eq.s32.totalorder %s122, 0
      %s125 = sadd.s32 %s124, 1
      %s126 = scalar_select %p123, %s124, %s125
      %p129 = pneg %p123
      %p130 = scmp.eq.s32.totalorder %s11, 1
      %p131 = por %p129, %p130
      %p132 = scmp.ne.s32.totalorder %s124, %s127
      %p133 = scmp.eq.s32.totalorder %s11, 0
      %p134 = por %p132, %p133
      %p135 = scmp.ne.s32.totalorder %s124, %s127
      %p136 = scmp.eq.s32.totalorder %s16, 1
      %p137 = por %p135, %p136
      %p138 = scmp.ne.s32.totalorder %s127, %s128
      %p139 = scmp.eq.s32.totalorder %s16, 0
      %p140 = por %p138, %p139
      %p141 = scmp.ne.s32.totalorder %s127, %s128
      %p142 = scmp.eq.s32.totalorder %s17, 1
      %p143 = por %p141, %p142
      %p145 = scmp.ne.s32.totalorder %s128, %s144
      %p146 = scmp.eq.s32.totalorder %s17, 0
      %p147 = por %p145, %p146
      %p148 = scmp.le.s32.totalorder 1, %s11
      %p149 = scmp.lt.s32.totalorder %s11, 3
      %p150 = pnand %p148, %p149
      %p151 = pneg %p150
      // Predicated region
      $region9: #{_lambda_.8} parent=5 // pred_check
        _
      $region10: #{_lambda_.8} parent=5 // pred_check_branch
        %153 = sbr.rel (%p150) target = $region12
      $region11: #{_lambda_.8} parent=5 // pred_region
        %s154 = ssub.s32 %s11, 1
        // Predicated region
        $region13: #{_lambda_.8} parent=11 // pred_check
          %p155 = pneg %p86
        $region14: #{_lambda_.8} parent=11 // pred_check_branch
          %157 = sbr.rel (%p155) target = $region16
        $region15: #{_lambda_.8} parent=11 // pred_region
          %s158 = smul.u32 16, %s23
          %s160 = ssub.s32 1024, 1024
          %161 = vsyncadd [#allocation4], %s160
          %s162 = sadd.s32 %s22, %s158
          %s163 = smul.addr %s162, 64
          %s164 = scalar_lea.hbm %s1, %s163
          %s165 = sshll.u32 [#allocation3], 4
          %s166 = int_to_ptr.vmem [resolvable:$true] %s165
          %171 = dma.hbm_to_vmem [thread:$0]  %s164, 1024, %s166, [#allocation4], 64, 64, 4
        $region16: #{_lambda_.8} parent=11 // pred_fallthru
          _
        // Predicated region
        $region17: #{_lambda_.8} parent=11 // pred_check
          %p172 = pneg %p112
        $region18: #{_lambda_.8} parent=11 // pred_check_branch
          %174 = sbr.rel (%p172) target = $region20
        $region19: #{_lambda_.8} parent=11 // pred_region
          %s176 = ssub.s32 16, 16
          %177 = vsyncadd [#allocation6], %s176
          %s178 = smul.addr %s22, 16
          %s179 = scalar_lea.hbm %s2, %s178
          %s181 = sshll.u32 [#allocation5], 4
          %s182 = int_to_ptr.vmem [resolvable:$true] %s181
          %184 = dma.hbm_to_vmem [thread:$0]  %s179, 16, %s182, [#allocation6]
        $region20: #{_lambda_.8} parent=11 // pred_fallthru
          _
      $region12: #{_lambda_.8} parent=5 // pred_fallthru
        _
      %p185 = scmp.lt.s32.totalorder %s11, 2
      // Predicated region
      $region21: #{_lambda_.8} parent=5 // pred_check
        %p186 = pneg %p185
      $region22: #{_lambda_.8} parent=5 // pred_check_branch
        %188 = sbr.rel (%p186) target = $region24
      $region23: #{_lambda_.8} parent=5 // pred_region
        // Predicated region
        $region25: #{_lambda_.8} parent=23 // pred_check
          %p189 = pneg %p52
        $region26: #{_lambda_.8} parent=23 // pred_check_branch
          %191 = sbr.rel (%p189) target = $region28
        $region27: #{_lambda_.8} parent=23 // pred_region
          %s192 = smul.u32 8, %s18
          %p193 = scmp.lt.s32.totalorder %s192, 15
          %s194 = scalar_select %p193, %s192, 15
          %p195 = scmp.lt.s32.totalorder %s20, 0
          %s196 = scalar_select %p195, %s20, 0
          %s197 = sadd.s32 %s196, %s194
          %s198 = smul.addr %s197, 4
          %s199 = scalar_lea.vmem %s0, %s198
          %s200 = smul.u32 8, %s18
        $region28: #{_lambda_.8} parent=23 // pred_fallthru
          _
      $region24: #{_lambda_.8} parent=5 // pred_fallthru
        _
      %p201 = scmp.le.s32.totalorder 1, %s11
      %p202 = scmp.lt.s32.totalorder %s11, 3
      %p203 = pnand %p201, %p202
      %p204 = pneg %p203
      // Predicated region
      $region29: #{_lambda_.8} parent=5 // pred_check
        _
      $region30: #{_lambda_.8} parent=5 // pred_check_branch
        %206 = sbr.rel (%p203) target = $region32
      $region31: #{_lambda_.8} parent=5 // pred_region
        %s207 = ssub.s32 %s11, 1
        // Predicated region
        $region33: #{_lambda_.8} parent=31 // pred_check
          %p208 = pneg %p86
        $region34: #{_lambda_.8} parent=31 // pred_check_branch
          %210 = sbr.rel (%p208) target = $region36
        $region35: #{_lambda_.8} parent=31 // pred_region
          %211 = dma.done [#allocation4], 1024
        $region36: #{_lambda_.8} parent=31 // pred_fallthru
          _
        // Predicated region
        $region37: #{_lambda_.8} parent=31 // pred_check
          %p212 = pneg %p112
        $region38: #{_lambda_.8} parent=31 // pred_check_branch
          %214 = sbr.rel (%p212) target = $region40
        $region39: #{_lambda_.8} parent=31 // pred_region
          %215 = dma.done [#allocation6], 16
        $region40: #{_lambda_.8} parent=31 // pred_fallthru
          _
        %s216 = smul.u32 8, %s21
        %p217 = scmp.lt.s32.totalorder %s216, 15
        %s218 = scalar_select %p217, %s216, 15
        %p219 = scmp.lt.s32.totalorder %s23, 0
        %s220 = scalar_select %p219, %s23, 0
        %s221 = sadd.s32 %s220, %s218
        %s222 = smul.addr %s221, 4
        %s223 = scalar_lea.vmem %s0, %s222
        %p224 = pneg %p58
        %p225 = pneg %p55
        %p226 = pneg %p86
        %p227 = pneg %p83
        %p228 = pneg %p112
        %p229 = pneg %p109
        %p230 = pneg %p140
        %p231 = pneg %p137
        %s232 = smul.u32 8, %s21
        %p233 = scmp.lt.s32.totalorder %s232, 15
        %s234 = scalar_select %p233, %s232, 15
        %p235 = scmp.lt.s32.totalorder %s22, 0
        %s236 = scalar_select %p235, %s22, 0
        %s237 = sadd.s32 %s236, %s234
        %s238 = smul.addr %s237, 4
        %s239 = scalar_lea.vmem %s3, %s238
        %s240 = smul.u32 8, %s21
        %p241 = scmp.lt.s32.totalorder %s240, 15
        %s242 = scalar_select %p241, %s240, 15
        %p243 = scmp.lt.s32.totalorder %s23, 0
        %s244 = scalar_select %p243, %s23, 0
        %s245 = sadd.s32 %s244, %s242
        %s246 = smul.addr %s245, 4
        %s247 = scalar_lea.vmem %s0, %s246
        %s248 = smul.u32 8, %s21
        %s249 = smul.u32 16, %s23
        %s250 = smul.u32 8, %s21
        %p251 = scmp.lt.s32.totalorder %s250, 15
        %s252 = scalar_select %p251, %s250, 15
        %p253 = scmp.lt.s32.totalorder %s22, 0
        %s254 = scalar_select %p253, %s22, 0
        %s255 = sadd.s32 %s254, %s252
        %s256 = smul.addr %s255, 4
        %s257 = scalar_lea.vmem %s3, %s256
        %s258 = smul.u32 8, %s21
        %p260 = scmp.eq.s32.totalorder %s23, 0
        // Predicated region
        $region41: #{_lambda_.8} parent=31 // pred_check
          %p261 = pneg %p260
        $region42: #{_lambda_.8} parent=31 // pred_check_branch
          %263 = sbr.rel (%p261) target = $region44
        $region43: #{_lambda_.8} parent=31 // pred_region
          %vm264 = vcmask 261120
          %265 = vst.msk [vmem:[#allocation2] sm:$0xff] %vm264, 0.0
          %266 = vst.msk [vmem:[#allocation2 + $0x8] sm:$0xff] %vm264, 0.0
          %267 = vst.msk [vmem:[#allocation2 + $0x10] sm:$0xff] %vm264, 0.0
          %268 = vst.msk [vmem:[#allocation2 + $0x18] sm:$0xff] %vm264, 0.0
          %269 = vst.msk [vmem:[#allocation2 + $0x20] sm:$0xff] %vm264, 0.0
          %270 = vst.msk [vmem:[#allocation2 + $0x28] sm:$0xff] %vm264, 0.0
          %271 = vst.msk [vmem:[#allocation2 + $0x30] sm:$0xff] %vm264, 0.0
          %272 = vst.msk [vmem:[#allocation2 + $0x38] sm:$0xff] %vm264, 0.0
        $region44: #{_lambda_.8} parent=31 // pred_fallthru
          _
        %v273 = vld [vmem:[#allocation2] sm:$0xff]
        %v274 = vld [vmem:[#allocation2 + $0x8] sm:$0xff]
        %v275 = vld [vmem:[#allocation2 + $0x10] sm:$0xff]
        %v276 = vld [vmem:[#allocation2 + $0x18] sm:$0xff]
        %v277 = vld [vmem:[#allocation2 + $0x20] sm:$0xff]
        %v278 = vld [vmem:[#allocation2 + $0x28] sm:$0xff]
        %v279 = vld [vmem:[#allocation2 + $0x30] sm:$0xff]
        %v280 = vld [vmem:[#allocation2 + $0x38] sm:$0xff]
        %v281 = vld [vmem:[%s247] sm:$0xf]
        %v282 = vld [vmem:[%s247 + $0x4] sm:$0xf]
        %v283 = vld [vmem:[%s247 + $0x8] sm:$0xf]
        %v284 = vld [vmem:[%s247 + $0xc] sm:$0xf]
        %v285 = vld [vmem:[%s247 + $0x10] sm:$0xf]
        %v286 = vld [vmem:[%s247 + $0x14] sm:$0xf]
        %v287 = vld [vmem:[%s247 + $0x18] sm:$0xf]
        %v288 = vld [vmem:[%s247 + $0x1c] sm:$0xf]
        %v289 = vld [vmem:[#allocation3] sm:$0xf]
        %v290 = vld [vmem:[#allocation3 + $0x4] sm:$0xf]
        %v291 = vld [vmem:[#allocation3 + $0x8] sm:$0xf]
        %v292 = vld [vmem:[#allocation3 + $0xc] sm:$0xf]
        %v293 = vld [vmem:[#allocation3 + $0x10] sm:$0xf]
        %v294 = vld [vmem:[#allocation3 + $0x14] sm:$0xf]
        %v295 = vld [vmem:[#allocation3 + $0x18] sm:$0xf]
        %v296 = vld [vmem:[#allocation3 + $0x1c] sm:$0xf]
        %v297 = vld [vmem:[#allocation3 + $0x20] sm:$0xf]
        %v298 = vld [vmem:[#allocation3 + $0x24] sm:$0xf]
        %v299 = vld [vmem:[#allocation3 + $0x28] sm:$0xf]
        %v300 = vld [vmem:[#allocation3 + $0x2c] sm:$0xf]
        %v301 = vld [vmem:[#allocation3 + $0x30] sm:$0xf]
        %v302 = vld [vmem:[#allocation3 + $0x34] sm:$0xf]
        %v303 = vld [vmem:[#allocation3 + $0x38] sm:$0xf]
        %v304 = vld [vmem:[#allocation3 + $0x3c] sm:$0xf]
        %v313 = vunpack.c.l.b16 %v281
        %v314 = vunpack.c.l.b16 %v282
        %v315 = vunpack.c.l.b16 %v283
        %v316 = vunpack.c.l.b16 %v284
        %v317 = vunpack.c.l.b16 %v285
        %v318 = vunpack.c.l.b16 %v286
        %v319 = vunpack.c.l.b16 %v287
        %v320 = vunpack.c.l.b16 %v288
        %v321 = vpack.c.b16 %v314, %v313
        %v322 = vpack.c.b16 %v316, %v315
        %v323 = vpack.c.b16 %v318, %v317
        %v324 = vpack.c.b16 %v320, %v319
        %v345 = vunpack.c.l.b16 %v289
        %v346 = vunpack.c.l.b16 %v290
        %v347 = vunpack.c.l.b16 %v291
        %v348 = vunpack.c.l.b16 %v292
        %v349 = vunpack.c.l.b16 %v293
        %v350 = vunpack.c.l.b16 %v294
        %v351 = vunpack.c.l.b16 %v295
        %v352 = vunpack.c.l.b16 %v296
        %v353 = vunpack.c.l.b16 %v297
        %v354 = vunpack.c.l.b16 %v298
        %v355 = vunpack.c.l.b16 %v299
        %v356 = vunpack.c.l.b16 %v300
        %v357 = vunpack.c.l.b16 %v301
        %v358 = vunpack.c.l.b16 %v302
        %v359 = vunpack.c.l.b16 %v303
        %v360 = vunpack.c.l.b16 %v304
        %v361 = vpack.c.b16 %v346, %v345
        %v362 = vpack.c.b16 %v348, %v347
        %v363 = vpack.c.b16 %v350, %v349
        %v364 = vpack.c.b16 %v352, %v351
        %v365 = vpack.c.b16 %v354, %v353
        %v366 = vpack.c.b16 %v356, %v355
        %v367 = vpack.c.b16 %v358, %v357
        %v368 = vpack.c.b16 %v360, %v359
        %377 = vmatprep.subr.bf16.mxu0 0
        %378 = vmatpush1.bf16.msra.mxu0 %v361
        %379 = vmatprep.subr.bf16.mxu0 0
        %380 = vmatpush1.bf16.msra.mxu0 %v362
        %381 = vmatprep.subr.bf16.mxu0 0
        %382 = vmatpush1.bf16.msra.mxu0 %v363
        %383 = vmatprep.subr.bf16.mxu0 0
        %384 = vmatpush1.bf16.msra.mxu0 %v364
        %385 = vmatprep.subr.bf16.mxu0 0
        %386 = vmatpush1.bf16.msra.mxu0 %v365
        %387 = vmatprep.subr.bf16.mxu0 0
        %388 = vmatpush1.bf16.msra.mxu0 %v366
        %389 = vmatprep.subr.bf16.mxu0 0
        %390 = vmatpush1.bf16.msra.mxu0 %v367
        %391 = vmatprep.subr.bf16.mxu0 0
        %392 = vmatpush1.bf16.msra.mxu0 %v368
        %393 = vmatprep.subr.bf16.mxu0 0
        %394 = vmatpush1.bf16.msra.mxu0 0
        %395 = vmatprep.subr.bf16.mxu0 0
        %396 = vmatpush1.bf16.msra.mxu0 0
        %397 = vmatprep.subr.bf16.mxu0 0
        %398 = vmatpush1.bf16.msra.mxu0 0
        %399 = vmatprep.subr.bf16.mxu0 0
        %400 = vmatpush1.bf16.msra.mxu0 0
        %401 = vmatprep.subr.bf16.mxu0 0
        %402 = vmatpush1.bf16.msra.mxu0 0
        %403 = vmatprep.subr.bf16.mxu0 0
        %404 = vmatpush1.bf16.msra.mxu0 0
        %405 = vmatprep.subr.bf16.mxu0 0
        %406 = vmatpush1.bf16.msra.mxu0 0
        %407 = vmatprep.subr.bf16.mxu0 0
        %408 = vmatpush1.bf16.msra.mxu0 0
        %409 = vmatprep.mubr.bf16.mxu0 0
        %410 = vmatmul.mubr.bf16.gmra.mrb[0].mxu0 %v321
        %v411 = vpop.f32.mrb[0].mxu0
        %v412 = vadd.f32 0.0, %v411
        %v413 = vpop.f32.mrb[0].mxu0
        %v414 = vpop.f32.mrb[0].mxu0
        %v415 = vadd.f32 0.0, %v414
        %v416 = vpop.f32.mrb[0].mxu0
        %417 = vmatprep.mubr.bf16.mxu0 0
        %418 = vmatmul.mubr.bf16.gmra.mrb[0].mxu0 %v322
        %v419 = vpop.f32.mrb[0].mxu0
        %v420 = vadd.f32 0.0, %v419
        %v421 = vpop.f32.mrb[0].mxu0
        %v422 = vpop.f32.mrb[0].mxu0
        %v423 = vadd.f32 0.0, %v422
        %v424 = vpop.f32.mrb[0].mxu0
        %425 = vmatprep.mubr.bf16.mxu0 0
        %426 = vmatmul.mubr.bf16.gmra.mrb[0].mxu0 %v323
        %v427 = vpop.f32.mrb[0].mxu0
        %v428 = vadd.f32 0.0, %v427
        %v429 = vpop.f32.mrb[0].mxu0
        %v430 = vpop.f32.mrb[0].mxu0
        %v431 = vadd.f32 0.0, %v430
        %v432 = vpop.f32.mrb[0].mxu0
        %433 = vmatprep.mubr.bf16.mxu0 0
        %434 = vmatmul.mubr.bf16.gmra.mrb[0].mxu0 %v324
        %v435 = vpop.f32.mrb[0].mxu0
        %v436 = vadd.f32 0.0, %v435
        %v437 = vpop.f32.mrb[0].mxu0
        %v438 = vpop.f32.mrb[0].mxu0
        %v439 = vadd.f32 0.0, %v438
        %v440 = vpop.f32.mrb[0].mxu0
        %441 = vdwg.mxu0
        %v442 = vadd.f32 %v273, %v412
        %v443 = vadd.f32 %v274, %v415
        %v444 = vadd.f32 %v275, %v420
        %v445 = vadd.f32 %v276, %v423
        %v446 = vadd.f32 %v277, %v428
        %v447 = vadd.f32 %v278, %v431
        %v448 = vadd.f32 %v279, %v436
        %v449 = vadd.f32 %v280, %v439
        %vm450 = vcmask 261120
        %451 = vst.msk [vmem:[#allocation2] sm:$0xff] %vm450, %v442
        %452 = vst.msk [vmem:[#allocation2 + $0x8] sm:$0xff] %vm450, %v443
        %453 = vst.msk [vmem:[#allocation2 + $0x10] sm:$0xff] %vm450, %v444
        %454 = vst.msk [vmem:[#allocation2 + $0x18] sm:$0xff] %vm450, %v445
        %455 = vst.msk [vmem:[#allocation2 + $0x20] sm:$0xff] %vm450, %v446
        %456 = vst.msk [vmem:[#allocation2 + $0x28] sm:$0xff] %vm450, %v447
        %457 = vst.msk [vmem:[#allocation2 + $0x30] sm:$0xff] %vm450, %v448
        %458 = vst.msk [vmem:[#allocation2 + $0x38] sm:$0xff] %vm450, %v449
        // Predicated region
        $region45: #{_lambda_.8} parent=31 // pred_check
          %p459 = pneg %p260
        $region46: #{_lambda_.8} parent=31 // pred_check_branch
          %461 = sbr.rel (%p459) target = $region48
        $region47: #{_lambda_.8} parent=31 // pred_region
          %v462 = vld [vmem:[#allocation2] sm:$0xff]
          %v463 = vld [vmem:[#allocation2 + $0x8] sm:$0xff]
          %v464 = vld [vmem:[#allocation2 + $0x10] sm:$0xff]
          %v465 = vld [vmem:[#allocation2 + $0x18] sm:$0xff]
          %v466 = vld [vmem:[#allocation2 + $0x20] sm:$0xff]
          %v467 = vld [vmem:[#allocation2 + $0x28] sm:$0xff]
          %v468 = vld [vmem:[#allocation2 + $0x30] sm:$0xff]
          %v469 = vld [vmem:[#allocation2 + $0x38] sm:$0xff]
          %v470 = vld [vmem:[#allocation5] sm:$0x1]
          %v472 = vlaneseq
          %v473 = vshrl.u32 %v472, 7
          %v474 = vsub.s32 0, %v473
          %v475 = vrot.slane %v470, %v474
          %v477 = vadd.f32 %v462, %v475
          %v478 = vadd.f32 %v463, %v475
          %v479 = vadd.f32 %v464, %v475
          %v480 = vadd.f32 %v465, %v475
          %v481 = vadd.f32 %v466, %v475
          %v482 = vadd.f32 %v467, %v475
          %v483 = vadd.f32 %v468, %v475
          %v484 = vadd.f32 %v469, %v475
          %v485 = vmax.f32 %v477, 0.0
          %v486 = vmax.f32 %v478, 0.0
          %v487 = vmax.f32 %v479, 0.0
          %v488 = vmax.f32 %v480, 0.0
          %v489 = vmax.f32 %v481, 0.0
          %v490 = vmax.f32 %v482, 0.0
          %v491 = vmax.f32 %v483, 0.0
          %v492 = vmax.f32 %v484, 0.0
          %v493 = vpack.c.bf16 %v486, %v485
          %v494 = vpack.c.bf16 %v488, %v487
          %v495 = vpack.c.bf16 %v490, %v489
          %v496 = vpack.c.bf16 %v492, %v491
          %v501 = vunpack.c.l.b16 %v493
          %v502 = vunpack.c.h.b16 %v493
          %v503 = vunpack.c.l.b16 %v494
          %v504 = vunpack.c.h.b16 %v494
          %v505 = vunpack.c.l.b16 %v495
          %v506 = vunpack.c.h.b16 %v495
          %v507 = vunpack.c.l.b16 %v496
          %v508 = vunpack.c.h.b16 %v496
          %v509 = vpack.c.b16 %v501, %v501
          %v510 = vpack.c.b16 %v502, %v502
          %v511 = vpack.c.b16 %v503, %v503
          %v512 = vpack.c.b16 %v504, %v504
          %v513 = vpack.c.b16 %v505, %v505
          %v514 = vpack.c.b16 %v506, %v506
          %v515 = vpack.c.b16 %v507, %v507
          %v516 = vpack.c.b16 %v508, %v508
          %vm525 = vcmask 257024
          %526 = vst.msk [vmem:[%s257] sm:$0xf] %vm525, %v509
          %527 = vst.msk [vmem:[%s257 + $0x4] sm:$0xf] %vm525, %v510
          %528 = vst.msk [vmem:[%s257 + $0x8] sm:$0xf] %vm525, %v511
          %529 = vst.msk [vmem:[%s257 + $0xc] sm:$0xf] %vm525, %v512
          %530 = vst.msk [vmem:[%s257 + $0x10] sm:$0xf] %vm525, %v513
          %531 = vst.msk [vmem:[%s257 + $0x14] sm:$0xf] %vm525, %v514
          %532 = vst.msk [vmem:[%s257 + $0x18] sm:$0xf] %vm525, %v515
          %533 = vst.msk [vmem:[%s257 + $0x1c] sm:$0xf] %vm525, %v516
        $region48: #{_lambda_.8} parent=31 // pred_fallthru
          _
        %s534 = smul.u32 8, %s21
        %p535 = scmp.lt.s32.totalorder %s534, 15
        %s536 = scalar_select %p535, %s534, 15
        %p537 = scmp.lt.s32.totalorder %s22, 0
        %s538 = scalar_select %p537, %s22, 0
        %s539 = sadd.s32 %s538, %s536
        %s540 = smul.addr %s539, 4
        %s541 = scalar_lea.vmem %s3, %s540
        // Predicated region
        $region49: #{_lambda_.8} parent=31 // pred_check
          %p542 = pneg %p137
        $region50: #{_lambda_.8} parent=31 // pred_check_branch
          %544 = sbr.rel (%p542) target = $region52
        $region51: #{_lambda_.8} parent=31 // pred_region
          %s545 = smul.u32 8, %s21
        $region52: #{_lambda_.8} parent=31 // pred_fallthru
          _
      $region32: #{_lambda_.8} parent=5 // pred_fallthru
        _
      %p546 = scmp.le.s32.totalorder 2, %s11
      // Predicated region
      $region53: #{_lambda_.8} parent=5 // pred_check
        %p547 = pneg %p546
      $region54: #{_lambda_.8} parent=5 // pred_check_branch
        %549 = sbr.rel (%p547) target = $region56
      $region55: #{_lambda_.8} parent=5 // pred_region
        %s550 = ssub.s32 %s11, 2
        // Predicated region
        $region57: #{_lambda_.8} parent=55 // pred_check
          %p551 = pneg %p143
        $region58: #{_lambda_.8} parent=55 // pred_check_branch
          %553 = sbr.rel (%p551) target = $region60
        $region59: #{_lambda_.8} parent=55 // pred_region
          %s554 = smul.u32 8, %s24
          %p555 = scmp.lt.s32.totalorder %s554, 15
          %s556 = scalar_select %p555, %s554, 15
          %p557 = scmp.lt.s32.totalorder %s25, 0
          %s558 = scalar_select %p557, %s25, 0
          %s559 = sadd.s32 %s558, %s556
          %s560 = smul.addr %s559, 4
          %s561 = scalar_lea.vmem %s3, %s560
        $region60: #{_lambda_.8} parent=55 // pred_fallthru
          _
      $region56: #{_lambda_.8} parent=5 // pred_fallthru
        _
    $region6: #{_lambda_.8} parent=1 // loop_footer
      %s15 = sadd.s32 1, %s11
    $region7: #{_lambda_.8} parent=1 // loop_footer_branch
      %10 = sbr.rel target = $region3
    $region8: #{_lambda_.8} parent=1 // loop_exit
      _
    %562 = vsyncpa [#allocation4], 1
    %s563 = scalar_lea.sflag [#allocation4], 1
    %564 = vsyncpa %s563, 1
    %565 = vsyncpa [#allocation6], 1

// kernel: _lambda_.9
$region0: #{_lambda_.9}
  #allocation0 [shape = 'u32[]', space=smem, size = 0x4, offset = 0x4, fixed_abs, tag = 'smem constant byte address 0x4 - core index']
  #allocation1 [shape = 'u32[144,128]{1,0:T(1,128)}', space=vmem, size = 0x12000, scoped, tag = 'internal scratch']
  #allocation2 [shape = 'f32[16,64]{1,0:T(8,128)}', space=vmem, size = 0x2000, scoped, tag = 'scratch operand']
  %s0 = inlined_call_operand.vmem [shape: bf16[32,384], index: 0, kind: input, shape index: {}]
  %s1 = inlined_call_operand.hbm [shape: bf16[384,64], index: 1, kind: input, shape index: {}]
  %s2 = inlined_call_operand.hbm [shape: f32[1,64], index: 2, kind: input, shape index: {}]
  %s3 = inlined_call_operand.vmem [shape: bf16[32,64], index: 3, kind: output, shape index: {}]
  %s4 = sld [smem:[#allocation0]]
  $region61: #{_lambda_.9} parent=0
    _
  %s6 = ssub.s32 1, %s4
  %s7 = scalar_select 0, %s6, %s4
  $region1: #{_lambda_.9} parent=0
    #allocation3 [shape = 'u8[98304]{0}', space=vmem, size = 0x18000, scoped, tag = 'input window, operand 1, single buffered']
    #allocation4 [shape = 's32[2]{0}', space=sflag, size = 0x8, scoped, tag = 'scoped memory for _lambda_.9']
    #allocation5 [shape = 'u8[512]{0}', space=vmem, size = 0x400, scoped, tag = 'input window, operand 2, single buffered']
    #allocation6 [shape = 's32[1]{0}', space=sflag, size = 0x4, scoped, tag = 'scoped memory for _lambda_.9']
    %8 = vsyncpa [#allocation4], 0
    %9 = vsyncpa [#allocation6], 0
    loop: start=0, step=1, limit=4
    $region2: #{_lambda_.9} parent=1 // loop_pre_header
      _
    $region3: #{_lambda_.9} parent=1 // loop_header
      %s11 = sphi 0, %s15
      %p12 = scmp.ge.s32.totalorder %s11, 4
      %s18 = sphi 0, %s37
      %s19 = sphi 0, %s33
      %s20 = sphi 0, %s29
      %s21 = sphi 0, %s18
      %s22 = sphi 0, %s19
      %s23 = sphi 0, %s20
      %s24 = sphi 0, %s21
      %s25 = sphi 0, %s22
      %s26 = sphi 0, %s23
      %s42 = sphi 0, %s44
      %s45 = sphi 0, %s42
      %s46 = sphi 0, %s45
      %s62 = sphi 0, %s46
      %s70 = sphi 0, %s72
      %s73 = sphi 0, %s70
      %s74 = sphi 0, %s73
      %s90 = sphi 0, %s74
      %s96 = sphi 0, %s98
      %s99 = sphi 0, %s96
      %s100 = sphi 0, %s99
      %s116 = sphi 0, %s100
      %s124 = sphi 0, %s126
      %s127 = sphi 0, %s124
      %s128 = sphi 0, %s127
      %s144 = sphi 0, %s128
    $region4: #{_lambda_.9} parent=1 // loop_header_branch
      %14 = sbr.rel (%p12) target = $region8
    $region5: #{_lambda_.9} parent=1 // loop_body
      %s16 = ssub.s32 %s11, 1
      %s17 = ssub.s32 %s11, 2
      %s27 = sadd.s32 1, %s20
      %p28 = scmp.ge.s32.totalorder %s27, 1
      %s29 = scalar_select %p28, 0, %s27
      %s30 = sadd.s32 1, %s19
      %s31 = scalar_select %p28, %s30, %s19
      %p32 = scmp.ge.s32.totalorder %s31, 1
      %s33 = scalar_select %p32, 0, %s31
      %s34 = sadd.s32 1, %s18
      %s35 = scalar_select %p32, %s34, %s18
      %p36 = scmp.ge.s32.totalorder %s35, 2
      %s37 = scalar_select %p36, 0, %s35
      %s38 = ssub.s32 %s18, %s37
      %s39 = ssub.s32 %s20, %s29
      %s40 = sor.u32 %s38, %s39
      %p41 = scmp.eq.s32.totalorder %s40, 0
      %s43 = sadd.s32 %s42, 1
      %s44 = scalar_select %p41, %s42, %s43
      %p47 = pneg %p41
      %p48 = scmp.eq.s32.totalorder %s11, 1
      %p49 = por %p47, %p48
      %p50 = scmp.ne.s32.totalorder %s42, %s45
      %p51 = scmp.eq.s32.totalorder %s11, 0
      %p52 = por %p50, %p51
      %p53 = scmp.ne.s32.totalorder %s42, %s45
      %p54 = scmp.eq.s32.totalorder %s16, 1
      %p55 = por %p53, %p54
      %p56 = scmp.ne.s32.totalorder %s45, %s46
      %p57 = scmp.eq.s32.totalorder %s16, 0
      %p58 = por %p56, %p57
      %p59 = scmp.ne.s32.totalorder %s45, %s46
      %p60 = scmp.eq.s32.totalorder %s17, 1
      %p61 = por %p59, %p60
      %p63 = scmp.ne.s32.totalorder %s46, %s62
      %p64 = scmp.eq.s32.totalorder %s17, 0
      %p65 = por %p63, %p64
      %s66 = ssub.s32 %s20, %s29
      %s67 = ssub.s32 %s19, %s33
      %s68 = sor.u32 %s66, %s67
      %p69 = scmp.eq.s32.totalorder %s68, 0
      %s71 = sadd.s32 %s70, 1
      %s72 = scalar_select %p69, %s70, %s71
      %p75 = pneg %p69
      %p76 = scmp.eq.s32.totalorder %s11, 1
      %p77 = por %p75, %p76
      %p78 = scmp.ne.s32.totalorder %s70, %s73
      %p79 = scmp.eq.s32.totalorder %s11, 0
      %p80 = por %p78, %p79
      %p81 = scmp.ne.s32.totalorder %s70, %s73
      %p82 = scmp.eq.s32.totalorder %s16, 1
      %p83 = por %p81, %p82
      %p84 = scmp.ne.s32.totalorder %s73, %s74
      %p85 = scmp.eq.s32.totalorder %s16, 0
      %p86 = por %p84, %p85
      %p87 = scmp.ne.s32.totalorder %s73, %s74
      %p88 = scmp.eq.s32.totalorder %s17, 1
      %p89 = por %p87, %p88
      %p91 = scmp.ne.s32.totalorder %s74, %s90
      %p92 = scmp.eq.s32.totalorder %s17, 0
      %p93 = por %p91, %p92
      %s94 = ssub.s32 %s19, %s33
      %p95 = scmp.eq.s32.totalorder %s94, 0
      %s97 = sadd.s32 %s96, 1
      %s98 = scalar_select %p95, %s96, %s97
      %p101 = pneg %p95
      %p102 = scmp.eq.s32.totalorder %s11, 1
      %p103 = por %p101, %p102
      %p104 = scmp.ne.s32.totalorder %s96, %s99
      %p105 = scmp.eq.s32.totalorder %s11, 0
      %p106 = por %p104, %p105
      %p107 = scmp.ne.s32.totalorder %s96, %s99
      %p108 = scmp.eq.s32.totalorder %s16, 1
      %p109 = por %p107, %p108
      %p110 = scmp.ne.s32.totalorder %s99, %s100
      %p111 = scmp.eq.s32.totalorder %s16, 0
      %p112 = por %p110, %p111
      %p113 = scmp.ne.s32.totalorder %s99, %s100
      %p114 = scmp.eq.s32.totalorder %s17, 1
      %p115 = por %p113, %p114
      %p117 = scmp.ne.s32.totalorder %s100, %s116
      %p118 = scmp.eq.s32.totalorder %s17, 0
      %p119 = por %p117, %p118
      %s120 = ssub.s32 %s18, %s37
      %s121 = ssub.s32 %s19, %s33
      %s122 = sor.u32 %s120, %s121
      %p123 = scmp.eq.s32.totalorder %s122, 0
      %s125 = sadd.s32 %s124, 1
      %s126 = scalar_select %p123, %s124, %s125
      %p129 = pneg %p123
      %p130 = scmp.eq.s32.totalorder %s11, 1
      %p131 = por %p129, %p130
      %p132 = scmp.ne.s32.totalorder %s124, %s127
      %p133 = scmp.eq.s32.totalorder %s11, 0
      %p134 = por %p132, %p133
      %p135 = scmp.ne.s32.totalorder %s124, %s127
      %p136 = scmp.eq.s32.totalorder %s16, 1
      %p137 = por %p135, %p136
      %p138 = scmp.ne.s32.totalorder %s127, %s128
      %p139 = scmp.eq.s32.totalorder %s16, 0
      %p140 = por %p138, %p139
      %p141 = scmp.ne.s32.totalorder %s127, %s128
      %p142 = scmp.eq.s32.totalorder %s17, 1
      %p143 = por %p141, %p142
      %p145 = scmp.ne.s32.totalorder %s128, %s144
      %p146 = scmp.eq.s32.totalorder %s17, 0
      %p147 = por %p145, %p146
      %p148 = scmp.le.s32.totalorder 1, %s11
      %p149 = scmp.lt.s32.totalorder %s11, 3
      %p150 = pnand %p148, %p149
      %p151 = pneg %p150
      // Predicated region
      $region9: #{_lambda_.9} parent=5 // pred_check
        _
      $region10: #{_lambda_.9} parent=5 // pred_check_branch
        %153 = sbr.rel (%p150) target = $region12
      $region11: #{_lambda_.9} parent=5 // pred_region
        %s154 = ssub.s32 %s11, 1
        // Predicated region
        $region13: #{_lambda_.9} parent=11 // pred_check
          %p155 = pneg %p86
        $region14: #{_lambda_.9} parent=11 // pred_check_branch
          %157 = sbr.rel (%p155) target = $region16
        $region15: #{_lambda_.9} parent=11 // pred_region
          %s158 = smul.u32 48, %s23
          %s160 = ssub.s32 3072, 3072
          %161 = vsyncadd [#allocation4], %s160
          %s162 = sadd.s32 %s22, %s158
          %s163 = smul.addr %s162, 64
          %s164 = scalar_lea.hbm %s1, %s163
          %s165 = sshll.u32 [#allocation3], 4
          %s166 = int_to_ptr.vmem [resolvable:$true] %s165
          %171 = dma.hbm_to_vmem [thread:$0]  %s164, 3072, %s166, [#allocation4], 64, 64, 4
        $region16: #{_lambda_.9} parent=11 // pred_fallthru
          _
        // Predicated region
        $region17: #{_lambda_.9} parent=11 // pred_check
          %p172 = pneg %p112
        $region18: #{_lambda_.9} parent=11 // pred_check_branch
          %174 = sbr.rel (%p172) target = $region20
        $region19: #{_lambda_.9} parent=11 // pred_region
          %s176 = ssub.s32 16, 16
          %177 = vsyncadd [#allocation6], %s176
          %s178 = smul.addr %s22, 16
          %s179 = scalar_lea.hbm %s2, %s178
          %s181 = sshll.u32 [#allocation5], 4
          %s182 = int_to_ptr.vmem [resolvable:$true] %s181
          %184 = dma.hbm_to_vmem [thread:$0]  %s179, 16, %s182, [#allocation6]
        $region20: #{_lambda_.9} parent=11 // pred_fallthru
          _
      $region12: #{_lambda_.9} parent=5 // pred_fallthru
        _
      %p185 = scmp.lt.s32.totalorder %s11, 2
      // Predicated region
      $region21: #{_lambda_.9} parent=5 // pred_check
        %p186 = pneg %p185
      $region22: #{_lambda_.9} parent=5 // pred_check_branch
        %188 = sbr.rel (%p186) target = $region24
      $region23: #{_lambda_.9} parent=5 // pred_region
        // Predicated region
        $region25: #{_lambda_.9} parent=23 // pred_check
          %p189 = pneg %p52
        $region26: #{_lambda_.9} parent=23 // pred_check_branch
          %191 = sbr.rel (%p189) target = $region28
        $region27: #{_lambda_.9} parent=23 // pred_region
          %s192 = smul.u32 2, %s18
          %s193 = smul.u32 3, %s20
          %p194 = scmp.lt.s32.totalorder %s192, 3
          %s195 = scalar_select %p194, %s192, 3
          %p196 = scmp.lt.s32.totalorder %s193, 2
          %s197 = scalar_select %p196, %s193, 2
          %s198 = smul.addr %s195, 3
          %s199 = sadd.s32 %s197, %s198
          %s200 = smul.addr %s199, 4
          %s201 = scalar_lea.vmem %s0, %s200
          %s202 = smul.u32 2, %s18
          %s203 = smul.u32 3, %s20
        $region28: #{_lambda_.9} parent=23 // pred_fallthru
          _
      $region24: #{_lambda_.9} parent=5 // pred_fallthru
        _
      %p204 = scmp.le.s32.totalorder 1, %s11
      %p205 = scmp.lt.s32.totalorder %s11, 3
      %p206 = pnand %p204, %p205
      %p207 = pneg %p206
      // Predicated region
      $region29: #{_lambda_.9} parent=5 // pred_check
        _
      $region30: #{_lambda_.9} parent=5 // pred_check_branch
        %209 = sbr.rel (%p206) target = $region32
      $region31: #{_lambda_.9} parent=5 // pred_region
        %s210 = ssub.s32 %s11, 1
        // Predicated region
        $region33: #{_lambda_.9} parent=31 // pred_check
          %p211 = pneg %p86
        $region34: #{_lambda_.9} parent=31 // pred_check_branch
          %213 = sbr.rel (%p211) target = $region36
        $region35: #{_lambda_.9} parent=31 // pred_region
          %214 = dma.done [#allocation4], 3072
        $region36: #{_lambda_.9} parent=31 // pred_fallthru
          _
        // Predicated region
        $region37: #{_lambda_.9} parent=31 // pred_check
          %p215 = pneg %p112
        $region38: #{_lambda_.9} parent=31 // pred_check_branch
          %217 = sbr.rel (%p215) target = $region40
        $region39: #{_lambda_.9} parent=31 // pred_region
          %218 = dma.done [#allocation6], 16
        $region40: #{_lambda_.9} parent=31 // pred_fallthru
          _
        %s219 = smul.u32 2, %s21
        %s220 = smul.u32 3, %s23
        %p221 = scmp.lt.s32.totalorder %s219, 3
        %s222 = scalar_select %p221, %s219, 3
        %p223 = scmp.lt.s32.totalorder %s220, 2
        %s224 = scalar_select %p223, %s220, 2
        %s225 = smul.addr %s222, 3
        %s226 = sadd.s32 %s224, %s225
        %s227 = smul.addr %s226, 4
        %s228 = scalar_lea.vmem %s0, %s227
        %p229 = pneg %p58
        %p230 = pneg %p55
        %p231 = pneg %p86
        %p232 = pneg %p83
        %p233 = pneg %p112
        %p234 = pneg %p109
        %p235 = pneg %p140
        %p236 = pneg %p137
        %s237 = smul.u32 2, %s21
        %p238 = scmp.lt.s32.totalorder %s237, 3
        %s239 = scalar_select %p238, %s237, 3
        %p240 = scmp.lt.s32.totalorder %s22, 0
        %s241 = scalar_select %p240, %s22, 0
        %s242 = sadd.s32 %s241, %s239
        %s243 = smul.addr %s242, 4
        %s244 = scalar_lea.vmem %s3, %s243
        %s245 = smul.u32 2, %s21
        %s246 = smul.u32 3, %s23
        %p247 = scmp.lt.s32.totalorder %s245, 3
        %s248 = scalar_select %p247, %s245, 3
        %p249 = scmp.lt.s32.totalorder %s246, 2
        %s250 = scalar_select %p249, %s246, 2
        %s251 = smul.addr %s248, 3
        %s252 = sadd.s32 %s250, %s251
        %s253 = smul.addr %s252, 4
        %s254 = scalar_lea.vmem %s0, %s253
        %s255 = smul.u32 2, %s21
        %s256 = smul.u32 3, %s23
        %s257 = smul.u32 48, %s23
        %s258 = smul.u32 2, %s21
        %p259 = scmp.lt.s32.totalorder %s258, 3
        %s260 = scalar_select %p259, %s258, 3
        %p261 = scmp.lt.s32.totalorder %s22, 0
        %s262 = scalar_select %p261, %s22, 0
        %s263 = sadd.s32 %s262, %s260
        %s264 = smul.addr %s263, 4
        %s265 = scalar_lea.vmem %s3, %s264
        %s266 = smul.u32 2, %s21
        %p268 = scmp.eq.s32.totalorder %s23, 0
        // Predicated region
        $region41: #{_lambda_.9} parent=31 // pred_check
          %p269 = pneg %p268
        $region42: #{_lambda_.9} parent=31 // pred_check_branch
          %271 = sbr.rel (%p269) target = $region44
        $region43: #{_lambda_.9} parent=31 // pred_region
          %vm272 = vcmask 523264
          %273 = vst.msk [vmem:[#allocation2] sm:$0xff] %vm272, 0.0
          %274 = vst.msk [vmem:[#allocation2 + $0x8] sm:$0xff] %vm272, 0.0
        $region44: #{_lambda_.9} parent=31 // pred_fallthru
          _
        %v275 = vld [vmem:[#allocation2] sm:$0xff]
        %v276 = vld [vmem:[#allocation2 + $0x8] sm:$0xff]
        %v277 = vld [vmem:[%s254] sm:$0xff]
        %v278 = vld [vmem:[%s254 + $0x8] sm:$0xf]
        %v279 = vld [vmem:[%s254 + $0xc] sm:$0xff]
        %v280 = vld [vmem:[%s254 + $0x14] sm:$0xf]
        %v281 = vld [vmem:[#allocation3] sm:$0xf]
        %v282 = vld [vmem:[#allocation3 + $0x4] sm:$0xf]
        %v283 = vld [vmem:[#allocation3 + $0x8] sm:$0xf]
        %v284 = vld [vmem:[#allocation3 + $0xc] sm:$0xf]
        %v285 = vld [vmem:[#allocation3 + $0x10] sm:$0xf]
        %v286 = vld [vmem:[#allocation3 + $0x14] sm:$0xf]
        %v287 = vld [vmem:[#allocation3 + $0x18] sm:$0xf]
        %v288 = vld [vmem:[#allocation3 + $0x1c] sm:$0xf]
        %v289 = vld [vmem:[#allocation3 + $0x20] sm:$0xf]
        %v290 = vld [vmem:[#allocation3 + $0x24] sm:$0xf]
        %v291 = vld [vmem:[#allocation3 + $0x28] sm:$0xf]
        %v292 = vld [vmem:[#allocation3 + $0x2c] sm:$0xf]
        %v293 = vld [vmem:[#allocation3 + $0x30] sm:$0xf]
        %v294 = vld [vmem:[#allocation3 + $0x34] sm:$0xf]
        %v295 = vld [vmem:[#allocation3 + $0x38] sm:$0xf]
        %v296 = vld [vmem:[#allocation3 + $0x3c] sm:$0xf]
        %v297 = vld [vmem:[#allocation3 + $0x40] sm:$0xf]
        %v298 = vld [vmem:[#allocation3 + $0x44] sm:$0xf]
        %v299 = vld [vmem:[#allocation3 + $0x48] sm:$0xf]
        %v300 = vld [vmem:[#allocation3 + $0x4c] sm:$0xf]
        %v301 = vld [vmem:[#allocation3 + $0x50] sm:$0xf]
        %v302 = vld [vmem:[#allocation3 + $0x54] sm:$0xf]
        %v303 = vld [vmem:[#allocation3 + $0x58] sm:$0xf]
        %v304 = vld [vmem:[#allocation3 + $0x5c] sm:$0xf]
        %v305 = vld [vmem:[#allocation3 + $0x60] sm:$0xf]
        %v306 = vld [vmem:[#allocation3 + $0x64] sm:$0xf]
        %v307 = vld [vmem:[#allocation3 + $0x68] sm:$0xf]
        %v308 = vld [vmem:[#allocation3 + $0x6c] sm:$0xf]
        %v309 = vld [vmem:[#allocation3 + $0x70] sm:$0xf]
        %v310 = vld [vmem:[#allocation3 + $0x74] sm:$0xf]
        %v311 = vld [vmem:[#allocation3 + $0x78] sm:$0xf]
        %v312 = vld [vmem:[#allocation3 + $0x7c] sm:$0xf]
        %v313 = vld [vmem:[#allocation3 + $0x80] sm:$0xf]
        %v314 = vld [vmem:[#allocation3 + $0x84] sm:$0xf]
        %v315 = vld [vmem:[#allocation3 + $0x88] sm:$0xf]
        %v316 = vld [vmem:[#allocation3 + $0x8c] sm:$0xf]
        %v317 = vld [vmem:[#allocation3 + $0x90] sm:$0xf]
        %v318 = vld [vmem:[#allocation3 + $0x94] sm:$0xf]
        %v319 = vld [vmem:[#allocation3 + $0x98] sm:$0xf]
        %v320 = vld [vmem:[#allocation3 + $0x9c] sm:$0xf]
        %v321 = vld [vmem:[#allocation3 + $0xa0] sm:$0xf]
        %v322 = vld [vmem:[#allocation3 + $0xa4] sm:$0xf]
        %v323 = vld [vmem:[#allocation3 + $0xa8] sm:$0xf]
        %v324 = vld [vmem:[#allocation3 + $0xac] sm:$0xf]
        %v325 = vld [vmem:[#allocation3 + $0xb0] sm:$0xf]
        %v326 = vld [vmem:[#allocation3 + $0xb4] sm:$0xf]
        %v327 = vld [vmem:[#allocation3 + $0xb8] sm:$0xf]
        %v328 = vld [vmem:[#allocation3 + $0xbc] sm:$0xf]
        %v333 = vunpack.c.l.b16 %v277
        %v334 = vunpack.c.h.b16 %v277
        %v335 = vunpack.c.l.b16 %v278
        %v336 = vunpack.c.l.b16 %v279
        %v337 = vunpack.c.h.b16 %v279
        %v338 = vunpack.c.l.b16 %v280
        %v339 = vpack.c.b16 %v336, %v333
        %v340 = vpack.c.b16 %v337, %v334
        %v341 = vpack.c.b16 %v338, %v335
        %v393 = vunpack.c.l.b16 %v281
        %v394 = vunpack.c.l.b16 %v282
        %v395 = vunpack.c.l.b16 %v283
        %v396 = vunpack.c.l.b16 %v284
        %v397 = vunpack.c.l.b16 %v285
        %v398 = vunpack.c.l.b16 %v286
        %v399 = vunpack.c.l.b16 %v287
        %v400 = vunpack.c.l.b16 %v288
        %v401 = vunpack.c.l.b16 %v289
        %v402 = vunpack.c.l.b16 %v290
        %v403 = vunpack.c.l.b16 %v291
        %v404 = vunpack.c.l.b16 %v292
        %v405 = vunpack.c.l.b16 %v293
        %v406 = vunpack.c.l.b16 %v294
        %v407 = vunpack.c.l.b16 %v295
        %v408 = vunpack.c.l.b16 %v296
        %v409 = vunpack.c.l.b16 %v297
        %v410 = vunpack.c.l.b16 %v298
        %v411 = vunpack.c.l.b16 %v299
        %v412 = vunpack.c.l.b16 %v300
        %v413 = vunpack.c.l.b16 %v301
        %v414 = vunpack.c.l.b16 %v302
        %v415 = vunpack.c.l.b16 %v303
        %v416 = vunpack.c.l.b16 %v304
        %v417 = vunpack.c.l.b16 %v305
        %v418 = vunpack.c.l.b16 %v306
        %v419 = vunpack.c.l.b16 %v307
        %v420 = vunpack.c.l.b16 %v308
        %v421 = vunpack.c.l.b16 %v309
        %v422 = vunpack.c.l.b16 %v310
        %v423 = vunpack.c.l.b16 %v311
        %v424 = vunpack.c.l.b16 %v312
        %v425 = vunpack.c.l.b16 %v313
        %v426 = vunpack.c.l.b16 %v314
        %v427 = vunpack.c.l.b16 %v315
        %v428 = vunpack.c.l.b16 %v316
        %v429 = vunpack.c.l.b16 %v317
        %v430 = vunpack.c.l.b16 %v318
        %v431 = vunpack.c.l.b16 %v319
        %v432 = vunpack.c.l.b16 %v320
        %v433 = vunpack.c.l.b16 %v321
        %v434 = vunpack.c.l.b16 %v322
        %v435 = vunpack.c.l.b16 %v323
        %v436 = vunpack.c.l.b16 %v324
        %v437 = vunpack.c.l.b16 %v325
        %v438 = vunpack.c.l.b16 %v326
        %v439 = vunpack.c.l.b16 %v327
        %v440 = vunpack.c.l.b16 %v328
        %v441 = vpack.c.b16 %v394, %v393
        %v442 = vpack.c.b16 %v396, %v395
        %v443 = vpack.c.b16 %v398, %v397
        %v444 = vpack.c.b16 %v400, %v399
        %v445 = vpack.c.b16 %v402, %v401
        %v446 = vpack.c.b16 %v404, %v403
        %v447 = vpack.c.b16 %v406, %v405
        %v448 = vpack.c.b16 %v408, %v407
        %v449 = vpack.c.b16 %v410, %v409
        %v450 = vpack.c.b16 %v412, %v411
        %v451 = vpack.c.b16 %v414, %v413
        %v452 = vpack.c.b16 %v416, %v415
        %v453 = vpack.c.b16 %v418, %v417
        %v454 = vpack.c.b16 %v420, %v419
        %v455 = vpack.c.b16 %v422, %v421
        %v456 = vpack.c.b16 %v424, %v423
        %v457 = vpack.c.b16 %v426, %v425
        %v458 = vpack.c.b16 %v428, %v427
        %v459 = vpack.c.b16 %v430, %v429
        %v460 = vpack.c.b16 %v432, %v431
        %v461 = vpack.c.b16 %v434, %v433
        %v462 = vpack.c.b16 %v436, %v435
        %v463 = vpack.c.b16 %v438, %v437
        %v464 = vpack.c.b16 %v440, %v439
        %489 = vmatprep.subr.bf16.mxu0 0
        %490 = vmatpush1.bf16.msra.mxu0 %v441
        %491 = vmatprep.subr.bf16.mxu0 0
        %492 = vmatpush1.bf16.msra.mxu0 %v442
        %493 = vmatprep.subr.bf16.mxu0 0
        %494 = vmatpush1.bf16.msra.mxu0 %v443
        %495 = vmatprep.subr.bf16.mxu0 0
        %496 = vmatpush1.bf16.msra.mxu0 %v444
        %497 = vmatprep.subr.bf16.mxu0 0
        %498 = vmatpush1.bf16.msra.mxu0 %v445
        %499 = vmatprep.subr.bf16.mxu0 0
        %500 = vmatpush1.bf16.msra.mxu0 %v446
        %501 = vmatprep.subr.bf16.mxu0 0
        %502 = vmatpush1.bf16.msra.mxu0 %v447
        %503 = vmatprep.subr.bf16.mxu0 0
        %504 = vmatpush1.bf16.msra.mxu0 %v448
        %505 = vmatprep.subr.bf16.mxu0 0
        %506 = vmatpush1.bf16.msra.mxu0 %v449
        %507 = vmatprep.subr.bf16.mxu0 0
        %508 = vmatpush1.bf16.msra.mxu0 %v450
        %509 = vmatprep.subr.bf16.mxu0 0
        %510 = vmatpush1.bf16.msra.mxu0 %v451
        %511 = vmatprep.subr.bf16.mxu0 0
        %512 = vmatpush1.bf16.msra.mxu0 %v452
        %513 = vmatprep.subr.bf16.mxu0 0
        %514 = vmatpush1.bf16.msra.mxu0 %v453
        %515 = vmatprep.subr.bf16.mxu0 0
        %516 = vmatpush1.bf16.msra.mxu0 %v454
        %517 = vmatprep.subr.bf16.mxu0 0
        %518 = vmatpush1.bf16.msra.mxu0 %v455
        %519 = vmatprep.subr.bf16.mxu0 0
        %520 = vmatpush1.bf16.msra.mxu0 %v456
        %521 = vmatprep.mubr.bf16.mxu0 %v340
        %522 = vmatmul.mubr.bf16.gmra.mrb[0].mxu0 %v339
        %v523 = vpop.f32.mrb[0].mxu0
        %v524 = vadd.f32 0.0, %v523
        %v525 = vpop.f32.mrb[0].mxu0
        %v526 = vpop.f32.mrb[0].mxu0
        %v527 = vadd.f32 0.0, %v526
        %v528 = vpop.f32.mrb[0].mxu0
        %529 = vdwg.mxu0
        %530 = vmatprep.subr.bf16.mxu0 0
        %531 = vmatpush1.bf16.msra.mxu0 %v457
        %532 = vmatprep.subr.bf16.mxu0 0
        %533 = vmatpush1.bf16.msra.mxu0 %v458
        %534 = vmatprep.subr.bf16.mxu0 0
        %535 = vmatpush1.bf16.msra.mxu0 %v459
        %536 = vmatprep.subr.bf16.mxu0 0
        %537 = vmatpush1.bf16.msra.mxu0 %v460
        %538 = vmatprep.subr.bf16.mxu0 0
        %539 = vmatpush1.bf16.msra.mxu0 %v461
        %540 = vmatprep.subr.bf16.mxu0 0
        %541 = vmatpush1.bf16.msra.mxu0 %v462
        %542 = vmatprep.subr.bf16.mxu0 0
        %543 = vmatpush1.bf16.msra.mxu0 %v463
        %544 = vmatprep.subr.bf16.mxu0 0
        %545 = vmatpush1.bf16.msra.mxu0 %v464
        %546 = vmatprep.subr.bf16.mxu0 0
        %547 = vmatpush1.bf16.msra.mxu0 0
        %548 = vmatprep.subr.bf16.mxu0 0
        %549 = vmatpush1.bf16.msra.mxu0 0
        %550 = vmatprep.subr.bf16.mxu0 0
        %551 = vmatpush1.bf16.msra.mxu0 0
        %552 = vmatprep.subr.bf16.mxu0 0
        %553 = vmatpush1.bf16.msra.mxu0 0
        %554 = vmatprep.subr.bf16.mxu0 0
        %555 = vmatpush1.bf16.msra.mxu0 0
        %556 = vmatprep.subr.bf16.mxu0 0
        %557 = vmatpush1.bf16.msra.mxu0 0
        %558 = vmatprep.subr.bf16.mxu0 0
        %559 = vmatpush1.bf16.msra.mxu0 0
        %560 = vmatprep.subr.bf16.mxu0 0
        %561 = vmatpush1.bf16.msra.mxu0 0
        %562 = vmatprep.mubr.bf16.mxu0 0
        %563 = vmatmul.mubr.bf16.gmra.mrb[0].mxu0 %v341
        %v564 = vpop.f32.mrb[0].mxu0
        %v565 = vadd.f32 %v524, %v564
        %v566 = vpop.f32.mrb[0].mxu0
        %v567 = vpop.f32.mrb[0].mxu0
        %v568 = vadd.f32 %v527, %v567
        %v569 = vpop.f32.mrb[0].mxu0
        %570 = vdwg.mxu0
        %v571 = vadd.f32 %v275, %v565
        %v572 = vadd.f32 %v276, %v568
        %vm573 = vcmask 523264
        %574 = vst.msk [vmem:[#allocation2] sm:$0xff] %vm573, %v571
        %575 = vst.msk [vmem:[#allocation2 + $0x8] sm:$0xff] %vm573, %v572
        // Predicated region
        $region45: #{_lambda_.9} parent=31 // pred_check
          %p576 = pneg %p268
        $region46: #{_lambda_.9} parent=31 // pred_check_branch
          %578 = sbr.rel (%p576) target = $region48
        $region47: #{_lambda_.9} parent=31 // pred_region
          %v579 = vld [vmem:[#allocation2] sm:$0xff]
          %v580 = vld [vmem:[#allocation2 + $0x8] sm:$0xff]
          %v581 = vld [vmem:[#allocation5] sm:$0x1]
          %v583 = vlaneseq
          %v584 = vshrl.u32 %v583, 7
          %v585 = vsub.s32 0, %v584
          %v586 = vrot.slane %v581, %v585
          %v588 = vadd.f32 %v579, %v586
          %v589 = vadd.f32 %v580, %v586
          %v590 = vmax.f32 %v588, 0.0
          %v591 = vmax.f32 %v589, 0.0
          %v592 = vpack.c.bf16 %v591, %v590
          %v594 = vunpack.c.l.b16 %v592
          %v595 = vunpack.c.h.b16 %v592
          %v596 = vpack.c.b16 %v594, %v594
          %v597 = vpack.c.b16 %v595, %v595
          %vm600 = vcmask 519168
          %601 = vst.msk [vmem:[%s265] sm:$0xf] %vm600, %v596
          %602 = vst.msk [vmem:[%s265 + $0x4] sm:$0xf] %vm600, %v597
        $region48: #{_lambda_.9} parent=31 // pred_fallthru
          _
        %s603 = smul.u32 2, %s21
        %p604 = scmp.lt.s32.totalorder %s603, 3
        %s605 = scalar_select %p604, %s603, 3
        %p606 = scmp.lt.s32.totalorder %s22, 0
        %s607 = scalar_select %p606, %s22, 0
        %s608 = sadd.s32 %s607, %s605
        %s609 = smul.addr %s608, 4
        %s610 = scalar_lea.vmem %s3, %s609
        // Predicated region
        $region49: #{_lambda_.9} parent=31 // pred_check
          %p611 = pneg %p137
        $region50: #{_lambda_.9} parent=31 // pred_check_branch
          %613 = sbr.rel (%p611) target = $region52
        $region51: #{_lambda_.9} parent=31 // pred_region
          %s614 = smul.u32 2, %s21
        $region52: #{_lambda_.9} parent=31 // pred_fallthru
          _
      $region32: #{_lambda_.9} parent=5 // pred_fallthru
        _
      %p615 = scmp.le.s32.totalorder 2, %s11
      // Predicated region
      $region53: #{_lambda_.9} parent=5 // pred_check
        %p616 = pneg %p615
      $region54: #{_lambda_.9} parent=5 // pred_check_branch
        %618 = sbr.rel (%p616) target = $region56
      $region55: #{_lambda_.9} parent=5 // pred_region
        %s619 = ssub.s32 %s11, 2
        // Predicated region
        $region57: #{_lambda_.9} parent=55 // pred_check
          %p620 = pneg %p143
        $region58: #{_lambda_.9} parent=55 // pred_check_branch
          %622 = sbr.rel (%p620) target = $region60
        $region59: #{_lambda_.9} parent=55 // pred_region
          %s623 = smul.u32 2, %s24
          %p624 = scmp.lt.s32.totalorder %s623, 3
          %s625 = scalar_select %p624, %s623, 3
          %p626 = scmp.lt.s32.totalorder %s25, 0
          %s627 = scalar_select %p626, %s25, 0
          %s628 = sadd.s32 %s627, %s625
          %s629 = smul.addr %s628, 4
          %s630 = scalar_lea.vmem %s3, %s629
        $region60: #{_lambda_.9} parent=55 // pred_fallthru
          _
      $region56: #{_lambda_.9} parent=5 // pred_fallthru
        _
    $region6: #{_lambda_.9} parent=1 // loop_footer
      %s15 = sadd.s32 1, %s11
    $region7: #{_lambda_.9} parent=1 // loop_footer_branch
      %10 = sbr.rel target = $region3
    $region8: #{_lambda_.9} parent=1 // loop_exit
      _
    %631 = vsyncpa [#allocation4], 1
    %s632 = scalar_lea.sflag [#allocation4], 1
    %633 = vsyncpa %s632, 1
    %634 = vsyncpa [#allocation6], 1

// kernel: _lambda_.10
$region0: #{_lambda_.10}
  #allocation0 [shape = 'u32[]', space=smem, size = 0x4, offset = 0x4, fixed_abs, tag = 'smem constant byte address 0x4 - core index']
  #allocation1 [shape = 'u32[144,128]{1,0:T(1,128)}', space=vmem, size = 0x12000, scoped, tag = 'internal scratch']
  #allocation2 [shape = 'f32[16,128]{1,0:T(8,128)}', space=vmem, size = 0x2000, scoped, tag = 'scratch operand']
  %s0 = inlined_call_operand.vmem [shape: bf16[16,640], index: 0, kind: input, shape index: {}]
  %s1 = inlined_call_operand.vmem [shape: bf16[640,128], index: 1, kind: input, shape index: {}]
  %s2 = inlined_call_operand.hbm [shape: f32[1,128], index: 2, kind: input, shape index: {}]
  %s3 = inlined_call_operand.vmem [shape: bf16[16,128], index: 3, kind: output, shape index: {}]
  %s4 = sld [smem:[#allocation0]]
  $region34: #{_lambda_.10} parent=0
    _
  %s6 = ssub.s32 1, %s4
  %s7 = scalar_select 0, %s6, %s4
  $region1: #{_lambda_.10} parent=0
    #allocation3 [shape = 'u8[512]{0}', space=vmem, size = 0x400, scoped, tag = 'input window, operand 2, single buffered']
    #allocation4 [shape = 's32[1]{0}', space=sflag, size = 0x4, scoped, tag = 'scoped memory for _lambda_.10']
    %8 = vsyncpa [#allocation4], 0
    // Predicated region
    $region2: #{_lambda_.10} parent=1 // pred_check
      _
    $region3: #{_lambda_.10} parent=1 // pred_check_branch
      %10 = sbr.rel (0) target = $region5
    $region4: #{_lambda_.10} parent=1 // pred_region
      _
    $region5: #{_lambda_.10} parent=1 // pred_fallthru
      _
    // Predicated region
    $region6: #{_lambda_.10} parent=1 // pred_check
      _
    $region7: #{_lambda_.10} parent=1 // pred_check_branch
      %12 = sbr.rel (0) target = $region9
    $region8: #{_lambda_.10} parent=1 // pred_region
      _
    $region9: #{_lambda_.10} parent=1 // pred_fallthru
      _
    // Predicated region
    $region10: #{_lambda_.10} parent=1 // pred_check
      _
    $region11: #{_lambda_.10} parent=1 // pred_check_branch
      %14 = sbr.rel (0) target = $region13
    $region12: #{_lambda_.10} parent=1 // pred_region
      %s16 = ssub.s32 16, 16
      %17 = vsyncadd [#allocation4], %s16
      %s19 = sshll.u32 [#allocation3], 4
      %s20 = int_to_ptr.vmem [resolvable:$true] %s19
      %22 = dma.hbm_to_vmem [thread:$0]  %s2, 16, %s20, [#allocation4]
    $region13: #{_lambda_.10} parent=1 // pred_fallthru
      _
    // Predicated region
    $region14: #{_lambda_.10} parent=1 // pred_check
      _
    $region15: #{_lambda_.10} parent=1 // pred_check_branch
      %24 = sbr.rel (0) target = $region17
    $region16: #{_lambda_.10} parent=1 // pred_region
      %25 = dma.done [#allocation4], 16
    $region17: #{_lambda_.10} parent=1 // pred_fallthru
      _
    %p27 = scmp.eq.s32.totalorder 0, 0
    // Predicated region
    $region18: #{_lambda_.10} parent=1 // pred_check
      %p28 = pneg %p27
    $region19: #{_lambda_.10} parent=1 // pred_check_branch
      %30 = sbr.rel (%p28) target = $region21
    $region20: #{_lambda_.10} parent=1 // pred_region
      %31 = vst [vmem:[#allocation2] sm:$0xff] 0.0
      %32 = vst [vmem:[#allocation2 + $0x8] sm:$0xff] 0.0
    $region21: #{_lambda_.10} parent=1 // pred_fallthru
      _
    %v33 = vld [vmem:[#allocation2] sm:$0xff]
    %v34 = vld [vmem:[#allocation2 + $0x8] sm:$0xff]
    %v35 = vld [vmem:[%s0] sm:$0xff]
    %v36 = vld [vmem:[%s0 + $0x8] sm:$0xff]
    %v37 = vld [vmem:[%s0 + $0x10] sm:$0xf]
    %v38 = vld [vmem:[%s0 + $0x14] sm:$0xff]
    %v39 = vld [vmem:[%s0 + $0x1c] sm:$0xff]
    %v40 = vld [vmem:[%s0 + $0x24] sm:$0xf]
    %v41 = vld [vmem:[%s1] sm:$0xf]
    %v42 = vld [vmem:[%s1 + $0x4] sm:$0xf]
    %v43 = vld [vmem:[%s1 + $0x8] sm:$0xf]
    %v44 = vld [vmem:[%s1 + $0xc] sm:$0xf]
    %v45 = vld [vmem:[%s1 + $0x10] sm:$0xf]
    %v46 = vld [vmem:[%s1 + $0x14] sm:$0xf]
    %v47 = vld [vmem:[%s1 + $0x18] sm:$0xf]
    %v48 = vld [vmem:[%s1 + $0x1c] sm:$0xf]
    %v49 = vld [vmem:[%s1 + $0x20] sm:$0xf]
    %v50 = vld [vmem:[%s1 + $0x24] sm:$0xf]
    %v51 = vld [vmem:[%s1 + $0x28] sm:$0xf]
    %v52 = vld [vmem:[%s1 + $0x2c] sm:$0xf]
    %v53 = vld [vmem:[%s1 + $0x30] sm:$0xf]
    %v54 = vld [vmem:[%s1 + $0x34] sm:$0xf]
    %v55 = vld [vmem:[%s1 + $0x38] sm:$0xf]
    %v56 = vld [vmem:[%s1 + $0x3c] sm:$0xf]
    %v57 = vld [vmem:[%s1 + $0x40] sm:$0xf]
    %v58 = vld [vmem:[%s1 + $0x44] sm:$0xf]
    %v59 = vld [vmem:[%s1 + $0x48] sm:$0xf]
    %v60 = vld [vmem:[%s1 + $0x4c] sm:$0xf]
    %v61 = vld [vmem:[%s1 + $0x50] sm:$0xf]
    %v62 = vld [vmem:[%s1 + $0x54] sm:$0xf]
    %v63 = vld [vmem:[%s1 + $0x58] sm:$0xf]
    %v64 = vld [vmem:[%s1 + $0x5c] sm:$0xf]
    %v65 = vld [vmem:[%s1 + $0x60] sm:$0xf]
    %v66 = vld [vmem:[%s1 + $0x64] sm:$0xf]
    %v67 = vld [vmem:[%s1 + $0x68] sm:$0xf]
    %v68 = vld [vmem:[%s1 + $0x6c] sm:$0xf]
    %v69 = vld [vmem:[%s1 + $0x70] sm:$0xf]
    %v70 = vld [vmem:[%s1 + $0x74] sm:$0xf]
    %v71 = vld [vmem:[%s1 + $0x78] sm:$0xf]
    %v72 = vld [vmem:[%s1 + $0x7c] sm:$0xf]
    %v73 = vld [vmem:[%s1 + $0x80] sm:$0xf]
    %v74 = vld [vmem:[%s1 + $0x84] sm:$0xf]
    %v75 = vld [vmem:[%s1 + $0x88] sm:$0xf]
    %v76 = vld [vmem:[%s1 + $0x8c] sm:$0xf]
    %v77 = vld [vmem:[%s1 + $0x90] sm:$0xf]
    %v78 = vld [vmem:[%s1 + $0x94] sm:$0xf]
    %v79 = vld [vmem:[%s1 + $0x98] sm:$0xf]
    %v80 = vld [vmem:[%s1 + $0x9c] sm:$0xf]
    %v81 = vld [vmem:[%s1 + $0xa0] sm:$0xf]
    %v82 = vld [vmem:[%s1 + $0xa4] sm:$0xf]
    %v83 = vld [vmem:[%s1 + $0xa8] sm:$0xf]
    %v84 = vld [vmem:[%s1 + $0xac] sm:$0xf]
    %v85 = vld [vmem:[%s1 + $0xb0] sm:$0xf]
    %v86 = vld [vmem:[%s1 + $0xb4] sm:$0xf]
    %v87 = vld [vmem:[%s1 + $0xb8] sm:$0xf]
    %v88 = vld [vmem:[%s1 + $0xbc] sm:$0xf]
    %v89 = vld [vmem:[%s1 + $0xc0] sm:$0xf]
    %v90 = vld [vmem:[%s1 + $0xc4] sm:$0xf]
    %v91 = vld [vmem:[%s1 + $0xc8] sm:$0xf]
    %v92 = vld [vmem:[%s1 + $0xcc] sm:$0xf]
    %v93 = vld [vmem:[%s1 + $0xd0] sm:$0xf]
    %v94 = vld [vmem:[%s1 + $0xd4] sm:$0xf]
    %v95 = vld [vmem:[%s1 + $0xd8] sm:$0xf]
    %v96 = vld [vmem:[%s1 + $0xdc] sm:$0xf]
    %v97 = vld [vmem:[%s1 + $0xe0] sm:$0xf]
    %v98 = vld [vmem:[%s1 + $0xe4] sm:$0xf]
    %v99 = vld [vmem:[%s1 + $0xe8] sm:$0xf]
    %v100 = vld [vmem:[%s1 + $0xec] sm:$0xf]
    %v101 = vld [vmem:[%s1 + $0xf0] sm:$0xf]
    %v102 = vld [vmem:[%s1 + $0xf4] sm:$0xf]
    %v103 = vld [vmem:[%s1 + $0xf8] sm:$0xf]
    %v104 = vld [vmem:[%s1 + $0xfc] sm:$0xf]
    %v105 = vld [vmem:[%s1 + $0x100] sm:$0xf]
    %v106 = vld [vmem:[%s1 + $0x104] sm:$0xf]
    %v107 = vld [vmem:[%s1 + $0x108] sm:$0xf]
    %v108 = vld [vmem:[%s1 + $0x10c] sm:$0xf]
    %v109 = vld [vmem:[%s1 + $0x110] sm:$0xf]
    %v110 = vld [vmem:[%s1 + $0x114] sm:$0xf]
    %v111 = vld [vmem:[%s1 + $0x118] sm:$0xf]
    %v112 = vld [vmem:[%s1 + $0x11c] sm:$0xf]
    %v113 = vld [vmem:[%s1 + $0x120] sm:$0xf]
    %v114 = vld [vmem:[%s1 + $0x124] sm:$0xf]
    %v115 = vld [vmem:[%s1 + $0x128] sm:$0xf]
    %v116 = vld [vmem:[%s1 + $0x12c] sm:$0xf]
    %v117 = vld [vmem:[%s1 + $0x130] sm:$0xf]
    %v118 = vld [vmem:[%s1 + $0x134] sm:$0xf]
    %v119 = vld [vmem:[%s1 + $0x138] sm:$0xf]
    %v120 = vld [vmem:[%s1 + $0x13c] sm:$0xf]
    %v127 = vunpack.c.l.b16 %v35
    %v128 = vunpack.c.h.b16 %v35
    %v129 = vunpack.c.l.b16 %v36
    %v130 = vunpack.c.h.b16 %v36
    %v131 = vunpack.c.l.b16 %v37
    %v132 = vunpack.c.l.b16 %v38
    %v133 = vunpack.c.h.b16 %v38
    %v134 = vunpack.c.l.b16 %v39
    %v135 = vunpack.c.h.b16 %v39
    %v136 = vunpack.c.l.b16 %v40
    %v137 = vpack.c.b16 %v132, %v127
    %v138 = vpack.c.b16 %v133, %v128
    %v139 = vpack.c.b16 %v134, %v129
    %v140 = vpack.c.b16 %v135, %v130
    %v141 = vpack.c.b16 %v136, %v131
    %v227 = vunpack.c.l.b16 %v41
    %v228 = vunpack.c.l.b16 %v42
    %v229 = vunpack.c.l.b16 %v43
    %v230 = vunpack.c.l.b16 %v44
    %v231 = vunpack.c.l.b16 %v45
    %v232 = vunpack.c.l.b16 %v46
    %v233 = vunpack.c.l.b16 %v47
    %v234 = vunpack.c.l.b16 %v48
    %v235 = vunpack.c.l.b16 %v49
    %v236 = vunpack.c.l.b16 %v50
    %v237 = vunpack.c.l.b16 %v51
    %v238 = vunpack.c.l.b16 %v52
    %v239 = vunpack.c.l.b16 %v53
    %v240 = vunpack.c.l.b16 %v54
    %v241 = vunpack.c.l.b16 %v55
    %v242 = vunpack.c.l.b16 %v56
    %v243 = vunpack.c.l.b16 %v57
    %v244 = vunpack.c.l.b16 %v58
    %v245 = vunpack.c.l.b16 %v59
    %v246 = vunpack.c.l.b16 %v60
    %v247 = vunpack.c.l.b16 %v61
    %v248 = vunpack.c.l.b16 %v62
    %v249 = vunpack.c.l.b16 %v63
    %v250 = vunpack.c.l.b16 %v64
    %v251 = vunpack.c.l.b16 %v65
    %v252 = vunpack.c.l.b16 %v66
    %v253 = vunpack.c.l.b16 %v67
    %v254 = vunpack.c.l.b16 %v68
    %v255 = vunpack.c.l.b16 %v69
    %v256 = vunpack.c.l.b16 %v70
    %v257 = vunpack.c.l.b16 %v71
    %v258 = vunpack.c.l.b16 %v72
    %v259 = vunpack.c.l.b16 %v73
    %v260 = vunpack.c.l.b16 %v74
    %v261 = vunpack.c.l.b16 %v75
    %v262 = vunpack.c.l.b16 %v76
    %v263 = vunpack.c.l.b16 %v77
    %v264 = vunpack.c.l.b16 %v78
    %v265 = vunpack.c.l.b16 %v79
    %v266 = vunpack.c.l.b16 %v80
    %v267 = vunpack.c.l.b16 %v81
    %v268 = vunpack.c.l.b16 %v82
    %v269 = vunpack.c.l.b16 %v83
    %v270 = vunpack.c.l.b16 %v84
    %v271 = vunpack.c.l.b16 %v85
    %v272 = vunpack.c.l.b16 %v86
    %v273 = vunpack.c.l.b16 %v87
    %v274 = vunpack.c.l.b16 %v88
    %v275 = vunpack.c.l.b16 %v89
    %v276 = vunpack.c.l.b16 %v90
    %v277 = vunpack.c.l.b16 %v91
    %v278 = vunpack.c.l.b16 %v92
    %v279 = vunpack.c.l.b16 %v93
    %v280 = vunpack.c.l.b16 %v94
    %v281 = vunpack.c.l.b16 %v95
    %v282 = vunpack.c.l.b16 %v96
    %v283 = vunpack.c.l.b16 %v97
    %v284 = vunpack.c.l.b16 %v98
    %v285 = vunpack.c.l.b16 %v99
    %v286 = vunpack.c.l.b16 %v100
    %v287 = vunpack.c.l.b16 %v101
    %v288 = vunpack.c.l.b16 %v102
    %v289 = vunpack.c.l.b16 %v103
    %v290 = vunpack.c.l.b16 %v104
    %v291 = vunpack.c.l.b16 %v105
    %v292 = vunpack.c.l.b16 %v106
    %v293 = vunpack.c.l.b16 %v107
    %v294 = vunpack.c.l.b16 %v108
    %v295 = vunpack.c.l.b16 %v109
    %v296 = vunpack.c.l.b16 %v110
    %v297 = vunpack.c.l.b16 %v111
    %v298 = vunpack.c.l.b16 %v112
    %v299 = vunpack.c.l.b16 %v113
    %v300 = vunpack.c.l.b16 %v114
    %v301 = vunpack.c.l.b16 %v115
    %v302 = vunpack.c.l.b16 %v116
    %v303 = vunpack.c.l.b16 %v117
    %v304 = vunpack.c.l.b16 %v118
    %v305 = vunpack.c.l.b16 %v119
    %v306 = vunpack.c.l.b16 %v120
    %v307 = vpack.c.b16 %v228, %v227
    %v308 = vpack.c.b16 %v230, %v229
    %v309 = vpack.c.b16 %v232, %v231
    %v310 = vpack.c.b16 %v234, %v233
    %v311 = vpack.c.b16 %v236, %v235
    %v312 = vpack.c.b16 %v238, %v237
    %v313 = vpack.c.b16 %v240, %v239
    %v314 = vpack.c.b16 %v242, %v241
    %v315 = vpack.c.b16 %v244, %v243
    %v316 = vpack.c.b16 %v246, %v245
    %v317 = vpack.c.b16 %v248, %v247
    %v318 = vpack.c.b16 %v250, %v249
    %v319 = vpack.c.b16 %v252, %v251
    %v320 = vpack.c.b16 %v254, %v253
    %v321 = vpack.c.b16 %v256, %v255
    %v322 = vpack.c.b16 %v258, %v257
    %v323 = vpack.c.b16 %v260, %v259
    %v324 = vpack.c.b16 %v262, %v261
    %v325 = vpack.c.b16 %v264, %v263
    %v326 = vpack.c.b16 %v266, %v265
    %v327 = vpack.c.b16 %v268, %v267
    %v328 = vpack.c.b16 %v270, %v269
    %v329 = vpack.c.b16 %v272, %v271
    %v330 = vpack.c.b16 %v274, %v273
    %v331 = vpack.c.b16 %v276, %v275
    %v332 = vpack.c.b16 %v278, %v277
    %v333 = vpack.c.b16 %v280, %v279
    %v334 = vpack.c.b16 %v282, %v281
    %v335 = vpack.c.b16 %v284, %v283
    %v336 = vpack.c.b16 %v286, %v285
    %v337 = vpack.c.b16 %v288, %v287
    %v338 = vpack.c.b16 %v290, %v289
    %v339 = vpack.c.b16 %v292, %v291
    %v340 = vpack.c.b16 %v294, %v293
    %v341 = vpack.c.b16 %v296, %v295
    %v342 = vpack.c.b16 %v298, %v297
    %v343 = vpack.c.b16 %v300, %v299
    %v344 = vpack.c.b16 %v302, %v301
    %v345 = vpack.c.b16 %v304, %v303
    %v346 = vpack.c.b16 %v306, %v305
    %387 = vmatprep.subr.bf16.mxu0 0
    %388 = vmatpush1.bf16.msra.mxu0 %v307
    %389 = vmatprep.subr.bf16.mxu0 0
    %390 = vmatpush1.bf16.msra.mxu0 %v308
    %391 = vmatprep.subr.bf16.mxu0 0
    %392 = vmatpush1.bf16.msra.mxu0 %v309
    %393 = vmatprep.subr.bf16.mxu0 0
    %394 = vmatpush1.bf16.msra.mxu0 %v310
    %395 = vmatprep.subr.bf16.mxu0 0
    %396 = vmatpush1.bf16.msra.mxu0 %v311
    %397 = vmatprep.subr.bf16.mxu0 0
    %398 = vmatpush1.bf16.msra.mxu0 %v312
    %399 = vmatprep.subr.bf16.mxu0 0
    %400 = vmatpush1.bf16.msra.mxu0 %v313
    %401 = vmatprep.subr.bf16.mxu0 0
    %402 = vmatpush1.bf16.msra.mxu0 %v314
    %403 = vmatprep.subr.bf16.mxu0 0
    %404 = vmatpush1.bf16.msra.mxu0 %v315
    %405 = vmatprep.subr.bf16.mxu0 0
    %406 = vmatpush1.bf16.msra.mxu0 %v316
    %407 = vmatprep.subr.bf16.mxu0 0
    %408 = vmatpush1.bf16.msra.mxu0 %v317
    %409 = vmatprep.subr.bf16.mxu0 0
    %410 = vmatpush1.bf16.msra.mxu0 %v318
    %411 = vmatprep.subr.bf16.mxu0 0
    %412 = vmatpush1.bf16.msra.mxu0 %v319
    %413 = vmatprep.subr.bf16.mxu0 0
    %414 = vmatpush1.bf16.msra.mxu0 %v320
    %415 = vmatprep.subr.bf16.mxu0 0
    %416 = vmatpush1.bf16.msra.mxu0 %v321
    %417 = vmatprep.subr.bf16.mxu0 0
    %418 = vmatpush1.bf16.msra.mxu0 %v322
    %419 = vmatprep.mubr.bf16.mxu0 %v138
    %420 = vmatmul.mubr.bf16.gmra.mrb[0].mxu0 %v137
    %v421 = vpop.f32.mrb[0].mxu0
    %v422 = vadd.f32 0.0, %v421
    %v423 = vpop.f32.mrb[0].mxu0
    %v424 = vpop.f32.mrb[0].mxu0
    %v425 = vadd.f32 0.0, %v424
    %v426 = vpop.f32.mrb[0].mxu0
    %427 = vdwg.mxu0
    %428 = vmatprep.subr.bf16.mxu0 0
    %429 = vmatpush1.bf16.msra.mxu0 %v323
    %430 = vmatprep.subr.bf16.mxu0 0
    %431 = vmatpush1.bf16.msra.mxu0 %v324
    %432 = vmatprep.subr.bf16.mxu0 0
    %433 = vmatpush1.bf16.msra.mxu0 %v325
    %434 = vmatprep.subr.bf16.mxu0 0
    %435 = vmatpush1.bf16.msra.mxu0 %v326
    %436 = vmatprep.subr.bf16.mxu0 0
    %437 = vmatpush1.bf16.msra.mxu0 %v327
    %438 = vmatprep.subr.bf16.mxu0 0
    %439 = vmatpush1.bf16.msra.mxu0 %v328
    %440 = vmatprep.subr.bf16.mxu0 0
    %441 = vmatpush1.bf16.msra.mxu0 %v329
    %442 = vmatprep.subr.bf16.mxu0 0
    %443 = vmatpush1.bf16.msra.mxu0 %v330
    %444 = vmatprep.subr.bf16.mxu0 0
    %445 = vmatpush1.bf16.msra.mxu0 %v331
    %446 = vmatprep.subr.bf16.mxu0 0
    %447 = vmatpush1.bf16.msra.mxu0 %v332
    %448 = vmatprep.subr.bf16.mxu0 0
    %449 = vmatpush1.bf16.msra.mxu0 %v333
    %450 = vmatprep.subr.bf16.mxu0 0
    %451 = vmatpush1.bf16.msra.mxu0 %v334
    %452 = vmatprep.subr.bf16.mxu0 0
    %453 = vmatpush1.bf16.msra.mxu0 %v335
    %454 = vmatprep.subr.bf16.mxu0 0
    %455 = vmatpush1.bf16.msra.mxu0 %v336
    %456 = vmatprep.subr.bf16.mxu0 0
    %457 = vmatpush1.bf16.msra.mxu0 %v337
    %458 = vmatprep.subr.bf16.mxu0 0
    %459 = vmatpush1.bf16.msra.mxu0 %v338
    %460 = vmatprep.mubr.bf16.mxu0 %v140
    %461 = vmatmul.mubr.bf16.gmra.mrb[0].mxu0 %v139
    %v462 = vpop.f32.mrb[0].mxu0
    %v463 = vadd.f32 %v422, %v462
    %v464 = vpop.f32.mrb[0].mxu0
    %v465 = vpop.f32.mrb[0].mxu0
    %v466 = vadd.f32 %v425, %v465
    %v467 = vpop.f32.mrb[0].mxu0
    %468 = vdwg.mxu0
    %469 = vmatprep.subr.bf16.mxu0 0
    %470 = vmatpush1.bf16.msra.mxu0 %v339
    %471 = vmatprep.subr.bf16.mxu0 0
    %472 = vmatpush1.bf16.msra.mxu0 %v340
    %473 = vmatprep.subr.bf16.mxu0 0
    %474 = vmatpush1.bf16.msra.mxu0 %v341
    %475 = vmatprep.subr.bf16.mxu0 0
    %476 = vmatpush1.bf16.msra.mxu0 %v342
    %477 = vmatprep.subr.bf16.mxu0 0
    %478 = vmatpush1.bf16.msra.mxu0 %v343
    %479 = vmatprep.subr.bf16.mxu0 0
    %480 = vmatpush1.bf16.msra.mxu0 %v344
    %481 = vmatprep.subr.bf16.mxu0 0
    %482 = vmatpush1.bf16.msra.mxu0 %v345
    %483 = vmatprep.subr.bf16.mxu0 0
    %484 = vmatpush1.bf16.msra.mxu0 %v346
    %485 = vmatprep.subr.bf16.mxu0 0
    %486 = vmatpush1.bf16.msra.mxu0 0
    %487 = vmatprep.subr.bf16.mxu0 0
    %488 = vmatpush1.bf16.msra.mxu0 0
    %489 = vmatprep.subr.bf16.mxu0 0
    %490 = vmatpush1.bf16.msra.mxu0 0
    %491 = vmatprep.subr.bf16.mxu0 0
    %492 = vmatpush1.bf16.msra.mxu0 0
    %493 = vmatprep.subr.bf16.mxu0 0
    %494 = vmatpush1.bf16.msra.mxu0 0
    %495 = vmatprep.subr.bf16.mxu0 0
    %496 = vmatpush1.bf16.msra.mxu0 0
    %497 = vmatprep.subr.bf16.mxu0 0
    %498 = vmatpush1.bf16.msra.mxu0 0
    %499 = vmatprep.subr.bf16.mxu0 0
    %500 = vmatpush1.bf16.msra.mxu0 0
    %501 = vmatprep.mubr.bf16.mxu0 0
    %502 = vmatmul.mubr.bf16.gmra.mrb[0].mxu0 %v141
    %v503 = vpop.f32.mrb[0].mxu0
    %v504 = vadd.f32 %v463, %v503
    %v505 = vpop.f32.mrb[0].mxu0
    %v506 = vpop.f32.mrb[0].mxu0
    %v507 = vadd.f32 %v466, %v506
    %v508 = vpop.f32.mrb[0].mxu0
    %509 = vdwg.mxu0
    %v510 = vadd.f32 %v33, %v504
    %v511 = vadd.f32 %v34, %v507
    %512 = vst [vmem:[#allocation2] sm:$0xff] %v510
    %513 = vst [vmem:[#allocation2 + $0x8] sm:$0xff] %v511
    // Predicated region
    $region22: #{_lambda_.10} parent=1 // pred_check
      %p514 = pneg %p27
    $region23: #{_lambda_.10} parent=1 // pred_check_branch
      %516 = sbr.rel (%p514) target = $region25
    $region24: #{_lambda_.10} parent=1 // pred_region
      %v517 = vld [vmem:[#allocation2] sm:$0xff]
      %v518 = vld [vmem:[#allocation2 + $0x8] sm:$0xff]
      %v519 = vld [vmem:[#allocation3] sm:$0x1]
      %v521 = vlaneseq
      %v522 = vshrl.u32 %v521, 7
      %v523 = vsub.s32 0, %v522
      %v524 = vrot.slane %v519, %v523
      %v526 = vadd.f32 %v517, %v524
      %v527 = vadd.f32 %v518, %v524
      %v528 = vmax.f32 %v526, 0.0
      %v529 = vmax.f32 %v527, 0.0
      %v530 = vpack.c.bf16 %v529, %v528
      %v532 = vunpack.c.l.b16 %v530
      %v533 = vunpack.c.h.b16 %v530
      %v534 = vpack.c.b16 %v532, %v532
      %v535 = vpack.c.b16 %v533, %v533
      %538 = vst [vmem:[%s3] sm:$0xf] %v534
      %539 = vst [vmem:[%s3 + $0x4] sm:$0xf] %v535
    $region25: #{_lambda_.10} parent=1 // pred_fallthru
      _
    // Predicated region
    $region26: #{_lambda_.10} parent=1 // pred_check
      _
    $region27: #{_lambda_.10} parent=1 // pred_check_branch
      %541 = sbr.rel (0) target = $region29
    $region28: #{_lambda_.10} parent=1 // pred_region
      _
    $region29: #{_lambda_.10} parent=1 // pred_fallthru
      _
    // Predicated region
    $region30: #{_lambda_.10} parent=1 // pred_check
      _
    $region31: #{_lambda_.10} parent=1 // pred_check_branch
      %543 = sbr.rel (0) target = $region33
    $region32: #{_lambda_.10} parent=1 // pred_region
      _
    $region33: #{_lambda_.10} parent=1 // pred_fallthru
      _
    %544 = vsyncpa [#allocation4], 1

// kernel: tile.22
$region0: #{tile.22}
  #allocation0 [shape = 's32[1]{0}', space=sflag, size = 0x4, scoped, tag = 'scoped memory for tile.22']
  %s0 = inlined_call_operand.vmem [shape: f32[128], index: 0, kind: input, shape index: {}]
  %s1 = inlined_call_operand.vmem [shape: f32[4,128], index: 1, kind: output, shape index: {}]
  // Predicated region
  $region2: #{tile.22} parent=0 // pred_check
    _
  $region3: #{tile.22} parent=0 // pred_check_branch
    %3 = sbr.rel (0) target = $region5
  $region4: #{tile.22} parent=0 // pred_region
    _
  $region5: #{tile.22} parent=0 // pred_fallthru
    _
  %v4 = vld [vmem:[%s0] ss:$0 sm:$0xff]
  %5 = vst [vmem:[%s1] sm:$0xf] %v4

// kernel: _lambda_.11
$region0: #{_lambda_.11}
  #allocation0 [shape = 'u32[]', space=smem, size = 0x4, offset = 0x4, fixed_abs, tag = 'smem constant byte address 0x4 - core index']
  #allocation1 [shape = 'u32[144,128]{1,0:T(1,128)}', space=vmem, size = 0x12000, scoped, tag = 'internal scratch']
  #allocation2 [shape = 'f32[16,128]{1,0:T(8,128)}', space=vmem, size = 0x2000, scoped, tag = 'scratch operand']
  %s0 = inlined_call_operand.vmem [shape: bf16[16,1152], index: 0, kind: input, shape index: {}]
  %s1 = inlined_call_operand.vmem [shape: bf16[1152,256], index: 1, kind: input, shape index: {}]
  %s2 = inlined_call_operand.vmem [shape: f32[1,256], index: 2, kind: input, shape index: {}]
  %s3 = inlined_call_operand.vmem [shape: bf16[16,256], index: 3, kind: output, shape index: {}]
  %s4 = sld [smem:[#allocation0]]
  $region131: #{_lambda_.11} parent=0
    _
  %s6 = ssub.s32 1, %s4
  %s7 = scalar_select 0, %s6, %s4
  $region1: #{_lambda_.11} parent=0
    #allocation3 [shape = 'u8[589824]{0}', space=vmem, size = 0x90000, scoped, tag = 'input window, operand 1']
    #allocation4 [shape = 'u8[8192]{0}', space=vmem, size = 0x2000, scoped, tag = 'output window, operand 0']
    loop: start=0, step=1, limit=4
    $region2: #{_lambda_.11} parent=1 // loop_pre_header
      _
    $region3: #{_lambda_.11} parent=1 // loop_header
      %s9 = sphi 0, %s13
      %p10 = scmp.ge.s32.totalorder %s9, 4
      %s16 = sphi 0, %s35
      %s17 = sphi 0, %s31
      %s18 = sphi 0, %s27
      %s19 = sphi 0, %s16
      %s20 = sphi 0, %s17
      %s21 = sphi 0, %s18
      %s22 = sphi 0, %s19
      %s23 = sphi 0, %s20
      %s24 = sphi 0, %s21
      %s40 = sphi 0, %s42
      %s43 = sphi 0, %s40
      %s44 = sphi 0, %s43
      %s60 = sphi 0, %s44
      %s68 = sphi 0, %s70
      %s71 = sphi 0, %s68
      %s72 = sphi 0, %s71
      %s88 = sphi 0, %s72
      %s94 = sphi 0, %s96
      %s97 = sphi 0, %s94
      %s98 = sphi 0, %s97
      %s114 = sphi 0, %s98
      %s122 = sphi 0, %s124
      %s125 = sphi 0, %s122
      %s126 = sphi 0, %s125
      %s142 = sphi 0, %s126
    $region4: #{_lambda_.11} parent=1 // loop_header_branch
      %12 = sbr.rel (%p10) target = $region8
    $region5: #{_lambda_.11} parent=1 // loop_body
      %s14 = ssub.s32 %s9, 1
      %s15 = ssub.s32 %s9, 2
      %s25 = sadd.s32 1, %s18
      %p26 = scmp.ge.s32.totalorder %s25, 1
      %s27 = scalar_select %p26, 0, %s25
      %s28 = sadd.s32 1, %s17
      %s29 = scalar_select %p26, %s28, %s17
      %p30 = scmp.ge.s32.totalorder %s29, 2
      %s31 = scalar_select %p30, 0, %s29
      %s32 = sadd.s32 1, %s16
      %s33 = scalar_select %p30, %s32, %s16
      %p34 = scmp.ge.s32.totalorder %s33, 1
      %s35 = scalar_select %p34, 0, %s33
      %s36 = ssub.s32 %s16, %s35
      %s37 = ssub.s32 %s18, %s27
      %s38 = sor.u32 %s36, %s37
      %p39 = scmp.eq.s32.totalorder %s38, 0
      %s41 = sadd.s32 %s40, 1
      %s42 = scalar_select %p39, %s40, %s41
      %p45 = pneg %p39
      %p46 = scmp.eq.s32.totalorder %s9, 1
      %p47 = por %p45, %p46
      %p48 = scmp.ne.s32.totalorder %s40, %s43
      %p49 = scmp.eq.s32.totalorder %s9, 0
      %p50 = por %p48, %p49
      %p51 = scmp.ne.s32.totalorder %s40, %s43
      %p52 = scmp.eq.s32.totalorder %s14, 1
      %p53 = por %p51, %p52
      %p54 = scmp.ne.s32.totalorder %s43, %s44
      %p55 = scmp.eq.s32.totalorder %s14, 0
      %p56 = por %p54, %p55
      %p57 = scmp.ne.s32.totalorder %s43, %s44
      %p58 = scmp.eq.s32.totalorder %s15, 1
      %p59 = por %p57, %p58
      %p61 = scmp.ne.s32.totalorder %s44, %s60
      %p62 = scmp.eq.s32.totalorder %s15, 0
      %p63 = por %p61, %p62
      %s64 = ssub.s32 %s18, %s27
      %s65 = ssub.s32 %s17, %s31
      %s66 = sor.u32 %s64, %s65
      %p67 = scmp.eq.s32.totalorder %s66, 0
      %s69 = sadd.s32 %s68, 1
      %s70 = scalar_select %p67, %s68, %s69
      %p73 = pneg %p67
      %p74 = scmp.eq.s32.totalorder %s9, 1
      %p75 = por %p73, %p74
      %p76 = scmp.ne.s32.totalorder %s68, %s71
      %p77 = scmp.eq.s32.totalorder %s9, 0
      %p78 = por %p76, %p77
      %p79 = scmp.ne.s32.totalorder %s68, %s71
      %p80 = scmp.eq.s32.totalorder %s14, 1
      %p81 = por %p79, %p80
      %p82 = scmp.ne.s32.totalorder %s71, %s72
      %p83 = scmp.eq.s32.totalorder %s14, 0
      %p84 = por %p82, %p83
      %p85 = scmp.ne.s32.totalorder %s71, %s72
      %p86 = scmp.eq.s32.totalorder %s15, 1
      %p87 = por %p85, %p86
      %p89 = scmp.ne.s32.totalorder %s72, %s88
      %p90 = scmp.eq.s32.totalorder %s15, 0
      %p91 = por %p89, %p90
      %s92 = ssub.s32 %s17, %s31
      %p93 = scmp.eq.s32.totalorder %s92, 0
      %s95 = sadd.s32 %s94, 1
      %s96 = scalar_select %p93, %s94, %s95
      %p99 = pneg %p93
      %p100 = scmp.eq.s32.totalorder %s9, 1
      %p101 = por %p99, %p100
      %p102 = scmp.ne.s32.totalorder %s94, %s97
      %p103 = scmp.eq.s32.totalorder %s9, 0
      %p104 = por %p102, %p103
      %p105 = scmp.ne.s32.totalorder %s94, %s97
      %p106 = scmp.eq.s32.totalorder %s14, 1
      %p107 = por %p105, %p106
      %p108 = scmp.ne.s32.totalorder %s97, %s98
      %p109 = scmp.eq.s32.totalorder %s14, 0
      %p110 = por %p108, %p109
      %p111 = scmp.ne.s32.totalorder %s97, %s98
      %p112 = scmp.eq.s32.totalorder %s15, 1
      %p113 = por %p111, %p112
      %p115 = scmp.ne.s32.totalorder %s98, %s114
      %p116 = scmp.eq.s32.totalorder %s15, 0
      %p117 = por %p115, %p116
      %s118 = ssub.s32 %s16, %s35
      %s119 = ssub.s32 %s17, %s31
      %s120 = sor.u32 %s118, %s119
      %p121 = scmp.eq.s32.totalorder %s120, 0
      %s123 = sadd.s32 %s122, 1
      %s124 = scalar_select %p121, %s122, %s123
      %p127 = pneg %p121
      %p128 = scmp.eq.s32.totalorder %s9, 1
      %p129 = por %p127, %p128
      %p130 = scmp.ne.s32.totalorder %s122, %s125
      %p131 = scmp.eq.s32.totalorder %s9, 0
      %p132 = por %p130, %p131
      %p133 = scmp.ne.s32.totalorder %s122, %s125
      %p134 = scmp.eq.s32.totalorder %s14, 1
      %p135 = por %p133, %p134
      %p136 = scmp.ne.s32.totalorder %s125, %s126
      %p137 = scmp.eq.s32.totalorder %s14, 0
      %p138 = por %p136, %p137
      %p139 = scmp.ne.s32.totalorder %s125, %s126
      %p140 = scmp.eq.s32.totalorder %s15, 1
      %p141 = por %p139, %p140
      %p143 = scmp.ne.s32.totalorder %s126, %s142
      %p144 = scmp.eq.s32.totalorder %s15, 0
      %p145 = por %p143, %p144
      %p146 = scmp.le.s32.totalorder 1, %s9
      %p147 = scmp.lt.s32.totalorder %s9, 3
      %p148 = pnand %p146, %p147
      %p149 = pneg %p148
      // Predicated region
      $region9: #{_lambda_.11} parent=5 // pred_check
        _
      $region10: #{_lambda_.11} parent=5 // pred_check_branch
        %151 = sbr.rel (%p148) target = $region12
      $region11: #{_lambda_.11} parent=5 // pred_region
        %s152 = ssub.s32 %s9, 1
        // Predicated region
        $region13: #{_lambda_.11} parent=11 // pred_check
          %p153 = pneg %p56
        $region14: #{_lambda_.11} parent=11 // pred_check_branch
          %155 = sbr.rel (%p153) target = $region16
        $region15: #{_lambda_.11} parent=11 // pred_region
          %s156 = smul.u32 2, %s19
          %s157 = smul.u32 9, %s21
          %p158 = scmp.lt.s32.totalorder %s156, 1
          %s159 = scalar_select %p158, %s156, 1
          %p160 = scmp.lt.s32.totalorder %s157, 8
          %s161 = scalar_select %p160, %s157, 8
          %s162 = smul.addr %s159, 9
          %s163 = sadd.s32 %s161, %s162
          %s164 = smul.addr %s163, 4
          %s165 = scalar_lea.vmem %s0, %s164
          %s166 = smul.u32 2, %s19
          %s167 = smul.u32 9, %s21
        $region16: #{_lambda_.11} parent=11 // pred_fallthru
          _
      $region12: #{_lambda_.11} parent=5 // pred_fallthru
        _
      %p168 = scmp.lt.s32.totalorder %s9, 2
      // Predicated region
      $region17: #{_lambda_.11} parent=5 // pred_check
        %p169 = pneg %p168
      $region18: #{_lambda_.11} parent=5 // pred_check_branch
        %171 = sbr.rel (%p169) target = $region20
      $region19: #{_lambda_.11} parent=5 // pred_region
        // Predicated region
        $region21: #{_lambda_.11} parent=19 // pred_check
          %p172 = pneg %p78
        $region22: #{_lambda_.11} parent=19 // pred_check_branch
          %174 = sbr.rel (%p172) target = $region24
        $region23: #{_lambda_.11} parent=19 // pred_region
          %s175 = sand.u32 %s68, 1
          %s176 = sand.u32 %s68, 1
          %s177 = smul.addr %s176, 576
          %s178 = scalar_lea.vmem [#allocation3], %s177
          %s179 = smul.u32 144, %s18
          %s180 = smul.addr %s179, 2
          %s181 = sadd.s32 %s17, %s180
          %s182 = smul.addr %s181, 4
          %s183 = scalar_lea.vmem %s1, %s182
          // Predicated region
          $region25: #{_lambda_.11} parent=23 // pred_check
            _
          $region26: #{_lambda_.11} parent=23 // pred_check_branch
            %185 = sbr.rel (0) target = $region28
          $region27: #{_lambda_.11} parent=23 // pred_region
            // Predicated region
            $region29: #{_lambda_.11} parent=27 // pred_check
              _
            $region30: #{_lambda_.11} parent=27 // pred_check_branch
              %187 = sbr.rel target = $region32
            $region31: #{_lambda_.11} parent=27 // pred_region
              // Predicated region
              $region44: #{_lambda_.11} parent=31 // pred_check
                _
              $region45: #{_lambda_.11} parent=31 // pred_check_branch
                %488 = sbr.rel (0) target = $region47
              $region46: #{_lambda_.11} parent=31 // pred_region
                loop: start=0, step=1, limit=1
                $region48: #{_lambda_.11} parent=46 // loop_pre_header
                  _
                $region49: #{_lambda_.11} parent=46 // loop_header
                  %s490 = sphi 0, %s494
                  %p491 = scmp.ge.s32.totalorder %s490, 1
                  %s495 = sphi %s183, %s183
                  %s496 = sphi %s178, %s178
                $region50: #{_lambda_.11} parent=46 // loop_header_branch
                  %493 = sbr.rel (%p491) target = $region54
                $region51: #{_lambda_.11} parent=46 // loop_body
                  _
                $region52: #{_lambda_.11} parent=46 // loop_footer
                  %s494 = sadd.s32 1, %s490
                $region53: #{_lambda_.11} parent=46 // loop_footer_branch
                  %489 = sbr.rel target = $region49
                $region54: #{_lambda_.11} parent=46 // loop_exit
                  _
                loop: start=0, step=1, limit=1
                $region55: #{_lambda_.11} parent=46 // loop_pre_header
                  _
                $region56: #{_lambda_.11} parent=46 // loop_header
                  %s499 = sphi 0, %s503
                  %p500 = scmp.ge.s32.totalorder %s499, 1
                  %s504 = sphi %s183, %s183
                  %s505 = sphi %s178, %s178
                $region57: #{_lambda_.11} parent=46 // loop_header_branch
                  %502 = sbr.rel (%p500) target = $region61
                $region58: #{_lambda_.11} parent=46 // loop_body
                  %v506 = vld [vmem:[%s504] sm:$0xf]
                  %507 = vst [vmem:[%s505] sm:$0xf] %v506
                  %v508 = vld [vmem:[%s504 + $0x8] sm:$0xf]
                  %509 = vst [vmem:[%s505 + $0x4] sm:$0xf] %v508
                  %v510 = vld [vmem:[%s504 + $0x10] sm:$0xf]
                  %511 = vst [vmem:[%s505 + $0x8] sm:$0xf] %v510
                  %v512 = vld [vmem:[%s504 + $0x18] sm:$0xf]
                  %513 = vst [vmem:[%s505 + $0xc] sm:$0xf] %v512
                  %v514 = vld [vmem:[%s504 + $0x20] sm:$0xf]
                  %515 = vst [vmem:[%s505 + $0x10] sm:$0xf] %v514
                  %v516 = vld [vmem:[%s504 + $0x28] sm:$0xf]
                  %517 = vst [vmem:[%s505 + $0x14] sm:$0xf] %v516
                  %v518 = vld [vmem:[%s504 + $0x30] sm:$0xf]
                  %519 = vst [vmem:[%s505 + $0x18] sm:$0xf] %v518
                  %v520 = vld [vmem:[%s504 + $0x38] sm:$0xf]
                  %521 = vst [vmem:[%s505 + $0x1c] sm:$0xf] %v520
                  %v522 = vld [vmem:[%s504 + $0x40] sm:$0xf]
                  %523 = vst [vmem:[%s505 + $0x20] sm:$0xf] %v522
                  %v524 = vld [vmem:[%s504 + $0x48] sm:$0xf]
                  %525 = vst [vmem:[%s505 + $0x24] sm:$0xf] %v524
                  %v526 = vld [vmem:[%s504 + $0x50] sm:$0xf]
                  %527 = vst [vmem:[%s505 + $0x28] sm:$0xf] %v526
                  %v528 = vld [vmem:[%s504 + $0x58] sm:$0xf]
                  %529 = vst [vmem:[%s505 + $0x2c] sm:$0xf] %v528
                  %v530 = vld [vmem:[%s504 + $0x60] sm:$0xf]
                  %531 = vst [vmem:[%s505 + $0x30] sm:$0xf] %v530
                  %v532 = vld [vmem:[%s504 + $0x68] sm:$0xf]
                  %533 = vst [vmem:[%s505 + $0x34] sm:$0xf] %v532
                  %v534 = vld [vmem:[%s504 + $0x70] sm:$0xf]
                  %535 = vst [vmem:[%s505 + $0x38] sm:$0xf] %v534
                  %v536 = vld [vmem:[%s504 + $0x78] sm:$0xf]
                  %537 = vst [vmem:[%s505 + $0x3c] sm:$0xf] %v536
                  %v538 = vld [vmem:[%s504 + $0x80] sm:$0xf]
                  %539 = vst [vmem:[%s505 + $0x40] sm:$0xf] %v538
                  %v540 = vld [vmem:[%s504 + $0x88] sm:$0xf]
                  %541 = vst [vmem:[%s505 + $0x44] sm:$0xf] %v540
                  %v542 = vld [vmem:[%s504 + $0x90] sm:$0xf]
                  %543 = vst [vmem:[%s505 + $0x48] sm:$0xf] %v542
                  %v544 = vld [vmem:[%s504 + $0x98] sm:$0xf]
                  %545 = vst [vmem:[%s505 + $0x4c] sm:$0xf] %v544
                  %v546 = vld [vmem:[%s504 + $0xa0] sm:$0xf]
                  %547 = vst [vmem:[%s505 + $0x50] sm:$0xf] %v546
                  %v548 = vld [vmem:[%s504 + $0xa8] sm:$0xf]
                  %549 = vst [vmem:[%s505 + $0x54] sm:$0xf] %v548
                  %v550 = vld [vmem:[%s504 + $0xb0] sm:$0xf]
                  %551 = vst [vmem:[%s505 + $0x58] sm:$0xf] %v550
                  %v552 = vld [vmem:[%s504 + $0xb8] sm:$0xf]
                  %553 = vst [vmem:[%s505 + $0x5c] sm:$0xf] %v552
                  %v554 = vld [vmem:[%s504 + $0xc0] sm:$0xf]
                  %555 = vst [vmem:[%s505 + $0x60] sm:$0xf] %v554
                  %v556 = vld [vmem:[%s504 + $0xc8] sm:$0xf]
                  %557 = vst [vmem:[%s505 + $0x64] sm:$0xf] %v556
                  %v558 = vld [vmem:[%s504 + $0xd0] sm:$0xf]
                  %559 = vst [vmem:[%s505 + $0x68] sm:$0xf] %v558
                  %v560 = vld [vmem:[%s504 + $0xd8] sm:$0xf]
                  %561 = vst [vmem:[%s505 + $0x6c] sm:$0xf] %v560
                  %v562 = vld [vmem:[%s504 + $0xe0] sm:$0xf]
                  %563 = vst [vmem:[%s505 + $0x70] sm:$0xf] %v562
                  %v564 = vld [vmem:[%s504 + $0xe8] sm:$0xf]
                  %565 = vst [vmem:[%s505 + $0x74] sm:$0xf] %v564
                  %v566 = vld [vmem:[%s504 + $0xf0] sm:$0xf]
                  %567 = vst [vmem:[%s505 + $0x78] sm:$0xf] %v566
                  %v568 = vld [vmem:[%s504 + $0xf8] sm:$0xf]
                  %569 = vst [vmem:[%s505 + $0x7c] sm:$0xf] %v568
                  %v570 = vld [vmem:[%s504 + $0x100] sm:$0xf]
                  %571 = vst [vmem:[%s505 + $0x80] sm:$0xf] %v570
                  %v572 = vld [vmem:[%s504 + $0x108] sm:$0xf]
                  %573 = vst [vmem:[%s505 + $0x84] sm:$0xf] %v572
                  %v574 = vld [vmem:[%s504 + $0x110] sm:$0xf]
                  %575 = vst [vmem:[%s505 + $0x88] sm:$0xf] %v574
                  %v576 = vld [vmem:[%s504 + $0x118] sm:$0xf]
                  %577 = vst [vmem:[%s505 + $0x8c] sm:$0xf] %v576
                  %v578 = vld [vmem:[%s504 + $0x120] sm:$0xf]
                  %579 = vst [vmem:[%s505 + $0x90] sm:$0xf] %v578
                  %v580 = vld [vmem:[%s504 + $0x128] sm:$0xf]
                  %581 = vst [vmem:[%s505 + $0x94] sm:$0xf] %v580
                  %v582 = vld [vmem:[%s504 + $0x130] sm:$0xf]
                  %583 = vst [vmem:[%s505 + $0x98] sm:$0xf] %v582
                  %v584 = vld [vmem:[%s504 + $0x138] sm:$0xf]
                  %585 = vst [vmem:[%s505 + $0x9c] sm:$0xf] %v584
                  %v586 = vld [vmem:[%s504 + $0x140] sm:$0xf]
                  %587 = vst [vmem:[%s505 + $0xa0] sm:$0xf] %v586
                  %v588 = vld [vmem:[%s504 + $0x148] sm:$0xf]
                  %589 = vst [vmem:[%s505 + $0xa4] sm:$0xf] %v588
                  %v590 = vld [vmem:[%s504 + $0x150] sm:$0xf]
                  %591 = vst [vmem:[%s505 + $0xa8] sm:$0xf] %v590
                  %v592 = vld [vmem:[%s504 + $0x158] sm:$0xf]
                  %593 = vst [vmem:[%s505 + $0xac] sm:$0xf] %v592
                  %v594 = vld [vmem:[%s504 + $0x160] sm:$0xf]
                  %595 = vst [vmem:[%s505 + $0xb0] sm:$0xf] %v594
                  %v596 = vld [vmem:[%s504 + $0x168] sm:$0xf]
                  %597 = vst [vmem:[%s505 + $0xb4] sm:$0xf] %v596
                  %v598 = vld [vmem:[%s504 + $0x170] sm:$0xf]
                  %599 = vst [vmem:[%s505 + $0xb8] sm:$0xf] %v598
                  %v600 = vld [vmem:[%s504 + $0x178] sm:$0xf]
                  %601 = vst [vmem:[%s505 + $0xbc] sm:$0xf] %v600
                  %v602 = vld [vmem:[%s504 + $0x180] sm:$0xf]
                  %603 = vst [vmem:[%s505 + $0xc0] sm:$0xf] %v602
                  %v604 = vld [vmem:[%s504 + $0x188] sm:$0xf]
                  %605 = vst [vmem:[%s505 + $0xc4] sm:$0xf] %v604
                  %v606 = vld [vmem:[%s504 + $0x190] sm:$0xf]
                  %607 = vst [vmem:[%s505 + $0xc8] sm:$0xf] %v606
                  %v608 = vld [vmem:[%s504 + $0x198] sm:$0xf]
                  %609 = vst [vmem:[%s505 + $0xcc] sm:$0xf] %v608
                  %v610 = vld [vmem:[%s504 + $0x1a0] sm:$0xf]
                  %611 = vst [vmem:[%s505 + $0xd0] sm:$0xf] %v610
                  %v612 = vld [vmem:[%s504 + $0x1a8] sm:$0xf]
                  %613 = vst [vmem:[%s505 + $0xd4] sm:$0xf] %v612
                  %v614 = vld [vmem:[%s504 + $0x1b0] sm:$0xf]
                  %615 = vst [vmem:[%s505 + $0xd8] sm:$0xf] %v614
                  %v616 = vld [vmem:[%s504 + $0x1b8] sm:$0xf]
                  %617 = vst [vmem:[%s505 + $0xdc] sm:$0xf] %v616
                  %v618 = vld [vmem:[%s504 + $0x1c0] sm:$0xf]
                  %619 = vst [vmem:[%s505 + $0xe0] sm:$0xf] %v618
                  %v620 = vld [vmem:[%s504 + $0x1c8] sm:$0xf]
                  %621 = vst [vmem:[%s505 + $0xe4] sm:$0xf] %v620
                  %v622 = vld [vmem:[%s504 + $0x1d0] sm:$0xf]
                  %623 = vst [vmem:[%s505 + $0xe8] sm:$0xf] %v622
                  %v624 = vld [vmem:[%s504 + $0x1d8] sm:$0xf]
                  %625 = vst [vmem:[%s505 + $0xec] sm:$0xf] %v624
                  %v626 = vld [vmem:[%s504 + $0x1e0] sm:$0xf]
                  %627 = vst [vmem:[%s505 + $0xf0] sm:$0xf] %v626
                  %v628 = vld [vmem:[%s504 + $0x1e8] sm:$0xf]
                  %629 = vst [vmem:[%s505 + $0xf4] sm:$0xf] %v628
                  %v630 = vld [vmem:[%s504 + $0x1f0] sm:$0xf]
                  %631 = vst [vmem:[%s505 + $0xf8] sm:$0xf] %v630
                  %v632 = vld [vmem:[%s504 + $0x1f8] sm:$0xf]
                  %633 = vst [vmem:[%s505 + $0xfc] sm:$0xf] %v632
                  %v634 = vld [vmem:[%s504 + $0x200] sm:$0xf]
                  %635 = vst [vmem:[%s505 + $0x100] sm:$0xf] %v634
                  %v636 = vld [vmem:[%s504 + $0x208] sm:$0xf]
                  %637 = vst [vmem:[%s505 + $0x104] sm:$0xf] %v636
                  %v638 = vld [vmem:[%s504 + $0x210] sm:$0xf]
                  %639 = vst [vmem:[%s505 + $0x108] sm:$0xf] %v638
                  %v640 = vld [vmem:[%s504 + $0x218] sm:$0xf]
                  %641 = vst [vmem:[%s505 + $0x10c] sm:$0xf] %v640
                  %v642 = vld [vmem:[%s504 + $0x220] sm:$0xf]
                  %643 = vst [vmem:[%s505 + $0x110] sm:$0xf] %v642
                  %v644 = vld [vmem:[%s504 + $0x228] sm:$0xf]
                  %645 = vst [vmem:[%s505 + $0x114] sm:$0xf] %v644
                  %v646 = vld [vmem:[%s504 + $0x230] sm:$0xf]
                  %647 = vst [vmem:[%s505 + $0x118] sm:$0xf] %v646
                  %v648 = vld [vmem:[%s504 + $0x238] sm:$0xf]
                  %649 = vst [vmem:[%s505 + $0x11c] sm:$0xf] %v648
                  %v650 = vld [vmem:[%s504 + $0x240] sm:$0xf]
                  %651 = vst [vmem:[%s505 + $0x120] sm:$0xf] %v650
                  %v652 = vld [vmem:[%s504 + $0x248] sm:$0xf]
                  %653 = vst [vmem:[%s505 + $0x124] sm:$0xf] %v652
                  %v654 = vld [vmem:[%s504 + $0x250] sm:$0xf]
                  %655 = vst [vmem:[%s505 + $0x128] sm:$0xf] %v654
                  %v656 = vld [vmem:[%s504 + $0x258] sm:$0xf]
                  %657 = vst [vmem:[%s505 + $0x12c] sm:$0xf] %v656
                  %v658 = vld [vmem:[%s504 + $0x260] sm:$0xf]
                  %659 = vst [vmem:[%s505 + $0x130] sm:$0xf] %v658
                  %v660 = vld [vmem:[%s504 + $0x268] sm:$0xf]
                  %661 = vst [vmem:[%s505 + $0x134] sm:$0xf] %v660
                  %v662 = vld [vmem:[%s504 + $0x270] sm:$0xf]
                  %663 = vst [vmem:[%s505 + $0x138] sm:$0xf] %v662
                  %v664 = vld [vmem:[%s504 + $0x278] sm:$0xf]
                  %665 = vst [vmem:[%s505 + $0x13c] sm:$0xf] %v664
                  %v666 = vld [vmem:[%s504 + $0x280] sm:$0xf]
                  %667 = vst [vmem:[%s505 + $0x140] sm:$0xf] %v666
                  %v668 = vld [vmem:[%s504 + $0x288] sm:$0xf]
                  %669 = vst [vmem:[%s505 + $0x144] sm:$0xf] %v668
                  %v670 = vld [vmem:[%s504 + $0x290] sm:$0xf]
                  %671 = vst [vmem:[%s505 + $0x148] sm:$0xf] %v670
                  %v672 = vld [vmem:[%s504 + $0x298] sm:$0xf]
                  %673 = vst [vmem:[%s505 + $0x14c] sm:$0xf] %v672
                  %v674 = vld [vmem:[%s504 + $0x2a0] sm:$0xf]
                  %675 = vst [vmem:[%s505 + $0x150] sm:$0xf] %v674
                  %v676 = vld [vmem:[%s504 + $0x2a8] sm:$0xf]
                  %677 = vst [vmem:[%s505 + $0x154] sm:$0xf] %v676
                  %v678 = vld [vmem:[%s504 + $0x2b0] sm:$0xf]
                  %679 = vst [vmem:[%s505 + $0x158] sm:$0xf] %v678
                  %v680 = vld [vmem:[%s504 + $0x2b8] sm:$0xf]
                  %681 = vst [vmem:[%s505 + $0x15c] sm:$0xf] %v680
                  %v682 = vld [vmem:[%s504 + $0x2c0] sm:$0xf]
                  %683 = vst [vmem:[%s505 + $0x160] sm:$0xf] %v682
                  %v684 = vld [vmem:[%s504 + $0x2c8] sm:$0xf]
                  %685 = vst [vmem:[%s505 + $0x164] sm:$0xf] %v684
                  %v686 = vld [vmem:[%s504 + $0x2d0] sm:$0xf]
                  %687 = vst [vmem:[%s505 + $0x168] sm:$0xf] %v686
                  %v688 = vld [vmem:[%s504 + $0x2d8] sm:$0xf]
                  %689 = vst [vmem:[%s505 + $0x16c] sm:$0xf] %v688
                  %v690 = vld [vmem:[%s504 + $0x2e0] sm:$0xf]
                  %691 = vst [vmem:[%s505 + $0x170] sm:$0xf] %v690
                  %v692 = vld [vmem:[%s504 + $0x2e8] sm:$0xf]
                  %693 = vst [vmem:[%s505 + $0x174] sm:$0xf] %v692
                  %v694 = vld [vmem:[%s504 + $0x2f0] sm:$0xf]
                  %695 = vst [vmem:[%s505 + $0x178] sm:$0xf] %v694
                  %v696 = vld [vmem:[%s504 + $0x2f8] sm:$0xf]
                  %697 = vst [vmem:[%s505 + $0x17c] sm:$0xf] %v696
                  %v698 = vld [vmem:[%s504 + $0x300] sm:$0xf]
                  %699 = vst [vmem:[%s505 + $0x180] sm:$0xf] %v698
                  %v700 = vld [vmem:[%s504 + $0x308] sm:$0xf]
                  %701 = vst [vmem:[%s505 + $0x184] sm:$0xf] %v700
                  %v702 = vld [vmem:[%s504 + $0x310] sm:$0xf]
                  %703 = vst [vmem:[%s505 + $0x188] sm:$0xf] %v702
                  %v704 = vld [vmem:[%s504 + $0x318] sm:$0xf]
                  %705 = vst [vmem:[%s505 + $0x18c] sm:$0xf] %v704
                  %v706 = vld [vmem:[%s504 + $0x320] sm:$0xf]
                  %707 = vst [vmem:[%s505 + $0x190] sm:$0xf] %v706
                  %v708 = vld [vmem:[%s504 + $0x328] sm:$0xf]
                  %709 = vst [vmem:[%s505 + $0x194] sm:$0xf] %v708
                  %v710 = vld [vmem:[%s504 + $0x330] sm:$0xf]
                  %711 = vst [vmem:[%s505 + $0x198] sm:$0xf] %v710
                  %v712 = vld [vmem:[%s504 + $0x338] sm:$0xf]
                  %713 = vst [vmem:[%s505 + $0x19c] sm:$0xf] %v712
                  %v714 = vld [vmem:[%s504 + $0x340] sm:$0xf]
                  %715 = vst [vmem:[%s505 + $0x1a0] sm:$0xf] %v714
                  %v716 = vld [vmem:[%s504 + $0x348] sm:$0xf]
                  %717 = vst [vmem:[%s505 + $0x1a4] sm:$0xf] %v716
                  %v718 = vld [vmem:[%s504 + $0x350] sm:$0xf]
                  %719 = vst [vmem:[%s505 + $0x1a8] sm:$0xf] %v718
                  %v720 = vld [vmem:[%s504 + $0x358] sm:$0xf]
                  %721 = vst [vmem:[%s505 + $0x1ac] sm:$0xf] %v720
                  %v722 = vld [vmem:[%s504 + $0x360] sm:$0xf]
                  %723 = vst [vmem:[%s505 + $0x1b0] sm:$0xf] %v722
                  %v724 = vld [vmem:[%s504 + $0x368] sm:$0xf]
                  %725 = vst [vmem:[%s505 + $0x1b4] sm:$0xf] %v724
                  %v726 = vld [vmem:[%s504 + $0x370] sm:$0xf]
                  %727 = vst [vmem:[%s505 + $0x1b8] sm:$0xf] %v726
                  %v728 = vld [vmem:[%s504 + $0x378] sm:$0xf]
                  %729 = vst [vmem:[%s505 + $0x1bc] sm:$0xf] %v728
                  %v730 = vld [vmem:[%s504 + $0x380] sm:$0xf]
                  %731 = vst [vmem:[%s505 + $0x1c0] sm:$0xf] %v730
                  %v732 = vld [vmem:[%s504 + $0x388] sm:$0xf]
                  %733 = vst [vmem:[%s505 + $0x1c4] sm:$0xf] %v732
                  %v734 = vld [vmem:[%s504 + $0x390] sm:$0xf]
                  %735 = vst [vmem:[%s505 + $0x1c8] sm:$0xf] %v734
                  %v736 = vld [vmem:[%s504 + $0x398] sm:$0xf]
                  %737 = vst [vmem:[%s505 + $0x1cc] sm:$0xf] %v736
                  %v738 = vld [vmem:[%s504 + $0x3a0] sm:$0xf]
                  %739 = vst [vmem:[%s505 + $0x1d0] sm:$0xf] %v738
                  %v740 = vld [vmem:[%s504 + $0x3a8] sm:$0xf]
                  %741 = vst [vmem:[%s505 + $0x1d4] sm:$0xf] %v740
                  %v742 = vld [vmem:[%s504 + $0x3b0] sm:$0xf]
                  %743 = vst [vmem:[%s505 + $0x1d8] sm:$0xf] %v742
                  %v744 = vld [vmem:[%s504 + $0x3b8] sm:$0xf]
                  %745 = vst [vmem:[%s505 + $0x1dc] sm:$0xf] %v744
                  %v746 = vld [vmem:[%s504 + $0x3c0] sm:$0xf]
                  %747 = vst [vmem:[%s505 + $0x1e0] sm:$0xf] %v746
                  %v748 = vld [vmem:[%s504 + $0x3c8] sm:$0xf]
                  %749 = vst [vmem:[%s505 + $0x1e4] sm:$0xf] %v748
                  %v750 = vld [vmem:[%s504 + $0x3d0] sm:$0xf]
                  %751 = vst [vmem:[%s505 + $0x1e8] sm:$0xf] %v750
                  %v752 = vld [vmem:[%s504 + $0x3d8] sm:$0xf]
                  %753 = vst [vmem:[%s505 + $0x1ec] sm:$0xf] %v752
                  %v754 = vld [vmem:[%s504 + $0x3e0] sm:$0xf]
                  %755 = vst [vmem:[%s505 + $0x1f0] sm:$0xf] %v754
                  %v756 = vld [vmem:[%s504 + $0x3e8] sm:$0xf]
                  %757 = vst [vmem:[%s505 + $0x1f4] sm:$0xf] %v756
                  %v758 = vld [vmem:[%s504 + $0x3f0] sm:$0xf]
                  %759 = vst [vmem:[%s505 + $0x1f8] sm:$0xf] %v758
                  %v760 = vld [vmem:[%s504 + $0x3f8] sm:$0xf]
                  %761 = vst [vmem:[%s505 + $0x1fc] sm:$0xf] %v760
                  %v762 = vld [vmem:[%s504 + $0x400] sm:$0xf]
                  %763 = vst [vmem:[%s505 + $0x200] sm:$0xf] %v762
                  %v764 = vld [vmem:[%s504 + $0x408] sm:$0xf]
                  %765 = vst [vmem:[%s505 + $0x204] sm:$0xf] %v764
                  %v766 = vld [vmem:[%s504 + $0x410] sm:$0xf]
                  %767 = vst [vmem:[%s505 + $0x208] sm:$0xf] %v766
                  %v768 = vld [vmem:[%s504 + $0x418] sm:$0xf]
                  %769 = vst [vmem:[%s505 + $0x20c] sm:$0xf] %v768
                  %v770 = vld [vmem:[%s504 + $0x420] sm:$0xf]
                  %771 = vst [vmem:[%s505 + $0x210] sm:$0xf] %v770
                  %v772 = vld [vmem:[%s504 + $0x428] sm:$0xf]
                  %773 = vst [vmem:[%s505 + $0x214] sm:$0xf] %v772
                  %v774 = vld [vmem:[%s504 + $0x430] sm:$0xf]
                  %775 = vst [vmem:[%s505 + $0x218] sm:$0xf] %v774
                  %v776 = vld [vmem:[%s504 + $0x438] sm:$0xf]
                  %777 = vst [vmem:[%s505 + $0x21c] sm:$0xf] %v776
                  %v778 = vld [vmem:[%s504 + $0x440] sm:$0xf]
                  %779 = vst [vmem:[%s505 + $0x220] sm:$0xf] %v778
                  %v780 = vld [vmem:[%s504 + $0x448] sm:$0xf]
                  %781 = vst [vmem:[%s505 + $0x224] sm:$0xf] %v780
                  %v782 = vld [vmem:[%s504 + $0x450] sm:$0xf]
                  %783 = vst [vmem:[%s505 + $0x228] sm:$0xf] %v782
                  %v784 = vld [vmem:[%s504 + $0x458] sm:$0xf]
                  %785 = vst [vmem:[%s505 + $0x22c] sm:$0xf] %v784
                  %v786 = vld [vmem:[%s504 + $0x460] sm:$0xf]
                  %787 = vst [vmem:[%s505 + $0x230] sm:$0xf] %v786
                  %v788 = vld [vmem:[%s504 + $0x468] sm:$0xf]
                  %789 = vst [vmem:[%s505 + $0x234] sm:$0xf] %v788
                  %v790 = vld [vmem:[%s504 + $0x470] sm:$0xf]
                  %791 = vst [vmem:[%s505 + $0x238] sm:$0xf] %v790
                  %v792 = vld [vmem:[%s504 + $0x478] sm:$0xf]
                  %793 = vst [vmem:[%s505 + $0x23c] sm:$0xf] %v792
                $region59: #{_lambda_.11} parent=46 // loop_footer
                  %s503 = sadd.s32 1, %s499
                $region60: #{_lambda_.11} parent=46 // loop_footer_branch
                  %498 = sbr.rel target = $region56
                $region61: #{_lambda_.11} parent=46 // loop_exit
                  _
              $region47: #{_lambda_.11} parent=31 // pred_fallthru
                _
            $region32: #{_lambda_.11} parent=27 // pred_fallthru
              _
            // Predicated region
            $region33: #{_lambda_.11} parent=27 // pred_check
              _
            $region34: #{_lambda_.11} parent=27 // pred_check_branch
              %189 = sbr.rel (0) target = $region36
            $region35: #{_lambda_.11} parent=27 // pred_region
              loop: start=0, step=1, limit=1
              $region37: #{_lambda_.11} parent=35 // loop_pre_header
                _
              $region38: #{_lambda_.11} parent=35 // loop_header
                %s192 = sphi 0, %s196
                %p193 = scmp.ge.s32.totalorder %s192, 1
                %s197 = sphi %s183, %s183
                %s198 = sphi %s178, %s178
              $region39: #{_lambda_.11} parent=35 // loop_header_branch
                %195 = sbr.rel (%p193) target = $region43
              $region40: #{_lambda_.11} parent=35 // loop_body
                %v199 = vld [vmem:[%s197] sm:$0xf]
                %200 = vst [vmem:[%s198] sm:$0xf] %v199
                %v201 = vld [vmem:[%s197 + $0x8] sm:$0xf]
                %202 = vst [vmem:[%s198 + $0x4] sm:$0xf] %v201
                %v203 = vld [vmem:[%s197 + $0x10] sm:$0xf]
                %204 = vst [vmem:[%s198 + $0x8] sm:$0xf] %v203
                %v205 = vld [vmem:[%s197 + $0x18] sm:$0xf]
                %206 = vst [vmem:[%s198 + $0xc] sm:$0xf] %v205
                %v207 = vld [vmem:[%s197 + $0x20] sm:$0xf]
                %208 = vst [vmem:[%s198 + $0x10] sm:$0xf] %v207
                %v209 = vld [vmem:[%s197 + $0x28] sm:$0xf]
                %210 = vst [vmem:[%s198 + $0x14] sm:$0xf] %v209
                %v211 = vld [vmem:[%s197 + $0x30] sm:$0xf]
                %212 = vst [vmem:[%s198 + $0x18] sm:$0xf] %v211
                %v213 = vld [vmem:[%s197 + $0x38] sm:$0xf]
                %214 = vst [vmem:[%s198 + $0x1c] sm:$0xf] %v213
                %v215 = vld [vmem:[%s197 + $0x40] sm:$0xf]
                %216 = vst [vmem:[%s198 + $0x20] sm:$0xf] %v215
                %v217 = vld [vmem:[%s197 + $0x48] sm:$0xf]
                %218 = vst [vmem:[%s198 + $0x24] sm:$0xf] %v217
                %v219 = vld [vmem:[%s197 + $0x50] sm:$0xf]
                %220 = vst [vmem:[%s198 + $0x28] sm:$0xf] %v219
                %v221 = vld [vmem:[%s197 + $0x58] sm:$0xf]
                %222 = vst [vmem:[%s198 + $0x2c] sm:$0xf] %v221
                %v223 = vld [vmem:[%s197 + $0x60] sm:$0xf]
                %224 = vst [vmem:[%s198 + $0x30] sm:$0xf] %v223
                %v225 = vld [vmem:[%s197 + $0x68] sm:$0xf]
                %226 = vst [vmem:[%s198 + $0x34] sm:$0xf] %v225
                %v227 = vld [vmem:[%s197 + $0x70] sm:$0xf]
                %228 = vst [vmem:[%s198 + $0x38] sm:$0xf] %v227
                %v229 = vld [vmem:[%s197 + $0x78] sm:$0xf]
                %230 = vst [vmem:[%s198 + $0x3c] sm:$0xf] %v229
                %v231 = vld [vmem:[%s197 + $0x80] sm:$0xf]
                %232 = vst [vmem:[%s198 + $0x40] sm:$0xf] %v231
                %v233 = vld [vmem:[%s197 + $0x88] sm:$0xf]
                %234 = vst [vmem:[%s198 + $0x44] sm:$0xf] %v233
                %v235 = vld [vmem:[%s197 + $0x90] sm:$0xf]
                %236 = vst [vmem:[%s198 + $0x48] sm:$0xf] %v235
                %v237 = vld [vmem:[%s197 + $0x98] sm:$0xf]
                %238 = vst [vmem:[%s198 + $0x4c] sm:$0xf] %v237
                %v239 = vld [vmem:[%s197 + $0xa0] sm:$0xf]
                %240 = vst [vmem:[%s198 + $0x50] sm:$0xf] %v239
                %v241 = vld [vmem:[%s197 + $0xa8] sm:$0xf]
                %242 = vst [vmem:[%s198 + $0x54] sm:$0xf] %v241
                %v243 = vld [vmem:[%s197 + $0xb0] sm:$0xf]
                %244 = vst [vmem:[%s198 + $0x58] sm:$0xf] %v243
                %v245 = vld [vmem:[%s197 + $0xb8] sm:$0xf]
                %246 = vst [vmem:[%s198 + $0x5c] sm:$0xf] %v245
                %v247 = vld [vmem:[%s197 + $0xc0] sm:$0xf]
                %248 = vst [vmem:[%s198 + $0x60] sm:$0xf] %v247
                %v249 = vld [vmem:[%s197 + $0xc8] sm:$0xf]
                %250 = vst [vmem:[%s198 + $0x64] sm:$0xf] %v249
                %v251 = vld [vmem:[%s197 + $0xd0] sm:$0xf]
                %252 = vst [vmem:[%s198 + $0x68] sm:$0xf] %v251
                %v253 = vld [vmem:[%s197 + $0xd8] sm:$0xf]
                %254 = vst [vmem:[%s198 + $0x6c] sm:$0xf] %v253
                %v255 = vld [vmem:[%s197 + $0xe0] sm:$0xf]
                %256 = vst [vmem:[%s198 + $0x70] sm:$0xf] %v255
                %v257 = vld [vmem:[%s197 + $0xe8] sm:$0xf]
                %258 = vst [vmem:[%s198 + $0x74] sm:$0xf] %v257
                %v259 = vld [vmem:[%s197 + $0xf0] sm:$0xf]
                %260 = vst [vmem:[%s198 + $0x78] sm:$0xf] %v259
                %v261 = vld [vmem:[%s197 + $0xf8] sm:$0xf]
                %262 = vst [vmem:[%s198 + $0x7c] sm:$0xf] %v261
                %v263 = vld [vmem:[%s197 + $0x100] sm:$0xf]
                %264 = vst [vmem:[%s198 + $0x80] sm:$0xf] %v263
                %v265 = vld [vmem:[%s197 + $0x108] sm:$0xf]
                %266 = vst [vmem:[%s198 + $0x84] sm:$0xf] %v265
                %v267 = vld [vmem:[%s197 + $0x110] sm:$0xf]
                %268 = vst [vmem:[%s198 + $0x88] sm:$0xf] %v267
                %v269 = vld [vmem:[%s197 + $0x118] sm:$0xf]
                %270 = vst [vmem:[%s198 + $0x8c] sm:$0xf] %v269
                %v271 = vld [vmem:[%s197 + $0x120] sm:$0xf]
                %272 = vst [vmem:[%s198 + $0x90] sm:$0xf] %v271
                %v273 = vld [vmem:[%s197 + $0x128] sm:$0xf]
                %274 = vst [vmem:[%s198 + $0x94] sm:$0xf] %v273
                %v275 = vld [vmem:[%s197 + $0x130] sm:$0xf]
                %276 = vst [vmem:[%s198 + $0x98] sm:$0xf] %v275
                %v277 = vld [vmem:[%s197 + $0x138] sm:$0xf]
                %278 = vst [vmem:[%s198 + $0x9c] sm:$0xf] %v277
                %v279 = vld [vmem:[%s197 + $0x140] sm:$0xf]
                %280 = vst [vmem:[%s198 + $0xa0] sm:$0xf] %v279
                %v281 = vld [vmem:[%s197 + $0x148] sm:$0xf]
                %282 = vst [vmem:[%s198 + $0xa4] sm:$0xf] %v281
                %v283 = vld [vmem:[%s197 + $0x150] sm:$0xf]
                %284 = vst [vmem:[%s198 + $0xa8] sm:$0xf] %v283
                %v285 = vld [vmem:[%s197 + $0x158] sm:$0xf]
                %286 = vst [vmem:[%s198 + $0xac] sm:$0xf] %v285
                %v287 = vld [vmem:[%s197 + $0x160] sm:$0xf]
                %288 = vst [vmem:[%s198 + $0xb0] sm:$0xf] %v287
                %v289 = vld [vmem:[%s197 + $0x168] sm:$0xf]
                %290 = vst [vmem:[%s198 + $0xb4] sm:$0xf] %v289
                %v291 = vld [vmem:[%s197 + $0x170] sm:$0xf]
                %292 = vst [vmem:[%s198 + $0xb8] sm:$0xf] %v291
                %v293 = vld [vmem:[%s197 + $0x178] sm:$0xf]
                %294 = vst [vmem:[%s198 + $0xbc] sm:$0xf] %v293
                %v295 = vld [vmem:[%s197 + $0x180] sm:$0xf]
                %296 = vst [vmem:[%s198 + $0xc0] sm:$0xf] %v295
                %v297 = vld [vmem:[%s197 + $0x188] sm:$0xf]
                %298 = vst [vmem:[%s198 + $0xc4] sm:$0xf] %v297
                %v299 = vld [vmem:[%s197 + $0x190] sm:$0xf]
                %300 = vst [vmem:[%s198 + $0xc8] sm:$0xf] %v299
                %v301 = vld [vmem:[%s197 + $0x198] sm:$0xf]
                %302 = vst [vmem:[%s198 + $0xcc] sm:$0xf] %v301
                %v303 = vld [vmem:[%s197 + $0x1a0] sm:$0xf]
                %304 = vst [vmem:[%s198 + $0xd0] sm:$0xf] %v303
                %v305 = vld [vmem:[%s197 + $0x1a8] sm:$0xf]
                %306 = vst [vmem:[%s198 + $0xd4] sm:$0xf] %v305
                %v307 = vld [vmem:[%s197 + $0x1b0] sm:$0xf]
                %308 = vst [vmem:[%s198 + $0xd8] sm:$0xf] %v307
                %v309 = vld [vmem:[%s197 + $0x1b8] sm:$0xf]
                %310 = vst [vmem:[%s198 + $0xdc] sm:$0xf] %v309
                %v311 = vld [vmem:[%s197 + $0x1c0] sm:$0xf]
                %312 = vst [vmem:[%s198 + $0xe0] sm:$0xf] %v311
                %v313 = vld [vmem:[%s197 + $0x1c8] sm:$0xf]
                %314 = vst [vmem:[%s198 + $0xe4] sm:$0xf] %v313
                %v315 = vld [vmem:[%s197 + $0x1d0] sm:$0xf]
                %316 = vst [vmem:[%s198 + $0xe8] sm:$0xf] %v315
                %v317 = vld [vmem:[%s197 + $0x1d8] sm:$0xf]
                %318 = vst [vmem:[%s198 + $0xec] sm:$0xf] %v317
                %v319 = vld [vmem:[%s197 + $0x1e0] sm:$0xf]
                %320 = vst [vmem:[%s198 + $0xf0] sm:$0xf] %v319
                %v321 = vld [vmem:[%s197 + $0x1e8] sm:$0xf]
                %322 = vst [vmem:[%s198 + $0xf4] sm:$0xf] %v321
                %v323 = vld [vmem:[%s197 + $0x1f0] sm:$0xf]
                %324 = vst [vmem:[%s198 + $0xf8] sm:$0xf] %v323
                %v325 = vld [vmem:[%s197 + $0x1f8] sm:$0xf]
                %326 = vst [vmem:[%s198 + $0xfc] sm:$0xf] %v325
                %v327 = vld [vmem:[%s197 + $0x200] sm:$0xf]
                %328 = vst [vmem:[%s198 + $0x100] sm:$0xf] %v327
                %v329 = vld [vmem:[%s197 + $0x208] sm:$0xf]
                %330 = vst [vmem:[%s198 + $0x104] sm:$0xf] %v329
                %v331 = vld [vmem:[%s197 + $0x210] sm:$0xf]
                %332 = vst [vmem:[%s198 + $0x108] sm:$0xf] %v331
                %v333 = vld [vmem:[%s197 + $0x218] sm:$0xf]
                %334 = vst [vmem:[%s198 + $0x10c] sm:$0xf] %v333
                %v335 = vld [vmem:[%s197 + $0x220] sm:$0xf]
                %336 = vst [vmem:[%s198 + $0x110] sm:$0xf] %v335
                %v337 = vld [vmem:[%s197 + $0x228] sm:$0xf]
                %338 = vst [vmem:[%s198 + $0x114] sm:$0xf] %v337
                %v339 = vld [vmem:[%s197 + $0x230] sm:$0xf]
                %340 = vst [vmem:[%s198 + $0x118] sm:$0xf] %v339
                %v341 = vld [vmem:[%s197 + $0x238] sm:$0xf]
                %342 = vst [vmem:[%s198 + $0x11c] sm:$0xf] %v341
                %v343 = vld [vmem:[%s197 + $0x240] sm:$0xf]
                %344 = vst [vmem:[%s198 + $0x120] sm:$0xf] %v343
                %v345 = vld [vmem:[%s197 + $0x248] sm:$0xf]
                %346 = vst [vmem:[%s198 + $0x124] sm:$0xf] %v345
                %v347 = vld [vmem:[%s197 + $0x250] sm:$0xf]
                %348 = vst [vmem:[%s198 + $0x128] sm:$0xf] %v347
                %v349 = vld [vmem:[%s197 + $0x258] sm:$0xf]
                %350 = vst [vmem:[%s198 + $0x12c] sm:$0xf] %v349
                %v351 = vld [vmem:[%s197 + $0x260] sm:$0xf]
                %352 = vst [vmem:[%s198 + $0x130] sm:$0xf] %v351
                %v353 = vld [vmem:[%s197 + $0x268] sm:$0xf]
                %354 = vst [vmem:[%s198 + $0x134] sm:$0xf] %v353
                %v355 = vld [vmem:[%s197 + $0x270] sm:$0xf]
                %356 = vst [vmem:[%s198 + $0x138] sm:$0xf] %v355
                %v357 = vld [vmem:[%s197 + $0x278] sm:$0xf]
                %358 = vst [vmem:[%s198 + $0x13c] sm:$0xf] %v357
                %v359 = vld [vmem:[%s197 + $0x280] sm:$0xf]
                %360 = vst [vmem:[%s198 + $0x140] sm:$0xf] %v359
                %v361 = vld [vmem:[%s197 + $0x288] sm:$0xf]
                %362 = vst [vmem:[%s198 + $0x144] sm:$0xf] %v361
                %v363 = vld [vmem:[%s197 + $0x290] sm:$0xf]
                %364 = vst [vmem:[%s198 + $0x148] sm:$0xf] %v363
                %v365 = vld [vmem:[%s197 + $0x298] sm:$0xf]
                %366 = vst [vmem:[%s198 + $0x14c] sm:$0xf] %v365
                %v367 = vld [vmem:[%s197 + $0x2a0] sm:$0xf]
                %368 = vst [vmem:[%s198 + $0x150] sm:$0xf] %v367
                %v369 = vld [vmem:[%s197 + $0x2a8] sm:$0xf]
                %370 = vst [vmem:[%s198 + $0x154] sm:$0xf] %v369
                %v371 = vld [vmem:[%s197 + $0x2b0] sm:$0xf]
                %372 = vst [vmem:[%s198 + $0x158] sm:$0xf] %v371
                %v373 = vld [vmem:[%s197 + $0x2b8] sm:$0xf]
                %374 = vst [vmem:[%s198 + $0x15c] sm:$0xf] %v373
                %v375 = vld [vmem:[%s197 + $0x2c0] sm:$0xf]
                %376 = vst [vmem:[%s198 + $0x160] sm:$0xf] %v375
                %v377 = vld [vmem:[%s197 + $0x2c8] sm:$0xf]
                %378 = vst [vmem:[%s198 + $0x164] sm:$0xf] %v377
                %v379 = vld [vmem:[%s197 + $0x2d0] sm:$0xf]
                %380 = vst [vmem:[%s198 + $0x168] sm:$0xf] %v379
                %v381 = vld [vmem:[%s197 + $0x2d8] sm:$0xf]
                %382 = vst [vmem:[%s198 + $0x16c] sm:$0xf] %v381
                %v383 = vld [vmem:[%s197 + $0x2e0] sm:$0xf]
                %384 = vst [vmem:[%s198 + $0x170] sm:$0xf] %v383
                %v385 = vld [vmem:[%s197 + $0x2e8] sm:$0xf]
                %386 = vst [vmem:[%s198 + $0x174] sm:$0xf] %v385
                %v387 = vld [vmem:[%s197 + $0x2f0] sm:$0xf]
                %388 = vst [vmem:[%s198 + $0x178] sm:$0xf] %v387
                %v389 = vld [vmem:[%s197 + $0x2f8] sm:$0xf]
                %390 = vst [vmem:[%s198 + $0x17c] sm:$0xf] %v389
                %v391 = vld [vmem:[%s197 + $0x300] sm:$0xf]
                %392 = vst [vmem:[%s198 + $0x180] sm:$0xf] %v391
                %v393 = vld [vmem:[%s197 + $0x308] sm:$0xf]
                %394 = vst [vmem:[%s198 + $0x184] sm:$0xf] %v393
                %v395 = vld [vmem:[%s197 + $0x310] sm:$0xf]
                %396 = vst [vmem:[%s198 + $0x188] sm:$0xf] %v395
                %v397 = vld [vmem:[%s197 + $0x318] sm:$0xf]
                %398 = vst [vmem:[%s198 + $0x18c] sm:$0xf] %v397
                %v399 = vld [vmem:[%s197 + $0x320] sm:$0xf]
                %400 = vst [vmem:[%s198 + $0x190] sm:$0xf] %v399
                %v401 = vld [vmem:[%s197 + $0x328] sm:$0xf]
                %402 = vst [vmem:[%s198 + $0x194] sm:$0xf] %v401
                %v403 = vld [vmem:[%s197 + $0x330] sm:$0xf]
                %404 = vst [vmem:[%s198 + $0x198] sm:$0xf] %v403
                %v405 = vld [vmem:[%s197 + $0x338] sm:$0xf]
                %406 = vst [vmem:[%s198 + $0x19c] sm:$0xf] %v405
                %v407 = vld [vmem:[%s197 + $0x340] sm:$0xf]
                %408 = vst [vmem:[%s198 + $0x1a0] sm:$0xf] %v407
                %v409 = vld [vmem:[%s197 + $0x348] sm:$0xf]
                %410 = vst [vmem:[%s198 + $0x1a4] sm:$0xf] %v409
                %v411 = vld [vmem:[%s197 + $0x350] sm:$0xf]
                %412 = vst [vmem:[%s198 + $0x1a8] sm:$0xf] %v411
                %v413 = vld [vmem:[%s197 + $0x358] sm:$0xf]
                %414 = vst [vmem:[%s198 + $0x1ac] sm:$0xf] %v413
                %v415 = vld [vmem:[%s197 + $0x360] sm:$0xf]
                %416 = vst [vmem:[%s198 + $0x1b0] sm:$0xf] %v415
                %v417 = vld [vmem:[%s197 + $0x368] sm:$0xf]
                %418 = vst [vmem:[%s198 + $0x1b4] sm:$0xf] %v417
                %v419 = vld [vmem:[%s197 + $0x370] sm:$0xf]
                %420 = vst [vmem:[%s198 + $0x1b8] sm:$0xf] %v419
                %v421 = vld [vmem:[%s197 + $0x378] sm:$0xf]
                %422 = vst [vmem:[%s198 + $0x1bc] sm:$0xf] %v421
                %v423 = vld [vmem:[%s197 + $0x380] sm:$0xf]
                %424 = vst [vmem:[%s198 + $0x1c0] sm:$0xf] %v423
                %v425 = vld [vmem:[%s197 + $0x388] sm:$0xf]
                %426 = vst [vmem:[%s198 + $0x1c4] sm:$0xf] %v425
                %v427 = vld [vmem:[%s197 + $0x390] sm:$0xf]
                %428 = vst [vmem:[%s198 + $0x1c8] sm:$0xf] %v427
                %v429 = vld [vmem:[%s197 + $0x398] sm:$0xf]
                %430 = vst [vmem:[%s198 + $0x1cc] sm:$0xf] %v429
                %v431 = vld [vmem:[%s197 + $0x3a0] sm:$0xf]
                %432 = vst [vmem:[%s198 + $0x1d0] sm:$0xf] %v431
                %v433 = vld [vmem:[%s197 + $0x3a8] sm:$0xf]
                %434 = vst [vmem:[%s198 + $0x1d4] sm:$0xf] %v433
                %v435 = vld [vmem:[%s197 + $0x3b0] sm:$0xf]
                %436 = vst [vmem:[%s198 + $0x1d8] sm:$0xf] %v435
                %v437 = vld [vmem:[%s197 + $0x3b8] sm:$0xf]
                %438 = vst [vmem:[%s198 + $0x1dc] sm:$0xf] %v437
                %v439 = vld [vmem:[%s197 + $0x3c0] sm:$0xf]
                %440 = vst [vmem:[%s198 + $0x1e0] sm:$0xf] %v439
                %v441 = vld [vmem:[%s197 + $0x3c8] sm:$0xf]
                %442 = vst [vmem:[%s198 + $0x1e4] sm:$0xf] %v441
                %v443 = vld [vmem:[%s197 + $0x3d0] sm:$0xf]
                %444 = vst [vmem:[%s198 + $0x1e8] sm:$0xf] %v443
                %v445 = vld [vmem:[%s197 + $0x3d8] sm:$0xf]
                %446 = vst [vmem:[%s198 + $0x1ec] sm:$0xf] %v445
                %v447 = vld [vmem:[%s197 + $0x3e0] sm:$0xf]
                %448 = vst [vmem:[%s198 + $0x1f0] sm:$0xf] %v447
                %v449 = vld [vmem:[%s197 + $0x3e8] sm:$0xf]
                %450 = vst [vmem:[%s198 + $0x1f4] sm:$0xf] %v449
                %v451 = vld [vmem:[%s197 + $0x3f0] sm:$0xf]
                %452 = vst [vmem:[%s198 + $0x1f8] sm:$0xf] %v451
                %v453 = vld [vmem:[%s197 + $0x3f8] sm:$0xf]
                %454 = vst [vmem:[%s198 + $0x1fc] sm:$0xf] %v453
                %v455 = vld [vmem:[%s197 + $0x400] sm:$0xf]
                %456 = vst [vmem:[%s198 + $0x200] sm:$0xf] %v455
                %v457 = vld [vmem:[%s197 + $0x408] sm:$0xf]
                %458 = vst [vmem:[%s198 + $0x204] sm:$0xf] %v457
                %v459 = vld [vmem:[%s197 + $0x410] sm:$0xf]
                %460 = vst [vmem:[%s198 + $0x208] sm:$0xf] %v459
                %v461 = vld [vmem:[%s197 + $0x418] sm:$0xf]
                %462 = vst [vmem:[%s198 + $0x20c] sm:$0xf] %v461
                %v463 = vld [vmem:[%s197 + $0x420] sm:$0xf]
                %464 = vst [vmem:[%s198 + $0x210] sm:$0xf] %v463
                %v465 = vld [vmem:[%s197 + $0x428] sm:$0xf]
                %466 = vst [vmem:[%s198 + $0x214] sm:$0xf] %v465
                %v467 = vld [vmem:[%s197 + $0x430] sm:$0xf]
                %468 = vst [vmem:[%s198 + $0x218] sm:$0xf] %v467
                %v469 = vld [vmem:[%s197 + $0x438] sm:$0xf]
                %470 = vst [vmem:[%s198 + $0x21c] sm:$0xf] %v469
                %v471 = vld [vmem:[%s197 + $0x440] sm:$0xf]
                %472 = vst [vmem:[%s198 + $0x220] sm:$0xf] %v471
                %v473 = vld [vmem:[%s197 + $0x448] sm:$0xf]
                %474 = vst [vmem:[%s198 + $0x224] sm:$0xf] %v473
                %v475 = vld [vmem:[%s197 + $0x450] sm:$0xf]
                %476 = vst [vmem:[%s198 + $0x228] sm:$0xf] %v475
                %v477 = vld [vmem:[%s197 + $0x458] sm:$0xf]
                %478 = vst [vmem:[%s198 + $0x22c] sm:$0xf] %v477
                %v479 = vld [vmem:[%s197 + $0x460] sm:$0xf]
                %480 = vst [vmem:[%s198 + $0x230] sm:$0xf] %v479
                %v481 = vld [vmem:[%s197 + $0x468] sm:$0xf]
                %482 = vst [vmem:[%s198 + $0x234] sm:$0xf] %v481
                %v483 = vld [vmem:[%s197 + $0x470] sm:$0xf]
                %484 = vst [vmem:[%s198 + $0x238] sm:$0xf] %v483
                %v485 = vld [vmem:[%s197 + $0x478] sm:$0xf]
                %486 = vst [vmem:[%s198 + $0x23c] sm:$0xf] %v485
              $region41: #{_lambda_.11} parent=35 // loop_footer
                %s196 = sadd.s32 1, %s192
              $region42: #{_lambda_.11} parent=35 // loop_footer_branch
                %191 = sbr.rel target = $region38
              $region43: #{_lambda_.11} parent=35 // loop_exit
                _
            $region36: #{_lambda_.11} parent=27 // pred_fallthru
              _
          $region28: #{_lambda_.11} parent=23 // pred_fallthru
            _
          %794 = vnop
        $region24: #{_lambda_.11} parent=19 // pred_fallthru
          _
        // Predicated region
        $region62: #{_lambda_.11} parent=19 // pred_check
          %p795 = pneg %p104
        $region63: #{_lambda_.11} parent=19 // pred_check_branch
          %797 = sbr.rel (%p795) target = $region65
        $region64: #{_lambda_.11} parent=19 // pred_region
          %p798 = scmp.lt.s32.totalorder %s17, 1
          %s799 = scalar_select %p798, %s17, 1
          %s800 = scalar_lea.vmem %s2, %s799
        $region65: #{_lambda_.11} parent=19 // pred_fallthru
          _
      $region20: #{_lambda_.11} parent=5 // pred_fallthru
        _
      %p801 = scmp.le.s32.totalorder 1, %s9
      %p802 = scmp.lt.s32.totalorder %s9, 3
      %p803 = pnand %p801, %p802
      %p804 = pneg %p803
      // Predicated region
      $region66: #{_lambda_.11} parent=5 // pred_check
        _
      $region67: #{_lambda_.11} parent=5 // pred_check_branch
        %806 = sbr.rel (%p803) target = $region69
      $region68: #{_lambda_.11} parent=5 // pred_region
        %s807 = ssub.s32 %s9, 1
        %s808 = sand.u32 %s71, 1
        %s809 = sand.u32 %s71, 1
        %s810 = smul.addr %s809, 576
        %s811 = scalar_lea.vmem [#allocation3], %s810
        // Predicated region
        $region70: #{_lambda_.11} parent=68 // pred_check
          %p812 = pneg %p84
        $region71: #{_lambda_.11} parent=68 // pred_check_branch
          %814 = sbr.rel (%p812) target = $region73
        $region72: #{_lambda_.11} parent=68 // pred_region
          _
        $region73: #{_lambda_.11} parent=68 // pred_fallthru
          _
        %s815 = smul.u32 2, %s19
        %s816 = smul.u32 9, %s21
        %p817 = scmp.lt.s32.totalorder %s815, 1
        %s818 = scalar_select %p817, %s815, 1
        %p819 = scmp.lt.s32.totalorder %s816, 8
        %s820 = scalar_select %p819, %s816, 8
        %s821 = smul.addr %s818, 9
        %s822 = sadd.s32 %s820, %s821
        %s823 = smul.addr %s822, 4
        %s824 = scalar_lea.vmem %s0, %s823
        %p825 = pneg %p56
        %p826 = pneg %p53
        %s827 = sand.u32 %s71, 1
        %s828 = sand.u32 %s71, 1
        %s829 = smul.addr %s828, 576
        %s830 = scalar_lea.vmem [#allocation3], %s829
        %p831 = pneg %p84
        %p832 = pneg %p81
        %p833 = scmp.lt.s32.totalorder %s20, 1
        %s834 = scalar_select %p833, %s20, 1
        %s835 = scalar_lea.vmem %s2, %s834
        %p836 = pneg %p110
        %p837 = pneg %p107
        %p838 = pneg %p138
        %p839 = pneg %p135
        %s840 = sand.u32 %s125, 1
        %s841 = sand.u32 %s125, 1
        %s842 = smul.addr %s841, 8
        %s843 = scalar_lea.vmem [#allocation4], %s842
        %s844 = smul.u32 2, %s19
        %s845 = smul.u32 9, %s21
        %p846 = scmp.lt.s32.totalorder %s844, 1
        %s847 = scalar_select %p846, %s844, 1
        %p848 = scmp.lt.s32.totalorder %s845, 8
        %s849 = scalar_select %p848, %s845, 8
        %s850 = smul.addr %s847, 9
        %s851 = sadd.s32 %s849, %s850
        %s852 = smul.addr %s851, 4
        %s853 = scalar_lea.vmem %s0, %s852
        %s854 = smul.u32 2, %s19
        %s855 = smul.u32 9, %s21
        %s856 = smul.u32 144, %s21
        %p857 = scmp.lt.s32.totalorder %s20, 1
        %s858 = scalar_select %p857, %s20, 1
        %s859 = scalar_lea.vmem %s2, %s858
        %s860 = smul.u32 2, %s19
        %p862 = scmp.eq.s32.totalorder %s21, 0
        // Predicated region
        $region74: #{_lambda_.11} parent=68 // pred_check
          %p863 = pneg %p862
        $region75: #{_lambda_.11} parent=68 // pred_check_branch
          %865 = sbr.rel (%p863) target = $region77
        $region76: #{_lambda_.11} parent=68 // pred_region
          %866 = vst [vmem:[#allocation2] sm:$0xff] 0.0
          %867 = vst [vmem:[#allocation2 + $0x8] sm:$0xff] 0.0
        $region77: #{_lambda_.11} parent=68 // pred_fallthru
          _
        %v868 = vld [vmem:[#allocation2] sm:$0xff]
        %v869 = vld [vmem:[#allocation2 + $0x8] sm:$0xff]
        %v870 = vld [vmem:[%s853] sm:$0xff]
        %v871 = vld [vmem:[%s853 + $0x8] sm:$0xff]
        %v872 = vld [vmem:[%s853 + $0x10] sm:$0xff]
        %v873 = vld [vmem:[%s853 + $0x18] sm:$0xff]
        %v874 = vld [vmem:[%s853 + $0x20] sm:$0xf]
        %v875 = vld [vmem:[%s853 + $0x24] sm:$0xff]
        %v876 = vld [vmem:[%s853 + $0x2c] sm:$0xff]
        %v877 = vld [vmem:[%s853 + $0x34] sm:$0xff]
        %v878 = vld [vmem:[%s853 + $0x3c] sm:$0xff]
        %v879 = vld [vmem:[%s853 + $0x44] sm:$0xf]
        %v880 = vld [vmem:[%s811] sm:$0xf]
        %v881 = vld [vmem:[%s811 + $0x4] sm:$0xf]
        %v882 = vld [vmem:[%s811 + $0x8] sm:$0xf]
        %v883 = vld [vmem:[%s811 + $0xc] sm:$0xf]
        %v884 = vld [vmem:[%s811 + $0x10] sm:$0xf]
        %v885 = vld [vmem:[%s811 + $0x14] sm:$0xf]
        %v886 = vld [vmem:[%s811 + $0x18] sm:$0xf]
        %v887 = vld [vmem:[%s811 + $0x1c] sm:$0xf]
        %v888 = vld [vmem:[%s811 + $0x20] sm:$0xf]
        %v889 = vld [vmem:[%s811 + $0x24] sm:$0xf]
        %v890 = vld [vmem:[%s811 + $0x28] sm:$0xf]
        %v891 = vld [vmem:[%s811 + $0x2c] sm:$0xf]
        %v892 = vld [vmem:[%s811 + $0x30] sm:$0xf]
        %v893 = vld [vmem:[%s811 + $0x34] sm:$0xf]
        %v894 = vld [vmem:[%s811 + $0x38] sm:$0xf]
        %v895 = vld [vmem:[%s811 + $0x3c] sm:$0xf]
        %v896 = vld [vmem:[%s811 + $0x40] sm:$0xf]
        %v897 = vld [vmem:[%s811 + $0x44] sm:$0xf]
        %v898 = vld [vmem:[%s811 + $0x48] sm:$0xf]
        %v899 = vld [vmem:[%s811 + $0x4c] sm:$0xf]
        %v900 = vld [vmem:[%s811 + $0x50] sm:$0xf]
        %v901 = vld [vmem:[%s811 + $0x54] sm:$0xf]
        %v902 = vld [vmem:[%s811 + $0x58] sm:$0xf]
        %v903 = vld [vmem:[%s811 + $0x5c] sm:$0xf]
        %v904 = vld [vmem:[%s811 + $0x60] sm:$0xf]
        %v905 = vld [vmem:[%s811 + $0x64] sm:$0xf]
        %v906 = vld [vmem:[%s811 + $0x68] sm:$0xf]
        %v907 = vld [vmem:[%s811 + $0x6c] sm:$0xf]
        %v908 = vld [vmem:[%s811 + $0x70] sm:$0xf]
        %v909 = vld [vmem:[%s811 + $0x74] sm:$0xf]
        %v910 = vld [vmem:[%s811 + $0x78] sm:$0xf]
        %v911 = vld [vmem:[%s811 + $0x7c] sm:$0xf]
        %v912 = vld [vmem:[%s811 + $0x80] sm:$0xf]
        %v913 = vld [vmem:[%s811 + $0x84] sm:$0xf]
        %v914 = vld [vmem:[%s811 + $0x88] sm:$0xf]
        %v915 = vld [vmem:[%s811 + $0x8c] sm:$0xf]
        %v916 = vld [vmem:[%s811 + $0x90] sm:$0xf]
        %v917 = vld [vmem:[%s811 + $0x94] sm:$0xf]
        %v918 = vld [vmem:[%s811 + $0x98] sm:$0xf]
        %v919 = vld [vmem:[%s811 + $0x9c] sm:$0xf]
        %v920 = vld [vmem:[%s811 + $0xa0] sm:$0xf]
        %v921 = vld [vmem:[%s811 + $0xa4] sm:$0xf]
        %v922 = vld [vmem:[%s811 + $0xa8] sm:$0xf]
        %v923 = vld [vmem:[%s811 + $0xac] sm:$0xf]
        %v924 = vld [vmem:[%s811 + $0xb0] sm:$0xf]
        %v925 = vld [vmem:[%s811 + $0xb4] sm:$0xf]
        %v926 = vld [vmem:[%s811 + $0xb8] sm:$0xf]
        %v927 = vld [vmem:[%s811 + $0xbc] sm:$0xf]
        %v928 = vld [vmem:[%s811 + $0xc0] sm:$0xf]
        %v929 = vld [vmem:[%s811 + $0xc4] sm:$0xf]
        %v930 = vld [vmem:[%s811 + $0xc8] sm:$0xf]
        %v931 = vld [vmem:[%s811 + $0xcc] sm:$0xf]
        %v932 = vld [vmem:[%s811 + $0xd0] sm:$0xf]
        %v933 = vld [vmem:[%s811 + $0xd4] sm:$0xf]
        %v934 = vld [vmem:[%s811 + $0xd8] sm:$0xf]
        %v935 = vld [vmem:[%s811 + $0xdc] sm:$0xf]
        %v936 = vld [vmem:[%s811 + $0xe0] sm:$0xf]
        %v937 = vld [vmem:[%s811 + $0xe4] sm:$0xf]
        %v938 = vld [vmem:[%s811 + $0xe8] sm:$0xf]
        %v939 = vld [vmem:[%s811 + $0xec] sm:$0xf]
        %v940 = vld [vmem:[%s811 + $0xf0] sm:$0xf]
        %v941 = vld [vmem:[%s811 + $0xf4] sm:$0xf]
        %v942 = vld [vmem:[%s811 + $0xf8] sm:$0xf]
        %v943 = vld [vmem:[%s811 + $0xfc] sm:$0xf]
        %v944 = vld [vmem:[%s811 + $0x100] sm:$0xf]
        %v945 = vld [vmem:[%s811 + $0x104] sm:$0xf]
        %v946 = vld [vmem:[%s811 + $0x108] sm:$0xf]
        %v947 = vld [vmem:[%s811 + $0x10c] sm:$0xf]
        %v948 = vld [vmem:[%s811 + $0x110] sm:$0xf]
        %v949 = vld [vmem:[%s811 + $0x114] sm:$0xf]
        %v950 = vld [vmem:[%s811 + $0x118] sm:$0xf]
        %v951 = vld [vmem:[%s811 + $0x11c] sm:$0xf]
        %v952 = vld [vmem:[%s811 + $0x120] sm:$0xf]
        %v953 = vld [vmem:[%s811 + $0x124] sm:$0xf]
        %v954 = vld [vmem:[%s811 + $0x128] sm:$0xf]
        %v955 = vld [vmem:[%s811 + $0x12c] sm:$0xf]
        %v956 = vld [vmem:[%s811 + $0x130] sm:$0xf]
        %v957 = vld [vmem:[%s811 + $0x134] sm:$0xf]
        %v958 = vld [vmem:[%s811 + $0x138] sm:$0xf]
        %v959 = vld [vmem:[%s811 + $0x13c] sm:$0xf]
        %v960 = vld [vmem:[%s811 + $0x140] sm:$0xf]
        %v961 = vld [vmem:[%s811 + $0x144] sm:$0xf]
        %v962 = vld [vmem:[%s811 + $0x148] sm:$0xf]
        %v963 = vld [vmem:[%s811 + $0x14c] sm:$0xf]
        %v964 = vld [vmem:[%s811 + $0x150] sm:$0xf]
        %v965 = vld [vmem:[%s811 + $0x154] sm:$0xf]
        %v966 = vld [vmem:[%s811 + $0x158] sm:$0xf]
        %v967 = vld [vmem:[%s811 + $0x15c] sm:$0xf]
        %v968 = vld [vmem:[%s811 + $0x160] sm:$0xf]
        %v969 = vld [vmem:[%s811 + $0x164] sm:$0xf]
        %v970 = vld [vmem:[%s811 + $0x168] sm:$0xf]
        %v971 = vld [vmem:[%s811 + $0x16c] sm:$0xf]
        %v972 = vld [vmem:[%s811 + $0x170] sm:$0xf]
        %v973 = vld [vmem:[%s811 + $0x174] sm:$0xf]
        %v974 = vld [vmem:[%s811 + $0x178] sm:$0xf]
        %v975 = vld [vmem:[%s811 + $0x17c] sm:$0xf]
        %v976 = vld [vmem:[%s811 + $0x180] sm:$0xf]
        %v977 = vld [vmem:[%s811 + $0x184] sm:$0xf]
        %v978 = vld [vmem:[%s811 + $0x188] sm:$0xf]
        %v979 = vld [vmem:[%s811 + $0x18c] sm:$0xf]
        %v980 = vld [vmem:[%s811 + $0x190] sm:$0xf]
        %v981 = vld [vmem:[%s811 + $0x194] sm:$0xf]
        %v982 = vld [vmem:[%s811 + $0x198] sm:$0xf]
        %v983 = vld [vmem:[%s811 + $0x19c] sm:$0xf]
        %v984 = vld [vmem:[%s811 + $0x1a0] sm:$0xf]
        %v985 = vld [vmem:[%s811 + $0x1a4] sm:$0xf]
        %v986 = vld [vmem:[%s811 + $0x1a8] sm:$0xf]
        %v987 = vld [vmem:[%s811 + $0x1ac] sm:$0xf]
        %v988 = vld [vmem:[%s811 + $0x1b0] sm:$0xf]
        %v989 = vld [vmem:[%s811 + $0x1b4] sm:$0xf]
        %v990 = vld [vmem:[%s811 + $0x1b8] sm:$0xf]
        %v991 = vld [vmem:[%s811 + $0x1bc] sm:$0xf]
        %v992 = vld [vmem:[%s811 + $0x1c0] sm:$0xf]
        %v993 = vld [vmem:[%s811 + $0x1c4] sm:$0xf]
        %v994 = vld [vmem:[%s811 + $0x1c8] sm:$0xf]
        %v995 = vld [vmem:[%s811 + $0x1cc] sm:$0xf]
        %v996 = vld [vmem:[%s811 + $0x1d0] sm:$0xf]
        %v997 = vld [vmem:[%s811 + $0x1d4] sm:$0xf]
        %v998 = vld [vmem:[%s811 + $0x1d8] sm:$0xf]
        %v999 = vld [vmem:[%s811 + $0x1dc] sm:$0xf]
        %v1000 = vld [vmem:[%s811 + $0x1e0] sm:$0xf]
        %v1001 = vld [vmem:[%s811 + $0x1e4] sm:$0xf]
        %v1002 = vld [vmem:[%s811 + $0x1e8] sm:$0xf]
        %v1003 = vld [vmem:[%s811 + $0x1ec] sm:$0xf]
        %v1004 = vld [vmem:[%s811 + $0x1f0] sm:$0xf]
        %v1005 = vld [vmem:[%s811 + $0x1f4] sm:$0xf]
        %v1006 = vld [vmem:[%s811 + $0x1f8] sm:$0xf]
        %v1007 = vld [vmem:[%s811 + $0x1fc] sm:$0xf]
        %v1008 = vld [vmem:[%s811 + $0x200] sm:$0xf]
        %v1009 = vld [vmem:[%s811 + $0x204] sm:$0xf]
        %v1010 = vld [vmem:[%s811 + $0x208] sm:$0xf]
        %v1011 = vld [vmem:[%s811 + $0x20c] sm:$0xf]
        %v1012 = vld [vmem:[%s811 + $0x210] sm:$0xf]
        %v1013 = vld [vmem:[%s811 + $0x214] sm:$0xf]
        %v1014 = vld [vmem:[%s811 + $0x218] sm:$0xf]
        %v1015 = vld [vmem:[%s811 + $0x21c] sm:$0xf]
        %v1016 = vld [vmem:[%s811 + $0x220] sm:$0xf]
        %v1017 = vld [vmem:[%s811 + $0x224] sm:$0xf]
        %v1018 = vld [vmem:[%s811 + $0x228] sm:$0xf]
        %v1019 = vld [vmem:[%s811 + $0x22c] sm:$0xf]
        %v1020 = vld [vmem:[%s811 + $0x230] sm:$0xf]
        %v1021 = vld [vmem:[%s811 + $0x234] sm:$0xf]
        %v1022 = vld [vmem:[%s811 + $0x238] sm:$0xf]
        %v1023 = vld [vmem:[%s811 + $0x23c] sm:$0xf]
        %v1034 = vunpack.c.l.b16 %v870
        %v1035 = vunpack.c.h.b16 %v870
        %v1036 = vunpack.c.l.b16 %v871
        %v1037 = vunpack.c.h.b16 %v871
        %v1038 = vunpack.c.l.b16 %v872
        %v1039 = vunpack.c.h.b16 %v872
        %v1040 = vunpack.c.l.b16 %v873
        %v1041 = vunpack.c.h.b16 %v873
        %v1042 = vunpack.c.l.b16 %v874
        %v1043 = vunpack.c.l.b16 %v875
        %v1044 = vunpack.c.h.b16 %v875
        %v1045 = vunpack.c.l.b16 %v876
        %v1046 = vunpack.c.h.b16 %v876
        %v1047 = vunpack.c.l.b16 %v877
        %v1048 = vunpack.c.h.b16 %v877
        %v1049 = vunpack.c.l.b16 %v878
        %v1050 = vunpack.c.h.b16 %v878
        %v1051 = vunpack.c.l.b16 %v879
        %v1052 = vpack.c.b16 %v1043, %v1034
        %v1053 = vpack.c.b16 %v1044, %v1035
        %v1054 = vpack.c.b16 %v1045, %v1036
        %v1055 = vpack.c.b16 %v1046, %v1037
        %v1056 = vpack.c.b16 %v1047, %v1038
        %v1057 = vpack.c.b16 %v1048, %v1039
        %v1058 = vpack.c.b16 %v1049, %v1040
        %v1059 = vpack.c.b16 %v1050, %v1041
        %v1060 = vpack.c.b16 %v1051, %v1042
        %v1214 = vunpack.c.l.b16 %v880
        %v1215 = vunpack.c.l.b16 %v881
        %v1216 = vunpack.c.l.b16 %v882
        %v1217 = vunpack.c.l.b16 %v883
        %v1218 = vunpack.c.l.b16 %v884
        %v1219 = vunpack.c.l.b16 %v885
        %v1220 = vunpack.c.l.b16 %v886
        %v1221 = vunpack.c.l.b16 %v887
        %v1222 = vunpack.c.l.b16 %v888
        %v1223 = vunpack.c.l.b16 %v889
        %v1224 = vunpack.c.l.b16 %v890
        %v1225 = vunpack.c.l.b16 %v891
        %v1226 = vunpack.c.l.b16 %v892
        %v1227 = vunpack.c.l.b16 %v893
        %v1228 = vunpack.c.l.b16 %v894
        %v1229 = vunpack.c.l.b16 %v895
        %v1230 = vunpack.c.l.b16 %v896
        %v1231 = vunpack.c.l.b16 %v897
        %v1232 = vunpack.c.l.b16 %v898
        %v1233 = vunpack.c.l.b16 %v899
        %v1234 = vunpack.c.l.b16 %v900
        %v1235 = vunpack.c.l.b16 %v901
        %v1236 = vunpack.c.l.b16 %v902
        %v1237 = vunpack.c.l.b16 %v903
        %v1238 = vunpack.c.l.b16 %v904
        %v1239 = vunpack.c.l.b16 %v905
        %v1240 = vunpack.c.l.b16 %v906
        %v1241 = vunpack.c.l.b16 %v907
        %v1242 = vunpack.c.l.b16 %v908
        %v1243 = vunpack.c.l.b16 %v909
        %v1244 = vunpack.c.l.b16 %v910
        %v1245 = vunpack.c.l.b16 %v911
        %v1246 = vunpack.c.l.b16 %v912
        %v1247 = vunpack.c.l.b16 %v913
        %v1248 = vunpack.c.l.b16 %v914
        %v1249 = vunpack.c.l.b16 %v915
        %v1250 = vunpack.c.l.b16 %v916
        %v1251 = vunpack.c.l.b16 %v917
        %v1252 = vunpack.c.l.b16 %v918
        %v1253 = vunpack.c.l.b16 %v919
        %v1254 = vunpack.c.l.b16 %v920
        %v1255 = vunpack.c.l.b16 %v921
        %v1256 = vunpack.c.l.b16 %v922
        %v1257 = vunpack.c.l.b16 %v923
        %v1258 = vunpack.c.l.b16 %v924
        %v1259 = vunpack.c.l.b16 %v925
        %v1260 = vunpack.c.l.b16 %v926
        %v1261 = vunpack.c.l.b16 %v927
        %v1262 = vunpack.c.l.b16 %v928
        %v1263 = vunpack.c.l.b16 %v929
        %v1264 = vunpack.c.l.b16 %v930
        %v1265 = vunpack.c.l.b16 %v931
        %v1266 = vunpack.c.l.b16 %v932
        %v1267 = vunpack.c.l.b16 %v933
        %v1268 = vunpack.c.l.b16 %v934
        %v1269 = vunpack.c.l.b16 %v935
        %v1270 = vunpack.c.l.b16 %v936
        %v1271 = vunpack.c.l.b16 %v937
        %v1272 = vunpack.c.l.b16 %v938
        %v1273 = vunpack.c.l.b16 %v939
        %v1274 = vunpack.c.l.b16 %v940
        %v1275 = vunpack.c.l.b16 %v941
        %v1276 = vunpack.c.l.b16 %v942
        %v1277 = vunpack.c.l.b16 %v943
        %v1278 = vunpack.c.l.b16 %v944
        %v1279 = vunpack.c.l.b16 %v945
        %v1280 = vunpack.c.l.b16 %v946
        %v1281 = vunpack.c.l.b16 %v947
        %v1282 = vunpack.c.l.b16 %v948
        %v1283 = vunpack.c.l.b16 %v949
        %v1284 = vunpack.c.l.b16 %v950
        %v1285 = vunpack.c.l.b16 %v951
        %v1286 = vunpack.c.l.b16 %v952
        %v1287 = vunpack.c.l.b16 %v953
        %v1288 = vunpack.c.l.b16 %v954
        %v1289 = vunpack.c.l.b16 %v955
        %v1290 = vunpack.c.l.b16 %v956
        %v1291 = vunpack.c.l.b16 %v957
        %v1292 = vunpack.c.l.b16 %v958
        %v1293 = vunpack.c.l.b16 %v959
        %v1294 = vunpack.c.l.b16 %v960
        %v1295 = vunpack.c.l.b16 %v961
        %v1296 = vunpack.c.l.b16 %v962
        %v1297 = vunpack.c.l.b16 %v963
        %v1298 = vunpack.c.l.b16 %v964
        %v1299 = vunpack.c.l.b16 %v965
        %v1300 = vunpack.c.l.b16 %v966
        %v1301 = vunpack.c.l.b16 %v967
        %v1302 = vunpack.c.l.b16 %v968
        %v1303 = vunpack.c.l.b16 %v969
        %v1304 = vunpack.c.l.b16 %v970
        %v1305 = vunpack.c.l.b16 %v971
        %v1306 = vunpack.c.l.b16 %v972
        %v1307 = vunpack.c.l.b16 %v973
        %v1308 = vunpack.c.l.b16 %v974
        %v1309 = vunpack.c.l.b16 %v975
        %v1310 = vunpack.c.l.b16 %v976
        %v1311 = vunpack.c.l.b16 %v977
        %v1312 = vunpack.c.l.b16 %v978
        %v1313 = vunpack.c.l.b16 %v979
        %v1314 = vunpack.c.l.b16 %v980
        %v1315 = vunpack.c.l.b16 %v981
        %v1316 = vunpack.c.l.b16 %v982
        %v1317 = vunpack.c.l.b16 %v983
        %v1318 = vunpack.c.l.b16 %v984
        %v1319 = vunpack.c.l.b16 %v985
        %v1320 = vunpack.c.l.b16 %v986
        %v1321 = vunpack.c.l.b16 %v987
        %v1322 = vunpack.c.l.b16 %v988
        %v1323 = vunpack.c.l.b16 %v989
        %v1324 = vunpack.c.l.b16 %v990
        %v1325 = vunpack.c.l.b16 %v991
        %v1326 = vunpack.c.l.b16 %v992
        %v1327 = vunpack.c.l.b16 %v993
        %v1328 = vunpack.c.l.b16 %v994
        %v1329 = vunpack.c.l.b16 %v995
        %v1330 = vunpack.c.l.b16 %v996
        %v1331 = vunpack.c.l.b16 %v997
        %v1332 = vunpack.c.l.b16 %v998
        %v1333 = vunpack.c.l.b16 %v999
        %v1334 = vunpack.c.l.b16 %v1000
        %v1335 = vunpack.c.l.b16 %v1001
        %v1336 = vunpack.c.l.b16 %v1002
        %v1337 = vunpack.c.l.b16 %v1003
        %v1338 = vunpack.c.l.b16 %v1004
        %v1339 = vunpack.c.l.b16 %v1005
        %v1340 = vunpack.c.l.b16 %v1006
        %v1341 = vunpack.c.l.b16 %v1007
        %v1342 = vunpack.c.l.b16 %v1008
        %v1343 = vunpack.c.l.b16 %v1009
        %v1344 = vunpack.c.l.b16 %v1010
        %v1345 = vunpack.c.l.b16 %v1011
        %v1346 = vunpack.c.l.b16 %v1012
        %v1347 = vunpack.c.l.b16 %v1013
        %v1348 = vunpack.c.l.b16 %v1014
        %v1349 = vunpack.c.l.b16 %v1015
        %v1350 = vunpack.c.l.b16 %v1016
        %v1351 = vunpack.c.l.b16 %v1017
        %v1352 = vunpack.c.l.b16 %v1018
        %v1353 = vunpack.c.l.b16 %v1019
        %v1354 = vunpack.c.l.b16 %v1020
        %v1355 = vunpack.c.l.b16 %v1021
        %v1356 = vunpack.c.l.b16 %v1022
        %v1357 = vunpack.c.l.b16 %v1023
        %v1358 = vpack.c.b16 %v1215, %v1214
        %v1359 = vpack.c.b16 %v1217, %v1216
        %v1360 = vpack.c.b16 %v1219, %v1218
        %v1361 = vpack.c.b16 %v1221, %v1220
        %v1362 = vpack.c.b16 %v1223, %v1222
        %v1363 = vpack.c.b16 %v1225, %v1224
        %v1364 = vpack.c.b16 %v1227, %v1226
        %v1365 = vpack.c.b16 %v1229, %v1228
        %v1366 = vpack.c.b16 %v1231, %v1230
        %v1367 = vpack.c.b16 %v1233, %v1232
        %v1368 = vpack.c.b16 %v1235, %v1234
        %v1369 = vpack.c.b16 %v1237, %v1236
        %v1370 = vpack.c.b16 %v1239, %v1238
        %v1371 = vpack.c.b16 %v1241, %v1240
        %v1372 = vpack.c.b16 %v1243, %v1242
        %v1373 = vpack.c.b16 %v1245, %v1244
        %v1374 = vpack.c.b16 %v1247, %v1246
        %v1375 = vpack.c.b16 %v1249, %v1248
        %v1376 = vpack.c.b16 %v1251, %v1250
        %v1377 = vpack.c.b16 %v1253, %v1252
        %v1378 = vpack.c.b16 %v1255, %v1254
        %v1379 = vpack.c.b16 %v1257, %v1256
        %v1380 = vpack.c.b16 %v1259, %v1258
        %v1381 = vpack.c.b16 %v1261, %v1260
        %v1382 = vpack.c.b16 %v1263, %v1262
        %v1383 = vpack.c.b16 %v1265, %v1264
        %v1384 = vpack.c.b16 %v1267, %v1266
        %v1385 = vpack.c.b16 %v1269, %v1268
        %v1386 = vpack.c.b16 %v1271, %v1270
        %v1387 = vpack.c.b16 %v1273, %v1272
        %v1388 = vpack.c.b16 %v1275, %v1274
        %v1389 = vpack.c.b16 %v1277, %v1276
        %v1390 = vpack.c.b16 %v1279, %v1278
        %v1391 = vpack.c.b16 %v1281, %v1280
        %v1392 = vpack.c.b16 %v1283, %v1282
        %v1393 = vpack.c.b16 %v1285, %v1284
        %v1394 = vpack.c.b16 %v1287, %v1286
        %v1395 = vpack.c.b16 %v1289, %v1288
        %v1396 = vpack.c.b16 %v1291, %v1290
        %v1397 = vpack.c.b16 %v1293, %v1292
        %v1398 = vpack.c.b16 %v1295, %v1294
        %v1399 = vpack.c.b16 %v1297, %v1296
        %v1400 = vpack.c.b16 %v1299, %v1298
        %v1401 = vpack.c.b16 %v1301, %v1300
        %v1402 = vpack.c.b16 %v1303, %v1302
        %v1403 = vpack.c.b16 %v1305, %v1304
        %v1404 = vpack.c.b16 %v1307, %v1306
        %v1405 = vpack.c.b16 %v1309, %v1308
        %v1406 = vpack.c.b16 %v1311, %v1310
        %v1407 = vpack.c.b16 %v1313, %v1312
        %v1408 = vpack.c.b16 %v1315, %v1314
        %v1409 = vpack.c.b16 %v1317, %v1316
        %v1410 = vpack.c.b16 %v1319, %v1318
        %v1411 = vpack.c.b16 %v1321, %v1320
        %v1412 = vpack.c.b16 %v1323, %v1322
        %v1413 = vpack.c.b16 %v1325, %v1324
        %v1414 = vpack.c.b16 %v1327, %v1326
        %v1415 = vpack.c.b16 %v1329, %v1328
        %v1416 = vpack.c.b16 %v1331, %v1330
        %v1417 = vpack.c.b16 %v1333, %v1332
        %v1418 = vpack.c.b16 %v1335, %v1334
        %v1419 = vpack.c.b16 %v1337, %v1336
        %v1420 = vpack.c.b16 %v1339, %v1338
        %v1421 = vpack.c.b16 %v1341, %v1340
        %v1422 = vpack.c.b16 %v1343, %v1342
        %v1423 = vpack.c.b16 %v1345, %v1344
        %v1424 = vpack.c.b16 %v1347, %v1346
        %v1425 = vpack.c.b16 %v1349, %v1348
        %v1426 = vpack.c.b16 %v1351, %v1350
        %v1427 = vpack.c.b16 %v1353, %v1352
        %v1428 = vpack.c.b16 %v1355, %v1354
        %v1429 = vpack.c.b16 %v1357, %v1356
        %1502 = vmatprep.subr.bf16.mxu0 0
        %1503 = vmatpush1.bf16.msra.mxu0 %v1358
        %1504 = vmatprep.subr.bf16.mxu0 0
        %1505 = vmatpush1.bf16.msra.mxu0 %v1359
        %1506 = vmatprep.subr.bf16.mxu0 0
        %1507 = vmatpush1.bf16.msra.mxu0 %v1360
        %1508 = vmatprep.subr.bf16.mxu0 0
        %1509 = vmatpush1.bf16.msra.mxu0 %v1361
        %1510 = vmatprep.subr.bf16.mxu0 0
        %1511 = vmatpush1.bf16.msra.mxu0 %v1362
        %1512 = vmatprep.subr.bf16.mxu0 0
        %1513 = vmatpush1.bf16.msra.mxu0 %v1363
        %1514 = vmatprep.subr.bf16.mxu0 0
        %1515 = vmatpush1.bf16.msra.mxu0 %v1364
        %1516 = vmatprep.subr.bf16.mxu0 0
        %1517 = vmatpush1.bf16.msra.mxu0 %v1365
        %1518 = vmatprep.subr.bf16.mxu0 0
        %1519 = vmatpush1.bf16.msra.mxu0 %v1366
        %1520 = vmatprep.subr.bf16.mxu0 0
        %1521 = vmatpush1.bf16.msra.mxu0 %v1367
        %1522 = vmatprep.subr.bf16.mxu0 0
        %1523 = vmatpush1.bf16.msra.mxu0 %v1368
        %1524 = vmatprep.subr.bf16.mxu0 0
        %1525 = vmatpush1.bf16.msra.mxu0 %v1369
        %1526 = vmatprep.subr.bf16.mxu0 0
        %1527 = vmatpush1.bf16.msra.mxu0 %v1370
        %1528 = vmatprep.subr.bf16.mxu0 0
        %1529 = vmatpush1.bf16.msra.mxu0 %v1371
        %1530 = vmatprep.subr.bf16.mxu0 0
        %1531 = vmatpush1.bf16.msra.mxu0 %v1372
        %1532 = vmatprep.subr.bf16.mxu0 0
        %1533 = vmatpush1.bf16.msra.mxu0 %v1373
        %1534 = vmatprep.mubr.bf16.mxu0 %v1053
        %1535 = vmatmul.mubr.bf16.gmra.mrb[0].mxu0 %v1052
        %v1536 = vpop.f32.mrb[0].mxu0
        %v1537 = vadd.f32 0.0, %v1536
        %v1538 = vpop.f32.mrb[0].mxu0
        %v1539 = vpop.f32.mrb[0].mxu0
        %v1540 = vadd.f32 0.0, %v1539
        %v1541 = vpop.f32.mrb[0].mxu0
        %1542 = vdwg.mxu0
        %1543 = vmatprep.subr.bf16.mxu0 0
        %1544 = vmatpush1.bf16.msra.mxu0 %v1374
        %1545 = vmatprep.subr.bf16.mxu0 0
        %1546 = vmatpush1.bf16.msra.mxu0 %v1375
        %1547 = vmatprep.subr.bf16.mxu0 0
        %1548 = vmatpush1.bf16.msra.mxu0 %v1376
        %1549 = vmatprep.subr.bf16.mxu0 0
        %1550 = vmatpush1.bf16.msra.mxu0 %v1377
        %1551 = vmatprep.subr.bf16.mxu0 0
        %1552 = vmatpush1.bf16.msra.mxu0 %v1378
        %1553 = vmatprep.subr.bf16.mxu0 0
        %1554 = vmatpush1.bf16.msra.mxu0 %v1379
        %1555 = vmatprep.subr.bf16.mxu0 0
        %1556 = vmatpush1.bf16.msra.mxu0 %v1380
        %1557 = vmatprep.subr.bf16.mxu0 0
        %1558 = vmatpush1.bf16.msra.mxu0 %v1381
        %1559 = vmatprep.subr.bf16.mxu0 0
        %1560 = vmatpush1.bf16.msra.mxu0 %v1382
        %1561 = vmatprep.subr.bf16.mxu0 0
        %1562 = vmatpush1.bf16.msra.mxu0 %v1383
        %1563 = vmatprep.subr.bf16.mxu0 0
        %1564 = vmatpush1.bf16.msra.mxu0 %v1384
        %1565 = vmatprep.subr.bf16.mxu0 0
        %1566 = vmatpush1.bf16.msra.mxu0 %v1385
        %1567 = vmatprep.subr.bf16.mxu0 0
        %1568 = vmatpush1.bf16.msra.mxu0 %v1386
        %1569 = vmatprep.subr.bf16.mxu0 0
        %1570 = vmatpush1.bf16.msra.mxu0 %v1387
        %1571 = vmatprep.subr.bf16.mxu0 0
        %1572 = vmatpush1.bf16.msra.mxu0 %v1388
        %1573 = vmatprep.subr.bf16.mxu0 0
        %1574 = vmatpush1.bf16.msra.mxu0 %v1389
        %1575 = vmatprep.mubr.bf16.mxu0 %v1055
        %1576 = vmatmul.mubr.bf16.gmra.mrb[0].mxu0 %v1054
        %v1577 = vpop.f32.mrb[0].mxu0
        %v1578 = vadd.f32 %v1537, %v1577
        %v1579 = vpop.f32.mrb[0].mxu0
        %v1580 = vpop.f32.mrb[0].mxu0
        %v1581 = vadd.f32 %v1540, %v1580
        %v1582 = vpop.f32.mrb[0].mxu0
        %1583 = vdwg.mxu0
        %1584 = vmatprep.subr.bf16.mxu0 0
        %1585 = vmatpush1.bf16.msra.mxu0 %v1390
        %1586 = vmatprep.subr.bf16.mxu0 0
        %1587 = vmatpush1.bf16.msra.mxu0 %v1391
        %1588 = vmatprep.subr.bf16.mxu0 0
        %1589 = vmatpush1.bf16.msra.mxu0 %v1392
        %1590 = vmatprep.subr.bf16.mxu0 0
        %1591 = vmatpush1.bf16.msra.mxu0 %v1393
        %1592 = vmatprep.subr.bf16.mxu0 0
        %1593 = vmatpush1.bf16.msra.mxu0 %v1394
        %1594 = vmatprep.subr.bf16.mxu0 0
        %1595 = vmatpush1.bf16.msra.mxu0 %v1395
        %1596 = vmatprep.subr.bf16.mxu0 0
        %1597 = vmatpush1.bf16.msra.mxu0 %v1396
        %1598 = vmatprep.subr.bf16.mxu0 0
        %1599 = vmatpush1.bf16.msra.mxu0 %v1397
        %1600 = vmatprep.subr.bf16.mxu0 0
        %1601 = vmatpush1.bf16.msra.mxu0 %v1398
        %1602 = vmatprep.subr.bf16.mxu0 0
        %1603 = vmatpush1.bf16.msra.mxu0 %v1399
        %1604 = vmatprep.subr.bf16.mxu0 0
        %1605 = vmatpush1.bf16.msra.mxu0 %v1400
        %1606 = vmatprep.subr.bf16.mxu0 0
        %1607 = vmatpush1.bf16.msra.mxu0 %v1401
        %1608 = vmatprep.subr.bf16.mxu0 0
        %1609 = vmatpush1.bf16.msra.mxu0 %v1402
        %1610 = vmatprep.subr.bf16.mxu0 0
        %1611 = vmatpush1.bf16.msra.mxu0 %v1403
        %1612 = vmatprep.subr.bf16.mxu0 0
        %1613 = vmatpush1.bf16.msra.mxu0 %v1404
        %1614 = vmatprep.subr.bf16.mxu0 0
        %1615 = vmatpush1.bf16.msra.mxu0 %v1405
        %1616 = vmatprep.mubr.bf16.mxu0 %v1057
        %1617 = vmatmul.mubr.bf16.gmra.mrb[0].mxu0 %v1056
        %v1618 = vpop.f32.mrb[0].mxu0
        %v1619 = vadd.f32 %v1578, %v1618
        %v1620 = vpop.f32.mrb[0].mxu0
        %v1621 = vpop.f32.mrb[0].mxu0
        %v1622 = vadd.f32 %v1581, %v1621
        %v1623 = vpop.f32.mrb[0].mxu0
        %1624 = vdwg.mxu0
        %1625 = vmatprep.subr.bf16.mxu0 0
        %1626 = vmatpush1.bf16.msra.mxu0 %v1406
        %1627 = vmatprep.subr.bf16.mxu0 0
        %1628 = vmatpush1.bf16.msra.mxu0 %v1407
        %1629 = vmatprep.subr.bf16.mxu0 0
        %1630 = vmatpush1.bf16.msra.mxu0 %v1408
        %1631 = vmatprep.subr.bf16.mxu0 0
        %1632 = vmatpush1.bf16.msra.mxu0 %v1409
        %1633 = vmatprep.subr.bf16.mxu0 0
        %1634 = vmatpush1.bf16.msra.mxu0 %v1410
        %1635 = vmatprep.subr.bf16.mxu0 0
        %1636 = vmatpush1.bf16.msra.mxu0 %v1411
        %1637 = vmatprep.subr.bf16.mxu0 0
        %1638 = vmatpush1.bf16.msra.mxu0 %v1412
        %1639 = vmatprep.subr.bf16.mxu0 0
        %1640 = vmatpush1.bf16.msra.mxu0 %v1413
        %1641 = vmatprep.subr.bf16.mxu0 0
        %1642 = vmatpush1.bf16.msra.mxu0 %v1414
        %1643 = vmatprep.subr.bf16.mxu0 0
        %1644 = vmatpush1.bf16.msra.mxu0 %v1415
        %1645 = vmatprep.subr.bf16.mxu0 0
        %1646 = vmatpush1.bf16.msra.mxu0 %v1416
        %1647 = vmatprep.subr.bf16.mxu0 0
        %1648 = vmatpush1.bf16.msra.mxu0 %v1417
        %1649 = vmatprep.subr.bf16.mxu0 0
        %1650 = vmatpush1.bf16.msra.mxu0 %v1418
        %1651 = vmatprep.subr.bf16.mxu0 0
        %1652 = vmatpush1.bf16.msra.mxu0 %v1419
        %1653 = vmatprep.subr.bf16.mxu0 0
        %1654 = vmatpush1.bf16.msra.mxu0 %v1420
        %1655 = vmatprep.subr.bf16.mxu0 0
        %1656 = vmatpush1.bf16.msra.mxu0 %v1421
        %1657 = vmatprep.mubr.bf16.mxu0 %v1059
        %1658 = vmatmul.mubr.bf16.gmra.mrb[0].mxu0 %v1058
        %v1659 = vpop.f32.mrb[0].mxu0
        %v1660 = vadd.f32 %v1619, %v1659
        %v1661 = vpop.f32.mrb[0].mxu0
        %v1662 = vpop.f32.mrb[0].mxu0
        %v1663 = vadd.f32 %v1622, %v1662
        %v1664 = vpop.f32.mrb[0].mxu0
        %1665 = vdwg.mxu0
        %1666 = vmatprep.subr.bf16.mxu0 0
        %1667 = vmatpush1.bf16.msra.mxu0 %v1422
        %1668 = vmatprep.subr.bf16.mxu0 0
        %1669 = vmatpush1.bf16.msra.mxu0 %v1423
        %1670 = vmatprep.subr.bf16.mxu0 0
        %1671 = vmatpush1.bf16.msra.mxu0 %v1424
        %1672 = vmatprep.subr.bf16.mxu0 0
        %1673 = vmatpush1.bf16.msra.mxu0 %v1425
        %1674 = vmatprep.subr.bf16.mxu0 0
        %1675 = vmatpush1.bf16.msra.mxu0 %v1426
        %1676 = vmatprep.subr.bf16.mxu0 0
        %1677 = vmatpush1.bf16.msra.mxu0 %v1427
        %1678 = vmatprep.subr.bf16.mxu0 0
        %1679 = vmatpush1.bf16.msra.mxu0 %v1428
        %1680 = vmatprep.subr.bf16.mxu0 0
        %1681 = vmatpush1.bf16.msra.mxu0 %v1429
        %1682 = vmatprep.subr.bf16.mxu0 0
        %1683 = vmatpush1.bf16.msra.mxu0 0
        %1684 = vmatprep.subr.bf16.mxu0 0
        %1685 = vmatpush1.bf16.msra.mxu0 0
        %1686 = vmatprep.subr.bf16.mxu0 0
        %1687 = vmatpush1.bf16.msra.mxu0 0
        %1688 = vmatprep.subr.bf16.mxu0 0
        %1689 = vmatpush1.bf16.msra.mxu0 0
        %1690 = vmatprep.subr.bf16.mxu0 0
        %1691 = vmatpush1.bf16.msra.mxu0 0
        %1692 = vmatprep.subr.bf16.mxu0 0
        %1693 = vmatpush1.bf16.msra.mxu0 0
        %1694 = vmatprep.subr.bf16.mxu0 0
        %1695 = vmatpush1.bf16.msra.mxu0 0
        %1696 = vmatprep.subr.bf16.mxu0 0
        %1697 = vmatpush1.bf16.msra.mxu0 0
        %1698 = vmatprep.mubr.bf16.mxu0 0
        %1699 = vmatmul.mubr.bf16.gmra.mrb[0].mxu0 %v1060
        %v1700 = vpop.f32.mrb[0].mxu0
        %v1701 = vadd.f32 %v1660, %v1700
        %v1702 = vpop.f32.mrb[0].mxu0
        %v1703 = vpop.f32.mrb[0].mxu0
        %v1704 = vadd.f32 %v1663, %v1703
        %v1705 = vpop.f32.mrb[0].mxu0
        %1706 = vdwg.mxu0
        %v1707 = vadd.f32 %v868, %v1701
        %v1708 = vadd.f32 %v869, %v1704
        %1709 = vst [vmem:[#allocation2] sm:$0xff] %v1707
        %1710 = vst [vmem:[#allocation2 + $0x8] sm:$0xff] %v1708
        // Predicated region
        $region78: #{_lambda_.11} parent=68 // pred_check
          %p1711 = pneg %p862
        $region79: #{_lambda_.11} parent=68 // pred_check_branch
          %1713 = sbr.rel (%p1711) target = $region81
        $region80: #{_lambda_.11} parent=68 // pred_region
          %v1714 = vld [vmem:[#allocation2] sm:$0xff]
          %v1715 = vld [vmem:[#allocation2 + $0x8] sm:$0xff]
          %v1716 = vld [vmem:[%s859] sm:$0x1]
          %v1718 = vlaneseq
          %v1719 = vshrl.u32 %v1718, 7
          %v1720 = vsub.s32 0, %v1719
          %v1721 = vrot.slane %v1716, %v1720
          %v1723 = vadd.f32 %v1714, %v1721
          %v1724 = vadd.f32 %v1715, %v1721
          %v1725 = vmax.f32 %v1723, 0.0
          %v1726 = vmax.f32 %v1724, 0.0
          %v1727 = vpack.c.bf16 %v1726, %v1725
          %v1729 = vunpack.c.l.b16 %v1727
          %v1730 = vunpack.c.h.b16 %v1727
          %v1731 = vpack.c.b16 %v1729, %v1729
          %v1732 = vpack.c.b16 %v1730, %v1730
          %1735 = vst [vmem:[%s843] sm:$0xf] %v1731
          %1736 = vst [vmem:[%s843 + $0x4] sm:$0xf] %v1732
        $region81: #{_lambda_.11} parent=68 // pred_fallthru
          _
        %s1737 = sand.u32 %s125, 1
        %s1738 = sand.u32 %s125, 1
        %s1739 = smul.addr %s1738, 8
        %s1740 = scalar_lea.vmem [#allocation4], %s1739
        // Predicated region
        $region82: #{_lambda_.11} parent=68 // pred_check
          %p1741 = pneg %p135
        $region83: #{_lambda_.11} parent=68 // pred_check_branch
          %1743 = sbr.rel (%p1741) target = $region85
        $region84: #{_lambda_.11} parent=68 // pred_region
          %s1744 = smul.u32 2, %s19
          %s1745 = smul.addr %s1744, 2
          %s1746 = sadd.s32 %s20, %s1745
          %s1747 = smul.addr %s1746, 4
          %s1748 = scalar_lea.vmem %s3, %s1747
          // Predicated region
          $region86: #{_lambda_.11} parent=84 // pred_check
            _
          $region87: #{_lambda_.11} parent=84 // pred_check_branch
            %1750 = sbr.rel (0) target = $region89
          $region88: #{_lambda_.11} parent=84 // pred_region
            // Predicated region
            $region90: #{_lambda_.11} parent=88 // pred_check
              _
            $region91: #{_lambda_.11} parent=88 // pred_check_branch
              %1752 = sbr.rel target = $region93
            $region92: #{_lambda_.11} parent=88 // pred_region
              // Predicated region
              $region105: #{_lambda_.11} parent=92 // pred_check
                _
              $region106: #{_lambda_.11} parent=92 // pred_check_branch
                %1769 = sbr.rel (0) target = $region108
              $region107: #{_lambda_.11} parent=92 // pred_region
                loop: start=0, step=1, limit=1
                $region109: #{_lambda_.11} parent=107 // loop_pre_header
                  _
                $region110: #{_lambda_.11} parent=107 // loop_header
                  %s1771 = sphi 0, %s1775
                  %p1772 = scmp.ge.s32.totalorder %s1771, 1
                  %s1776 = sphi %s1740, %s1740
                  %s1777 = sphi %s1748, %s1748
                $region111: #{_lambda_.11} parent=107 // loop_header_branch
                  %1774 = sbr.rel (%p1772) target = $region115
                $region112: #{_lambda_.11} parent=107 // loop_body
                  _
                $region113: #{_lambda_.11} parent=107 // loop_footer
                  %s1775 = sadd.s32 1, %s1771
                $region114: #{_lambda_.11} parent=107 // loop_footer_branch
                  %1770 = sbr.rel target = $region110
                $region115: #{_lambda_.11} parent=107 // loop_exit
                  _
                loop: start=0, step=1, limit=1
                $region116: #{_lambda_.11} parent=107 // loop_pre_header
                  _
                $region117: #{_lambda_.11} parent=107 // loop_header
                  %s1780 = sphi 0, %s1784
                  %p1781 = scmp.ge.s32.totalorder %s1780, 1
                  %s1785 = sphi %s1740, %s1740
                  %s1786 = sphi %s1748, %s1748
                $region118: #{_lambda_.11} parent=107 // loop_header_branch
                  %1783 = sbr.rel (%p1781) target = $region122
                $region119: #{_lambda_.11} parent=107 // loop_body
                  %v1787 = vld [vmem:[%s1785] sm:$0xf]
                  %1788 = vst [vmem:[%s1786] sm:$0xf] %v1787
                  %v1789 = vld [vmem:[%s1785 + $0x4] sm:$0xf]
                  %1790 = vst [vmem:[%s1786 + $0x8] sm:$0xf] %v1789
                $region120: #{_lambda_.11} parent=107 // loop_footer
                  %s1784 = sadd.s32 1, %s1780
                $region121: #{_lambda_.11} parent=107 // loop_footer_branch
                  %1779 = sbr.rel target = $region117
                $region122: #{_lambda_.11} parent=107 // loop_exit
                  _
              $region108: #{_lambda_.11} parent=92 // pred_fallthru
                _
            $region93: #{_lambda_.11} parent=88 // pred_fallthru
              _
            // Predicated region
            $region94: #{_lambda_.11} parent=88 // pred_check
              _
            $region95: #{_lambda_.11} parent=88 // pred_check_branch
              %1754 = sbr.rel (0) target = $region97
            $region96: #{_lambda_.11} parent=88 // pred_region
              loop: start=0, step=1, limit=1
              $region98: #{_lambda_.11} parent=96 // loop_pre_header
                _
              $region99: #{_lambda_.11} parent=96 // loop_header
                %s1757 = sphi 0, %s1761
                %p1758 = scmp.ge.s32.totalorder %s1757, 1
                %s1762 = sphi %s1740, %s1740
                %s1763 = sphi %s1748, %s1748
              $region100: #{_lambda_.11} parent=96 // loop_header_branch
                %1760 = sbr.rel (%p1758) target = $region104
              $region101: #{_lambda_.11} parent=96 // loop_body
                %v1764 = vld [vmem:[%s1762] sm:$0xf]
                %1765 = vst [vmem:[%s1763] sm:$0xf] %v1764
                %v1766 = vld [vmem:[%s1762 + $0x4] sm:$0xf]
                %1767 = vst [vmem:[%s1763 + $0x8] sm:$0xf] %v1766
              $region102: #{_lambda_.11} parent=96 // loop_footer
                %s1761 = sadd.s32 1, %s1757
              $region103: #{_lambda_.11} parent=96 // loop_footer_branch
                %1756 = sbr.rel target = $region99
              $region104: #{_lambda_.11} parent=96 // loop_exit
                _
            $region97: #{_lambda_.11} parent=88 // pred_fallthru
              _
          $region89: #{_lambda_.11} parent=84 // pred_fallthru
            _
          %1791 = vnop
        $region85: #{_lambda_.11} parent=68 // pred_fallthru
          _
      $region69: #{_lambda_.11} parent=5 // pred_fallthru
        _
      %p1792 = scmp.le.s32.totalorder 2, %s9
      // Predicated region
      $region123: #{_lambda_.11} parent=5 // pred_check
        %p1793 = pneg %p1792
      $region124: #{_lambda_.11} parent=5 // pred_check_branch
        %1795 = sbr.rel (%p1793) target = $region126
      $region125: #{_lambda_.11} parent=5 // pred_region
        %s1796 = ssub.s32 %s9, 2
        // Predicated region
        $region127: #{_lambda_.11} parent=125 // pred_check
          %p1797 = pneg %p141
        $region128: #{_lambda_.11} parent=125 // pred_check_branch
          %1799 = sbr.rel (%p1797) target = $region130
        $region129: #{_lambda_.11} parent=125 // pred_region
          %s1800 = sand.u32 %s126, 1
          %s1801 = sand.u32 %s126, 1
          %s1802 = smul.addr %s1801, 8
          %s1803 = scalar_lea.vmem [#allocation4], %s1802
        $region130: #{_lambda_.11} parent=125 // pred_fallthru
          _
      $region126: #{_lambda_.11} parent=5 // pred_fallthru
        _
    $region6: #{_lambda_.11} parent=1 // loop_footer
      %s13 = sadd.s32 1, %s9
    $region7: #{_lambda_.11} parent=1 // loop_footer_branch
      %8 = sbr.rel target = $region3
    $region8: #{_lambda_.11} parent=1 // loop_exit
      _

// kernel: tile.27
$region0: #{tile.27}
  %s0 = inlined_call_operand.vmem [shape: f32[4,64], index: 0, kind: input, shape index: {}]
  %s1 = inlined_call_operand.vmem [shape: f32[1,256], index: 1, kind: output, shape index: {}]
  $region1: #{tile.27} parent=0
    #allocation0 [shape = 'u8[8192]{0}', space=vmem, size = 0x2000, scoped, tag = 'scoped mem for output reshape']
    #allocation1 [shape = 'u8[4096]{0}', space=vmem, size = 0x1000, scoped, tag = 'scoped mem for input reshape']
    %s3 = sshllo.u32 0, 4
    %v4 = vld [vmem:[%s0] sm:%s3]
    %5 = vst [vmem:[#allocation1] sm:%s3] %v4
    %s6 = smov 3
    %v7 = vld [vmem:[#allocation1] ss:$2 sm:%s6]
    %vm8 = vcmask 523264
    %9 = vst.msk [vmem:[#allocation0] ss:$8 sm:$0x3] %vm8, %v7
    %s10 = scalar_lea.vmem [#allocation1], 1
    %s11 = smov 3
    %v12 = vld [vmem:[%s10] ss:$2 sm:%s11]
    %13 = vrot.lane.b32.xlu0 %v12, 64
    %v14 = vpop.permute.xlu0 %13
    %vm15 = vcmask 1048064
    %16 = vst.msk [vmem:[#allocation0] ss:$8 sm:$0x3] %vm15, %v14
    %s18 = sshllo.u32 0, 1
    %v20 = vld [vmem:[#allocation0] sm:%s18]
    %s21 = sshllo.u32 0, 1
    %22 = vst [vmem:[%s1] sm:%s21] %v20
    %s23 = scalar_lea.vmem [#allocation0], 8
    %v24 = vld [vmem:[%s23] sm:%s18]
    %s25 = sshllo.u32 0, 1
    %s26 = scalar_lea.vmem %s1, 1
    %27 = vst [vmem:[%s26] sm:%s25] %v24

// kernel: tile.26
$region0: #{tile.26}
  #allocation0 [shape = 's32[1]{0}', space=sflag, size = 0x4, scoped, tag = 'scoped memory for tile.26']
  %s0 = inlined_call_operand.vmem [shape: f32[64], index: 0, kind: input, shape index: {}]
  %s1 = inlined_call_operand.vmem [shape: f32[4,64], index: 1, kind: output, shape index: {}]
  // Predicated region
  $region2: #{tile.26} parent=0 // pred_check
    _
  $region3: #{tile.26} parent=0 // pred_check_branch
    %3 = sbr.rel (0) target = $region5
  $region4: #{tile.26} parent=0 // pred_region
    _
  $region5: #{tile.26} parent=0 // pred_fallthru
    _
  %v4 = vld [vmem:[%s0] ss:$0 sm:$0xff]
  %5 = vst [vmem:[%s1] sm:$0xf] %v4

// kernel: _lambda_.12
$region0: #{_lambda_.12}
  #allocation0 [shape = 'u32[]', space=smem, size = 0x4, offset = 0x4, fixed_abs, tag = 'smem constant byte address 0x4 - core index']
  #allocation1 [shape = 'u32[144,128]{1,0:T(1,128)}', space=vmem, size = 0x12000, scoped, tag = 'internal scratch']
  #allocation2 [shape = 'f32[16,256]{1,0:T(8,128)}', space=vmem, size = 0x4000, scoped, tag = 'scratch operand']
  %s0 = inlined_call_operand.vmem [shape: bf16[16,2304], index: 0, kind: input, shape index: {}]
  %s1 = inlined_call_operand.vmem [shape: bf16[2304,512], index: 1, kind: input, shape index: {}]
  %s2 = inlined_call_operand.vmem [shape: f32[1,512], index: 2, kind: input, shape index: {}]
  %s3 = inlined_call_operand.vmem [shape: bf16[16,512], index: 3, kind: output, shape index: {}]
  %s4 = sld [smem:[#allocation0]]
  $region125: #{_lambda_.12} parent=0
    _
  %s6 = ssub.s32 1, %s4
  %s7 = scalar_select 0, %s6, %s4
  $region1: #{_lambda_.12} parent=0
    #allocation3 [shape = 'u8[2359296]{0}', space=vmem, size = 0x240000, scoped, tag = 'input window, operand 1']
    #allocation4 [shape = 'u8[16384]{0}', space=vmem, size = 0x4000, scoped, tag = 'output window, operand 0']
    loop: start=0, step=1, limit=4
    $region2: #{_lambda_.12} parent=1 // loop_pre_header
      _
    $region3: #{_lambda_.12} parent=1 // loop_header
      %s9 = sphi 0, %s13
      %p10 = scmp.ge.s32.totalorder %s9, 4
      %s16 = sphi 0, %s35
      %s17 = sphi 0, %s31
      %s18 = sphi 0, %s27
      %s19 = sphi 0, %s16
      %s20 = sphi 0, %s17
      %s21 = sphi 0, %s18
      %s22 = sphi 0, %s19
      %s23 = sphi 0, %s20
      %s24 = sphi 0, %s21
      %s40 = sphi 0, %s42
      %s43 = sphi 0, %s40
      %s44 = sphi 0, %s43
      %s60 = sphi 0, %s44
      %s68 = sphi 0, %s70
      %s71 = sphi 0, %s68
      %s72 = sphi 0, %s71
      %s88 = sphi 0, %s72
      %s94 = sphi 0, %s96
      %s97 = sphi 0, %s94
      %s98 = sphi 0, %s97
      %s114 = sphi 0, %s98
      %s122 = sphi 0, %s124
      %s125 = sphi 0, %s122
      %s126 = sphi 0, %s125
      %s142 = sphi 0, %s126
    $region4: #{_lambda_.12} parent=1 // loop_header_branch
      %12 = sbr.rel (%p10) target = $region8
    $region5: #{_lambda_.12} parent=1 // loop_body
      %s14 = ssub.s32 %s9, 1
      %s15 = ssub.s32 %s9, 2
      %s25 = sadd.s32 1, %s18
      %p26 = scmp.ge.s32.totalorder %s25, 1
      %s27 = scalar_select %p26, 0, %s25
      %s28 = sadd.s32 1, %s17
      %s29 = scalar_select %p26, %s28, %s17
      %p30 = scmp.ge.s32.totalorder %s29, 2
      %s31 = scalar_select %p30, 0, %s29
      %s32 = sadd.s32 1, %s16
      %s33 = scalar_select %p30, %s32, %s16
      %p34 = scmp.ge.s32.totalorder %s33, 1
      %s35 = scalar_select %p34, 0, %s33
      %s36 = ssub.s32 %s16, %s35
      %s37 = ssub.s32 %s18, %s27
      %s38 = sor.u32 %s36, %s37
      %p39 = scmp.eq.s32.totalorder %s38, 0
      %s41 = sadd.s32 %s40, 1
      %s42 = scalar_select %p39, %s40, %s41
      %p45 = pneg %p39
      %p46 = scmp.eq.s32.totalorder %s9, 1
      %p47 = por %p45, %p46
      %p48 = scmp.ne.s32.totalorder %s40, %s43
      %p49 = scmp.eq.s32.totalorder %s9, 0
      %p50 = por %p48, %p49
      %p51 = scmp.ne.s32.totalorder %s40, %s43
      %p52 = scmp.eq.s32.totalorder %s14, 1
      %p53 = por %p51, %p52
      %p54 = scmp.ne.s32.totalorder %s43, %s44
      %p55 = scmp.eq.s32.totalorder %s14, 0
      %p56 = por %p54, %p55
      %p57 = scmp.ne.s32.totalorder %s43, %s44
      %p58 = scmp.eq.s32.totalorder %s15, 1
      %p59 = por %p57, %p58
      %p61 = scmp.ne.s32.totalorder %s44, %s60
      %p62 = scmp.eq.s32.totalorder %s15, 0
      %p63 = por %p61, %p62
      %s64 = ssub.s32 %s18, %s27
      %s65 = ssub.s32 %s17, %s31
      %s66 = sor.u32 %s64, %s65
      %p67 = scmp.eq.s32.totalorder %s66, 0
      %s69 = sadd.s32 %s68, 1
      %s70 = scalar_select %p67, %s68, %s69
      %p73 = pneg %p67
      %p74 = scmp.eq.s32.totalorder %s9, 1
      %p75 = por %p73, %p74
      %p76 = scmp.ne.s32.totalorder %s68, %s71
      %p77 = scmp.eq.s32.totalorder %s9, 0
      %p78 = por %p76, %p77
      %p79 = scmp.ne.s32.totalorder %s68, %s71
      %p80 = scmp.eq.s32.totalorder %s14, 1
      %p81 = por %p79, %p80
      %p82 = scmp.ne.s32.totalorder %s71, %s72
      %p83 = scmp.eq.s32.totalorder %s14, 0
      %p84 = por %p82, %p83
      %p85 = scmp.ne.s32.totalorder %s71, %s72
      %p86 = scmp.eq.s32.totalorder %s15, 1
      %p87 = por %p85, %p86
      %p89 = scmp.ne.s32.totalorder %s72, %s88
      %p90 = scmp.eq.s32.totalorder %s15, 0
      %p91 = por %p89, %p90
      %s92 = ssub.s32 %s17, %s31
      %p93 = scmp.eq.s32.totalorder %s92, 0
      %s95 = sadd.s32 %s94, 1
      %s96 = scalar_select %p93, %s94, %s95
      %p99 = pneg %p93
      %p100 = scmp.eq.s32.totalorder %s9, 1
      %p101 = por %p99, %p100
      %p102 = scmp.ne.s32.totalorder %s94, %s97
      %p103 = scmp.eq.s32.totalorder %s9, 0
      %p104 = por %p102, %p103
      %p105 = scmp.ne.s32.totalorder %s94, %s97
      %p106 = scmp.eq.s32.totalorder %s14, 1
      %p107 = por %p105, %p106
      %p108 = scmp.ne.s32.totalorder %s97, %s98
      %p109 = scmp.eq.s32.totalorder %s14, 0
      %p110 = por %p108, %p109
      %p111 = scmp.ne.s32.totalorder %s97, %s98
      %p112 = scmp.eq.s32.totalorder %s15, 1
      %p113 = por %p111, %p112
      %p115 = scmp.ne.s32.totalorder %s98, %s114
      %p116 = scmp.eq.s32.totalorder %s15, 0
      %p117 = por %p115, %p116
      %s118 = ssub.s32 %s16, %s35
      %s119 = ssub.s32 %s17, %s31
      %s120 = sor.u32 %s118, %s119
      %p121 = scmp.eq.s32.totalorder %s120, 0
      %s123 = sadd.s32 %s122, 1
      %s124 = scalar_select %p121, %s122, %s123
      %p127 = pneg %p121
      %p128 = scmp.eq.s32.totalorder %s9, 1
      %p129 = por %p127, %p128
      %p130 = scmp.ne.s32.totalorder %s122, %s125
      %p131 = scmp.eq.s32.totalorder %s9, 0
      %p132 = por %p130, %p131
      %p133 = scmp.ne.s32.totalorder %s122, %s125
      %p134 = scmp.eq.s32.totalorder %s14, 1
      %p135 = por %p133, %p134
      %p136 = scmp.ne.s32.totalorder %s125, %s126
      %p137 = scmp.eq.s32.totalorder %s14, 0
      %p138 = por %p136, %p137
      %p139 = scmp.ne.s32.totalorder %s125, %s126
      %p140 = scmp.eq.s32.totalorder %s15, 1
      %p141 = por %p139, %p140
      %p143 = scmp.ne.s32.totalorder %s126, %s142
      %p144 = scmp.eq.s32.totalorder %s15, 0
      %p145 = por %p143, %p144
      %p146 = scmp.le.s32.totalorder 1, %s9
      %p147 = scmp.lt.s32.totalorder %s9, 3
      %p148 = pnand %p146, %p147
      %p149 = pneg %p148
      // Predicated region
      $region9: #{_lambda_.12} parent=5 // pred_check
        _
      $region10: #{_lambda_.12} parent=5 // pred_check_branch
        %151 = sbr.rel (%p148) target = $region12
      $region11: #{_lambda_.12} parent=5 // pred_region
        %s152 = ssub.s32 %s9, 1
        // Predicated region
        $region13: #{_lambda_.12} parent=11 // pred_check
          %p153 = pneg %p56
        $region14: #{_lambda_.12} parent=11 // pred_check_branch
          %155 = sbr.rel (%p153) target = $region16
        $region15: #{_lambda_.12} parent=11 // pred_region
          %s156 = smul.u32 2, %s19
          %s157 = smul.u32 18, %s21
          %p158 = scmp.lt.s32.totalorder %s156, 1
          %s159 = scalar_select %p158, %s156, 1
          %p160 = scmp.lt.s32.totalorder %s157, 17
          %s161 = scalar_select %p160, %s157, 17
          %s162 = smul.addr %s159, 18
          %s163 = sadd.s32 %s161, %s162
          %s164 = smul.addr %s163, 4
          %s165 = scalar_lea.vmem %s0, %s164
          %s166 = smul.u32 2, %s19
          %s167 = smul.u32 18, %s21
        $region16: #{_lambda_.12} parent=11 // pred_fallthru
          _
      $region12: #{_lambda_.12} parent=5 // pred_fallthru
        _
      %p168 = scmp.lt.s32.totalorder %s9, 2
      // Predicated region
      $region17: #{_lambda_.12} parent=5 // pred_check
        %p169 = pneg %p168
      $region18: #{_lambda_.12} parent=5 // pred_check_branch
        %171 = sbr.rel (%p169) target = $region20
      $region19: #{_lambda_.12} parent=5 // pred_region
        // Predicated region
        $region21: #{_lambda_.12} parent=19 // pred_check
          %p172 = pneg %p78
        $region22: #{_lambda_.12} parent=19 // pred_check_branch
          %174 = sbr.rel (%p172) target = $region24
        $region23: #{_lambda_.12} parent=19 // pred_region
          %s175 = sand.u32 %s68, 1
          %s176 = sand.u32 %s68, 1
          %s177 = smul.addr %s176, 2304
          %s178 = scalar_lea.vmem [#allocation3], %s177
          %s179 = smul.u32 288, %s18
          %s180 = smul.u32 2, %s17
          %s181 = smul.addr %s179, 4
          %s182 = sadd.s32 %s180, %s181
          %s183 = smul.addr %s182, 4
          %s184 = scalar_lea.vmem %s1, %s183
          // Predicated region
          $region25: #{_lambda_.12} parent=23 // pred_check
            _
          $region26: #{_lambda_.12} parent=23 // pred_check_branch
            %186 = sbr.rel (0) target = $region28
          $region27: #{_lambda_.12} parent=23 // pred_region
            // Predicated region
            $region29: #{_lambda_.12} parent=27 // pred_check
              _
            $region30: #{_lambda_.12} parent=27 // pred_check_branch
              %188 = sbr.rel (0) target = $region32
            $region31: #{_lambda_.12} parent=27 // pred_region
              // Predicated region
              $region44: #{_lambda_.12} parent=31 // pred_check
                _
              $region45: #{_lambda_.12} parent=31 // pred_check_branch
                %777 = sbr.rel (0) target = $region47
              $region46: #{_lambda_.12} parent=31 // pred_region
                loop: start=0, step=1, limit=1
                $region48: #{_lambda_.12} parent=46 // loop_pre_header
                  _
                $region49: #{_lambda_.12} parent=46 // loop_header
                  %s779 = sphi 0, %s783
                  %p780 = scmp.ge.s32.totalorder %s779, 1
                  %s784 = sphi %s184, %s184
                  %s785 = sphi %s178, %s178
                $region50: #{_lambda_.12} parent=46 // loop_header_branch
                  %782 = sbr.rel (%p780) target = $region54
                $region51: #{_lambda_.12} parent=46 // loop_body
                  %v786 = vld [vmem:[%s784] sm:$0xff]
                  %787 = vst [vmem:[%s785] sm:$0xff] %v786
                  %v788 = vld [vmem:[%s784 + $0x10] sm:$0xff]
                  %789 = vst [vmem:[%s785 + $0x8] sm:$0xff] %v788
                  %v790 = vld [vmem:[%s784 + $0x20] sm:$0xff]
                  %791 = vst [vmem:[%s785 + $0x10] sm:$0xff] %v790
                  %v792 = vld [vmem:[%s784 + $0x30] sm:$0xff]
                  %793 = vst [vmem:[%s785 + $0x18] sm:$0xff] %v792
                  %v794 = vld [vmem:[%s784 + $0x40] sm:$0xff]
                  %795 = vst [vmem:[%s785 + $0x20] sm:$0xff] %v794
                  %v796 = vld [vmem:[%s784 + $0x50] sm:$0xff]
                  %797 = vst [vmem:[%s785 + $0x28] sm:$0xff] %v796
                  %v798 = vld [vmem:[%s784 + $0x60] sm:$0xff]
                  %799 = vst [vmem:[%s785 + $0x30] sm:$0xff] %v798
                  %v800 = vld [vmem:[%s784 + $0x70] sm:$0xff]
                  %801 = vst [vmem:[%s785 + $0x38] sm:$0xff] %v800
                  %v802 = vld [vmem:[%s784 + $0x80] sm:$0xff]
                  %803 = vst [vmem:[%s785 + $0x40] sm:$0xff] %v802
                  %v804 = vld [vmem:[%s784 + $0x90] sm:$0xff]
                  %805 = vst [vmem:[%s785 + $0x48] sm:$0xff] %v804
                  %v806 = vld [vmem:[%s784 + $0xa0] sm:$0xff]
                  %807 = vst [vmem:[%s785 + $0x50] sm:$0xff] %v806
                  %v808 = vld [vmem:[%s784 + $0xb0] sm:$0xff]
                  %809 = vst [vmem:[%s785 + $0x58] sm:$0xff] %v808
                  %v810 = vld [vmem:[%s784 + $0xc0] sm:$0xff]
                  %811 = vst [vmem:[%s785 + $0x60] sm:$0xff] %v810
                  %v812 = vld [vmem:[%s784 + $0xd0] sm:$0xff]
                  %813 = vst [vmem:[%s785 + $0x68] sm:$0xff] %v812
                  %v814 = vld [vmem:[%s784 + $0xe0] sm:$0xff]
                  %815 = vst [vmem:[%s785 + $0x70] sm:$0xff] %v814
                  %v816 = vld [vmem:[%s784 + $0xf0] sm:$0xff]
                  %817 = vst [vmem:[%s785 + $0x78] sm:$0xff] %v816
                  %v818 = vld [vmem:[%s784 + $0x100] sm:$0xff]
                  %819 = vst [vmem:[%s785 + $0x80] sm:$0xff] %v818
                  %v820 = vld [vmem:[%s784 + $0x110] sm:$0xff]
                  %821 = vst [vmem:[%s785 + $0x88] sm:$0xff] %v820
                  %v822 = vld [vmem:[%s784 + $0x120] sm:$0xff]
                  %823 = vst [vmem:[%s785 + $0x90] sm:$0xff] %v822
                  %v824 = vld [vmem:[%s784 + $0x130] sm:$0xff]
                  %825 = vst [vmem:[%s785 + $0x98] sm:$0xff] %v824
                  %v826 = vld [vmem:[%s784 + $0x140] sm:$0xff]
                  %827 = vst [vmem:[%s785 + $0xa0] sm:$0xff] %v826
                  %v828 = vld [vmem:[%s784 + $0x150] sm:$0xff]
                  %829 = vst [vmem:[%s785 + $0xa8] sm:$0xff] %v828
                  %v830 = vld [vmem:[%s784 + $0x160] sm:$0xff]
                  %831 = vst [vmem:[%s785 + $0xb0] sm:$0xff] %v830
                  %v832 = vld [vmem:[%s784 + $0x170] sm:$0xff]
                  %833 = vst [vmem:[%s785 + $0xb8] sm:$0xff] %v832
                  %v834 = vld [vmem:[%s784 + $0x180] sm:$0xff]
                  %835 = vst [vmem:[%s785 + $0xc0] sm:$0xff] %v834
                  %v836 = vld [vmem:[%s784 + $0x190] sm:$0xff]
                  %837 = vst [vmem:[%s785 + $0xc8] sm:$0xff] %v836
                  %v838 = vld [vmem:[%s784 + $0x1a0] sm:$0xff]
                  %839 = vst [vmem:[%s785 + $0xd0] sm:$0xff] %v838
                  %v840 = vld [vmem:[%s784 + $0x1b0] sm:$0xff]
                  %841 = vst [vmem:[%s785 + $0xd8] sm:$0xff] %v840
                  %v842 = vld [vmem:[%s784 + $0x1c0] sm:$0xff]
                  %843 = vst [vmem:[%s785 + $0xe0] sm:$0xff] %v842
                  %v844 = vld [vmem:[%s784 + $0x1d0] sm:$0xff]
                  %845 = vst [vmem:[%s785 + $0xe8] sm:$0xff] %v844
                  %v846 = vld [vmem:[%s784 + $0x1e0] sm:$0xff]
                  %847 = vst [vmem:[%s785 + $0xf0] sm:$0xff] %v846
                  %v848 = vld [vmem:[%s784 + $0x1f0] sm:$0xff]
                  %849 = vst [vmem:[%s785 + $0xf8] sm:$0xff] %v848
                  %v850 = vld [vmem:[%s784 + $0x200] sm:$0xff]
                  %851 = vst [vmem:[%s785 + $0x100] sm:$0xff] %v850
                  %v852 = vld [vmem:[%s784 + $0x210] sm:$0xff]
                  %853 = vst [vmem:[%s785 + $0x108] sm:$0xff] %v852
                  %v854 = vld [vmem:[%s784 + $0x220] sm:$0xff]
                  %855 = vst [vmem:[%s785 + $0x110] sm:$0xff] %v854
                  %v856 = vld [vmem:[%s784 + $0x230] sm:$0xff]
                  %857 = vst [vmem:[%s785 + $0x118] sm:$0xff] %v856
                  %v858 = vld [vmem:[%s784 + $0x240] sm:$0xff]
                  %859 = vst [vmem:[%s785 + $0x120] sm:$0xff] %v858
                  %v860 = vld [vmem:[%s784 + $0x250] sm:$0xff]
                  %861 = vst [vmem:[%s785 + $0x128] sm:$0xff] %v860
                  %v862 = vld [vmem:[%s784 + $0x260] sm:$0xff]
                  %863 = vst [vmem:[%s785 + $0x130] sm:$0xff] %v862
                  %v864 = vld [vmem:[%s784 + $0x270] sm:$0xff]
                  %865 = vst [vmem:[%s785 + $0x138] sm:$0xff] %v864
                  %v866 = vld [vmem:[%s784 + $0x280] sm:$0xff]
                  %867 = vst [vmem:[%s785 + $0x140] sm:$0xff] %v866
                  %v868 = vld [vmem:[%s784 + $0x290] sm:$0xff]
                  %869 = vst [vmem:[%s785 + $0x148] sm:$0xff] %v868
                  %v870 = vld [vmem:[%s784 + $0x2a0] sm:$0xff]
                  %871 = vst [vmem:[%s785 + $0x150] sm:$0xff] %v870
                  %v872 = vld [vmem:[%s784 + $0x2b0] sm:$0xff]
                  %873 = vst [vmem:[%s785 + $0x158] sm:$0xff] %v872
                  %v874 = vld [vmem:[%s784 + $0x2c0] sm:$0xff]
                  %875 = vst [vmem:[%s785 + $0x160] sm:$0xff] %v874
                  %v876 = vld [vmem:[%s784 + $0x2d0] sm:$0xff]
                  %877 = vst [vmem:[%s785 + $0x168] sm:$0xff] %v876
                  %v878 = vld [vmem:[%s784 + $0x2e0] sm:$0xff]
                  %879 = vst [vmem:[%s785 + $0x170] sm:$0xff] %v878
                  %v880 = vld [vmem:[%s784 + $0x2f0] sm:$0xff]
                  %881 = vst [vmem:[%s785 + $0x178] sm:$0xff] %v880
                  %v882 = vld [vmem:[%s784 + $0x300] sm:$0xff]
                  %883 = vst [vmem:[%s785 + $0x180] sm:$0xff] %v882
                  %v884 = vld [vmem:[%s784 + $0x310] sm:$0xff]
                  %885 = vst [vmem:[%s785 + $0x188] sm:$0xff] %v884
                  %v886 = vld [vmem:[%s784 + $0x320] sm:$0xff]
                  %887 = vst [vmem:[%s785 + $0x190] sm:$0xff] %v886
                  %v888 = vld [vmem:[%s784 + $0x330] sm:$0xff]
                  %889 = vst [vmem:[%s785 + $0x198] sm:$0xff] %v888
                  %v890 = vld [vmem:[%s784 + $0x340] sm:$0xff]
                  %891 = vst [vmem:[%s785 + $0x1a0] sm:$0xff] %v890
                  %v892 = vld [vmem:[%s784 + $0x350] sm:$0xff]
                  %893 = vst [vmem:[%s785 + $0x1a8] sm:$0xff] %v892
                  %v894 = vld [vmem:[%s784 + $0x360] sm:$0xff]
                  %895 = vst [vmem:[%s785 + $0x1b0] sm:$0xff] %v894
                  %v896 = vld [vmem:[%s784 + $0x370] sm:$0xff]
                  %897 = vst [vmem:[%s785 + $0x1b8] sm:$0xff] %v896
                  %v898 = vld [vmem:[%s784 + $0x380] sm:$0xff]
                  %899 = vst [vmem:[%s785 + $0x1c0] sm:$0xff] %v898
                  %v900 = vld [vmem:[%s784 + $0x390] sm:$0xff]
                  %901 = vst [vmem:[%s785 + $0x1c8] sm:$0xff] %v900
                  %v902 = vld [vmem:[%s784 + $0x3a0] sm:$0xff]
                  %903 = vst [vmem:[%s785 + $0x1d0] sm:$0xff] %v902
                  %v904 = vld [vmem:[%s784 + $0x3b0] sm:$0xff]
                  %905 = vst [vmem:[%s785 + $0x1d8] sm:$0xff] %v904
                  %v906 = vld [vmem:[%s784 + $0x3c0] sm:$0xff]
                  %907 = vst [vmem:[%s785 + $0x1e0] sm:$0xff] %v906
                  %v908 = vld [vmem:[%s784 + $0x3d0] sm:$0xff]
                  %909 = vst [vmem:[%s785 + $0x1e8] sm:$0xff] %v908
                  %v910 = vld [vmem:[%s784 + $0x3e0] sm:$0xff]
                  %911 = vst [vmem:[%s785 + $0x1f0] sm:$0xff] %v910
                  %v912 = vld [vmem:[%s784 + $0x3f0] sm:$0xff]
                  %913 = vst [vmem:[%s785 + $0x1f8] sm:$0xff] %v912
                  %v914 = vld [vmem:[%s784 + $0x400] sm:$0xff]
                  %915 = vst [vmem:[%s785 + $0x200] sm:$0xff] %v914
                  %v916 = vld [vmem:[%s784 + $0x410] sm:$0xff]
                  %917 = vst [vmem:[%s785 + $0x208] sm:$0xff] %v916
                  %v918 = vld [vmem:[%s784 + $0x420] sm:$0xff]
                  %919 = vst [vmem:[%s785 + $0x210] sm:$0xff] %v918
                  %v920 = vld [vmem:[%s784 + $0x430] sm:$0xff]
                  %921 = vst [vmem:[%s785 + $0x218] sm:$0xff] %v920
                  %v922 = vld [vmem:[%s784 + $0x440] sm:$0xff]
                  %923 = vst [vmem:[%s785 + $0x220] sm:$0xff] %v922
                  %v924 = vld [vmem:[%s784 + $0x450] sm:$0xff]
                  %925 = vst [vmem:[%s785 + $0x228] sm:$0xff] %v924
                  %v926 = vld [vmem:[%s784 + $0x460] sm:$0xff]
                  %927 = vst [vmem:[%s785 + $0x230] sm:$0xff] %v926
                  %v928 = vld [vmem:[%s784 + $0x470] sm:$0xff]
                  %929 = vst [vmem:[%s785 + $0x238] sm:$0xff] %v928
                  %v930 = vld [vmem:[%s784 + $0x480] sm:$0xff]
                  %931 = vst [vmem:[%s785 + $0x240] sm:$0xff] %v930
                  %v932 = vld [vmem:[%s784 + $0x490] sm:$0xff]
                  %933 = vst [vmem:[%s785 + $0x248] sm:$0xff] %v932
                  %v934 = vld [vmem:[%s784 + $0x4a0] sm:$0xff]
                  %935 = vst [vmem:[%s785 + $0x250] sm:$0xff] %v934
                  %v936 = vld [vmem:[%s784 + $0x4b0] sm:$0xff]
                  %937 = vst [vmem:[%s785 + $0x258] sm:$0xff] %v936
                  %v938 = vld [vmem:[%s784 + $0x4c0] sm:$0xff]
                  %939 = vst [vmem:[%s785 + $0x260] sm:$0xff] %v938
                  %v940 = vld [vmem:[%s784 + $0x4d0] sm:$0xff]
                  %941 = vst [vmem:[%s785 + $0x268] sm:$0xff] %v940
                  %v942 = vld [vmem:[%s784 + $0x4e0] sm:$0xff]
                  %943 = vst [vmem:[%s785 + $0x270] sm:$0xff] %v942
                  %v944 = vld [vmem:[%s784 + $0x4f0] sm:$0xff]
                  %945 = vst [vmem:[%s785 + $0x278] sm:$0xff] %v944
                  %v946 = vld [vmem:[%s784 + $0x500] sm:$0xff]
                  %947 = vst [vmem:[%s785 + $0x280] sm:$0xff] %v946
                  %v948 = vld [vmem:[%s784 + $0x510] sm:$0xff]
                  %949 = vst [vmem:[%s785 + $0x288] sm:$0xff] %v948
                  %v950 = vld [vmem:[%s784 + $0x520] sm:$0xff]
                  %951 = vst [vmem:[%s785 + $0x290] sm:$0xff] %v950
                  %v952 = vld [vmem:[%s784 + $0x530] sm:$0xff]
                  %953 = vst [vmem:[%s785 + $0x298] sm:$0xff] %v952
                  %v954 = vld [vmem:[%s784 + $0x540] sm:$0xff]
                  %955 = vst [vmem:[%s785 + $0x2a0] sm:$0xff] %v954
                  %v956 = vld [vmem:[%s784 + $0x550] sm:$0xff]
                  %957 = vst [vmem:[%s785 + $0x2a8] sm:$0xff] %v956
                  %v958 = vld [vmem:[%s784 + $0x560] sm:$0xff]
                  %959 = vst [vmem:[%s785 + $0x2b0] sm:$0xff] %v958
                  %v960 = vld [vmem:[%s784 + $0x570] sm:$0xff]
                  %961 = vst [vmem:[%s785 + $0x2b8] sm:$0xff] %v960
                  %v962 = vld [vmem:[%s784 + $0x580] sm:$0xff]
                  %963 = vst [vmem:[%s785 + $0x2c0] sm:$0xff] %v962
                  %v964 = vld [vmem:[%s784 + $0x590] sm:$0xff]
                  %965 = vst [vmem:[%s785 + $0x2c8] sm:$0xff] %v964
                  %v966 = vld [vmem:[%s784 + $0x5a0] sm:$0xff]
                  %967 = vst [vmem:[%s785 + $0x2d0] sm:$0xff] %v966
                  %v968 = vld [vmem:[%s784 + $0x5b0] sm:$0xff]
                  %969 = vst [vmem:[%s785 + $0x2d8] sm:$0xff] %v968
                  %v970 = vld [vmem:[%s784 + $0x5c0] sm:$0xff]
                  %971 = vst [vmem:[%s785 + $0x2e0] sm:$0xff] %v970
                  %v972 = vld [vmem:[%s784 + $0x5d0] sm:$0xff]
                  %973 = vst [vmem:[%s785 + $0x2e8] sm:$0xff] %v972
                  %v974 = vld [vmem:[%s784 + $0x5e0] sm:$0xff]
                  %975 = vst [vmem:[%s785 + $0x2f0] sm:$0xff] %v974
                  %v976 = vld [vmem:[%s784 + $0x5f0] sm:$0xff]
                  %977 = vst [vmem:[%s785 + $0x2f8] sm:$0xff] %v976
                  %v978 = vld [vmem:[%s784 + $0x600] sm:$0xff]
                  %979 = vst [vmem:[%s785 + $0x300] sm:$0xff] %v978
                  %v980 = vld [vmem:[%s784 + $0x610] sm:$0xff]
                  %981 = vst [vmem:[%s785 + $0x308] sm:$0xff] %v980
                  %v982 = vld [vmem:[%s784 + $0x620] sm:$0xff]
                  %983 = vst [vmem:[%s785 + $0x310] sm:$0xff] %v982
                  %v984 = vld [vmem:[%s784 + $0x630] sm:$0xff]
                  %985 = vst [vmem:[%s785 + $0x318] sm:$0xff] %v984
                  %v986 = vld [vmem:[%s784 + $0x640] sm:$0xff]
                  %987 = vst [vmem:[%s785 + $0x320] sm:$0xff] %v986
                  %v988 = vld [vmem:[%s784 + $0x650] sm:$0xff]
                  %989 = vst [vmem:[%s785 + $0x328] sm:$0xff] %v988
                  %v990 = vld [vmem:[%s784 + $0x660] sm:$0xff]
                  %991 = vst [vmem:[%s785 + $0x330] sm:$0xff] %v990
                  %v992 = vld [vmem:[%s784 + $0x670] sm:$0xff]
                  %993 = vst [vmem:[%s785 + $0x338] sm:$0xff] %v992
                  %v994 = vld [vmem:[%s784 + $0x680] sm:$0xff]
                  %995 = vst [vmem:[%s785 + $0x340] sm:$0xff] %v994
                  %v996 = vld [vmem:[%s784 + $0x690] sm:$0xff]
                  %997 = vst [vmem:[%s785 + $0x348] sm:$0xff] %v996
                  %v998 = vld [vmem:[%s784 + $0x6a0] sm:$0xff]
                  %999 = vst [vmem:[%s785 + $0x350] sm:$0xff] %v998
                  %v1000 = vld [vmem:[%s784 + $0x6b0] sm:$0xff]
                  %1001 = vst [vmem:[%s785 + $0x358] sm:$0xff] %v1000
                  %v1002 = vld [vmem:[%s784 + $0x6c0] sm:$0xff]
                  %1003 = vst [vmem:[%s785 + $0x360] sm:$0xff] %v1002
                  %v1004 = vld [vmem:[%s784 + $0x6d0] sm:$0xff]
                  %1005 = vst [vmem:[%s785 + $0x368] sm:$0xff] %v1004
                  %v1006 = vld [vmem:[%s784 + $0x6e0] sm:$0xff]
                  %1007 = vst [vmem:[%s785 + $0x370] sm:$0xff] %v1006
                  %v1008 = vld [vmem:[%s784 + $0x6f0] sm:$0xff]
                  %1009 = vst [vmem:[%s785 + $0x378] sm:$0xff] %v1008
                  %v1010 = vld [vmem:[%s784 + $0x700] sm:$0xff]
                  %1011 = vst [vmem:[%s785 + $0x380] sm:$0xff] %v1010
                  %v1012 = vld [vmem:[%s784 + $0x710] sm:$0xff]
                  %1013 = vst [vmem:[%s785 + $0x388] sm:$0xff] %v1012
                  %v1014 = vld [vmem:[%s784 + $0x720] sm:$0xff]
                  %1015 = vst [vmem:[%s785 + $0x390] sm:$0xff] %v1014
                  %v1016 = vld [vmem:[%s784 + $0x730] sm:$0xff]
                  %1017 = vst [vmem:[%s785 + $0x398] sm:$0xff] %v1016
                  %v1018 = vld [vmem:[%s784 + $0x740] sm:$0xff]
                  %1019 = vst [vmem:[%s785 + $0x3a0] sm:$0xff] %v1018
                  %v1020 = vld [vmem:[%s784 + $0x750] sm:$0xff]
                  %1021 = vst [vmem:[%s785 + $0x3a8] sm:$0xff] %v1020
                  %v1022 = vld [vmem:[%s784 + $0x760] sm:$0xff]
                  %1023 = vst [vmem:[%s785 + $0x3b0] sm:$0xff] %v1022
                  %v1024 = vld [vmem:[%s784 + $0x770] sm:$0xff]
                  %1025 = vst [vmem:[%s785 + $0x3b8] sm:$0xff] %v1024
                  %v1026 = vld [vmem:[%s784 + $0x780] sm:$0xff]
                  %1027 = vst [vmem:[%s785 + $0x3c0] sm:$0xff] %v1026
                  %v1028 = vld [vmem:[%s784 + $0x790] sm:$0xff]
                  %1029 = vst [vmem:[%s785 + $0x3c8] sm:$0xff] %v1028
                  %v1030 = vld [vmem:[%s784 + $0x7a0] sm:$0xff]
                  %1031 = vst [vmem:[%s785 + $0x3d0] sm:$0xff] %v1030
                  %v1032 = vld [vmem:[%s784 + $0x7b0] sm:$0xff]
                  %1033 = vst [vmem:[%s785 + $0x3d8] sm:$0xff] %v1032
                  %v1034 = vld [vmem:[%s784 + $0x7c0] sm:$0xff]
                  %1035 = vst [vmem:[%s785 + $0x3e0] sm:$0xff] %v1034
                  %v1036 = vld [vmem:[%s784 + $0x7d0] sm:$0xff]
                  %1037 = vst [vmem:[%s785 + $0x3e8] sm:$0xff] %v1036
                  %v1038 = vld [vmem:[%s784 + $0x7e0] sm:$0xff]
                  %1039 = vst [vmem:[%s785 + $0x3f0] sm:$0xff] %v1038
                  %v1040 = vld [vmem:[%s784 + $0x7f0] sm:$0xff]
                  %1041 = vst [vmem:[%s785 + $0x3f8] sm:$0xff] %v1040
                  %v1042 = vld [vmem:[%s784 + $0x800] sm:$0xff]
                  %1043 = vst [vmem:[%s785 + $0x400] sm:$0xff] %v1042
                  %v1044 = vld [vmem:[%s784 + $0x810] sm:$0xff]
                  %1045 = vst [vmem:[%s785 + $0x408] sm:$0xff] %v1044
                  %v1046 = vld [vmem:[%s784 + $0x820] sm:$0xff]
                  %1047 = vst [vmem:[%s785 + $0x410] sm:$0xff] %v1046
                  %v1048 = vld [vmem:[%s784 + $0x830] sm:$0xff]
                  %1049 = vst [vmem:[%s785 + $0x418] sm:$0xff] %v1048
                  %v1050 = vld [vmem:[%s784 + $0x840] sm:$0xff]
                  %1051 = vst [vmem:[%s785 + $0x420] sm:$0xff] %v1050
                  %v1052 = vld [vmem:[%s784 + $0x850] sm:$0xff]
                  %1053 = vst [vmem:[%s785 + $0x428] sm:$0xff] %v1052
                  %v1054 = vld [vmem:[%s784 + $0x860] sm:$0xff]
                  %1055 = vst [vmem:[%s785 + $0x430] sm:$0xff] %v1054
                  %v1056 = vld [vmem:[%s784 + $0x870] sm:$0xff]
                  %1057 = vst [vmem:[%s785 + $0x438] sm:$0xff] %v1056
                  %v1058 = vld [vmem:[%s784 + $0x880] sm:$0xff]
                  %1059 = vst [vmem:[%s785 + $0x440] sm:$0xff] %v1058
                  %v1060 = vld [vmem:[%s784 + $0x890] sm:$0xff]
                  %1061 = vst [vmem:[%s785 + $0x448] sm:$0xff] %v1060
                  %v1062 = vld [vmem:[%s784 + $0x8a0] sm:$0xff]
                  %1063 = vst [vmem:[%s785 + $0x450] sm:$0xff] %v1062
                  %v1064 = vld [vmem:[%s784 + $0x8b0] sm:$0xff]
                  %1065 = vst [vmem:[%s785 + $0x458] sm:$0xff] %v1064
                  %v1066 = vld [vmem:[%s784 + $0x8c0] sm:$0xff]
                  %1067 = vst [vmem:[%s785 + $0x460] sm:$0xff] %v1066
                  %v1068 = vld [vmem:[%s784 + $0x8d0] sm:$0xff]
                  %1069 = vst [vmem:[%s785 + $0x468] sm:$0xff] %v1068
                  %v1070 = vld [vmem:[%s784 + $0x8e0] sm:$0xff]
                  %1071 = vst [vmem:[%s785 + $0x470] sm:$0xff] %v1070
                  %v1072 = vld [vmem:[%s784 + $0x8f0] sm:$0xff]
                  %1073 = vst [vmem:[%s785 + $0x478] sm:$0xff] %v1072
                  %v1074 = vld [vmem:[%s784 + $0x900] sm:$0xff]
                  %1075 = vst [vmem:[%s785 + $0x480] sm:$0xff] %v1074
                  %v1076 = vld [vmem:[%s784 + $0x910] sm:$0xff]
                  %1077 = vst [vmem:[%s785 + $0x488] sm:$0xff] %v1076
                  %v1078 = vld [vmem:[%s784 + $0x920] sm:$0xff]
                  %1079 = vst [vmem:[%s785 + $0x490] sm:$0xff] %v1078
                  %v1080 = vld [vmem:[%s784 + $0x930] sm:$0xff]
                  %1081 = vst [vmem:[%s785 + $0x498] sm:$0xff] %v1080
                  %v1082 = vld [vmem:[%s784 + $0x940] sm:$0xff]
                  %1083 = vst [vmem:[%s785 + $0x4a0] sm:$0xff] %v1082
                  %v1084 = vld [vmem:[%s784 + $0x950] sm:$0xff]
                  %1085 = vst [vmem:[%s785 + $0x4a8] sm:$0xff] %v1084
                  %v1086 = vld [vmem:[%s784 + $0x960] sm:$0xff]
                  %1087 = vst [vmem:[%s785 + $0x4b0] sm:$0xff] %v1086
                  %v1088 = vld [vmem:[%s784 + $0x970] sm:$0xff]
                  %1089 = vst [vmem:[%s785 + $0x4b8] sm:$0xff] %v1088
                  %v1090 = vld [vmem:[%s784 + $0x980] sm:$0xff]
                  %1091 = vst [vmem:[%s785 + $0x4c0] sm:$0xff] %v1090
                  %v1092 = vld [vmem:[%s784 + $0x990] sm:$0xff]
                  %1093 = vst [vmem:[%s785 + $0x4c8] sm:$0xff] %v1092
                  %v1094 = vld [vmem:[%s784 + $0x9a0] sm:$0xff]
                  %1095 = vst [vmem:[%s785 + $0x4d0] sm:$0xff] %v1094
                  %v1096 = vld [vmem:[%s784 + $0x9b0] sm:$0xff]
                  %1097 = vst [vmem:[%s785 + $0x4d8] sm:$0xff] %v1096
                  %v1098 = vld [vmem:[%s784 + $0x9c0] sm:$0xff]
                  %1099 = vst [vmem:[%s785 + $0x4e0] sm:$0xff] %v1098
                  %v1100 = vld [vmem:[%s784 + $0x9d0] sm:$0xff]
                  %1101 = vst [vmem:[%s785 + $0x4e8] sm:$0xff] %v1100
                  %v1102 = vld [vmem:[%s784 + $0x9e0] sm:$0xff]
                  %1103 = vst [vmem:[%s785 + $0x4f0] sm:$0xff] %v1102
                  %v1104 = vld [vmem:[%s784 + $0x9f0] sm:$0xff]
                  %1105 = vst [vmem:[%s785 + $0x4f8] sm:$0xff] %v1104
                  %v1106 = vld [vmem:[%s784 + $0xa00] sm:$0xff]
                  %1107 = vst [vmem:[%s785 + $0x500] sm:$0xff] %v1106
                  %v1108 = vld [vmem:[%s784 + $0xa10] sm:$0xff]
                  %1109 = vst [vmem:[%s785 + $0x508] sm:$0xff] %v1108
                  %v1110 = vld [vmem:[%s784 + $0xa20] sm:$0xff]
                  %1111 = vst [vmem:[%s785 + $0x510] sm:$0xff] %v1110
                  %v1112 = vld [vmem:[%s784 + $0xa30] sm:$0xff]
                  %1113 = vst [vmem:[%s785 + $0x518] sm:$0xff] %v1112
                  %v1114 = vld [vmem:[%s784 + $0xa40] sm:$0xff]
                  %1115 = vst [vmem:[%s785 + $0x520] sm:$0xff] %v1114
                  %v1116 = vld [vmem:[%s784 + $0xa50] sm:$0xff]
                  %1117 = vst [vmem:[%s785 + $0x528] sm:$0xff] %v1116
                  %v1118 = vld [vmem:[%s784 + $0xa60] sm:$0xff]
                  %1119 = vst [vmem:[%s785 + $0x530] sm:$0xff] %v1118
                  %v1120 = vld [vmem:[%s784 + $0xa70] sm:$0xff]
                  %1121 = vst [vmem:[%s785 + $0x538] sm:$0xff] %v1120
                  %v1122 = vld [vmem:[%s784 + $0xa80] sm:$0xff]
                  %1123 = vst [vmem:[%s785 + $0x540] sm:$0xff] %v1122
                  %v1124 = vld [vmem:[%s784 + $0xa90] sm:$0xff]
                  %1125 = vst [vmem:[%s785 + $0x548] sm:$0xff] %v1124
                  %v1126 = vld [vmem:[%s784 + $0xaa0] sm:$0xff]
                  %1127 = vst [vmem:[%s785 + $0x550] sm:$0xff] %v1126
                  %v1128 = vld [vmem:[%s784 + $0xab0] sm:$0xff]
                  %1129 = vst [vmem:[%s785 + $0x558] sm:$0xff] %v1128
                  %v1130 = vld [vmem:[%s784 + $0xac0] sm:$0xff]
                  %1131 = vst [vmem:[%s785 + $0x560] sm:$0xff] %v1130
                  %v1132 = vld [vmem:[%s784 + $0xad0] sm:$0xff]
                  %1133 = vst [vmem:[%s785 + $0x568] sm:$0xff] %v1132
                  %v1134 = vld [vmem:[%s784 + $0xae0] sm:$0xff]
                  %1135 = vst [vmem:[%s785 + $0x570] sm:$0xff] %v1134
                  %v1136 = vld [vmem:[%s784 + $0xaf0] sm:$0xff]
                  %1137 = vst [vmem:[%s785 + $0x578] sm:$0xff] %v1136
                  %v1138 = vld [vmem:[%s784 + $0xb00] sm:$0xff]
                  %1139 = vst [vmem:[%s785 + $0x580] sm:$0xff] %v1138
                  %v1140 = vld [vmem:[%s784 + $0xb10] sm:$0xff]
                  %1141 = vst [vmem:[%s785 + $0x588] sm:$0xff] %v1140
                  %v1142 = vld [vmem:[%s784 + $0xb20] sm:$0xff]
                  %1143 = vst [vmem:[%s785 + $0x590] sm:$0xff] %v1142
                  %v1144 = vld [vmem:[%s784 + $0xb30] sm:$0xff]
                  %1145 = vst [vmem:[%s785 + $0x598] sm:$0xff] %v1144
                  %v1146 = vld [vmem:[%s784 + $0xb40] sm:$0xff]
                  %1147 = vst [vmem:[%s785 + $0x5a0] sm:$0xff] %v1146
                  %v1148 = vld [vmem:[%s784 + $0xb50] sm:$0xff]
                  %1149 = vst [vmem:[%s785 + $0x5a8] sm:$0xff] %v1148
                  %v1150 = vld [vmem:[%s784 + $0xb60] sm:$0xff]
                  %1151 = vst [vmem:[%s785 + $0x5b0] sm:$0xff] %v1150
                  %v1152 = vld [vmem:[%s784 + $0xb70] sm:$0xff]
                  %1153 = vst [vmem:[%s785 + $0x5b8] sm:$0xff] %v1152
                  %v1154 = vld [vmem:[%s784 + $0xb80] sm:$0xff]
                  %1155 = vst [vmem:[%s785 + $0x5c0] sm:$0xff] %v1154
                  %v1156 = vld [vmem:[%s784 + $0xb90] sm:$0xff]
                  %1157 = vst [vmem:[%s785 + $0x5c8] sm:$0xff] %v1156
                  %v1158 = vld [vmem:[%s784 + $0xba0] sm:$0xff]
                  %1159 = vst [vmem:[%s785 + $0x5d0] sm:$0xff] %v1158
                  %v1160 = vld [vmem:[%s784 + $0xbb0] sm:$0xff]
                  %1161 = vst [vmem:[%s785 + $0x5d8] sm:$0xff] %v1160
                  %v1162 = vld [vmem:[%s784 + $0xbc0] sm:$0xff]
                  %1163 = vst [vmem:[%s785 + $0x5e0] sm:$0xff] %v1162
                  %v1164 = vld [vmem:[%s784 + $0xbd0] sm:$0xff]
                  %1165 = vst [vmem:[%s785 + $0x5e8] sm:$0xff] %v1164
                  %v1166 = vld [vmem:[%s784 + $0xbe0] sm:$0xff]
                  %1167 = vst [vmem:[%s785 + $0x5f0] sm:$0xff] %v1166
                  %v1168 = vld [vmem:[%s784 + $0xbf0] sm:$0xff]
                  %1169 = vst [vmem:[%s785 + $0x5f8] sm:$0xff] %v1168
                  %v1170 = vld [vmem:[%s784 + $0xc00] sm:$0xff]
                  %1171 = vst [vmem:[%s785 + $0x600] sm:$0xff] %v1170
                  %v1172 = vld [vmem:[%s784 + $0xc10] sm:$0xff]
                  %1173 = vst [vmem:[%s785 + $0x608] sm:$0xff] %v1172
                  %v1174 = vld [vmem:[%s784 + $0xc20] sm:$0xff]
                  %1175 = vst [vmem:[%s785 + $0x610] sm:$0xff] %v1174
                  %v1176 = vld [vmem:[%s784 + $0xc30] sm:$0xff]
                  %1177 = vst [vmem:[%s785 + $0x618] sm:$0xff] %v1176
                  %v1178 = vld [vmem:[%s784 + $0xc40] sm:$0xff]
                  %1179 = vst [vmem:[%s785 + $0x620] sm:$0xff] %v1178
                  %v1180 = vld [vmem:[%s784 + $0xc50] sm:$0xff]
                  %1181 = vst [vmem:[%s785 + $0x628] sm:$0xff] %v1180
                  %v1182 = vld [vmem:[%s784 + $0xc60] sm:$0xff]
                  %1183 = vst [vmem:[%s785 + $0x630] sm:$0xff] %v1182
                  %v1184 = vld [vmem:[%s784 + $0xc70] sm:$0xff]
                  %1185 = vst [vmem:[%s785 + $0x638] sm:$0xff] %v1184
                  %v1186 = vld [vmem:[%s784 + $0xc80] sm:$0xff]
                  %1187 = vst [vmem:[%s785 + $0x640] sm:$0xff] %v1186
                  %v1188 = vld [vmem:[%s784 + $0xc90] sm:$0xff]
                  %1189 = vst [vmem:[%s785 + $0x648] sm:$0xff] %v1188
                  %v1190 = vld [vmem:[%s784 + $0xca0] sm:$0xff]
                  %1191 = vst [vmem:[%s785 + $0x650] sm:$0xff] %v1190
                  %v1192 = vld [vmem:[%s784 + $0xcb0] sm:$0xff]
                  %1193 = vst [vmem:[%s785 + $0x658] sm:$0xff] %v1192
                  %v1194 = vld [vmem:[%s784 + $0xcc0] sm:$0xff]
                  %1195 = vst [vmem:[%s785 + $0x660] sm:$0xff] %v1194
                  %v1196 = vld [vmem:[%s784 + $0xcd0] sm:$0xff]
                  %1197 = vst [vmem:[%s785 + $0x668] sm:$0xff] %v1196
                  %v1198 = vld [vmem:[%s784 + $0xce0] sm:$0xff]
                  %1199 = vst [vmem:[%s785 + $0x670] sm:$0xff] %v1198
                  %v1200 = vld [vmem:[%s784 + $0xcf0] sm:$0xff]
                  %1201 = vst [vmem:[%s785 + $0x678] sm:$0xff] %v1200
                  %v1202 = vld [vmem:[%s784 + $0xd00] sm:$0xff]
                  %1203 = vst [vmem:[%s785 + $0x680] sm:$0xff] %v1202
                  %v1204 = vld [vmem:[%s784 + $0xd10] sm:$0xff]
                  %1205 = vst [vmem:[%s785 + $0x688] sm:$0xff] %v1204
                  %v1206 = vld [vmem:[%s784 + $0xd20] sm:$0xff]
                  %1207 = vst [vmem:[%s785 + $0x690] sm:$0xff] %v1206
                  %v1208 = vld [vmem:[%s784 + $0xd30] sm:$0xff]
                  %1209 = vst [vmem:[%s785 + $0x698] sm:$0xff] %v1208
                  %v1210 = vld [vmem:[%s784 + $0xd40] sm:$0xff]
                  %1211 = vst [vmem:[%s785 + $0x6a0] sm:$0xff] %v1210
                  %v1212 = vld [vmem:[%s784 + $0xd50] sm:$0xff]
                  %1213 = vst [vmem:[%s785 + $0x6a8] sm:$0xff] %v1212
                  %v1214 = vld [vmem:[%s784 + $0xd60] sm:$0xff]
                  %1215 = vst [vmem:[%s785 + $0x6b0] sm:$0xff] %v1214
                  %v1216 = vld [vmem:[%s784 + $0xd70] sm:$0xff]
                  %1217 = vst [vmem:[%s785 + $0x6b8] sm:$0xff] %v1216
                  %v1218 = vld [vmem:[%s784 + $0xd80] sm:$0xff]
                  %1219 = vst [vmem:[%s785 + $0x6c0] sm:$0xff] %v1218
                  %v1220 = vld [vmem:[%s784 + $0xd90] sm:$0xff]
                  %1221 = vst [vmem:[%s785 + $0x6c8] sm:$0xff] %v1220
                  %v1222 = vld [vmem:[%s784 + $0xda0] sm:$0xff]
                  %1223 = vst [vmem:[%s785 + $0x6d0] sm:$0xff] %v1222
                  %v1224 = vld [vmem:[%s784 + $0xdb0] sm:$0xff]
                  %1225 = vst [vmem:[%s785 + $0x6d8] sm:$0xff] %v1224
                  %v1226 = vld [vmem:[%s784 + $0xdc0] sm:$0xff]
                  %1227 = vst [vmem:[%s785 + $0x6e0] sm:$0xff] %v1226
                  %v1228 = vld [vmem:[%s784 + $0xdd0] sm:$0xff]
                  %1229 = vst [vmem:[%s785 + $0x6e8] sm:$0xff] %v1228
                  %v1230 = vld [vmem:[%s784 + $0xde0] sm:$0xff]
                  %1231 = vst [vmem:[%s785 + $0x6f0] sm:$0xff] %v1230
                  %v1232 = vld [vmem:[%s784 + $0xdf0] sm:$0xff]
                  %1233 = vst [vmem:[%s785 + $0x6f8] sm:$0xff] %v1232
                  %v1234 = vld [vmem:[%s784 + $0xe00] sm:$0xff]
                  %1235 = vst [vmem:[%s785 + $0x700] sm:$0xff] %v1234
                  %v1236 = vld [vmem:[%s784 + $0xe10] sm:$0xff]
                  %1237 = vst [vmem:[%s785 + $0x708] sm:$0xff] %v1236
                  %v1238 = vld [vmem:[%s784 + $0xe20] sm:$0xff]
                  %1239 = vst [vmem:[%s785 + $0x710] sm:$0xff] %v1238
                  %v1240 = vld [vmem:[%s784 + $0xe30] sm:$0xff]
                  %1241 = vst [vmem:[%s785 + $0x718] sm:$0xff] %v1240
                  %v1242 = vld [vmem:[%s784 + $0xe40] sm:$0xff]
                  %1243 = vst [vmem:[%s785 + $0x720] sm:$0xff] %v1242
                  %v1244 = vld [vmem:[%s784 + $0xe50] sm:$0xff]
                  %1245 = vst [vmem:[%s785 + $0x728] sm:$0xff] %v1244
                  %v1246 = vld [vmem:[%s784 + $0xe60] sm:$0xff]
                  %1247 = vst [vmem:[%s785 + $0x730] sm:$0xff] %v1246
                  %v1248 = vld [vmem:[%s784 + $0xe70] sm:$0xff]
                  %1249 = vst [vmem:[%s785 + $0x738] sm:$0xff] %v1248
                  %v1250 = vld [vmem:[%s784 + $0xe80] sm:$0xff]
                  %1251 = vst [vmem:[%s785 + $0x740] sm:$0xff] %v1250
                  %v1252 = vld [vmem:[%s784 + $0xe90] sm:$0xff]
                  %1253 = vst [vmem:[%s785 + $0x748] sm:$0xff] %v1252
                  %v1254 = vld [vmem:[%s784 + $0xea0] sm:$0xff]
                  %1255 = vst [vmem:[%s785 + $0x750] sm:$0xff] %v1254
                  %v1256 = vld [vmem:[%s784 + $0xeb0] sm:$0xff]
                  %1257 = vst [vmem:[%s785 + $0x758] sm:$0xff] %v1256
                  %v1258 = vld [vmem:[%s784 + $0xec0] sm:$0xff]
                  %1259 = vst [vmem:[%s785 + $0x760] sm:$0xff] %v1258
                  %v1260 = vld [vmem:[%s784 + $0xed0] sm:$0xff]
                  %1261 = vst [vmem:[%s785 + $0x768] sm:$0xff] %v1260
                  %v1262 = vld [vmem:[%s784 + $0xee0] sm:$0xff]
                  %1263 = vst [vmem:[%s785 + $0x770] sm:$0xff] %v1262
                  %v1264 = vld [vmem:[%s784 + $0xef0] sm:$0xff]
                  %1265 = vst [vmem:[%s785 + $0x778] sm:$0xff] %v1264
                  %v1266 = vld [vmem:[%s784 + $0xf00] sm:$0xff]
                  %1267 = vst [vmem:[%s785 + $0x780] sm:$0xff] %v1266
                  %v1268 = vld [vmem:[%s784 + $0xf10] sm:$0xff]
                  %1269 = vst [vmem:[%s785 + $0x788] sm:$0xff] %v1268
                  %v1270 = vld [vmem:[%s784 + $0xf20] sm:$0xff]
                  %1271 = vst [vmem:[%s785 + $0x790] sm:$0xff] %v1270
                  %v1272 = vld [vmem:[%s784 + $0xf30] sm:$0xff]
                  %1273 = vst [vmem:[%s785 + $0x798] sm:$0xff] %v1272
                  %v1274 = vld [vmem:[%s784 + $0xf40] sm:$0xff]
                  %1275 = vst [vmem:[%s785 + $0x7a0] sm:$0xff] %v1274
                  %v1276 = vld [vmem:[%s784 + $0xf50] sm:$0xff]
                  %1277 = vst [vmem:[%s785 + $0x7a8] sm:$0xff] %v1276
                  %v1278 = vld [vmem:[%s784 + $0xf60] sm:$0xff]
                  %1279 = vst [vmem:[%s785 + $0x7b0] sm:$0xff] %v1278
                  %v1280 = vld [vmem:[%s784 + $0xf70] sm:$0xff]
                  %1281 = vst [vmem:[%s785 + $0x7b8] sm:$0xff] %v1280
                  %v1282 = vld [vmem:[%s784 + $0xf80] sm:$0xff]
                  %1283 = vst [vmem:[%s785 + $0x7c0] sm:$0xff] %v1282
                  %v1284 = vld [vmem:[%s784 + $0xf90] sm:$0xff]
                  %1285 = vst [vmem:[%s785 + $0x7c8] sm:$0xff] %v1284
                  %v1286 = vld [vmem:[%s784 + $0xfa0] sm:$0xff]
                  %1287 = vst [vmem:[%s785 + $0x7d0] sm:$0xff] %v1286
                  %v1288 = vld [vmem:[%s784 + $0xfb0] sm:$0xff]
                  %1289 = vst [vmem:[%s785 + $0x7d8] sm:$0xff] %v1288
                  %v1290 = vld [vmem:[%s784 + $0xfc0] sm:$0xff]
                  %1291 = vst [vmem:[%s785 + $0x7e0] sm:$0xff] %v1290
                  %v1292 = vld [vmem:[%s784 + $0xfd0] sm:$0xff]
                  %1293 = vst [vmem:[%s785 + $0x7e8] sm:$0xff] %v1292
                  %v1294 = vld [vmem:[%s784 + $0xfe0] sm:$0xff]
                  %1295 = vst [vmem:[%s785 + $0x7f0] sm:$0xff] %v1294
                  %v1296 = vld [vmem:[%s784 + $0xff0] sm:$0xff]
                  %1297 = vst [vmem:[%s785 + $0x7f8] sm:$0xff] %v1296
                  %v1298 = vld [vmem:[%s784 + $0x1000] sm:$0xff]
                  %1299 = vst [vmem:[%s785 + $0x800] sm:$0xff] %v1298
                  %v1300 = vld [vmem:[%s784 + $0x1010] sm:$0xff]
                  %1301 = vst [vmem:[%s785 + $0x808] sm:$0xff] %v1300
                  %v1302 = vld [vmem:[%s784 + $0x1020] sm:$0xff]
                  %1303 = vst [vmem:[%s785 + $0x810] sm:$0xff] %v1302
                  %v1304 = vld [vmem:[%s784 + $0x1030] sm:$0xff]
                  %1305 = vst [vmem:[%s785 + $0x818] sm:$0xff] %v1304
                  %v1306 = vld [vmem:[%s784 + $0x1040] sm:$0xff]
                  %1307 = vst [vmem:[%s785 + $0x820] sm:$0xff] %v1306
                  %v1308 = vld [vmem:[%s784 + $0x1050] sm:$0xff]
                  %1309 = vst [vmem:[%s785 + $0x828] sm:$0xff] %v1308
                  %v1310 = vld [vmem:[%s784 + $0x1060] sm:$0xff]
                  %1311 = vst [vmem:[%s785 + $0x830] sm:$0xff] %v1310
                  %v1312 = vld [vmem:[%s784 + $0x1070] sm:$0xff]
                  %1313 = vst [vmem:[%s785 + $0x838] sm:$0xff] %v1312
                  %v1314 = vld [vmem:[%s784 + $0x1080] sm:$0xff]
                  %1315 = vst [vmem:[%s785 + $0x840] sm:$0xff] %v1314
                  %v1316 = vld [vmem:[%s784 + $0x1090] sm:$0xff]
                  %1317 = vst [vmem:[%s785 + $0x848] sm:$0xff] %v1316
                  %v1318 = vld [vmem:[%s784 + $0x10a0] sm:$0xff]
                  %1319 = vst [vmem:[%s785 + $0x850] sm:$0xff] %v1318
                  %v1320 = vld [vmem:[%s784 + $0x10b0] sm:$0xff]
                  %1321 = vst [vmem:[%s785 + $0x858] sm:$0xff] %v1320
                  %v1322 = vld [vmem:[%s784 + $0x10c0] sm:$0xff]
                  %1323 = vst [vmem:[%s785 + $0x860] sm:$0xff] %v1322
                  %v1324 = vld [vmem:[%s784 + $0x10d0] sm:$0xff]
                  %1325 = vst [vmem:[%s785 + $0x868] sm:$0xff] %v1324
                  %v1326 = vld [vmem:[%s784 + $0x10e0] sm:$0xff]
                  %1327 = vst [vmem:[%s785 + $0x870] sm:$0xff] %v1326
                  %v1328 = vld [vmem:[%s784 + $0x10f0] sm:$0xff]
                  %1329 = vst [vmem:[%s785 + $0x878] sm:$0xff] %v1328
                  %v1330 = vld [vmem:[%s784 + $0x1100] sm:$0xff]
                  %1331 = vst [vmem:[%s785 + $0x880] sm:$0xff] %v1330
                  %v1332 = vld [vmem:[%s784 + $0x1110] sm:$0xff]
                  %1333 = vst [vmem:[%s785 + $0x888] sm:$0xff] %v1332
                  %v1334 = vld [vmem:[%s784 + $0x1120] sm:$0xff]
                  %1335 = vst [vmem:[%s785 + $0x890] sm:$0xff] %v1334
                  %v1336 = vld [vmem:[%s784 + $0x1130] sm:$0xff]
                  %1337 = vst [vmem:[%s785 + $0x898] sm:$0xff] %v1336
                  %v1338 = vld [vmem:[%s784 + $0x1140] sm:$0xff]
                  %1339 = vst [vmem:[%s785 + $0x8a0] sm:$0xff] %v1338
                  %v1340 = vld [vmem:[%s784 + $0x1150] sm:$0xff]
                  %1341 = vst [vmem:[%s785 + $0x8a8] sm:$0xff] %v1340
                  %v1342 = vld [vmem:[%s784 + $0x1160] sm:$0xff]
                  %1343 = vst [vmem:[%s785 + $0x8b0] sm:$0xff] %v1342
                  %v1344 = vld [vmem:[%s784 + $0x1170] sm:$0xff]
                  %1345 = vst [vmem:[%s785 + $0x8b8] sm:$0xff] %v1344
                  %v1346 = vld [vmem:[%s784 + $0x1180] sm:$0xff]
                  %1347 = vst [vmem:[%s785 + $0x8c0] sm:$0xff] %v1346
                  %v1348 = vld [vmem:[%s784 + $0x1190] sm:$0xff]
                  %1349 = vst [vmem:[%s785 + $0x8c8] sm:$0xff] %v1348
                  %v1350 = vld [vmem:[%s784 + $0x11a0] sm:$0xff]
                  %1351 = vst [vmem:[%s785 + $0x8d0] sm:$0xff] %v1350
                  %v1352 = vld [vmem:[%s784 + $0x11b0] sm:$0xff]
                  %1353 = vst [vmem:[%s785 + $0x8d8] sm:$0xff] %v1352
                  %v1354 = vld [vmem:[%s784 + $0x11c0] sm:$0xff]
                  %1355 = vst [vmem:[%s785 + $0x8e0] sm:$0xff] %v1354
                  %v1356 = vld [vmem:[%s784 + $0x11d0] sm:$0xff]
                  %1357 = vst [vmem:[%s785 + $0x8e8] sm:$0xff] %v1356
                  %v1358 = vld [vmem:[%s784 + $0x11e0] sm:$0xff]
                  %1359 = vst [vmem:[%s785 + $0x8f0] sm:$0xff] %v1358
                  %v1360 = vld [vmem:[%s784 + $0x11f0] sm:$0xff]
                  %1361 = vst [vmem:[%s785 + $0x8f8] sm:$0xff] %v1360
                $region52: #{_lambda_.12} parent=46 // loop_footer
                  %s783 = sadd.s32 1, %s779
                $region53: #{_lambda_.12} parent=46 // loop_footer_branch
                  %778 = sbr.rel target = $region49
                $region54: #{_lambda_.12} parent=46 // loop_exit
                  _
              $region47: #{_lambda_.12} parent=31 // pred_fallthru
                _
              // Predicated region
              $region55: #{_lambda_.12} parent=31 // pred_check
                _
              $region56: #{_lambda_.12} parent=31 // pred_check_branch
                %1363 = sbr.rel target = $region58
              $region57: #{_lambda_.12} parent=31 // pred_region
                _
              $region58: #{_lambda_.12} parent=31 // pred_fallthru
                _
            $region32: #{_lambda_.12} parent=27 // pred_fallthru
              _
            // Predicated region
            $region33: #{_lambda_.12} parent=27 // pred_check
              _
            $region34: #{_lambda_.12} parent=27 // pred_check_branch
              %190 = sbr.rel target = $region36
            $region35: #{_lambda_.12} parent=27 // pred_region
              loop: start=0, step=1, limit=1
              $region37: #{_lambda_.12} parent=35 // loop_pre_header
                _
              $region38: #{_lambda_.12} parent=35 // loop_header
                %s193 = sphi 0, %s197
                %p194 = scmp.ge.s32.totalorder %s193, 1
                %s198 = sphi %s184, %s184
                %s199 = sphi %s178, %s178
              $region39: #{_lambda_.12} parent=35 // loop_header_branch
                %196 = sbr.rel (%p194) target = $region43
              $region40: #{_lambda_.12} parent=35 // loop_body
                %v200 = vld [vmem:[%s198] sm:$0xff]
                %201 = vst [vmem:[%s199] sm:$0xff] %v200
                %v202 = vld [vmem:[%s198 + $0x10] sm:$0xff]
                %203 = vst [vmem:[%s199 + $0x8] sm:$0xff] %v202
                %v204 = vld [vmem:[%s198 + $0x20] sm:$0xff]
                %205 = vst [vmem:[%s199 + $0x10] sm:$0xff] %v204
                %v206 = vld [vmem:[%s198 + $0x30] sm:$0xff]
                %207 = vst [vmem:[%s199 + $0x18] sm:$0xff] %v206
                %v208 = vld [vmem:[%s198 + $0x40] sm:$0xff]
                %209 = vst [vmem:[%s199 + $0x20] sm:$0xff] %v208
                %v210 = vld [vmem:[%s198 + $0x50] sm:$0xff]
                %211 = vst [vmem:[%s199 + $0x28] sm:$0xff] %v210
                %v212 = vld [vmem:[%s198 + $0x60] sm:$0xff]
                %213 = vst [vmem:[%s199 + $0x30] sm:$0xff] %v212
                %v214 = vld [vmem:[%s198 + $0x70] sm:$0xff]
                %215 = vst [vmem:[%s199 + $0x38] sm:$0xff] %v214
                %v216 = vld [vmem:[%s198 + $0x80] sm:$0xff]
                %217 = vst [vmem:[%s199 + $0x40] sm:$0xff] %v216
                %v218 = vld [vmem:[%s198 + $0x90] sm:$0xff]
                %219 = vst [vmem:[%s199 + $0x48] sm:$0xff] %v218
                %v220 = vld [vmem:[%s198 + $0xa0] sm:$0xff]
                %221 = vst [vmem:[%s199 + $0x50] sm:$0xff] %v220
                %v222 = vld [vmem:[%s198 + $0xb0] sm:$0xff]
                %223 = vst [vmem:[%s199 + $0x58] sm:$0xff] %v222
                %v224 = vld [vmem:[%s198 + $0xc0] sm:$0xff]
                %225 = vst [vmem:[%s199 + $0x60] sm:$0xff] %v224
                %v226 = vld [vmem:[%s198 + $0xd0] sm:$0xff]
                %227 = vst [vmem:[%s199 + $0x68] sm:$0xff] %v226
                %v228 = vld [vmem:[%s198 + $0xe0] sm:$0xff]
                %229 = vst [vmem:[%s199 + $0x70] sm:$0xff] %v228
                %v230 = vld [vmem:[%s198 + $0xf0] sm:$0xff]
                %231 = vst [vmem:[%s199 + $0x78] sm:$0xff] %v230
                %v232 = vld [vmem:[%s198 + $0x100] sm:$0xff]
                %233 = vst [vmem:[%s199 + $0x80] sm:$0xff] %v232
                %v234 = vld [vmem:[%s198 + $0x110] sm:$0xff]
                %235 = vst [vmem:[%s199 + $0x88] sm:$0xff] %v234
                %v236 = vld [vmem:[%s198 + $0x120] sm:$0xff]
                %237 = vst [vmem:[%s199 + $0x90] sm:$0xff] %v236
                %v238 = vld [vmem:[%s198 + $0x130] sm:$0xff]
                %239 = vst [vmem:[%s199 + $0x98] sm:$0xff] %v238
                %v240 = vld [vmem:[%s198 + $0x140] sm:$0xff]
                %241 = vst [vmem:[%s199 + $0xa0] sm:$0xff] %v240
                %v242 = vld [vmem:[%s198 + $0x150] sm:$0xff]
                %243 = vst [vmem:[%s199 + $0xa8] sm:$0xff] %v242
                %v244 = vld [vmem:[%s198 + $0x160] sm:$0xff]
                %245 = vst [vmem:[%s199 + $0xb0] sm:$0xff] %v244
                %v246 = vld [vmem:[%s198 + $0x170] sm:$0xff]
                %247 = vst [vmem:[%s199 + $0xb8] sm:$0xff] %v246
                %v248 = vld [vmem:[%s198 + $0x180] sm:$0xff]
                %249 = vst [vmem:[%s199 + $0xc0] sm:$0xff] %v248
                %v250 = vld [vmem:[%s198 + $0x190] sm:$0xff]
                %251 = vst [vmem:[%s199 + $0xc8] sm:$0xff] %v250
                %v252 = vld [vmem:[%s198 + $0x1a0] sm:$0xff]
                %253 = vst [vmem:[%s199 + $0xd0] sm:$0xff] %v252
                %v254 = vld [vmem:[%s198 + $0x1b0] sm:$0xff]
                %255 = vst [vmem:[%s199 + $0xd8] sm:$0xff] %v254
                %v256 = vld [vmem:[%s198 + $0x1c0] sm:$0xff]
                %257 = vst [vmem:[%s199 + $0xe0] sm:$0xff] %v256
                %v258 = vld [vmem:[%s198 + $0x1d0] sm:$0xff]
                %259 = vst [vmem:[%s199 + $0xe8] sm:$0xff] %v258
                %v260 = vld [vmem:[%s198 + $0x1e0] sm:$0xff]
                %261 = vst [vmem:[%s199 + $0xf0] sm:$0xff] %v260
                %v262 = vld [vmem:[%s198 + $0x1f0] sm:$0xff]
                %263 = vst [vmem:[%s199 + $0xf8] sm:$0xff] %v262
                %v264 = vld [vmem:[%s198 + $0x200] sm:$0xff]
                %265 = vst [vmem:[%s199 + $0x100] sm:$0xff] %v264
                %v266 = vld [vmem:[%s198 + $0x210] sm:$0xff]
                %267 = vst [vmem:[%s199 + $0x108] sm:$0xff] %v266
                %v268 = vld [vmem:[%s198 + $0x220] sm:$0xff]
                %269 = vst [vmem:[%s199 + $0x110] sm:$0xff] %v268
                %v270 = vld [vmem:[%s198 + $0x230] sm:$0xff]
                %271 = vst [vmem:[%s199 + $0x118] sm:$0xff] %v270
                %v272 = vld [vmem:[%s198 + $0x240] sm:$0xff]
                %273 = vst [vmem:[%s199 + $0x120] sm:$0xff] %v272
                %v274 = vld [vmem:[%s198 + $0x250] sm:$0xff]
                %275 = vst [vmem:[%s199 + $0x128] sm:$0xff] %v274
                %v276 = vld [vmem:[%s198 + $0x260] sm:$0xff]
                %277 = vst [vmem:[%s199 + $0x130] sm:$0xff] %v276
                %v278 = vld [vmem:[%s198 + $0x270] sm:$0xff]
                %279 = vst [vmem:[%s199 + $0x138] sm:$0xff] %v278
                %v280 = vld [vmem:[%s198 + $0x280] sm:$0xff]
                %281 = vst [vmem:[%s199 + $0x140] sm:$0xff] %v280
                %v282 = vld [vmem:[%s198 + $0x290] sm:$0xff]
                %283 = vst [vmem:[%s199 + $0x148] sm:$0xff] %v282
                %v284 = vld [vmem:[%s198 + $0x2a0] sm:$0xff]
                %285 = vst [vmem:[%s199 + $0x150] sm:$0xff] %v284
                %v286 = vld [vmem:[%s198 + $0x2b0] sm:$0xff]
                %287 = vst [vmem:[%s199 + $0x158] sm:$0xff] %v286
                %v288 = vld [vmem:[%s198 + $0x2c0] sm:$0xff]
                %289 = vst [vmem:[%s199 + $0x160] sm:$0xff] %v288
                %v290 = vld [vmem:[%s198 + $0x2d0] sm:$0xff]
                %291 = vst [vmem:[%s199 + $0x168] sm:$0xff] %v290
                %v292 = vld [vmem:[%s198 + $0x2e0] sm:$0xff]
                %293 = vst [vmem:[%s199 + $0x170] sm:$0xff] %v292
                %v294 = vld [vmem:[%s198 + $0x2f0] sm:$0xff]
                %295 = vst [vmem:[%s199 + $0x178] sm:$0xff] %v294
                %v296 = vld [vmem:[%s198 + $0x300] sm:$0xff]
                %297 = vst [vmem:[%s199 + $0x180] sm:$0xff] %v296
                %v298 = vld [vmem:[%s198 + $0x310] sm:$0xff]
                %299 = vst [vmem:[%s199 + $0x188] sm:$0xff] %v298
                %v300 = vld [vmem:[%s198 + $0x320] sm:$0xff]
                %301 = vst [vmem:[%s199 + $0x190] sm:$0xff] %v300
                %v302 = vld [vmem:[%s198 + $0x330] sm:$0xff]
                %303 = vst [vmem:[%s199 + $0x198] sm:$0xff] %v302
                %v304 = vld [vmem:[%s198 + $0x340] sm:$0xff]
                %305 = vst [vmem:[%s199 + $0x1a0] sm:$0xff] %v304
                %v306 = vld [vmem:[%s198 + $0x350] sm:$0xff]
                %307 = vst [vmem:[%s199 + $0x1a8] sm:$0xff] %v306
                %v308 = vld [vmem:[%s198 + $0x360] sm:$0xff]
                %309 = vst [vmem:[%s199 + $0x1b0] sm:$0xff] %v308
                %v310 = vld [vmem:[%s198 + $0x370] sm:$0xff]
                %311 = vst [vmem:[%s199 + $0x1b8] sm:$0xff] %v310
                %v312 = vld [vmem:[%s198 + $0x380] sm:$0xff]
                %313 = vst [vmem:[%s199 + $0x1c0] sm:$0xff] %v312
                %v314 = vld [vmem:[%s198 + $0x390] sm:$0xff]
                %315 = vst [vmem:[%s199 + $0x1c8] sm:$0xff] %v314
                %v316 = vld [vmem:[%s198 + $0x3a0] sm:$0xff]
                %317 = vst [vmem:[%s199 + $0x1d0] sm:$0xff] %v316
                %v318 = vld [vmem:[%s198 + $0x3b0] sm:$0xff]
                %319 = vst [vmem:[%s199 + $0x1d8] sm:$0xff] %v318
                %v320 = vld [vmem:[%s198 + $0x3c0] sm:$0xff]
                %321 = vst [vmem:[%s199 + $0x1e0] sm:$0xff] %v320
                %v322 = vld [vmem:[%s198 + $0x3d0] sm:$0xff]
                %323 = vst [vmem:[%s199 + $0x1e8] sm:$0xff] %v322
                %v324 = vld [vmem:[%s198 + $0x3e0] sm:$0xff]
                %325 = vst [vmem:[%s199 + $0x1f0] sm:$0xff] %v324
                %v326 = vld [vmem:[%s198 + $0x3f0] sm:$0xff]
                %327 = vst [vmem:[%s199 + $0x1f8] sm:$0xff] %v326
                %v328 = vld [vmem:[%s198 + $0x400] sm:$0xff]
                %329 = vst [vmem:[%s199 + $0x200] sm:$0xff] %v328
                %v330 = vld [vmem:[%s198 + $0x410] sm:$0xff]
                %331 = vst [vmem:[%s199 + $0x208] sm:$0xff] %v330
                %v332 = vld [vmem:[%s198 + $0x420] sm:$0xff]
                %333 = vst [vmem:[%s199 + $0x210] sm:$0xff] %v332
                %v334 = vld [vmem:[%s198 + $0x430] sm:$0xff]
                %335 = vst [vmem:[%s199 + $0x218] sm:$0xff] %v334
                %v336 = vld [vmem:[%s198 + $0x440] sm:$0xff]
                %337 = vst [vmem:[%s199 + $0x220] sm:$0xff] %v336
                %v338 = vld [vmem:[%s198 + $0x450] sm:$0xff]
                %339 = vst [vmem:[%s199 + $0x228] sm:$0xff] %v338
                %v340 = vld [vmem:[%s198 + $0x460] sm:$0xff]
                %341 = vst [vmem:[%s199 + $0x230] sm:$0xff] %v340
                %v342 = vld [vmem:[%s198 + $0x470] sm:$0xff]
                %343 = vst [vmem:[%s199 + $0x238] sm:$0xff] %v342
                %v344 = vld [vmem:[%s198 + $0x480] sm:$0xff]
                %345 = vst [vmem:[%s199 + $0x240] sm:$0xff] %v344
                %v346 = vld [vmem:[%s198 + $0x490] sm:$0xff]
                %347 = vst [vmem:[%s199 + $0x248] sm:$0xff] %v346
                %v348 = vld [vmem:[%s198 + $0x4a0] sm:$0xff]
                %349 = vst [vmem:[%s199 + $0x250] sm:$0xff] %v348
                %v350 = vld [vmem:[%s198 + $0x4b0] sm:$0xff]
                %351 = vst [vmem:[%s199 + $0x258] sm:$0xff] %v350
                %v352 = vld [vmem:[%s198 + $0x4c0] sm:$0xff]
                %353 = vst [vmem:[%s199 + $0x260] sm:$0xff] %v352
                %v354 = vld [vmem:[%s198 + $0x4d0] sm:$0xff]
                %355 = vst [vmem:[%s199 + $0x268] sm:$0xff] %v354
                %v356 = vld [vmem:[%s198 + $0x4e0] sm:$0xff]
                %357 = vst [vmem:[%s199 + $0x270] sm:$0xff] %v356
                %v358 = vld [vmem:[%s198 + $0x4f0] sm:$0xff]
                %359 = vst [vmem:[%s199 + $0x278] sm:$0xff] %v358
                %v360 = vld [vmem:[%s198 + $0x500] sm:$0xff]
                %361 = vst [vmem:[%s199 + $0x280] sm:$0xff] %v360
                %v362 = vld [vmem:[%s198 + $0x510] sm:$0xff]
                %363 = vst [vmem:[%s199 + $0x288] sm:$0xff] %v362
                %v364 = vld [vmem:[%s198 + $0x520] sm:$0xff]
                %365 = vst [vmem:[%s199 + $0x290] sm:$0xff] %v364
                %v366 = vld [vmem:[%s198 + $0x530] sm:$0xff]
                %367 = vst [vmem:[%s199 + $0x298] sm:$0xff] %v366
                %v368 = vld [vmem:[%s198 + $0x540] sm:$0xff]
                %369 = vst [vmem:[%s199 + $0x2a0] sm:$0xff] %v368
                %v370 = vld [vmem:[%s198 + $0x550] sm:$0xff]
                %371 = vst [vmem:[%s199 + $0x2a8] sm:$0xff] %v370
                %v372 = vld [vmem:[%s198 + $0x560] sm:$0xff]
                %373 = vst [vmem:[%s199 + $0x2b0] sm:$0xff] %v372
                %v374 = vld [vmem:[%s198 + $0x570] sm:$0xff]
                %375 = vst [vmem:[%s199 + $0x2b8] sm:$0xff] %v374
                %v376 = vld [vmem:[%s198 + $0x580] sm:$0xff]
                %377 = vst [vmem:[%s199 + $0x2c0] sm:$0xff] %v376
                %v378 = vld [vmem:[%s198 + $0x590] sm:$0xff]
                %379 = vst [vmem:[%s199 + $0x2c8] sm:$0xff] %v378
                %v380 = vld [vmem:[%s198 + $0x5a0] sm:$0xff]
                %381 = vst [vmem:[%s199 + $0x2d0] sm:$0xff] %v380
                %v382 = vld [vmem:[%s198 + $0x5b0] sm:$0xff]
                %383 = vst [vmem:[%s199 + $0x2d8] sm:$0xff] %v382
                %v384 = vld [vmem:[%s198 + $0x5c0] sm:$0xff]
                %385 = vst [vmem:[%s199 + $0x2e0] sm:$0xff] %v384
                %v386 = vld [vmem:[%s198 + $0x5d0] sm:$0xff]
                %387 = vst [vmem:[%s199 + $0x2e8] sm:$0xff] %v386
                %v388 = vld [vmem:[%s198 + $0x5e0] sm:$0xff]
                %389 = vst [vmem:[%s199 + $0x2f0] sm:$0xff] %v388
                %v390 = vld [vmem:[%s198 + $0x5f0] sm:$0xff]
                %391 = vst [vmem:[%s199 + $0x2f8] sm:$0xff] %v390
                %v392 = vld [vmem:[%s198 + $0x600] sm:$0xff]
                %393 = vst [vmem:[%s199 + $0x300] sm:$0xff] %v392
                %v394 = vld [vmem:[%s198 + $0x610] sm:$0xff]
                %395 = vst [vmem:[%s199 + $0x308] sm:$0xff] %v394
                %v396 = vld [vmem:[%s198 + $0x620] sm:$0xff]
                %397 = vst [vmem:[%s199 + $0x310] sm:$0xff] %v396
                %v398 = vld [vmem:[%s198 + $0x630] sm:$0xff]
                %399 = vst [vmem:[%s199 + $0x318] sm:$0xff] %v398
                %v400 = vld [vmem:[%s198 + $0x640] sm:$0xff]
                %401 = vst [vmem:[%s199 + $0x320] sm:$0xff] %v400
                %v402 = vld [vmem:[%s198 + $0x650] sm:$0xff]
                %403 = vst [vmem:[%s199 + $0x328] sm:$0xff] %v402
                %v404 = vld [vmem:[%s198 + $0x660] sm:$0xff]
                %405 = vst [vmem:[%s199 + $0x330] sm:$0xff] %v404
                %v406 = vld [vmem:[%s198 + $0x670] sm:$0xff]
                %407 = vst [vmem:[%s199 + $0x338] sm:$0xff] %v406
                %v408 = vld [vmem:[%s198 + $0x680] sm:$0xff]
                %409 = vst [vmem:[%s199 + $0x340] sm:$0xff] %v408
                %v410 = vld [vmem:[%s198 + $0x690] sm:$0xff]
                %411 = vst [vmem:[%s199 + $0x348] sm:$0xff] %v410
                %v412 = vld [vmem:[%s198 + $0x6a0] sm:$0xff]
                %413 = vst [vmem:[%s199 + $0x350] sm:$0xff] %v412
                %v414 = vld [vmem:[%s198 + $0x6b0] sm:$0xff]
                %415 = vst [vmem:[%s199 + $0x358] sm:$0xff] %v414
                %v416 = vld [vmem:[%s198 + $0x6c0] sm:$0xff]
                %417 = vst [vmem:[%s199 + $0x360] sm:$0xff] %v416
                %v418 = vld [vmem:[%s198 + $0x6d0] sm:$0xff]
                %419 = vst [vmem:[%s199 + $0x368] sm:$0xff] %v418
                %v420 = vld [vmem:[%s198 + $0x6e0] sm:$0xff]
                %421 = vst [vmem:[%s199 + $0x370] sm:$0xff] %v420
                %v422 = vld [vmem:[%s198 + $0x6f0] sm:$0xff]
                %423 = vst [vmem:[%s199 + $0x378] sm:$0xff] %v422
                %v424 = vld [vmem:[%s198 + $0x700] sm:$0xff]
                %425 = vst [vmem:[%s199 + $0x380] sm:$0xff] %v424
                %v426 = vld [vmem:[%s198 + $0x710] sm:$0xff]
                %427 = vst [vmem:[%s199 + $0x388] sm:$0xff] %v426
                %v428 = vld [vmem:[%s198 + $0x720] sm:$0xff]
                %429 = vst [vmem:[%s199 + $0x390] sm:$0xff] %v428
                %v430 = vld [vmem:[%s198 + $0x730] sm:$0xff]
                %431 = vst [vmem:[%s199 + $0x398] sm:$0xff] %v430
                %v432 = vld [vmem:[%s198 + $0x740] sm:$0xff]
                %433 = vst [vmem:[%s199 + $0x3a0] sm:$0xff] %v432
                %v434 = vld [vmem:[%s198 + $0x750] sm:$0xff]
                %435 = vst [vmem:[%s199 + $0x3a8] sm:$0xff] %v434
                %v436 = vld [vmem:[%s198 + $0x760] sm:$0xff]
                %437 = vst [vmem:[%s199 + $0x3b0] sm:$0xff] %v436
                %v438 = vld [vmem:[%s198 + $0x770] sm:$0xff]
                %439 = vst [vmem:[%s199 + $0x3b8] sm:$0xff] %v438
                %v440 = vld [vmem:[%s198 + $0x780] sm:$0xff]
                %441 = vst [vmem:[%s199 + $0x3c0] sm:$0xff] %v440
                %v442 = vld [vmem:[%s198 + $0x790] sm:$0xff]
                %443 = vst [vmem:[%s199 + $0x3c8] sm:$0xff] %v442
                %v444 = vld [vmem:[%s198 + $0x7a0] sm:$0xff]
                %445 = vst [vmem:[%s199 + $0x3d0] sm:$0xff] %v444
                %v446 = vld [vmem:[%s198 + $0x7b0] sm:$0xff]
                %447 = vst [vmem:[%s199 + $0x3d8] sm:$0xff] %v446
                %v448 = vld [vmem:[%s198 + $0x7c0] sm:$0xff]
                %449 = vst [vmem:[%s199 + $0x3e0] sm:$0xff] %v448
                %v450 = vld [vmem:[%s198 + $0x7d0] sm:$0xff]
                %451 = vst [vmem:[%s199 + $0x3e8] sm:$0xff] %v450
                %v452 = vld [vmem:[%s198 + $0x7e0] sm:$0xff]
                %453 = vst [vmem:[%s199 + $0x3f0] sm:$0xff] %v452
                %v454 = vld [vmem:[%s198 + $0x7f0] sm:$0xff]
                %455 = vst [vmem:[%s199 + $0x3f8] sm:$0xff] %v454
                %v456 = vld [vmem:[%s198 + $0x800] sm:$0xff]
                %457 = vst [vmem:[%s199 + $0x400] sm:$0xff] %v456
                %v458 = vld [vmem:[%s198 + $0x810] sm:$0xff]
                %459 = vst [vmem:[%s199 + $0x408] sm:$0xff] %v458
                %v460 = vld [vmem:[%s198 + $0x820] sm:$0xff]
                %461 = vst [vmem:[%s199 + $0x410] sm:$0xff] %v460
                %v462 = vld [vmem:[%s198 + $0x830] sm:$0xff]
                %463 = vst [vmem:[%s199 + $0x418] sm:$0xff] %v462
                %v464 = vld [vmem:[%s198 + $0x840] sm:$0xff]
                %465 = vst [vmem:[%s199 + $0x420] sm:$0xff] %v464
                %v466 = vld [vmem:[%s198 + $0x850] sm:$0xff]
                %467 = vst [vmem:[%s199 + $0x428] sm:$0xff] %v466
                %v468 = vld [vmem:[%s198 + $0x860] sm:$0xff]
                %469 = vst [vmem:[%s199 + $0x430] sm:$0xff] %v468
                %v470 = vld [vmem:[%s198 + $0x870] sm:$0xff]
                %471 = vst [vmem:[%s199 + $0x438] sm:$0xff] %v470
                %v472 = vld [vmem:[%s198 + $0x880] sm:$0xff]
                %473 = vst [vmem:[%s199 + $0x440] sm:$0xff] %v472
                %v474 = vld [vmem:[%s198 + $0x890] sm:$0xff]
                %475 = vst [vmem:[%s199 + $0x448] sm:$0xff] %v474
                %v476 = vld [vmem:[%s198 + $0x8a0] sm:$0xff]
                %477 = vst [vmem:[%s199 + $0x450] sm:$0xff] %v476
                %v478 = vld [vmem:[%s198 + $0x8b0] sm:$0xff]
                %479 = vst [vmem:[%s199 + $0x458] sm:$0xff] %v478
                %v480 = vld [vmem:[%s198 + $0x8c0] sm:$0xff]
                %481 = vst [vmem:[%s199 + $0x460] sm:$0xff] %v480
                %v482 = vld [vmem:[%s198 + $0x8d0] sm:$0xff]
                %483 = vst [vmem:[%s199 + $0x468] sm:$0xff] %v482
                %v484 = vld [vmem:[%s198 + $0x8e0] sm:$0xff]
                %485 = vst [vmem:[%s199 + $0x470] sm:$0xff] %v484
                %v486 = vld [vmem:[%s198 + $0x8f0] sm:$0xff]
                %487 = vst [vmem:[%s199 + $0x478] sm:$0xff] %v486
                %v488 = vld [vmem:[%s198 + $0x900] sm:$0xff]
                %489 = vst [vmem:[%s199 + $0x480] sm:$0xff] %v488
                %v490 = vld [vmem:[%s198 + $0x910] sm:$0xff]
                %491 = vst [vmem:[%s199 + $0x488] sm:$0xff] %v490
                %v492 = vld [vmem:[%s198 + $0x920] sm:$0xff]
                %493 = vst [vmem:[%s199 + $0x490] sm:$0xff] %v492
                %v494 = vld [vmem:[%s198 + $0x930] sm:$0xff]
                %495 = vst [vmem:[%s199 + $0x498] sm:$0xff] %v494
                %v496 = vld [vmem:[%s198 + $0x940] sm:$0xff]
                %497 = vst [vmem:[%s199 + $0x4a0] sm:$0xff] %v496
                %v498 = vld [vmem:[%s198 + $0x950] sm:$0xff]
                %499 = vst [vmem:[%s199 + $0x4a8] sm:$0xff] %v498
                %v500 = vld [vmem:[%s198 + $0x960] sm:$0xff]
                %501 = vst [vmem:[%s199 + $0x4b0] sm:$0xff] %v500
                %v502 = vld [vmem:[%s198 + $0x970] sm:$0xff]
                %503 = vst [vmem:[%s199 + $0x4b8] sm:$0xff] %v502
                %v504 = vld [vmem:[%s198 + $0x980] sm:$0xff]
                %505 = vst [vmem:[%s199 + $0x4c0] sm:$0xff] %v504
                %v506 = vld [vmem:[%s198 + $0x990] sm:$0xff]
                %507 = vst [vmem:[%s199 + $0x4c8] sm:$0xff] %v506
                %v508 = vld [vmem:[%s198 + $0x9a0] sm:$0xff]
                %509 = vst [vmem:[%s199 + $0x4d0] sm:$0xff] %v508
                %v510 = vld [vmem:[%s198 + $0x9b0] sm:$0xff]
                %511 = vst [vmem:[%s199 + $0x4d8] sm:$0xff] %v510
                %v512 = vld [vmem:[%s198 + $0x9c0] sm:$0xff]
                %513 = vst [vmem:[%s199 + $0x4e0] sm:$0xff] %v512
                %v514 = vld [vmem:[%s198 + $0x9d0] sm:$0xff]
                %515 = vst [vmem:[%s199 + $0x4e8] sm:$0xff] %v514
                %v516 = vld [vmem:[%s198 + $0x9e0] sm:$0xff]
                %517 = vst [vmem:[%s199 + $0x4f0] sm:$0xff] %v516
                %v518 = vld [vmem:[%s198 + $0x9f0] sm:$0xff]
                %519 = vst [vmem:[%s199 + $0x4f8] sm:$0xff] %v518
                %v520 = vld [vmem:[%s198 + $0xa00] sm:$0xff]
                %521 = vst [vmem:[%s199 + $0x500] sm:$0xff] %v520
                %v522 = vld [vmem:[%s198 + $0xa10] sm:$0xff]
                %523 = vst [vmem:[%s199 + $0x508] sm:$0xff] %v522
                %v524 = vld [vmem:[%s198 + $0xa20] sm:$0xff]
                %525 = vst [vmem:[%s199 + $0x510] sm:$0xff] %v524
                %v526 = vld [vmem:[%s198 + $0xa30] sm:$0xff]
                %527 = vst [vmem:[%s199 + $0x518] sm:$0xff] %v526
                %v528 = vld [vmem:[%s198 + $0xa40] sm:$0xff]
                %529 = vst [vmem:[%s199 + $0x520] sm:$0xff] %v528
                %v530 = vld [vmem:[%s198 + $0xa50] sm:$0xff]
                %531 = vst [vmem:[%s199 + $0x528] sm:$0xff] %v530
                %v532 = vld [vmem:[%s198 + $0xa60] sm:$0xff]
                %533 = vst [vmem:[%s199 + $0x530] sm:$0xff] %v532
                %v534 = vld [vmem:[%s198 + $0xa70] sm:$0xff]
                %535 = vst [vmem:[%s199 + $0x538] sm:$0xff] %v534
                %v536 = vld [vmem:[%s198 + $0xa80] sm:$0xff]
                %537 = vst [vmem:[%s199 + $0x540] sm:$0xff] %v536
                %v538 = vld [vmem:[%s198 + $0xa90] sm:$0xff]
                %539 = vst [vmem:[%s199 + $0x548] sm:$0xff] %v538
                %v540 = vld [vmem:[%s198 + $0xaa0] sm:$0xff]
                %541 = vst [vmem:[%s199 + $0x550] sm:$0xff] %v540
                %v542 = vld [vmem:[%s198 + $0xab0] sm:$0xff]
                %543 = vst [vmem:[%s199 + $0x558] sm:$0xff] %v542
                %v544 = vld [vmem:[%s198 + $0xac0] sm:$0xff]
                %545 = vst [vmem:[%s199 + $0x560] sm:$0xff] %v544
                %v546 = vld [vmem:[%s198 + $0xad0] sm:$0xff]
                %547 = vst [vmem:[%s199 + $0x568] sm:$0xff] %v546
                %v548 = vld [vmem:[%s198 + $0xae0] sm:$0xff]
                %549 = vst [vmem:[%s199 + $0x570] sm:$0xff] %v548
                %v550 = vld [vmem:[%s198 + $0xaf0] sm:$0xff]
                %551 = vst [vmem:[%s199 + $0x578] sm:$0xff] %v550
                %v552 = vld [vmem:[%s198 + $0xb00] sm:$0xff]
                %553 = vst [vmem:[%s199 + $0x580] sm:$0xff] %v552
                %v554 = vld [vmem:[%s198 + $0xb10] sm:$0xff]
                %555 = vst [vmem:[%s199 + $0x588] sm:$0xff] %v554
                %v556 = vld [vmem:[%s198 + $0xb20] sm:$0xff]
                %557 = vst [vmem:[%s199 + $0x590] sm:$0xff] %v556
                %v558 = vld [vmem:[%s198 + $0xb30] sm:$0xff]
                %559 = vst [vmem:[%s199 + $0x598] sm:$0xff] %v558
                %v560 = vld [vmem:[%s198 + $0xb40] sm:$0xff]
                %561 = vst [vmem:[%s199 + $0x5a0] sm:$0xff] %v560
                %v562 = vld [vmem:[%s198 + $0xb50] sm:$0xff]
                %563 = vst [vmem:[%s199 + $0x5a8] sm:$0xff] %v562
                %v564 = vld [vmem:[%s198 + $0xb60] sm:$0xff]
                %565 = vst [vmem:[%s199 + $0x5b0] sm:$0xff] %v564
                %v566 = vld [vmem:[%s198 + $0xb70] sm:$0xff]
                %567 = vst [vmem:[%s199 + $0x5b8] sm:$0xff] %v566
                %v568 = vld [vmem:[%s198 + $0xb80] sm:$0xff]
                %569 = vst [vmem:[%s199 + $0x5c0] sm:$0xff] %v568
                %v570 = vld [vmem:[%s198 + $0xb90] sm:$0xff]
                %571 = vst [vmem:[%s199 + $0x5c8] sm:$0xff] %v570
                %v572 = vld [vmem:[%s198 + $0xba0] sm:$0xff]
                %573 = vst [vmem:[%s199 + $0x5d0] sm:$0xff] %v572
                %v574 = vld [vmem:[%s198 + $0xbb0] sm:$0xff]
                %575 = vst [vmem:[%s199 + $0x5d8] sm:$0xff] %v574
                %v576 = vld [vmem:[%s198 + $0xbc0] sm:$0xff]
                %577 = vst [vmem:[%s199 + $0x5e0] sm:$0xff] %v576
                %v578 = vld [vmem:[%s198 + $0xbd0] sm:$0xff]
                %579 = vst [vmem:[%s199 + $0x5e8] sm:$0xff] %v578
                %v580 = vld [vmem:[%s198 + $0xbe0] sm:$0xff]
                %581 = vst [vmem:[%s199 + $0x5f0] sm:$0xff] %v580
                %v582 = vld [vmem:[%s198 + $0xbf0] sm:$0xff]
                %583 = vst [vmem:[%s199 + $0x5f8] sm:$0xff] %v582
                %v584 = vld [vmem:[%s198 + $0xc00] sm:$0xff]
                %585 = vst [vmem:[%s199 + $0x600] sm:$0xff] %v584
                %v586 = vld [vmem:[%s198 + $0xc10] sm:$0xff]
                %587 = vst [vmem:[%s199 + $0x608] sm:$0xff] %v586
                %v588 = vld [vmem:[%s198 + $0xc20] sm:$0xff]
                %589 = vst [vmem:[%s199 + $0x610] sm:$0xff] %v588
                %v590 = vld [vmem:[%s198 + $0xc30] sm:$0xff]
                %591 = vst [vmem:[%s199 + $0x618] sm:$0xff] %v590
                %v592 = vld [vmem:[%s198 + $0xc40] sm:$0xff]
                %593 = vst [vmem:[%s199 + $0x620] sm:$0xff] %v592
                %v594 = vld [vmem:[%s198 + $0xc50] sm:$0xff]
                %595 = vst [vmem:[%s199 + $0x628] sm:$0xff] %v594
                %v596 = vld [vmem:[%s198 + $0xc60] sm:$0xff]
                %597 = vst [vmem:[%s199 + $0x630] sm:$0xff] %v596
                %v598 = vld [vmem:[%s198 + $0xc70] sm:$0xff]
                %599 = vst [vmem:[%s199 + $0x638] sm:$0xff] %v598
                %v600 = vld [vmem:[%s198 + $0xc80] sm:$0xff]
                %601 = vst [vmem:[%s199 + $0x640] sm:$0xff] %v600
                %v602 = vld [vmem:[%s198 + $0xc90] sm:$0xff]
                %603 = vst [vmem:[%s199 + $0x648] sm:$0xff] %v602
                %v604 = vld [vmem:[%s198 + $0xca0] sm:$0xff]
                %605 = vst [vmem:[%s199 + $0x650] sm:$0xff] %v604
                %v606 = vld [vmem:[%s198 + $0xcb0] sm:$0xff]
                %607 = vst [vmem:[%s199 + $0x658] sm:$0xff] %v606
                %v608 = vld [vmem:[%s198 + $0xcc0] sm:$0xff]
                %609 = vst [vmem:[%s199 + $0x660] sm:$0xff] %v608
                %v610 = vld [vmem:[%s198 + $0xcd0] sm:$0xff]
                %611 = vst [vmem:[%s199 + $0x668] sm:$0xff] %v610
                %v612 = vld [vmem:[%s198 + $0xce0] sm:$0xff]
                %613 = vst [vmem:[%s199 + $0x670] sm:$0xff] %v612
                %v614 = vld [vmem:[%s198 + $0xcf0] sm:$0xff]
                %615 = vst [vmem:[%s199 + $0x678] sm:$0xff] %v614
                %v616 = vld [vmem:[%s198 + $0xd00] sm:$0xff]
                %617 = vst [vmem:[%s199 + $0x680] sm:$0xff] %v616
                %v618 = vld [vmem:[%s198 + $0xd10] sm:$0xff]
                %619 = vst [vmem:[%s199 + $0x688] sm:$0xff] %v618
                %v620 = vld [vmem:[%s198 + $0xd20] sm:$0xff]
                %621 = vst [vmem:[%s199 + $0x690] sm:$0xff] %v620
                %v622 = vld [vmem:[%s198 + $0xd30] sm:$0xff]
                %623 = vst [vmem:[%s199 + $0x698] sm:$0xff] %v622
                %v624 = vld [vmem:[%s198 + $0xd40] sm:$0xff]
                %625 = vst [vmem:[%s199 + $0x6a0] sm:$0xff] %v624
                %v626 = vld [vmem:[%s198 + $0xd50] sm:$0xff]
                %627 = vst [vmem:[%s199 + $0x6a8] sm:$0xff] %v626
                %v628 = vld [vmem:[%s198 + $0xd60] sm:$0xff]
                %629 = vst [vmem:[%s199 + $0x6b0] sm:$0xff] %v628
                %v630 = vld [vmem:[%s198 + $0xd70] sm:$0xff]
                %631 = vst [vmem:[%s199 + $0x6b8] sm:$0xff] %v630
                %v632 = vld [vmem:[%s198 + $0xd80] sm:$0xff]
                %633 = vst [vmem:[%s199 + $0x6c0] sm:$0xff] %v632
                %v634 = vld [vmem:[%s198 + $0xd90] sm:$0xff]
                %635 = vst [vmem:[%s199 + $0x6c8] sm:$0xff] %v634
                %v636 = vld [vmem:[%s198 + $0xda0] sm:$0xff]
                %637 = vst [vmem:[%s199 + $0x6d0] sm:$0xff] %v636
                %v638 = vld [vmem:[%s198 + $0xdb0] sm:$0xff]
                %639 = vst [vmem:[%s199 + $0x6d8] sm:$0xff] %v638
                %v640 = vld [vmem:[%s198 + $0xdc0] sm:$0xff]
                %641 = vst [vmem:[%s199 + $0x6e0] sm:$0xff] %v640
                %v642 = vld [vmem:[%s198 + $0xdd0] sm:$0xff]
                %643 = vst [vmem:[%s199 + $0x6e8] sm:$0xff] %v642
                %v644 = vld [vmem:[%s198 + $0xde0] sm:$0xff]
                %645 = vst [vmem:[%s199 + $0x6f0] sm:$0xff] %v644
                %v646 = vld [vmem:[%s198 + $0xdf0] sm:$0xff]
                %647 = vst [vmem:[%s199 + $0x6f8] sm:$0xff] %v646
                %v648 = vld [vmem:[%s198 + $0xe00] sm:$0xff]
                %649 = vst [vmem:[%s199 + $0x700] sm:$0xff] %v648
                %v650 = vld [vmem:[%s198 + $0xe10] sm:$0xff]
                %651 = vst [vmem:[%s199 + $0x708] sm:$0xff] %v650
                %v652 = vld [vmem:[%s198 + $0xe20] sm:$0xff]
                %653 = vst [vmem:[%s199 + $0x710] sm:$0xff] %v652
                %v654 = vld [vmem:[%s198 + $0xe30] sm:$0xff]
                %655 = vst [vmem:[%s199 + $0x718] sm:$0xff] %v654
                %v656 = vld [vmem:[%s198 + $0xe40] sm:$0xff]
                %657 = vst [vmem:[%s199 + $0x720] sm:$0xff] %v656
                %v658 = vld [vmem:[%s198 + $0xe50] sm:$0xff]
                %659 = vst [vmem:[%s199 + $0x728] sm:$0xff] %v658
                %v660 = vld [vmem:[%s198 + $0xe60] sm:$0xff]
                %661 = vst [vmem:[%s199 + $0x730] sm:$0xff] %v660
                %v662 = vld [vmem:[%s198 + $0xe70] sm:$0xff]
                %663 = vst [vmem:[%s199 + $0x738] sm:$0xff] %v662
                %v664 = vld [vmem:[%s198 + $0xe80] sm:$0xff]
                %665 = vst [vmem:[%s199 + $0x740] sm:$0xff] %v664
                %v666 = vld [vmem:[%s198 + $0xe90] sm:$0xff]
                %667 = vst [vmem:[%s199 + $0x748] sm:$0xff] %v666
                %v668 = vld [vmem:[%s198 + $0xea0] sm:$0xff]
                %669 = vst [vmem:[%s199 + $0x750] sm:$0xff] %v668
                %v670 = vld [vmem:[%s198 + $0xeb0] sm:$0xff]
                %671 = vst [vmem:[%s199 + $0x758] sm:$0xff] %v670
                %v672 = vld [vmem:[%s198 + $0xec0] sm:$0xff]
                %673 = vst [vmem:[%s199 + $0x760] sm:$0xff] %v672
                %v674 = vld [vmem:[%s198 + $0xed0] sm:$0xff]
                %675 = vst [vmem:[%s199 + $0x768] sm:$0xff] %v674
                %v676 = vld [vmem:[%s198 + $0xee0] sm:$0xff]
                %677 = vst [vmem:[%s199 + $0x770] sm:$0xff] %v676
                %v678 = vld [vmem:[%s198 + $0xef0] sm:$0xff]
                %679 = vst [vmem:[%s199 + $0x778] sm:$0xff] %v678
                %v680 = vld [vmem:[%s198 + $0xf00] sm:$0xff]
                %681 = vst [vmem:[%s199 + $0x780] sm:$0xff] %v680
                %v682 = vld [vmem:[%s198 + $0xf10] sm:$0xff]
                %683 = vst [vmem:[%s199 + $0x788] sm:$0xff] %v682
                %v684 = vld [vmem:[%s198 + $0xf20] sm:$0xff]
                %685 = vst [vmem:[%s199 + $0x790] sm:$0xff] %v684
                %v686 = vld [vmem:[%s198 + $0xf30] sm:$0xff]
                %687 = vst [vmem:[%s199 + $0x798] sm:$0xff] %v686
                %v688 = vld [vmem:[%s198 + $0xf40] sm:$0xff]
                %689 = vst [vmem:[%s199 + $0x7a0] sm:$0xff] %v688
                %v690 = vld [vmem:[%s198 + $0xf50] sm:$0xff]
                %691 = vst [vmem:[%s199 + $0x7a8] sm:$0xff] %v690
                %v692 = vld [vmem:[%s198 + $0xf60] sm:$0xff]
                %693 = vst [vmem:[%s199 + $0x7b0] sm:$0xff] %v692
                %v694 = vld [vmem:[%s198 + $0xf70] sm:$0xff]
                %695 = vst [vmem:[%s199 + $0x7b8] sm:$0xff] %v694
                %v696 = vld [vmem:[%s198 + $0xf80] sm:$0xff]
                %697 = vst [vmem:[%s199 + $0x7c0] sm:$0xff] %v696
                %v698 = vld [vmem:[%s198 + $0xf90] sm:$0xff]
                %699 = vst [vmem:[%s199 + $0x7c8] sm:$0xff] %v698
                %v700 = vld [vmem:[%s198 + $0xfa0] sm:$0xff]
                %701 = vst [vmem:[%s199 + $0x7d0] sm:$0xff] %v700
                %v702 = vld [vmem:[%s198 + $0xfb0] sm:$0xff]
                %703 = vst [vmem:[%s199 + $0x7d8] sm:$0xff] %v702
                %v704 = vld [vmem:[%s198 + $0xfc0] sm:$0xff]
                %705 = vst [vmem:[%s199 + $0x7e0] sm:$0xff] %v704
                %v706 = vld [vmem:[%s198 + $0xfd0] sm:$0xff]
                %707 = vst [vmem:[%s199 + $0x7e8] sm:$0xff] %v706
                %v708 = vld [vmem:[%s198 + $0xfe0] sm:$0xff]
                %709 = vst [vmem:[%s199 + $0x7f0] sm:$0xff] %v708
                %v710 = vld [vmem:[%s198 + $0xff0] sm:$0xff]
                %711 = vst [vmem:[%s199 + $0x7f8] sm:$0xff] %v710
                %v712 = vld [vmem:[%s198 + $0x1000] sm:$0xff]
                %713 = vst [vmem:[%s199 + $0x800] sm:$0xff] %v712
                %v714 = vld [vmem:[%s198 + $0x1010] sm:$0xff]
                %715 = vst [vmem:[%s199 + $0x808] sm:$0xff] %v714
                %v716 = vld [vmem:[%s198 + $0x1020] sm:$0xff]
                %717 = vst [vmem:[%s199 + $0x810] sm:$0xff] %v716
                %v718 = vld [vmem:[%s198 + $0x1030] sm:$0xff]
                %719 = vst [vmem:[%s199 + $0x818] sm:$0xff] %v718
                %v720 = vld [vmem:[%s198 + $0x1040] sm:$0xff]
                %721 = vst [vmem:[%s199 + $0x820] sm:$0xff] %v720
                %v722 = vld [vmem:[%s198 + $0x1050] sm:$0xff]
                %723 = vst [vmem:[%s199 + $0x828] sm:$0xff] %v722
                %v724 = vld [vmem:[%s198 + $0x1060] sm:$0xff]
                %725 = vst [vmem:[%s199 + $0x830] sm:$0xff] %v724
                %v726 = vld [vmem:[%s198 + $0x1070] sm:$0xff]
                %727 = vst [vmem:[%s199 + $0x838] sm:$0xff] %v726
                %v728 = vld [vmem:[%s198 + $0x1080] sm:$0xff]
                %729 = vst [vmem:[%s199 + $0x840] sm:$0xff] %v728
                %v730 = vld [vmem:[%s198 + $0x1090] sm:$0xff]
                %731 = vst [vmem:[%s199 + $0x848] sm:$0xff] %v730
                %v732 = vld [vmem:[%s198 + $0x10a0] sm:$0xff]
                %733 = vst [vmem:[%s199 + $0x850] sm:$0xff] %v732
                %v734 = vld [vmem:[%s198 + $0x10b0] sm:$0xff]
                %735 = vst [vmem:[%s199 + $0x858] sm:$0xff] %v734
                %v736 = vld [vmem:[%s198 + $0x10c0] sm:$0xff]
                %737 = vst [vmem:[%s199 + $0x860] sm:$0xff] %v736
                %v738 = vld [vmem:[%s198 + $0x10d0] sm:$0xff]
                %739 = vst [vmem:[%s199 + $0x868] sm:$0xff] %v738
                %v740 = vld [vmem:[%s198 + $0x10e0] sm:$0xff]
                %741 = vst [vmem:[%s199 + $0x870] sm:$0xff] %v740
                %v742 = vld [vmem:[%s198 + $0x10f0] sm:$0xff]
                %743 = vst [vmem:[%s199 + $0x878] sm:$0xff] %v742
                %v744 = vld [vmem:[%s198 + $0x1100] sm:$0xff]
                %745 = vst [vmem:[%s199 + $0x880] sm:$0xff] %v744
                %v746 = vld [vmem:[%s198 + $0x1110] sm:$0xff]
                %747 = vst [vmem:[%s199 + $0x888] sm:$0xff] %v746
                %v748 = vld [vmem:[%s198 + $0x1120] sm:$0xff]
                %749 = vst [vmem:[%s199 + $0x890] sm:$0xff] %v748
                %v750 = vld [vmem:[%s198 + $0x1130] sm:$0xff]
                %751 = vst [vmem:[%s199 + $0x898] sm:$0xff] %v750
                %v752 = vld [vmem:[%s198 + $0x1140] sm:$0xff]
                %753 = vst [vmem:[%s199 + $0x8a0] sm:$0xff] %v752
                %v754 = vld [vmem:[%s198 + $0x1150] sm:$0xff]
                %755 = vst [vmem:[%s199 + $0x8a8] sm:$0xff] %v754
                %v756 = vld [vmem:[%s198 + $0x1160] sm:$0xff]
                %757 = vst [vmem:[%s199 + $0x8b0] sm:$0xff] %v756
                %v758 = vld [vmem:[%s198 + $0x1170] sm:$0xff]
                %759 = vst [vmem:[%s199 + $0x8b8] sm:$0xff] %v758
                %v760 = vld [vmem:[%s198 + $0x1180] sm:$0xff]
                %761 = vst [vmem:[%s199 + $0x8c0] sm:$0xff] %v760
                %v762 = vld [vmem:[%s198 + $0x1190] sm:$0xff]
                %763 = vst [vmem:[%s199 + $0x8c8] sm:$0xff] %v762
                %v764 = vld [vmem:[%s198 + $0x11a0] sm:$0xff]
                %765 = vst [vmem:[%s199 + $0x8d0] sm:$0xff] %v764
                %v766 = vld [vmem:[%s198 + $0x11b0] sm:$0xff]
                %767 = vst [vmem:[%s199 + $0x8d8] sm:$0xff] %v766
                %v768 = vld [vmem:[%s198 + $0x11c0] sm:$0xff]
                %769 = vst [vmem:[%s199 + $0x8e0] sm:$0xff] %v768
                %v770 = vld [vmem:[%s198 + $0x11d0] sm:$0xff]
                %771 = vst [vmem:[%s199 + $0x8e8] sm:$0xff] %v770
                %v772 = vld [vmem:[%s198 + $0x11e0] sm:$0xff]
                %773 = vst [vmem:[%s199 + $0x8f0] sm:$0xff] %v772
                %v774 = vld [vmem:[%s198 + $0x11f0] sm:$0xff]
                %775 = vst [vmem:[%s199 + $0x8f8] sm:$0xff] %v774
              $region41: #{_lambda_.12} parent=35 // loop_footer
                %s197 = sadd.s32 1, %s193
              $region42: #{_lambda_.12} parent=35 // loop_footer_branch
                %192 = sbr.rel target = $region38
              $region43: #{_lambda_.12} parent=35 // loop_exit
                _
            $region36: #{_lambda_.12} parent=27 // pred_fallthru
              _
          $region28: #{_lambda_.12} parent=23 // pred_fallthru
            _
          %1364 = vnop
        $region24: #{_lambda_.12} parent=19 // pred_fallthru
          _
        // Predicated region
        $region59: #{_lambda_.12} parent=19 // pred_check
          %p1365 = pneg %p104
        $region60: #{_lambda_.12} parent=19 // pred_check_branch
          %1367 = sbr.rel (%p1365) target = $region62
        $region61: #{_lambda_.12} parent=19 // pred_region
          %s1368 = smul.u32 2, %s17
          %p1369 = scmp.lt.s32.totalorder %s1368, 3
          %s1370 = scalar_select %p1369, %s1368, 3
          %s1371 = scalar_lea.vmem %s2, %s1370
          %s1372 = smul.u32 2, %s17
        $region62: #{_lambda_.12} parent=19 // pred_fallthru
          _
      $region20: #{_lambda_.12} parent=5 // pred_fallthru
        _
      %p1373 = scmp.le.s32.totalorder 1, %s9
      %p1374 = scmp.lt.s32.totalorder %s9, 3
      %p1375 = pnand %p1373, %p1374
      %p1376 = pneg %p1375
      // Predicated region
      $region63: #{_lambda_.12} parent=5 // pred_check
        _
      $region64: #{_lambda_.12} parent=5 // pred_check_branch
        %1378 = sbr.rel (%p1375) target = $region66
      $region65: #{_lambda_.12} parent=5 // pred_region
        %s1379 = ssub.s32 %s9, 1
        %s1380 = sand.u32 %s71, 1
        %s1381 = sand.u32 %s71, 1
        %s1382 = smul.addr %s1381, 2304
        %s1383 = scalar_lea.vmem [#allocation3], %s1382
        // Predicated region
        $region67: #{_lambda_.12} parent=65 // pred_check
          %p1384 = pneg %p84
        $region68: #{_lambda_.12} parent=65 // pred_check_branch
          %1386 = sbr.rel (%p1384) target = $region70
        $region69: #{_lambda_.12} parent=65 // pred_region
          _
        $region70: #{_lambda_.12} parent=65 // pred_fallthru
          _
        %s1387 = smul.u32 2, %s19
        %s1388 = smul.u32 18, %s21
        %p1389 = scmp.lt.s32.totalorder %s1387, 1
        %s1390 = scalar_select %p1389, %s1387, 1
        %p1391 = scmp.lt.s32.totalorder %s1388, 17
        %s1392 = scalar_select %p1391, %s1388, 17
        %s1393 = smul.addr %s1390, 18
        %s1394 = sadd.s32 %s1392, %s1393
        %s1395 = smul.addr %s1394, 4
        %s1396 = scalar_lea.vmem %s0, %s1395
        %p1397 = pneg %p56
        %p1398 = pneg %p53
        %s1399 = sand.u32 %s71, 1
        %s1400 = sand.u32 %s71, 1
        %s1401 = smul.addr %s1400, 2304
        %s1402 = scalar_lea.vmem [#allocation3], %s1401
        %p1403 = pneg %p84
        %p1404 = pneg %p81
        %s1405 = smul.u32 2, %s20
        %p1406 = scmp.lt.s32.totalorder %s1405, 3
        %s1407 = scalar_select %p1406, %s1405, 3
        %s1408 = scalar_lea.vmem %s2, %s1407
        %p1409 = pneg %p110
        %p1410 = pneg %p107
        %p1411 = pneg %p138
        %p1412 = pneg %p135
        %s1413 = sand.u32 %s125, 1
        %s1414 = sand.u32 %s125, 1
        %s1415 = smul.addr %s1414, 16
        %s1416 = scalar_lea.vmem [#allocation4], %s1415
        %s1417 = smul.u32 2, %s19
        %s1418 = smul.u32 18, %s21
        %p1419 = scmp.lt.s32.totalorder %s1417, 1
        %s1420 = scalar_select %p1419, %s1417, 1
        %p1421 = scmp.lt.s32.totalorder %s1418, 17
        %s1422 = scalar_select %p1421, %s1418, 17
        %s1423 = smul.addr %s1420, 18
        %s1424 = sadd.s32 %s1422, %s1423
        %s1425 = smul.addr %s1424, 4
        %s1426 = scalar_lea.vmem %s0, %s1425
        %s1427 = smul.u32 2, %s19
        %s1428 = smul.u32 18, %s21
        %s1429 = smul.u32 288, %s21
        %s1430 = smul.u32 2, %s20
        %s1431 = smul.u32 2, %s20
        %p1432 = scmp.lt.s32.totalorder %s1431, 3
        %s1433 = scalar_select %p1432, %s1431, 3
        %s1434 = scalar_lea.vmem %s2, %s1433
        %s1435 = smul.u32 2, %s20
        %s1436 = smul.u32 2, %s19
        %s1437 = smul.u32 2, %s20
        %p1438 = scmp.eq.s32.totalorder %s21, 0
        // Predicated region
        $region71: #{_lambda_.12} parent=65 // pred_check
          %p1439 = pneg %p1438
        $region72: #{_lambda_.12} parent=65 // pred_check_branch
          %1441 = sbr.rel (%p1439) target = $region74
        $region73: #{_lambda_.12} parent=65 // pred_region
          %1442 = vst [vmem:[#allocation2] sm:$0xff] 0.0
          %1443 = vst [vmem:[#allocation2 + $0x8] sm:$0xff] 0.0
          %1444 = vst [vmem:[#allocation2 + $0x10] sm:$0xff] 0.0
          %1445 = vst [vmem:[#allocation2 + $0x18] sm:$0xff] 0.0
        $region74: #{_lambda_.12} parent=65 // pred_fallthru
          _
        %v1446 = vld [vmem:[#allocation2] sm:$0xff]
        %v1447 = vld [vmem:[#allocation2 + $0x8] sm:$0xff]
        %v1448 = vld [vmem:[#allocation2 + $0x10] sm:$0xff]
        %v1449 = vld [vmem:[#allocation2 + $0x18] sm:$0xff]
        %v1450 = vld [vmem:[%s1426] sm:$0xff]
        %v1451 = vld [vmem:[%s1426 + $0x8] sm:$0xff]
        %v1452 = vld [vmem:[%s1426 + $0x10] sm:$0xff]
        %v1453 = vld [vmem:[%s1426 + $0x18] sm:$0xff]
        %v1454 = vld [vmem:[%s1426 + $0x20] sm:$0xff]
        %v1455 = vld [vmem:[%s1426 + $0x28] sm:$0xff]
        %v1456 = vld [vmem:[%s1426 + $0x30] sm:$0xff]
        %v1457 = vld [vmem:[%s1426 + $0x38] sm:$0xff]
        %v1458 = vld [vmem:[%s1426 + $0x40] sm:$0xff]
        %v1459 = vld [vmem:[%s1426 + $0x48] sm:$0xff]
        %v1460 = vld [vmem:[%s1426 + $0x50] sm:$0xff]
        %v1461 = vld [vmem:[%s1426 + $0x58] sm:$0xff]
        %v1462 = vld [vmem:[%s1426 + $0x60] sm:$0xff]
        %v1463 = vld [vmem:[%s1426 + $0x68] sm:$0xff]
        %v1464 = vld [vmem:[%s1426 + $0x70] sm:$0xff]
        %v1465 = vld [vmem:[%s1426 + $0x78] sm:$0xff]
        %v1466 = vld [vmem:[%s1426 + $0x80] sm:$0xff]
        %v1467 = vld [vmem:[%s1426 + $0x88] sm:$0xff]
        %v1468 = vld [vmem:[%s1383] sm:$0xff]
        %v1469 = vld [vmem:[%s1383 + $0x8] sm:$0xff]
        %v1470 = vld [vmem:[%s1383 + $0x10] sm:$0xff]
        %v1471 = vld [vmem:[%s1383 + $0x18] sm:$0xff]
        %v1472 = vld [vmem:[%s1383 + $0x20] sm:$0xff]
        %v1473 = vld [vmem:[%s1383 + $0x28] sm:$0xff]
        %v1474 = vld [vmem:[%s1383 + $0x30] sm:$0xff]
        %v1475 = vld [vmem:[%s1383 + $0x38] sm:$0xff]
        %v1476 = vld [vmem:[%s1383 + $0x40] sm:$0xff]
        %v1477 = vld [vmem:[%s1383 + $0x48] sm:$0xff]
        %v1478 = vld [vmem:[%s1383 + $0x50] sm:$0xff]
        %v1479 = vld [vmem:[%s1383 + $0x58] sm:$0xff]
        %v1480 = vld [vmem:[%s1383 + $0x60] sm:$0xff]
        %v1481 = vld [vmem:[%s1383 + $0x68] sm:$0xff]
        %v1482 = vld [vmem:[%s1383 + $0x70] sm:$0xff]
        %v1483 = vld [vmem:[%s1383 + $0x78] sm:$0xff]
        %v1484 = vld [vmem:[%s1383 + $0x80] sm:$0xff]
        %v1485 = vld [vmem:[%s1383 + $0x88] sm:$0xff]
        %v1486 = vld [vmem:[%s1383 + $0x90] sm:$0xff]
        %v1487 = vld [vmem:[%s1383 + $0x98] sm:$0xff]
        %v1488 = vld [vmem:[%s1383 + $0xa0] sm:$0xff]
        %v1489 = vld [vmem:[%s1383 + $0xa8] sm:$0xff]
        %v1490 = vld [vmem:[%s1383 + $0xb0] sm:$0xff]
        %v1491 = vld [vmem:[%s1383 + $0xb8] sm:$0xff]
        %v1492 = vld [vmem:[%s1383 + $0xc0] sm:$0xff]
        %v1493 = vld [vmem:[%s1383 + $0xc8] sm:$0xff]
        %v1494 = vld [vmem:[%s1383 + $0xd0] sm:$0xff]
        %v1495 = vld [vmem:[%s1383 + $0xd8] sm:$0xff]
        %v1496 = vld [vmem:[%s1383 + $0xe0] sm:$0xff]
        %v1497 = vld [vmem:[%s1383 + $0xe8] sm:$0xff]
        %v1498 = vld [vmem:[%s1383 + $0xf0] sm:$0xff]
        %v1499 = vld [vmem:[%s1383 + $0xf8] sm:$0xff]
        %v1500 = vld [vmem:[%s1383 + $0x100] sm:$0xff]
        %v1501 = vld [vmem:[%s1383 + $0x108] sm:$0xff]
        %v1502 = vld [vmem:[%s1383 + $0x110] sm:$0xff]
        %v1503 = vld [vmem:[%s1383 + $0x118] sm:$0xff]
        %v1504 = vld [vmem:[%s1383 + $0x120] sm:$0xff]
        %v1505 = vld [vmem:[%s1383 + $0x128] sm:$0xff]
        %v1506 = vld [vmem:[%s1383 + $0x130] sm:$0xff]
        %v1507 = vld [vmem:[%s1383 + $0x138] sm:$0xff]
        %v1508 = vld [vmem:[%s1383 + $0x140] sm:$0xff]
        %v1509 = vld [vmem:[%s1383 + $0x148] sm:$0xff]
        %v1510 = vld [vmem:[%s1383 + $0x150] sm:$0xff]
        %v1511 = vld [vmem:[%s1383 + $0x158] sm:$0xff]
        %v1512 = vld [vmem:[%s1383 + $0x160] sm:$0xff]
        %v1513 = vld [vmem:[%s1383 + $0x168] sm:$0xff]
        %v1514 = vld [vmem:[%s1383 + $0x170] sm:$0xff]
        %v1515 = vld [vmem:[%s1383 + $0x178] sm:$0xff]
        %v1516 = vld [vmem:[%s1383 + $0x180] sm:$0xff]
        %v1517 = vld [vmem:[%s1383 + $0x188] sm:$0xff]
        %v1518 = vld [vmem:[%s1383 + $0x190] sm:$0xff]
        %v1519 = vld [vmem:[%s1383 + $0x198] sm:$0xff]
        %v1520 = vld [vmem:[%s1383 + $0x1a0] sm:$0xff]
        %v1521 = vld [vmem:[%s1383 + $0x1a8] sm:$0xff]
        %v1522 = vld [vmem:[%s1383 + $0x1b0] sm:$0xff]
        %v1523 = vld [vmem:[%s1383 + $0x1b8] sm:$0xff]
        %v1524 = vld [vmem:[%s1383 + $0x1c0] sm:$0xff]
        %v1525 = vld [vmem:[%s1383 + $0x1c8] sm:$0xff]
        %v1526 = vld [vmem:[%s1383 + $0x1d0] sm:$0xff]
        %v1527 = vld [vmem:[%s1383 + $0x1d8] sm:$0xff]
        %v1528 = vld [vmem:[%s1383 + $0x1e0] sm:$0xff]
        %v1529 = vld [vmem:[%s1383 + $0x1e8] sm:$0xff]
        %v1530 = vld [vmem:[%s1383 + $0x1f0] sm:$0xff]
        %v1531 = vld [vmem:[%s1383 + $0x1f8] sm:$0xff]
        %v1532 = vld [vmem:[%s1383 + $0x200] sm:$0xff]
        %v1533 = vld [vmem:[%s1383 + $0x208] sm:$0xff]
        %v1534 = vld [vmem:[%s1383 + $0x210] sm:$0xff]
        %v1535 = vld [vmem:[%s1383 + $0x218] sm:$0xff]
        %v1536 = vld [vmem:[%s1383 + $0x220] sm:$0xff]
        %v1537 = vld [vmem:[%s1383 + $0x228] sm:$0xff]
        %v1538 = vld [vmem:[%s1383 + $0x230] sm:$0xff]
        %v1539 = vld [vmem:[%s1383 + $0x238] sm:$0xff]
        %v1540 = vld [vmem:[%s1383 + $0x240] sm:$0xff]
        %v1541 = vld [vmem:[%s1383 + $0x248] sm:$0xff]
        %v1542 = vld [vmem:[%s1383 + $0x250] sm:$0xff]
        %v1543 = vld [vmem:[%s1383 + $0x258] sm:$0xff]
        %v1544 = vld [vmem:[%s1383 + $0x260] sm:$0xff]
        %v1545 = vld [vmem:[%s1383 + $0x268] sm:$0xff]
        %v1546 = vld [vmem:[%s1383 + $0x270] sm:$0xff]
        %v1547 = vld [vmem:[%s1383 + $0x278] sm:$0xff]
        %v1548 = vld [vmem:[%s1383 + $0x280] sm:$0xff]
        %v1549 = vld [vmem:[%s1383 + $0x288] sm:$0xff]
        %v1550 = vld [vmem:[%s1383 + $0x290] sm:$0xff]
        %v1551 = vld [vmem:[%s1383 + $0x298] sm:$0xff]
        %v1552 = vld [vmem:[%s1383 + $0x2a0] sm:$0xff]
        %v1553 = vld [vmem:[%s1383 + $0x2a8] sm:$0xff]
        %v1554 = vld [vmem:[%s1383 + $0x2b0] sm:$0xff]
        %v1555 = vld [vmem:[%s1383 + $0x2b8] sm:$0xff]
        %v1556 = vld [vmem:[%s1383 + $0x2c0] sm:$0xff]
        %v1557 = vld [vmem:[%s1383 + $0x2c8] sm:$0xff]
        %v1558 = vld [vmem:[%s1383 + $0x2d0] sm:$0xff]
        %v1559 = vld [vmem:[%s1383 + $0x2d8] sm:$0xff]
        %v1560 = vld [vmem:[%s1383 + $0x2e0] sm:$0xff]
        %v1561 = vld [vmem:[%s1383 + $0x2e8] sm:$0xff]
        %v1562 = vld [vmem:[%s1383 + $0x2f0] sm:$0xff]
        %v1563 = vld [vmem:[%s1383 + $0x2f8] sm:$0xff]
        %v1564 = vld [vmem:[%s1383 + $0x300] sm:$0xff]
        %v1565 = vld [vmem:[%s1383 + $0x308] sm:$0xff]
        %v1566 = vld [vmem:[%s1383 + $0x310] sm:$0xff]
        %v1567 = vld [vmem:[%s1383 + $0x318] sm:$0xff]
        %v1568 = vld [vmem:[%s1383 + $0x320] sm:$0xff]
        %v1569 = vld [vmem:[%s1383 + $0x328] sm:$0xff]
        %v1570 = vld [vmem:[%s1383 + $0x330] sm:$0xff]
        %v1571 = vld [vmem:[%s1383 + $0x338] sm:$0xff]
        %v1572 = vld [vmem:[%s1383 + $0x340] sm:$0xff]
        %v1573 = vld [vmem:[%s1383 + $0x348] sm:$0xff]
        %v1574 = vld [vmem:[%s1383 + $0x350] sm:$0xff]
        %v1575 = vld [vmem:[%s1383 + $0x358] sm:$0xff]
        %v1576 = vld [vmem:[%s1383 + $0x360] sm:$0xff]
        %v1577 = vld [vmem:[%s1383 + $0x368] sm:$0xff]
        %v1578 = vld [vmem:[%s1383 + $0x370] sm:$0xff]
        %v1579 = vld [vmem:[%s1383 + $0x378] sm:$0xff]
        %v1580 = vld [vmem:[%s1383 + $0x380] sm:$0xff]
        %v1581 = vld [vmem:[%s1383 + $0x388] sm:$0xff]
        %v1582 = vld [vmem:[%s1383 + $0x390] sm:$0xff]
        %v1583 = vld [vmem:[%s1383 + $0x398] sm:$0xff]
        %v1584 = vld [vmem:[%s1383 + $0x3a0] sm:$0xff]
        %v1585 = vld [vmem:[%s1383 + $0x3a8] sm:$0xff]
        %v1586 = vld [vmem:[%s1383 + $0x3b0] sm:$0xff]
        %v1587 = vld [vmem:[%s1383 + $0x3b8] sm:$0xff]
        %v1588 = vld [vmem:[%s1383 + $0x3c0] sm:$0xff]
        %v1589 = vld [vmem:[%s1383 + $0x3c8] sm:$0xff]
        %v1590 = vld [vmem:[%s1383 + $0x3d0] sm:$0xff]
        %v1591 = vld [vmem:[%s1383 + $0x3d8] sm:$0xff]
        %v1592 = vld [vmem:[%s1383 + $0x3e0] sm:$0xff]
        %v1593 = vld [vmem:[%s1383 + $0x3e8] sm:$0xff]
        %v1594 = vld [vmem:[%s1383 + $0x3f0] sm:$0xff]
        %v1595 = vld [vmem:[%s1383 + $0x3f8] sm:$0xff]
        %v1596 = vld [vmem:[%s1383 + $0x400] sm:$0xff]
        %v1597 = vld [vmem:[%s1383 + $0x408] sm:$0xff]
        %v1598 = vld [vmem:[%s1383 + $0x410] sm:$0xff]
        %v1599 = vld [vmem:[%s1383 + $0x418] sm:$0xff]
        %v1600 = vld [vmem:[%s1383 + $0x420] sm:$0xff]
        %v1601 = vld [vmem:[%s1383 + $0x428] sm:$0xff]
        %v1602 = vld [vmem:[%s1383 + $0x430] sm:$0xff]
        %v1603 = vld [vmem:[%s1383 + $0x438] sm:$0xff]
        %v1604 = vld [vmem:[%s1383 + $0x440] sm:$0xff]
        %v1605 = vld [vmem:[%s1383 + $0x448] sm:$0xff]
        %v1606 = vld [vmem:[%s1383 + $0x450] sm:$0xff]
        %v1607 = vld [vmem:[%s1383 + $0x458] sm:$0xff]
        %v1608 = vld [vmem:[%s1383 + $0x460] sm:$0xff]
        %v1609 = vld [vmem:[%s1383 + $0x468] sm:$0xff]
        %v1610 = vld [vmem:[%s1383 + $0x470] sm:$0xff]
        %v1611 = vld [vmem:[%s1383 + $0x478] sm:$0xff]
        %v1612 = vld [vmem:[%s1383 + $0x480] sm:$0xff]
        %v1613 = vld [vmem:[%s1383 + $0x488] sm:$0xff]
        %v1614 = vld [vmem:[%s1383 + $0x490] sm:$0xff]
        %v1615 = vld [vmem:[%s1383 + $0x498] sm:$0xff]
        %v1616 = vld [vmem:[%s1383 + $0x4a0] sm:$0xff]
        %v1617 = vld [vmem:[%s1383 + $0x4a8] sm:$0xff]
        %v1618 = vld [vmem:[%s1383 + $0x4b0] sm:$0xff]
        %v1619 = vld [vmem:[%s1383 + $0x4b8] sm:$0xff]
        %v1620 = vld [vmem:[%s1383 + $0x4c0] sm:$0xff]
        %v1621 = vld [vmem:[%s1383 + $0x4c8] sm:$0xff]
        %v1622 = vld [vmem:[%s1383 + $0x4d0] sm:$0xff]
        %v1623 = vld [vmem:[%s1383 + $0x4d8] sm:$0xff]
        %v1624 = vld [vmem:[%s1383 + $0x4e0] sm:$0xff]
        %v1625 = vld [vmem:[%s1383 + $0x4e8] sm:$0xff]
        %v1626 = vld [vmem:[%s1383 + $0x4f0] sm:$0xff]
        %v1627 = vld [vmem:[%s1383 + $0x4f8] sm:$0xff]
        %v1628 = vld [vmem:[%s1383 + $0x500] sm:$0xff]
        %v1629 = vld [vmem:[%s1383 + $0x508] sm:$0xff]
        %v1630 = vld [vmem:[%s1383 + $0x510] sm:$0xff]
        %v1631 = vld [vmem:[%s1383 + $0x518] sm:$0xff]
        %v1632 = vld [vmem:[%s1383 + $0x520] sm:$0xff]
        %v1633 = vld [vmem:[%s1383 + $0x528] sm:$0xff]
        %v1634 = vld [vmem:[%s1383 + $0x530] sm:$0xff]
        %v1635 = vld [vmem:[%s1383 + $0x538] sm:$0xff]
        %v1636 = vld [vmem:[%s1383 + $0x540] sm:$0xff]
        %v1637 = vld [vmem:[%s1383 + $0x548] sm:$0xff]
        %v1638 = vld [vmem:[%s1383 + $0x550] sm:$0xff]
        %v1639 = vld [vmem:[%s1383 + $0x558] sm:$0xff]
        %v1640 = vld [vmem:[%s1383 + $0x560] sm:$0xff]
        %v1641 = vld [vmem:[%s1383 + $0x568] sm:$0xff]
        %v1642 = vld [vmem:[%s1383 + $0x570] sm:$0xff]
        %v1643 = vld [vmem:[%s1383 + $0x578] sm:$0xff]
        %v1644 = vld [vmem:[%s1383 + $0x580] sm:$0xff]
        %v1645 = vld [vmem:[%s1383 + $0x588] sm:$0xff]
        %v1646 = vld [vmem:[%s1383 + $0x590] sm:$0xff]
        %v1647 = vld [vmem:[%s1383 + $0x598] sm:$0xff]
        %v1648 = vld [vmem:[%s1383 + $0x5a0] sm:$0xff]
        %v1649 = vld [vmem:[%s1383 + $0x5a8] sm:$0xff]
        %v1650 = vld [vmem:[%s1383 + $0x5b0] sm:$0xff]
        %v1651 = vld [vmem:[%s1383 + $0x5b8] sm:$0xff]
        %v1652 = vld [vmem:[%s1383 + $0x5c0] sm:$0xff]
        %v1653 = vld [vmem:[%s1383 + $0x5c8] sm:$0xff]
        %v1654 = vld [vmem:[%s1383 + $0x5d0] sm:$0xff]
        %v1655 = vld [vmem:[%s1383 + $0x5d8] sm:$0xff]
        %v1656 = vld [vmem:[%s1383 + $0x5e0] sm:$0xff]
        %v1657 = vld [vmem:[%s1383 + $0x5e8] sm:$0xff]
        %v1658 = vld [vmem:[%s1383 + $0x5f0] sm:$0xff]
        %v1659 = vld [vmem:[%s1383 + $0x5f8] sm:$0xff]
        %v1660 = vld [vmem:[%s1383 + $0x600] sm:$0xff]
        %v1661 = vld [vmem:[%s1383 + $0x608] sm:$0xff]
        %v1662 = vld [vmem:[%s1383 + $0x610] sm:$0xff]
        %v1663 = vld [vmem:[%s1383 + $0x618] sm:$0xff]
        %v1664 = vld [vmem:[%s1383 + $0x620] sm:$0xff]
        %v1665 = vld [vmem:[%s1383 + $0x628] sm:$0xff]
        %v1666 = vld [vmem:[%s1383 + $0x630] sm:$0xff]
        %v1667 = vld [vmem:[%s1383 + $0x638] sm:$0xff]
        %v1668 = vld [vmem:[%s1383 + $0x640] sm:$0xff]
        %v1669 = vld [vmem:[%s1383 + $0x648] sm:$0xff]
        %v1670 = vld [vmem:[%s1383 + $0x650] sm:$0xff]
        %v1671 = vld [vmem:[%s1383 + $0x658] sm:$0xff]
        %v1672 = vld [vmem:[%s1383 + $0x660] sm:$0xff]
        %v1673 = vld [vmem:[%s1383 + $0x668] sm:$0xff]
        %v1674 = vld [vmem:[%s1383 + $0x670] sm:$0xff]
        %v1675 = vld [vmem:[%s1383 + $0x678] sm:$0xff]
        %v1676 = vld [vmem:[%s1383 + $0x680] sm:$0xff]
        %v1677 = vld [vmem:[%s1383 + $0x688] sm:$0xff]
        %v1678 = vld [vmem:[%s1383 + $0x690] sm:$0xff]
        %v1679 = vld [vmem:[%s1383 + $0x698] sm:$0xff]
        %v1680 = vld [vmem:[%s1383 + $0x6a0] sm:$0xff]
        %v1681 = vld [vmem:[%s1383 + $0x6a8] sm:$0xff]
        %v1682 = vld [vmem:[%s1383 + $0x6b0] sm:$0xff]
        %v1683 = vld [vmem:[%s1383 + $0x6b8] sm:$0xff]
        %v1684 = vld [vmem:[%s1383 + $0x6c0] sm:$0xff]
        %v1685 = vld [vmem:[%s1383 + $0x6c8] sm:$0xff]
        %v1686 = vld [vmem:[%s1383 + $0x6d0] sm:$0xff]
        %v1687 = vld [vmem:[%s1383 + $0x6d8] sm:$0xff]
        %v1688 = vld [vmem:[%s1383 + $0x6e0] sm:$0xff]
        %v1689 = vld [vmem:[%s1383 + $0x6e8] sm:$0xff]
        %v1690 = vld [vmem:[%s1383 + $0x6f0] sm:$0xff]
        %v1691 = vld [vmem:[%s1383 + $0x6f8] sm:$0xff]
        %v1692 = vld [vmem:[%s1383 + $0x700] sm:$0xff]
        %v1693 = vld [vmem:[%s1383 + $0x708] sm:$0xff]
        %v1694 = vld [vmem:[%s1383 + $0x710] sm:$0xff]
        %v1695 = vld [vmem:[%s1383 + $0x718] sm:$0xff]
        %v1696 = vld [vmem:[%s1383 + $0x720] sm:$0xff]
        %v1697 = vld [vmem:[%s1383 + $0x728] sm:$0xff]
        %v1698 = vld [vmem:[%s1383 + $0x730] sm:$0xff]
        %v1699 = vld [vmem:[%s1383 + $0x738] sm:$0xff]
        %v1700 = vld [vmem:[%s1383 + $0x740] sm:$0xff]
        %v1701 = vld [vmem:[%s1383 + $0x748] sm:$0xff]
        %v1702 = vld [vmem:[%s1383 + $0x750] sm:$0xff]
        %v1703 = vld [vmem:[%s1383 + $0x758] sm:$0xff]
        %v1704 = vld [vmem:[%s1383 + $0x760] sm:$0xff]
        %v1705 = vld [vmem:[%s1383 + $0x768] sm:$0xff]
        %v1706 = vld [vmem:[%s1383 + $0x770] sm:$0xff]
        %v1707 = vld [vmem:[%s1383 + $0x778] sm:$0xff]
        %v1708 = vld [vmem:[%s1383 + $0x780] sm:$0xff]
        %v1709 = vld [vmem:[%s1383 + $0x788] sm:$0xff]
        %v1710 = vld [vmem:[%s1383 + $0x790] sm:$0xff]
        %v1711 = vld [vmem:[%s1383 + $0x798] sm:$0xff]
        %v1712 = vld [vmem:[%s1383 + $0x7a0] sm:$0xff]
        %v1713 = vld [vmem:[%s1383 + $0x7a8] sm:$0xff]
        %v1714 = vld [vmem:[%s1383 + $0x7b0] sm:$0xff]
        %v1715 = vld [vmem:[%s1383 + $0x7b8] sm:$0xff]
        %v1716 = vld [vmem:[%s1383 + $0x7c0] sm:$0xff]
        %v1717 = vld [vmem:[%s1383 + $0x7c8] sm:$0xff]
        %v1718 = vld [vmem:[%s1383 + $0x7d0] sm:$0xff]
        %v1719 = vld [vmem:[%s1383 + $0x7d8] sm:$0xff]
        %v1720 = vld [vmem:[%s1383 + $0x7e0] sm:$0xff]
        %v1721 = vld [vmem:[%s1383 + $0x7e8] sm:$0xff]
        %v1722 = vld [vmem:[%s1383 + $0x7f0] sm:$0xff]
        %v1723 = vld [vmem:[%s1383 + $0x7f8] sm:$0xff]
        %v1724 = vld [vmem:[%s1383 + $0x800] sm:$0xff]
        %v1725 = vld [vmem:[%s1383 + $0x808] sm:$0xff]
        %v1726 = vld [vmem:[%s1383 + $0x810] sm:$0xff]
        %v1727 = vld [vmem:[%s1383 + $0x818] sm:$0xff]
        %v1728 = vld [vmem:[%s1383 + $0x820] sm:$0xff]
        %v1729 = vld [vmem:[%s1383 + $0x828] sm:$0xff]
        %v1730 = vld [vmem:[%s1383 + $0x830] sm:$0xff]
        %v1731 = vld [vmem:[%s1383 + $0x838] sm:$0xff]
        %v1732 = vld [vmem:[%s1383 + $0x840] sm:$0xff]
        %v1733 = vld [vmem:[%s1383 + $0x848] sm:$0xff]
        %v1734 = vld [vmem:[%s1383 + $0x850] sm:$0xff]
        %v1735 = vld [vmem:[%s1383 + $0x858] sm:$0xff]
        %v1736 = vld [vmem:[%s1383 + $0x860] sm:$0xff]
        %v1737 = vld [vmem:[%s1383 + $0x868] sm:$0xff]
        %v1738 = vld [vmem:[%s1383 + $0x870] sm:$0xff]
        %v1739 = vld [vmem:[%s1383 + $0x878] sm:$0xff]
        %v1740 = vld [vmem:[%s1383 + $0x880] sm:$0xff]
        %v1741 = vld [vmem:[%s1383 + $0x888] sm:$0xff]
        %v1742 = vld [vmem:[%s1383 + $0x890] sm:$0xff]
        %v1743 = vld [vmem:[%s1383 + $0x898] sm:$0xff]
        %v1744 = vld [vmem:[%s1383 + $0x8a0] sm:$0xff]
        %v1745 = vld [vmem:[%s1383 + $0x8a8] sm:$0xff]
        %v1746 = vld [vmem:[%s1383 + $0x8b0] sm:$0xff]
        %v1747 = vld [vmem:[%s1383 + $0x8b8] sm:$0xff]
        %v1748 = vld [vmem:[%s1383 + $0x8c0] sm:$0xff]
        %v1749 = vld [vmem:[%s1383 + $0x8c8] sm:$0xff]
        %v1750 = vld [vmem:[%s1383 + $0x8d0] sm:$0xff]
        %v1751 = vld [vmem:[%s1383 + $0x8d8] sm:$0xff]
        %v1752 = vld [vmem:[%s1383 + $0x8e0] sm:$0xff]
        %v1753 = vld [vmem:[%s1383 + $0x8e8] sm:$0xff]
        %v1754 = vld [vmem:[%s1383 + $0x8f0] sm:$0xff]
        %v1755 = vld [vmem:[%s1383 + $0x8f8] sm:$0xff]
        %v1774 = vunpack.c.l.b16 %v1450
        %v1775 = vunpack.c.h.b16 %v1450
        %v1776 = vunpack.c.l.b16 %v1451
        %v1777 = vunpack.c.h.b16 %v1451
        %v1778 = vunpack.c.l.b16 %v1452
        %v1779 = vunpack.c.h.b16 %v1452
        %v1780 = vunpack.c.l.b16 %v1453
        %v1781 = vunpack.c.h.b16 %v1453
        %v1782 = vunpack.c.l.b16 %v1454
        %v1783 = vunpack.c.h.b16 %v1454
        %v1784 = vunpack.c.l.b16 %v1455
        %v1785 = vunpack.c.h.b16 %v1455
        %v1786 = vunpack.c.l.b16 %v1456
        %v1787 = vunpack.c.h.b16 %v1456
        %v1788 = vunpack.c.l.b16 %v1457
        %v1789 = vunpack.c.h.b16 %v1457
        %v1790 = vunpack.c.l.b16 %v1458
        %v1791 = vunpack.c.h.b16 %v1458
        %v1792 = vunpack.c.l.b16 %v1459
        %v1793 = vunpack.c.h.b16 %v1459
        %v1794 = vunpack.c.l.b16 %v1460
        %v1795 = vunpack.c.h.b16 %v1460
        %v1796 = vunpack.c.l.b16 %v1461
        %v1797 = vunpack.c.h.b16 %v1461
        %v1798 = vunpack.c.l.b16 %v1462
        %v1799 = vunpack.c.h.b16 %v1462
        %v1800 = vunpack.c.l.b16 %v1463
        %v1801 = vunpack.c.h.b16 %v1463
        %v1802 = vunpack.c.l.b16 %v1464
        %v1803 = vunpack.c.h.b16 %v1464
        %v1804 = vunpack.c.l.b16 %v1465
        %v1805 = vunpack.c.h.b16 %v1465
        %v1806 = vunpack.c.l.b16 %v1466
        %v1807 = vunpack.c.h.b16 %v1466
        %v1808 = vunpack.c.l.b16 %v1467
        %v1809 = vunpack.c.h.b16 %v1467
        %v1810 = vpack.c.b16 %v1792, %v1774
        %v1811 = vpack.c.b16 %v1793, %v1775
        %v1812 = vpack.c.b16 %v1794, %v1776
        %v1813 = vpack.c.b16 %v1795, %v1777
        %v1814 = vpack.c.b16 %v1796, %v1778
        %v1815 = vpack.c.b16 %v1797, %v1779
        %v1816 = vpack.c.b16 %v1798, %v1780
        %v1817 = vpack.c.b16 %v1799, %v1781
        %v1818 = vpack.c.b16 %v1800, %v1782
        %v1819 = vpack.c.b16 %v1801, %v1783
        %v1820 = vpack.c.b16 %v1802, %v1784
        %v1821 = vpack.c.b16 %v1803, %v1785
        %v1822 = vpack.c.b16 %v1804, %v1786
        %v1823 = vpack.c.b16 %v1805, %v1787
        %v1824 = vpack.c.b16 %v1806, %v1788
        %v1825 = vpack.c.b16 %v1807, %v1789
        %v1826 = vpack.c.b16 %v1808, %v1790
        %v1827 = vpack.c.b16 %v1809, %v1791
        %v2134 = vunpack.c.l.b16 %v1468
        %v2135 = vunpack.c.h.b16 %v1468
        %v2136 = vunpack.c.l.b16 %v1469
        %v2137 = vunpack.c.h.b16 %v1469
        %v2138 = vunpack.c.l.b16 %v1470
        %v2139 = vunpack.c.h.b16 %v1470
        %v2140 = vunpack.c.l.b16 %v1471
        %v2141 = vunpack.c.h.b16 %v1471
        %v2142 = vunpack.c.l.b16 %v1472
        %v2143 = vunpack.c.h.b16 %v1472
        %v2144 = vunpack.c.l.b16 %v1473
        %v2145 = vunpack.c.h.b16 %v1473
        %v2146 = vunpack.c.l.b16 %v1474
        %v2147 = vunpack.c.h.b16 %v1474
        %v2148 = vunpack.c.l.b16 %v1475
        %v2149 = vunpack.c.h.b16 %v1475
        %v2150 = vunpack.c.l.b16 %v1476
        %v2151 = vunpack.c.h.b16 %v1476
        %v2152 = vunpack.c.l.b16 %v1477
        %v2153 = vunpack.c.h.b16 %v1477
        %v2154 = vunpack.c.l.b16 %v1478
        %v2155 = vunpack.c.h.b16 %v1478
        %v2156 = vunpack.c.l.b16 %v1479
        %v2157 = vunpack.c.h.b16 %v1479
        %v2158 = vunpack.c.l.b16 %v1480
        %v2159 = vunpack.c.h.b16 %v1480
        %v2160 = vunpack.c.l.b16 %v1481
        %v2161 = vunpack.c.h.b16 %v1481
        %v2162 = vunpack.c.l.b16 %v1482
        %v2163 = vunpack.c.h.b16 %v1482
        %v2164 = vunpack.c.l.b16 %v1483
        %v2165 = vunpack.c.h.b16 %v1483
        %v2166 = vunpack.c.l.b16 %v1484
        %v2167 = vunpack.c.h.b16 %v1484
        %v2168 = vunpack.c.l.b16 %v1485
        %v2169 = vunpack.c.h.b16 %v1485
        %v2170 = vunpack.c.l.b16 %v1486
        %v2171 = vunpack.c.h.b16 %v1486
        %v2172 = vunpack.c.l.b16 %v1487
        %v2173 = vunpack.c.h.b16 %v1487
        %v2174 = vunpack.c.l.b16 %v1488
        %v2175 = vunpack.c.h.b16 %v1488
        %v2176 = vunpack.c.l.b16 %v1489
        %v2177 = vunpack.c.h.b16 %v1489
        %v2178 = vunpack.c.l.b16 %v1490
        %v2179 = vunpack.c.h.b16 %v1490
        %v2180 = vunpack.c.l.b16 %v1491
        %v2181 = vunpack.c.h.b16 %v1491
        %v2182 = vunpack.c.l.b16 %v1492
        %v2183 = vunpack.c.h.b16 %v1492
        %v2184 = vunpack.c.l.b16 %v1493
        %v2185 = vunpack.c.h.b16 %v1493
        %v2186 = vunpack.c.l.b16 %v1494
        %v2187 = vunpack.c.h.b16 %v1494
        %v2188 = vunpack.c.l.b16 %v1495
        %v2189 = vunpack.c.h.b16 %v1495
        %v2190 = vunpack.c.l.b16 %v1496
        %v2191 = vunpack.c.h.b16 %v1496
        %v2192 = vunpack.c.l.b16 %v1497
        %v2193 = vunpack.c.h.b16 %v1497
        %v2194 = vunpack.c.l.b16 %v1498
        %v2195 = vunpack.c.h.b16 %v1498
        %v2196 = vunpack.c.l.b16 %v1499
        %v2197 = vunpack.c.h.b16 %v1499
        %v2198 = vunpack.c.l.b16 %v1500
        %v2199 = vunpack.c.h.b16 %v1500
        %v2200 = vunpack.c.l.b16 %v1501
        %v2201 = vunpack.c.h.b16 %v1501
        %v2202 = vunpack.c.l.b16 %v1502
        %v2203 = vunpack.c.h.b16 %v1502
        %v2204 = vunpack.c.l.b16 %v1503
        %v2205 = vunpack.c.h.b16 %v1503
        %v2206 = vunpack.c.l.b16 %v1504
        %v2207 = vunpack.c.h.b16 %v1504
        %v2208 = vunpack.c.l.b16 %v1505
        %v2209 = vunpack.c.h.b16 %v1505
        %v2210 = vunpack.c.l.b16 %v1506
        %v2211 = vunpack.c.h.b16 %v1506
        %v2212 = vunpack.c.l.b16 %v1507
        %v2213 = vunpack.c.h.b16 %v1507
        %v2214 = vunpack.c.l.b16 %v1508
        %v2215 = vunpack.c.h.b16 %v1508
        %v2216 = vunpack.c.l.b16 %v1509
        %v2217 = vunpack.c.h.b16 %v1509
        %v2218 = vunpack.c.l.b16 %v1510
        %v2219 = vunpack.c.h.b16 %v1510
        %v2220 = vunpack.c.l.b16 %v1511
        %v2221 = vunpack.c.h.b16 %v1511
        %v2222 = vunpack.c.l.b16 %v1512
        %v2223 = vunpack.c.h.b16 %v1512
        %v2224 = vunpack.c.l.b16 %v1513
        %v2225 = vunpack.c.h.b16 %v1513
        %v2226 = vunpack.c.l.b16 %v1514
        %v2227 = vunpack.c.h.b16 %v1514
        %v2228 = vunpack.c.l.b16 %v1515
        %v2229 = vunpack.c.h.b16 %v1515
        %v2230 = vunpack.c.l.b16 %v1516
        %v2231 = vunpack.c.h.b16 %v1516
        %v2232 = vunpack.c.l.b16 %v1517
        %v2233 = vunpack.c.h.b16 %v1517
        %v2234 = vunpack.c.l.b16 %v1518
        %v2235 = vunpack.c.h.b16 %v1518
        %v2236 = vunpack.c.l.b16 %v1519
        %v2237 = vunpack.c.h.b16 %v1519
        %v2238 = vunpack.c.l.b16 %v1520
        %v2239 = vunpack.c.h.b16 %v1520
        %v2240 = vunpack.c.l.b16 %v1521
        %v2241 = vunpack.c.h.b16 %v1521
        %v2242 = vunpack.c.l.b16 %v1522
        %v2243 = vunpack.c.h.b16 %v1522
        %v2244 = vunpack.c.l.b16 %v1523
        %v2245 = vunpack.c.h.b16 %v1523
        %v2246 = vunpack.c.l.b16 %v1524
        %v2247 = vunpack.c.h.b16 %v1524
        %v2248 = vunpack.c.l.b16 %v1525
        %v2249 = vunpack.c.h.b16 %v1525
        %v2250 = vunpack.c.l.b16 %v1526
        %v2251 = vunpack.c.h.b16 %v1526
        %v2252 = vunpack.c.l.b16 %v1527
        %v2253 = vunpack.c.h.b16 %v1527
        %v2254 = vunpack.c.l.b16 %v1528
        %v2255 = vunpack.c.h.b16 %v1528
        %v2256 = vunpack.c.l.b16 %v1529
        %v2257 = vunpack.c.h.b16 %v1529
        %v2258 = vunpack.c.l.b16 %v1530
        %v2259 = vunpack.c.h.b16 %v1530
        %v2260 = vunpack.c.l.b16 %v1531
        %v2261 = vunpack.c.h.b16 %v1531
        %v2262 = vunpack.c.l.b16 %v1532
        %v2263 = vunpack.c.h.b16 %v1532
        %v2264 = vunpack.c.l.b16 %v1533
        %v2265 = vunpack.c.h.b16 %v1533
        %v2266 = vunpack.c.l.b16 %v1534
        %v2267 = vunpack.c.h.b16 %v1534
        %v2268 = vunpack.c.l.b16 %v1535
        %v2269 = vunpack.c.h.b16 %v1535
        %v2270 = vunpack.c.l.b16 %v1536
        %v2271 = vunpack.c.h.b16 %v1536
        %v2272 = vunpack.c.l.b16 %v1537
        %v2273 = vunpack.c.h.b16 %v1537
        %v2274 = vunpack.c.l.b16 %v1538
        %v2275 = vunpack.c.h.b16 %v1538
        %v2276 = vunpack.c.l.b16 %v1539
        %v2277 = vunpack.c.h.b16 %v1539
        %v2278 = vunpack.c.l.b16 %v1540
        %v2279 = vunpack.c.h.b16 %v1540
        %v2280 = vunpack.c.l.b16 %v1541
        %v2281 = vunpack.c.h.b16 %v1541
        %v2282 = vunpack.c.l.b16 %v1542
        %v2283 = vunpack.c.h.b16 %v1542
        %v2284 = vunpack.c.l.b16 %v1543
        %v2285 = vunpack.c.h.b16 %v1543
        %v2286 = vunpack.c.l.b16 %v1544
        %v2287 = vunpack.c.h.b16 %v1544
        %v2288 = vunpack.c.l.b16 %v1545
        %v2289 = vunpack.c.h.b16 %v1545
        %v2290 = vunpack.c.l.b16 %v1546
        %v2291 = vunpack.c.h.b16 %v1546
        %v2292 = vunpack.c.l.b16 %v1547
        %v2293 = vunpack.c.h.b16 %v1547
        %v2294 = vunpack.c.l.b16 %v1548
        %v2295 = vunpack.c.h.b16 %v1548
        %v2296 = vunpack.c.l.b16 %v1549
        %v2297 = vunpack.c.h.b16 %v1549
        %v2298 = vunpack.c.l.b16 %v1550
        %v2299 = vunpack.c.h.b16 %v1550
        %v2300 = vunpack.c.l.b16 %v1551
        %v2301 = vunpack.c.h.b16 %v1551
        %v2302 = vunpack.c.l.b16 %v1552
        %v2303 = vunpack.c.h.b16 %v1552
        %v2304 = vunpack.c.l.b16 %v1553
        %v2305 = vunpack.c.h.b16 %v1553
        %v2306 = vunpack.c.l.b16 %v1554
        %v2307 = vunpack.c.h.b16 %v1554
        %v2308 = vunpack.c.l.b16 %v1555
        %v2309 = vunpack.c.h.b16 %v1555
        %v2310 = vunpack.c.l.b16 %v1556
        %v2311 = vunpack.c.h.b16 %v1556
        %v2312 = vunpack.c.l.b16 %v1557
        %v2313 = vunpack.c.h.b16 %v1557
        %v2314 = vunpack.c.l.b16 %v1558
        %v2315 = vunpack.c.h.b16 %v1558
        %v2316 = vunpack.c.l.b16 %v1559
        %v2317 = vunpack.c.h.b16 %v1559
        %v2318 = vunpack.c.l.b16 %v1560
        %v2319 = vunpack.c.h.b16 %v1560
        %v2320 = vunpack.c.l.b16 %v1561
        %v2321 = vunpack.c.h.b16 %v1561
        %v2322 = vunpack.c.l.b16 %v1562
        %v2323 = vunpack.c.h.b16 %v1562
        %v2324 = vunpack.c.l.b16 %v1563
        %v2325 = vunpack.c.h.b16 %v1563
        %v2326 = vunpack.c.l.b16 %v1564
        %v2327 = vunpack.c.h.b16 %v1564
        %v2328 = vunpack.c.l.b16 %v1565
        %v2329 = vunpack.c.h.b16 %v1565
        %v2330 = vunpack.c.l.b16 %v1566
        %v2331 = vunpack.c.h.b16 %v1566
        %v2332 = vunpack.c.l.b16 %v1567
        %v2333 = vunpack.c.h.b16 %v1567
        %v2334 = vunpack.c.l.b16 %v1568
        %v2335 = vunpack.c.h.b16 %v1568
        %v2336 = vunpack.c.l.b16 %v1569
        %v2337 = vunpack.c.h.b16 %v1569
        %v2338 = vunpack.c.l.b16 %v1570
        %v2339 = vunpack.c.h.b16 %v1570
        %v2340 = vunpack.c.l.b16 %v1571
        %v2341 = vunpack.c.h.b16 %v1571
        %v2342 = vunpack.c.l.b16 %v1572
        %v2343 = vunpack.c.h.b16 %v1572
        %v2344 = vunpack.c.l.b16 %v1573
        %v2345 = vunpack.c.h.b16 %v1573
        %v2346 = vunpack.c.l.b16 %v1574
        %v2347 = vunpack.c.h.b16 %v1574
        %v2348 = vunpack.c.l.b16 %v1575
        %v2349 = vunpack.c.h.b16 %v1575
        %v2350 = vunpack.c.l.b16 %v1576
        %v2351 = vunpack.c.h.b16 %v1576
        %v2352 = vunpack.c.l.b16 %v1577
        %v2353 = vunpack.c.h.b16 %v1577
        %v2354 = vunpack.c.l.b16 %v1578
        %v2355 = vunpack.c.h.b16 %v1578
        %v2356 = vunpack.c.l.b16 %v1579
        %v2357 = vunpack.c.h.b16 %v1579
        %v2358 = vunpack.c.l.b16 %v1580
        %v2359 = vunpack.c.h.b16 %v1580
        %v2360 = vunpack.c.l.b16 %v1581
        %v2361 = vunpack.c.h.b16 %v1581
        %v2362 = vunpack.c.l.b16 %v1582
        %v2363 = vunpack.c.h.b16 %v1582
        %v2364 = vunpack.c.l.b16 %v1583
        %v2365 = vunpack.c.h.b16 %v1583
        %v2366 = vunpack.c.l.b16 %v1584
        %v2367 = vunpack.c.h.b16 %v1584
        %v2368 = vunpack.c.l.b16 %v1585
        %v2369 = vunpack.c.h.b16 %v1585
        %v2370 = vunpack.c.l.b16 %v1586
        %v2371 = vunpack.c.h.b16 %v1586
        %v2372 = vunpack.c.l.b16 %v1587
        %v2373 = vunpack.c.h.b16 %v1587
        %v2374 = vunpack.c.l.b16 %v1588
        %v2375 = vunpack.c.h.b16 %v1588
        %v2376 = vunpack.c.l.b16 %v1589
        %v2377 = vunpack.c.h.b16 %v1589
        %v2378 = vunpack.c.l.b16 %v1590
        %v2379 = vunpack.c.h.b16 %v1590
        %v2380 = vunpack.c.l.b16 %v1591
        %v2381 = vunpack.c.h.b16 %v1591
        %v2382 = vunpack.c.l.b16 %v1592
        %v2383 = vunpack.c.h.b16 %v1592
        %v2384 = vunpack.c.l.b16 %v1593
        %v2385 = vunpack.c.h.b16 %v1593
        %v2386 = vunpack.c.l.b16 %v1594
        %v2387 = vunpack.c.h.b16 %v1594
        %v2388 = vunpack.c.l.b16 %v1595
        %v2389 = vunpack.c.h.b16 %v1595
        %v2390 = vunpack.c.l.b16 %v1596
        %v2391 = vunpack.c.h.b16 %v1596
        %v2392 = vunpack.c.l.b16 %v1597
        %v2393 = vunpack.c.h.b16 %v1597
        %v2394 = vunpack.c.l.b16 %v1598
        %v2395 = vunpack.c.h.b16 %v1598
        %v2396 = vunpack.c.l.b16 %v1599
        %v2397 = vunpack.c.h.b16 %v1599
        %v2398 = vunpack.c.l.b16 %v1600
        %v2399 = vunpack.c.h.b16 %v1600
        %v2400 = vunpack.c.l.b16 %v1601
        %v2401 = vunpack.c.h.b16 %v1601
        %v2402 = vunpack.c.l.b16 %v1602
        %v2403 = vunpack.c.h.b16 %v1602
        %v2404 = vunpack.c.l.b16 %v1603
        %v2405 = vunpack.c.h.b16 %v1603
        %v2406 = vunpack.c.l.b16 %v1604
        %v2407 = vunpack.c.h.b16 %v1604
        %v2408 = vunpack.c.l.b16 %v1605
        %v2409 = vunpack.c.h.b16 %v1605
        %v2410 = vunpack.c.l.b16 %v1606
        %v2411 = vunpack.c.h.b16 %v1606
        %v2412 = vunpack.c.l.b16 %v1607
        %v2413 = vunpack.c.h.b16 %v1607
        %v2414 = vunpack.c.l.b16 %v1608
        %v2415 = vunpack.c.h.b16 %v1608
        %v2416 = vunpack.c.l.b16 %v1609
        %v2417 = vunpack.c.h.b16 %v1609
        %v2418 = vunpack.c.l.b16 %v1610
        %v2419 = vunpack.c.h.b16 %v1610
        %v2420 = vunpack.c.l.b16 %v1611
        %v2421 = vunpack.c.h.b16 %v1611
        %v2422 = vunpack.c.l.b16 %v1612
        %v2423 = vunpack.c.h.b16 %v1612
        %v2424 = vunpack.c.l.b16 %v1613
        %v2425 = vunpack.c.h.b16 %v1613
        %v2426 = vunpack.c.l.b16 %v1614
        %v2427 = vunpack.c.h.b16 %v1614
        %v2428 = vunpack.c.l.b16 %v1615
        %v2429 = vunpack.c.h.b16 %v1615
        %v2430 = vunpack.c.l.b16 %v1616
        %v2431 = vunpack.c.h.b16 %v1616
        %v2432 = vunpack.c.l.b16 %v1617
        %v2433 = vunpack.c.h.b16 %v1617
        %v2434 = vunpack.c.l.b16 %v1618
        %v2435 = vunpack.c.h.b16 %v1618
        %v2436 = vunpack.c.l.b16 %v1619
        %v2437 = vunpack.c.h.b16 %v1619
        %v2438 = vunpack.c.l.b16 %v1620
        %v2439 = vunpack.c.h.b16 %v1620
        %v2440 = vunpack.c.l.b16 %v1621
        %v2441 = vunpack.c.h.b16 %v1621
        %v2442 = vunpack.c.l.b16 %v1622
        %v2443 = vunpack.c.h.b16 %v1622
        %v2444 = vunpack.c.l.b16 %v1623
        %v2445 = vunpack.c.h.b16 %v1623
        %v2446 = vunpack.c.l.b16 %v1624
        %v2447 = vunpack.c.h.b16 %v1624
        %v2448 = vunpack.c.l.b16 %v1625
        %v2449 = vunpack.c.h.b16 %v1625
        %v2450 = vunpack.c.l.b16 %v1626
        %v2451 = vunpack.c.h.b16 %v1626
        %v2452 = vunpack.c.l.b16 %v1627
        %v2453 = vunpack.c.h.b16 %v1627
        %v2454 = vunpack.c.l.b16 %v1628
        %v2455 = vunpack.c.h.b16 %v1628
        %v2456 = vunpack.c.l.b16 %v1629
        %v2457 = vunpack.c.h.b16 %v1629
        %v2458 = vunpack.c.l.b16 %v1630
        %v2459 = vunpack.c.h.b16 %v1630
        %v2460 = vunpack.c.l.b16 %v1631
        %v2461 = vunpack.c.h.b16 %v1631
        %v2462 = vunpack.c.l.b16 %v1632
        %v2463 = vunpack.c.h.b16 %v1632
        %v2464 = vunpack.c.l.b16 %v1633
        %v2465 = vunpack.c.h.b16 %v1633
        %v2466 = vunpack.c.l.b16 %v1634
        %v2467 = vunpack.c.h.b16 %v1634
        %v2468 = vunpack.c.l.b16 %v1635
        %v2469 = vunpack.c.h.b16 %v1635
        %v2470 = vunpack.c.l.b16 %v1636
        %v2471 = vunpack.c.h.b16 %v1636
        %v2472 = vunpack.c.l.b16 %v1637
        %v2473 = vunpack.c.h.b16 %v1637
        %v2474 = vunpack.c.l.b16 %v1638
        %v2475 = vunpack.c.h.b16 %v1638
        %v2476 = vunpack.c.l.b16 %v1639
        %v2477 = vunpack.c.h.b16 %v1639
        %v2478 = vunpack.c.l.b16 %v1640
        %v2479 = vunpack.c.h.b16 %v1640
        %v2480 = vunpack.c.l.b16 %v1641
        %v2481 = vunpack.c.h.b16 %v1641
        %v2482 = vunpack.c.l.b16 %v1642
        %v2483 = vunpack.c.h.b16 %v1642
        %v2484 = vunpack.c.l.b16 %v1643
        %v2485 = vunpack.c.h.b16 %v1643
        %v2486 = vunpack.c.l.b16 %v1644
        %v2487 = vunpack.c.h.b16 %v1644
        %v2488 = vunpack.c.l.b16 %v1645
        %v2489 = vunpack.c.h.b16 %v1645
        %v2490 = vunpack.c.l.b16 %v1646
        %v2491 = vunpack.c.h.b16 %v1646
        %v2492 = vunpack.c.l.b16 %v1647
        %v2493 = vunpack.c.h.b16 %v1647
        %v2494 = vunpack.c.l.b16 %v1648
        %v2495 = vunpack.c.h.b16 %v1648
        %v2496 = vunpack.c.l.b16 %v1649
        %v2497 = vunpack.c.h.b16 %v1649
        %v2498 = vunpack.c.l.b16 %v1650
        %v2499 = vunpack.c.h.b16 %v1650
        %v2500 = vunpack.c.l.b16 %v1651
        %v2501 = vunpack.c.h.b16 %v1651
        %v2502 = vunpack.c.l.b16 %v1652
        %v2503 = vunpack.c.h.b16 %v1652
        %v2504 = vunpack.c.l.b16 %v1653
        %v2505 = vunpack.c.h.b16 %v1653
        %v2506 = vunpack.c.l.b16 %v1654
        %v2507 = vunpack.c.h.b16 %v1654
        %v2508 = vunpack.c.l.b16 %v1655
        %v2509 = vunpack.c.h.b16 %v1655
        %v2510 = vunpack.c.l.b16 %v1656
        %v2511 = vunpack.c.h.b16 %v1656
        %v2512 = vunpack.c.l.b16 %v1657
        %v2513 = vunpack.c.h.b16 %v1657
        %v2514 = vunpack.c.l.b16 %v1658
        %v2515 = vunpack.c.h.b16 %v1658
        %v2516 = vunpack.c.l.b16 %v1659
        %v2517 = vunpack.c.h.b16 %v1659
        %v2518 = vunpack.c.l.b16 %v1660
        %v2519 = vunpack.c.h.b16 %v1660
        %v2520 = vunpack.c.l.b16 %v1661
        %v2521 = vunpack.c.h.b16 %v1661
        %v2522 = vunpack.c.l.b16 %v1662
        %v2523 = vunpack.c.h.b16 %v1662
        %v2524 = vunpack.c.l.b16 %v1663
        %v2525 = vunpack.c.h.b16 %v1663
        %v2526 = vunpack.c.l.b16 %v1664
        %v2527 = vunpack.c.h.b16 %v1664
        %v2528 = vunpack.c.l.b16 %v1665
        %v2529 = vunpack.c.h.b16 %v1665
        %v2530 = vunpack.c.l.b16 %v1666
        %v2531 = vunpack.c.h.b16 %v1666
        %v2532 = vunpack.c.l.b16 %v1667
        %v2533 = vunpack.c.h.b16 %v1667
        %v2534 = vunpack.c.l.b16 %v1668
        %v2535 = vunpack.c.h.b16 %v1668
        %v2536 = vunpack.c.l.b16 %v1669
        %v2537 = vunpack.c.h.b16 %v1669
        %v2538 = vunpack.c.l.b16 %v1670
        %v2539 = vunpack.c.h.b16 %v1670
        %v2540 = vunpack.c.l.b16 %v1671
        %v2541 = vunpack.c.h.b16 %v1671
        %v2542 = vunpack.c.l.b16 %v1672
        %v2543 = vunpack.c.h.b16 %v1672
        %v2544 = vunpack.c.l.b16 %v1673
        %v2545 = vunpack.c.h.b16 %v1673
        %v2546 = vunpack.c.l.b16 %v1674
        %v2547 = vunpack.c.h.b16 %v1674
        %v2548 = vunpack.c.l.b16 %v1675
        %v2549 = vunpack.c.h.b16 %v1675
        %v2550 = vunpack.c.l.b16 %v1676
        %v2551 = vunpack.c.h.b16 %v1676
        %v2552 = vunpack.c.l.b16 %v1677
        %v2553 = vunpack.c.h.b16 %v1677
        %v2554 = vunpack.c.l.b16 %v1678
        %v2555 = vunpack.c.h.b16 %v1678
        %v2556 = vunpack.c.l.b16 %v1679
        %v2557 = vunpack.c.h.b16 %v1679
        %v2558 = vunpack.c.l.b16 %v1680
        %v2559 = vunpack.c.h.b16 %v1680
        %v2560 = vunpack.c.l.b16 %v1681
        %v2561 = vunpack.c.h.b16 %v1681
        %v2562 = vunpack.c.l.b16 %v1682
        %v2563 = vunpack.c.h.b16 %v1682
        %v2564 = vunpack.c.l.b16 %v1683
        %v2565 = vunpack.c.h.b16 %v1683
        %v2566 = vunpack.c.l.b16 %v1684
        %v2567 = vunpack.c.h.b16 %v1684
        %v2568 = vunpack.c.l.b16 %v1685
        %v2569 = vunpack.c.h.b16 %v1685
        %v2570 = vunpack.c.l.b16 %v1686
        %v2571 = vunpack.c.h.b16 %v1686
        %v2572 = vunpack.c.l.b16 %v1687
        %v2573 = vunpack.c.h.b16 %v1687
        %v2574 = vunpack.c.l.b16 %v1688
        %v2575 = vunpack.c.h.b16 %v1688
        %v2576 = vunpack.c.l.b16 %v1689
        %v2577 = vunpack.c.h.b16 %v1689
        %v2578 = vunpack.c.l.b16 %v1690
        %v2579 = vunpack.c.h.b16 %v1690
        %v2580 = vunpack.c.l.b16 %v1691
        %v2581 = vunpack.c.h.b16 %v1691
        %v2582 = vunpack.c.l.b16 %v1692
        %v2583 = vunpack.c.h.b16 %v1692
        %v2584 = vunpack.c.l.b16 %v1693
        %v2585 = vunpack.c.h.b16 %v1693
        %v2586 = vunpack.c.l.b16 %v1694
        %v2587 = vunpack.c.h.b16 %v1694
        %v2588 = vunpack.c.l.b16 %v1695
        %v2589 = vunpack.c.h.b16 %v1695
        %v2590 = vunpack.c.l.b16 %v1696
        %v2591 = vunpack.c.h.b16 %v1696
        %v2592 = vunpack.c.l.b16 %v1697
        %v2593 = vunpack.c.h.b16 %v1697
        %v2594 = vunpack.c.l.b16 %v1698
        %v2595 = vunpack.c.h.b16 %v1698
        %v2596 = vunpack.c.l.b16 %v1699
        %v2597 = vunpack.c.h.b16 %v1699
        %v2598 = vunpack.c.l.b16 %v1700
        %v2599 = vunpack.c.h.b16 %v1700
        %v2600 = vunpack.c.l.b16 %v1701
        %v2601 = vunpack.c.h.b16 %v1701
        %v2602 = vunpack.c.l.b16 %v1702
        %v2603 = vunpack.c.h.b16 %v1702
        %v2604 = vunpack.c.l.b16 %v1703
        %v2605 = vunpack.c.h.b16 %v1703
        %v2606 = vunpack.c.l.b16 %v1704
        %v2607 = vunpack.c.h.b16 %v1704
        %v2608 = vunpack.c.l.b16 %v1705
        %v2609 = vunpack.c.h.b16 %v1705
        %v2610 = vunpack.c.l.b16 %v1706
        %v2611 = vunpack.c.h.b16 %v1706
        %v2612 = vunpack.c.l.b16 %v1707
        %v2613 = vunpack.c.h.b16 %v1707
        %v2614 = vunpack.c.l.b16 %v1708
        %v2615 = vunpack.c.h.b16 %v1708
        %v2616 = vunpack.c.l.b16 %v1709
        %v2617 = vunpack.c.h.b16 %v1709
        %v2618 = vunpack.c.l.b16 %v1710
        %v2619 = vunpack.c.h.b16 %v1710
        %v2620 = vunpack.c.l.b16 %v1711
        %v2621 = vunpack.c.h.b16 %v1711
        %v2622 = vunpack.c.l.b16 %v1712
        %v2623 = vunpack.c.h.b16 %v1712
        %v2624 = vunpack.c.l.b16 %v1713
        %v2625 = vunpack.c.h.b16 %v1713
        %v2626 = vunpack.c.l.b16 %v1714
        %v2627 = vunpack.c.h.b16 %v1714
        %v2628 = vunpack.c.l.b16 %v1715
        %v2629 = vunpack.c.h.b16 %v1715
        %v2630 = vunpack.c.l.b16 %v1716
        %v2631 = vunpack.c.h.b16 %v1716
        %v2632 = vunpack.c.l.b16 %v1717
        %v2633 = vunpack.c.h.b16 %v1717
        %v2634 = vunpack.c.l.b16 %v1718
        %v2635 = vunpack.c.h.b16 %v1718
        %v2636 = vunpack.c.l.b16 %v1719
        %v2637 = vunpack.c.h.b16 %v1719
        %v2638 = vunpack.c.l.b16 %v1720
        %v2639 = vunpack.c.h.b16 %v1720
        %v2640 = vunpack.c.l.b16 %v1721
        %v2641 = vunpack.c.h.b16 %v1721
        %v2642 = vunpack.c.l.b16 %v1722
        %v2643 = vunpack.c.h.b16 %v1722
        %v2644 = vunpack.c.l.b16 %v1723
        %v2645 = vunpack.c.h.b16 %v1723
        %v2646 = vunpack.c.l.b16 %v1724
        %v2647 = vunpack.c.h.b16 %v1724
        %v2648 = vunpack.c.l.b16 %v1725
        %v2649 = vunpack.c.h.b16 %v1725
        %v2650 = vunpack.c.l.b16 %v1726
        %v2651 = vunpack.c.h.b16 %v1726
        %v2652 = vunpack.c.l.b16 %v1727
        %v2653 = vunpack.c.h.b16 %v1727
        %v2654 = vunpack.c.l.b16 %v1728
        %v2655 = vunpack.c.h.b16 %v1728
        %v2656 = vunpack.c.l.b16 %v1729
        %v2657 = vunpack.c.h.b16 %v1729
        %v2658 = vunpack.c.l.b16 %v1730
        %v2659 = vunpack.c.h.b16 %v1730
        %v2660 = vunpack.c.l.b16 %v1731
        %v2661 = vunpack.c.h.b16 %v1731
        %v2662 = vunpack.c.l.b16 %v1732
        %v2663 = vunpack.c.h.b16 %v1732
        %v2664 = vunpack.c.l.b16 %v1733
        %v2665 = vunpack.c.h.b16 %v1733
        %v2666 = vunpack.c.l.b16 %v1734
        %v2667 = vunpack.c.h.b16 %v1734
        %v2668 = vunpack.c.l.b16 %v1735
        %v2669 = vunpack.c.h.b16 %v1735
        %v2670 = vunpack.c.l.b16 %v1736
        %v2671 = vunpack.c.h.b16 %v1736
        %v2672 = vunpack.c.l.b16 %v1737
        %v2673 = vunpack.c.h.b16 %v1737
        %v2674 = vunpack.c.l.b16 %v1738
        %v2675 = vunpack.c.h.b16 %v1738
        %v2676 = vunpack.c.l.b16 %v1739
        %v2677 = vunpack.c.h.b16 %v1739
        %v2678 = vunpack.c.l.b16 %v1740
        %v2679 = vunpack.c.h.b16 %v1740
        %v2680 = vunpack.c.l.b16 %v1741
        %v2681 = vunpack.c.h.b16 %v1741
        %v2682 = vunpack.c.l.b16 %v1742
        %v2683 = vunpack.c.h.b16 %v1742
        %v2684 = vunpack.c.l.b16 %v1743
        %v2685 = vunpack.c.h.b16 %v1743
        %v2686 = vunpack.c.l.b16 %v1744
        %v2687 = vunpack.c.h.b16 %v1744
        %v2688 = vunpack.c.l.b16 %v1745
        %v2689 = vunpack.c.h.b16 %v1745
        %v2690 = vunpack.c.l.b16 %v1746
        %v2691 = vunpack.c.h.b16 %v1746
        %v2692 = vunpack.c.l.b16 %v1747
        %v2693 = vunpack.c.h.b16 %v1747
        %v2694 = vunpack.c.l.b16 %v1748
        %v2695 = vunpack.c.h.b16 %v1748
        %v2696 = vunpack.c.l.b16 %v1749
        %v2697 = vunpack.c.h.b16 %v1749
        %v2698 = vunpack.c.l.b16 %v1750
        %v2699 = vunpack.c.h.b16 %v1750
        %v2700 = vunpack.c.l.b16 %v1751
        %v2701 = vunpack.c.h.b16 %v1751
        %v2702 = vunpack.c.l.b16 %v1752
        %v2703 = vunpack.c.h.b16 %v1752
        %v2704 = vunpack.c.l.b16 %v1753
        %v2705 = vunpack.c.h.b16 %v1753
        %v2706 = vunpack.c.l.b16 %v1754
        %v2707 = vunpack.c.h.b16 %v1754
        %v2708 = vunpack.c.l.b16 %v1755
        %v2709 = vunpack.c.h.b16 %v1755
        %v2710 = vpack.c.b16 %v2136, %v2134
        %v2711 = vpack.c.b16 %v2137, %v2135
        %v2712 = vpack.c.b16 %v2140, %v2138
        %v2713 = vpack.c.b16 %v2141, %v2139
        %v2714 = vpack.c.b16 %v2144, %v2142
        %v2715 = vpack.c.b16 %v2145, %v2143
        %v2716 = vpack.c.b16 %v2148, %v2146
        %v2717 = vpack.c.b16 %v2149, %v2147
        %v2718 = vpack.c.b16 %v2152, %v2150
        %v2719 = vpack.c.b16 %v2153, %v2151
        %v2720 = vpack.c.b16 %v2156, %v2154
        %v2721 = vpack.c.b16 %v2157, %v2155
        %v2722 = vpack.c.b16 %v2160, %v2158
        %v2723 = vpack.c.b16 %v2161, %v2159
        %v2724 = vpack.c.b16 %v2164, %v2162
        %v2725 = vpack.c.b16 %v2165, %v2163
        %v2726 = vpack.c.b16 %v2168, %v2166
        %v2727 = vpack.c.b16 %v2169, %v2167
        %v2728 = vpack.c.b16 %v2172, %v2170
        %v2729 = vpack.c.b16 %v2173, %v2171
        %v2730 = vpack.c.b16 %v2176, %v2174
        %v2731 = vpack.c.b16 %v2177, %v2175
        %v2732 = vpack.c.b16 %v2180, %v2178
        %v2733 = vpack.c.b16 %v2181, %v2179
        %v2734 = vpack.c.b16 %v2184, %v2182
        %v2735 = vpack.c.b16 %v2185, %v2183
        %v2736 = vpack.c.b16 %v2188, %v2186
        %v2737 = vpack.c.b16 %v2189, %v2187
        %v2738 = vpack.c.b16 %v2192, %v2190
        %v2739 = vpack.c.b16 %v2193, %v2191
        %v2740 = vpack.c.b16 %v2196, %v2194
        %v2741 = vpack.c.b16 %v2197, %v2195
        %v2742 = vpack.c.b16 %v2200, %v2198
        %v2743 = vpack.c.b16 %v2201, %v2199
        %v2744 = vpack.c.b16 %v2204, %v2202
        %v2745 = vpack.c.b16 %v2205, %v2203
        %v2746 = vpack.c.b16 %v2208, %v2206
        %v2747 = vpack.c.b16 %v2209, %v2207
        %v2748 = vpack.c.b16 %v2212, %v2210
        %v2749 = vpack.c.b16 %v2213, %v2211
        %v2750 = vpack.c.b16 %v2216, %v2214
        %v2751 = vpack.c.b16 %v2217, %v2215
        %v2752 = vpack.c.b16 %v2220, %v2218
        %v2753 = vpack.c.b16 %v2221, %v2219
        %v2754 = vpack.c.b16 %v2224, %v2222
        %v2755 = vpack.c.b16 %v2225, %v2223
        %v2756 = vpack.c.b16 %v2228, %v2226
        %v2757 = vpack.c.b16 %v2229, %v2227
        %v2758 = vpack.c.b16 %v2232, %v2230
        %v2759 = vpack.c.b16 %v2233, %v2231
        %v2760 = vpack.c.b16 %v2236, %v2234
        %v2761 = vpack.c.b16 %v2237, %v2235
        %v2762 = vpack.c.b16 %v2240, %v2238
        %v2763 = vpack.c.b16 %v2241, %v2239
        %v2764 = vpack.c.b16 %v2244, %v2242
        %v2765 = vpack.c.b16 %v2245, %v2243
        %v2766 = vpack.c.b16 %v2248, %v2246
        %v2767 = vpack.c.b16 %v2249, %v2247
        %v2768 = vpack.c.b16 %v2252, %v2250
        %v2769 = vpack.c.b16 %v2253, %v2251
        %v2770 = vpack.c.b16 %v2256, %v2254
        %v2771 = vpack.c.b16 %v2257, %v2255
        %v2772 = vpack.c.b16 %v2260, %v2258
        %v2773 = vpack.c.b16 %v2261, %v2259
        %v2774 = vpack.c.b16 %v2264, %v2262
        %v2775 = vpack.c.b16 %v2265, %v2263
        %v2776 = vpack.c.b16 %v2268, %v2266
        %v2777 = vpack.c.b16 %v2269, %v2267
        %v2778 = vpack.c.b16 %v2272, %v2270
        %v2779 = vpack.c.b16 %v2273, %v2271
        %v2780 = vpack.c.b16 %v2276, %v2274
        %v2781 = vpack.c.b16 %v2277, %v2275
        %v2782 = vpack.c.b16 %v2280, %v2278
        %v2783 = vpack.c.b16 %v2281, %v2279
        %v2784 = vpack.c.b16 %v2284, %v2282
        %v2785 = vpack.c.b16 %v2285, %v2283
        %v2786 = vpack.c.b16 %v2288, %v2286
        %v2787 = vpack.c.b16 %v2289, %v2287
        %v2788 = vpack.c.b16 %v2292, %v2290
        %v2789 = vpack.c.b16 %v2293, %v2291
        %v2790 = vpack.c.b16 %v2296, %v2294
        %v2791 = vpack.c.b16 %v2297, %v2295
        %v2792 = vpack.c.b16 %v2300, %v2298
        %v2793 = vpack.c.b16 %v2301, %v2299
        %v2794 = vpack.c.b16 %v2304, %v2302
        %v2795 = vpack.c.b16 %v2305, %v2303
        %v2796 = vpack.c.b16 %v2308, %v2306
        %v2797 = vpack.c.b16 %v2309, %v2307
        %v2798 = vpack.c.b16 %v2312, %v2310
        %v2799 = vpack.c.b16 %v2313, %v2311
        %v2800 = vpack.c.b16 %v2316, %v2314
        %v2801 = vpack.c.b16 %v2317, %v2315
        %v2802 = vpack.c.b16 %v2320, %v2318
        %v2803 = vpack.c.b16 %v2321, %v2319
        %v2804 = vpack.c.b16 %v2324, %v2322
        %v2805 = vpack.c.b16 %v2325, %v2323
        %v2806 = vpack.c.b16 %v2328, %v2326
        %v2807 = vpack.c.b16 %v2329, %v2327
        %v2808 = vpack.c.b16 %v2332, %v2330
        %v2809 = vpack.c.b16 %v2333, %v2331
        %v2810 = vpack.c.b16 %v2336, %v2334
        %v2811 = vpack.c.b16 %v2337, %v2335
        %v2812 = vpack.c.b16 %v2340, %v2338
        %v2813 = vpack.c.b16 %v2341, %v2339
        %v2814 = vpack.c.b16 %v2344, %v2342
        %v2815 = vpack.c.b16 %v2345, %v2343
        %v2816 = vpack.c.b16 %v2348, %v2346
        %v2817 = vpack.c.b16 %v2349, %v2347
        %v2818 = vpack.c.b16 %v2352, %v2350
        %v2819 = vpack.c.b16 %v2353, %v2351
        %v2820 = vpack.c.b16 %v2356, %v2354
        %v2821 = vpack.c.b16 %v2357, %v2355
        %v2822 = vpack.c.b16 %v2360, %v2358
        %v2823 = vpack.c.b16 %v2361, %v2359
        %v2824 = vpack.c.b16 %v2364, %v2362
        %v2825 = vpack.c.b16 %v2365, %v2363
        %v2826 = vpack.c.b16 %v2368, %v2366
        %v2827 = vpack.c.b16 %v2369, %v2367
        %v2828 = vpack.c.b16 %v2372, %v2370
        %v2829 = vpack.c.b16 %v2373, %v2371
        %v2830 = vpack.c.b16 %v2376, %v2374
        %v2831 = vpack.c.b16 %v2377, %v2375
        %v2832 = vpack.c.b16 %v2380, %v2378
        %v2833 = vpack.c.b16 %v2381, %v2379
        %v2834 = vpack.c.b16 %v2384, %v2382
        %v2835 = vpack.c.b16 %v2385, %v2383
        %v2836 = vpack.c.b16 %v2388, %v2386
        %v2837 = vpack.c.b16 %v2389, %v2387
        %v2838 = vpack.c.b16 %v2392, %v2390
        %v2839 = vpack.c.b16 %v2393, %v2391
        %v2840 = vpack.c.b16 %v2396, %v2394
        %v2841 = vpack.c.b16 %v2397, %v2395
        %v2842 = vpack.c.b16 %v2400, %v2398
        %v2843 = vpack.c.b16 %v2401, %v2399
        %v2844 = vpack.c.b16 %v2404, %v2402
        %v2845 = vpack.c.b16 %v2405, %v2403
        %v2846 = vpack.c.b16 %v2408, %v2406
        %v2847 = vpack.c.b16 %v2409, %v2407
        %v2848 = vpack.c.b16 %v2412, %v2410
        %v2849 = vpack.c.b16 %v2413, %v2411
        %v2850 = vpack.c.b16 %v2416, %v2414
        %v2851 = vpack.c.b16 %v2417, %v2415
        %v2852 = vpack.c.b16 %v2420, %v2418
        %v2853 = vpack.c.b16 %v2421, %v2419
        %v2854 = vpack.c.b16 %v2424, %v2422
        %v2855 = vpack.c.b16 %v2425, %v2423
        %v2856 = vpack.c.b16 %v2428, %v2426
        %v2857 = vpack.c.b16 %v2429, %v2427
        %v2858 = vpack.c.b16 %v2432, %v2430
        %v2859 = vpack.c.b16 %v2433, %v2431
        %v2860 = vpack.c.b16 %v2436, %v2434
        %v2861 = vpack.c.b16 %v2437, %v2435
        %v2862 = vpack.c.b16 %v2440, %v2438
        %v2863 = vpack.c.b16 %v2441, %v2439
        %v2864 = vpack.c.b16 %v2444, %v2442
        %v2865 = vpack.c.b16 %v2445, %v2443
        %v2866 = vpack.c.b16 %v2448, %v2446
        %v2867 = vpack.c.b16 %v2449, %v2447
        %v2868 = vpack.c.b16 %v2452, %v2450
        %v2869 = vpack.c.b16 %v2453, %v2451
        %v2870 = vpack.c.b16 %v2456, %v2454
        %v2871 = vpack.c.b16 %v2457, %v2455
        %v2872 = vpack.c.b16 %v2460, %v2458
        %v2873 = vpack.c.b16 %v2461, %v2459
        %v2874 = vpack.c.b16 %v2464, %v2462
        %v2875 = vpack.c.b16 %v2465, %v2463
        %v2876 = vpack.c.b16 %v2468, %v2466
        %v2877 = vpack.c.b16 %v2469, %v2467
        %v2878 = vpack.c.b16 %v2472, %v2470
        %v2879 = vpack.c.b16 %v2473, %v2471
        %v2880 = vpack.c.b16 %v2476, %v2474
        %v2881 = vpack.c.b16 %v2477, %v2475
        %v2882 = vpack.c.b16 %v2480, %v2478
        %v2883 = vpack.c.b16 %v2481, %v2479
        %v2884 = vpack.c.b16 %v2484, %v2482
        %v2885 = vpack.c.b16 %v2485, %v2483
        %v2886 = vpack.c.b16 %v2488, %v2486
        %v2887 = vpack.c.b16 %v2489, %v2487
        %v2888 = vpack.c.b16 %v2492, %v2490
        %v2889 = vpack.c.b16 %v2493, %v2491
        %v2890 = vpack.c.b16 %v2496, %v2494
        %v2891 = vpack.c.b16 %v2497, %v2495
        %v2892 = vpack.c.b16 %v2500, %v2498
        %v2893 = vpack.c.b16 %v2501, %v2499
        %v2894 = vpack.c.b16 %v2504, %v2502
        %v2895 = vpack.c.b16 %v2505, %v2503
        %v2896 = vpack.c.b16 %v2508, %v2506
        %v2897 = vpack.c.b16 %v2509, %v2507
        %v2898 = vpack.c.b16 %v2512, %v2510
        %v2899 = vpack.c.b16 %v2513, %v2511
        %v2900 = vpack.c.b16 %v2516, %v2514
        %v2901 = vpack.c.b16 %v2517, %v2515
        %v2902 = vpack.c.b16 %v2520, %v2518
        %v2903 = vpack.c.b16 %v2521, %v2519
        %v2904 = vpack.c.b16 %v2524, %v2522
        %v2905 = vpack.c.b16 %v2525, %v2523
        %v2906 = vpack.c.b16 %v2528, %v2526
        %v2907 = vpack.c.b16 %v2529, %v2527
        %v2908 = vpack.c.b16 %v2532, %v2530
        %v2909 = vpack.c.b16 %v2533, %v2531
        %v2910 = vpack.c.b16 %v2536, %v2534
        %v2911 = vpack.c.b16 %v2537, %v2535
        %v2912 = vpack.c.b16 %v2540, %v2538
        %v2913 = vpack.c.b16 %v2541, %v2539
        %v2914 = vpack.c.b16 %v2544, %v2542
        %v2915 = vpack.c.b16 %v2545, %v2543
        %v2916 = vpack.c.b16 %v2548, %v2546
        %v2917 = vpack.c.b16 %v2549, %v2547
        %v2918 = vpack.c.b16 %v2552, %v2550
        %v2919 = vpack.c.b16 %v2553, %v2551
        %v2920 = vpack.c.b16 %v2556, %v2554
        %v2921 = vpack.c.b16 %v2557, %v2555
        %v2922 = vpack.c.b16 %v2560, %v2558
        %v2923 = vpack.c.b16 %v2561, %v2559
        %v2924 = vpack.c.b16 %v2564, %v2562
        %v2925 = vpack.c.b16 %v2565, %v2563
        %v2926 = vpack.c.b16 %v2568, %v2566
        %v2927 = vpack.c.b16 %v2569, %v2567
        %v2928 = vpack.c.b16 %v2572, %v2570
        %v2929 = vpack.c.b16 %v2573, %v2571
        %v2930 = vpack.c.b16 %v2576, %v2574
        %v2931 = vpack.c.b16 %v2577, %v2575
        %v2932 = vpack.c.b16 %v2580, %v2578
        %v2933 = vpack.c.b16 %v2581, %v2579
        %v2934 = vpack.c.b16 %v2584, %v2582
        %v2935 = vpack.c.b16 %v2585, %v2583
        %v2936 = vpack.c.b16 %v2588, %v2586
        %v2937 = vpack.c.b16 %v2589, %v2587
        %v2938 = vpack.c.b16 %v2592, %v2590
        %v2939 = vpack.c.b16 %v2593, %v2591
        %v2940 = vpack.c.b16 %v2596, %v2594
        %v2941 = vpack.c.b16 %v2597, %v2595
        %v2942 = vpack.c.b16 %v2600, %v2598
        %v2943 = vpack.c.b16 %v2601, %v2599
        %v2944 = vpack.c.b16 %v2604, %v2602
        %v2945 = vpack.c.b16 %v2605, %v2603
        %v2946 = vpack.c.b16 %v2608, %v2606
        %v2947 = vpack.c.b16 %v2609, %v2607
        %v2948 = vpack.c.b16 %v2612, %v2610
        %v2949 = vpack.c.b16 %v2613, %v2611
        %v2950 = vpack.c.b16 %v2616, %v2614
        %v2951 = vpack.c.b16 %v2617, %v2615
        %v2952 = vpack.c.b16 %v2620, %v2618
        %v2953 = vpack.c.b16 %v2621, %v2619
        %v2954 = vpack.c.b16 %v2624, %v2622
        %v2955 = vpack.c.b16 %v2625, %v2623
        %v2956 = vpack.c.b16 %v2628, %v2626
        %v2957 = vpack.c.b16 %v2629, %v2627
        %v2958 = vpack.c.b16 %v2632, %v2630
        %v2959 = vpack.c.b16 %v2633, %v2631
        %v2960 = vpack.c.b16 %v2636, %v2634
        %v2961 = vpack.c.b16 %v2637, %v2635
        %v2962 = vpack.c.b16 %v2640, %v2638
        %v2963 = vpack.c.b16 %v2641, %v2639
        %v2964 = vpack.c.b16 %v2644, %v2642
        %v2965 = vpack.c.b16 %v2645, %v2643
        %v2966 = vpack.c.b16 %v2648, %v2646
        %v2967 = vpack.c.b16 %v2649, %v2647
        %v2968 = vpack.c.b16 %v2652, %v2650
        %v2969 = vpack.c.b16 %v2653, %v2651
        %v2970 = vpack.c.b16 %v2656, %v2654
        %v2971 = vpack.c.b16 %v2657, %v2655
        %v2972 = vpack.c.b16 %v2660, %v2658
        %v2973 = vpack.c.b16 %v2661, %v2659
        %v2974 = vpack.c.b16 %v2664, %v2662
        %v2975 = vpack.c.b16 %v2665, %v2663
        %v2976 = vpack.c.b16 %v2668, %v2666
        %v2977 = vpack.c.b16 %v2669, %v2667
        %v2978 = vpack.c.b16 %v2672, %v2670
        %v2979 = vpack.c.b16 %v2673, %v2671
        %v2980 = vpack.c.b16 %v2676, %v2674
        %v2981 = vpack.c.b16 %v2677, %v2675
        %v2982 = vpack.c.b16 %v2680, %v2678
        %v2983 = vpack.c.b16 %v2681, %v2679
        %v2984 = vpack.c.b16 %v2684, %v2682
        %v2985 = vpack.c.b16 %v2685, %v2683
        %v2986 = vpack.c.b16 %v2688, %v2686
        %v2987 = vpack.c.b16 %v2689, %v2687
        %v2988 = vpack.c.b16 %v2692, %v2690
        %v2989 = vpack.c.b16 %v2693, %v2691
        %v2990 = vpack.c.b16 %v2696, %v2694
        %v2991 = vpack.c.b16 %v2697, %v2695
        %v2992 = vpack.c.b16 %v2700, %v2698
        %v2993 = vpack.c.b16 %v2701, %v2699
        %v2994 = vpack.c.b16 %v2704, %v2702
        %v2995 = vpack.c.b16 %v2705, %v2703
        %v2996 = vpack.c.b16 %v2708, %v2706
        %v2997 = vpack.c.b16 %v2709, %v2707
        %3286 = vmatprep.subr.bf16.mxu0 %v2711
        %3287 = vmatpush1.bf16.msra.mxu0 %v2710
        %3288 = vmatprep.subr.bf16.mxu0 %v2713
        %3289 = vmatpush1.bf16.msra.mxu0 %v2712
        %3290 = vmatprep.subr.bf16.mxu0 %v2715
        %3291 = vmatpush1.bf16.msra.mxu0 %v2714
        %3292 = vmatprep.subr.bf16.mxu0 %v2717
        %3293 = vmatpush1.bf16.msra.mxu0 %v2716
        %3294 = vmatprep.subr.bf16.mxu0 %v2719
        %3295 = vmatpush1.bf16.msra.mxu0 %v2718
        %3296 = vmatprep.subr.bf16.mxu0 %v2721
        %3297 = vmatpush1.bf16.msra.mxu0 %v2720
        %3298 = vmatprep.subr.bf16.mxu0 %v2723
        %3299 = vmatpush1.bf16.msra.mxu0 %v2722
        %3300 = vmatprep.subr.bf16.mxu0 %v2725
        %3301 = vmatpush1.bf16.msra.mxu0 %v2724
        %3302 = vmatprep.subr.bf16.mxu0 %v2727
        %3303 = vmatpush1.bf16.msra.mxu0 %v2726
        %3304 = vmatprep.subr.bf16.mxu0 %v2729
        %3305 = vmatpush1.bf16.msra.mxu0 %v2728
        %3306 = vmatprep.subr.bf16.mxu0 %v2731
        %3307 = vmatpush1.bf16.msra.mxu0 %v2730
        %3308 = vmatprep.subr.bf16.mxu0 %v2733
        %3309 = vmatpush1.bf16.msra.mxu0 %v2732
        %3310 = vmatprep.subr.bf16.mxu0 %v2735
        %3311 = vmatpush1.bf16.msra.mxu0 %v2734
        %3312 = vmatprep.subr.bf16.mxu0 %v2737
        %3313 = vmatpush1.bf16.msra.mxu0 %v2736
        %3314 = vmatprep.subr.bf16.mxu0 %v2739
        %3315 = vmatpush1.bf16.msra.mxu0 %v2738
        %3316 = vmatprep.subr.bf16.mxu0 %v2741
        %3317 = vmatpush1.bf16.msra.mxu0 %v2740
        %3318 = vmatprep.mubr.bf16.mxu0 %v1811
        %3319 = vmatmul.mubr.bf16.gmra.mrb[0].mxu0 %v1810
        %v3320 = vpop.f32.mrb[0].mxu0
        %v3321 = vadd.f32 0.0, %v3320
        %v3322 = vpop.f32.mrb[0].mxu0
        %v3323 = vadd.f32 0.0, %v3322
        %v3324 = vpop.f32.mrb[0].mxu0
        %v3325 = vadd.f32 0.0, %v3324
        %v3326 = vpop.f32.mrb[0].mxu0
        %v3327 = vadd.f32 0.0, %v3326
        %3328 = vdwg.mxu0
        %3329 = vmatprep.subr.bf16.mxu0 %v2743
        %3330 = vmatpush1.bf16.msra.mxu0 %v2742
        %3331 = vmatprep.subr.bf16.mxu0 %v2745
        %3332 = vmatpush1.bf16.msra.mxu0 %v2744
        %3333 = vmatprep.subr.bf16.mxu0 %v2747
        %3334 = vmatpush1.bf16.msra.mxu0 %v2746
        %3335 = vmatprep.subr.bf16.mxu0 %v2749
        %3336 = vmatpush1.bf16.msra.mxu0 %v2748
        %3337 = vmatprep.subr.bf16.mxu0 %v2751
        %3338 = vmatpush1.bf16.msra.mxu0 %v2750
        %3339 = vmatprep.subr.bf16.mxu0 %v2753
        %3340 = vmatpush1.bf16.msra.mxu0 %v2752
        %3341 = vmatprep.subr.bf16.mxu0 %v2755
        %3342 = vmatpush1.bf16.msra.mxu0 %v2754
        %3343 = vmatprep.subr.bf16.mxu0 %v2757
        %3344 = vmatpush1.bf16.msra.mxu0 %v2756
        %3345 = vmatprep.subr.bf16.mxu0 %v2759
        %3346 = vmatpush1.bf16.msra.mxu0 %v2758
        %3347 = vmatprep.subr.bf16.mxu0 %v2761
        %3348 = vmatpush1.bf16.msra.mxu0 %v2760
        %3349 = vmatprep.subr.bf16.mxu0 %v2763
        %3350 = vmatpush1.bf16.msra.mxu0 %v2762
        %3351 = vmatprep.subr.bf16.mxu0 %v2765
        %3352 = vmatpush1.bf16.msra.mxu0 %v2764
        %3353 = vmatprep.subr.bf16.mxu0 %v2767
        %3354 = vmatpush1.bf16.msra.mxu0 %v2766
        %3355 = vmatprep.subr.bf16.mxu0 %v2769
        %3356 = vmatpush1.bf16.msra.mxu0 %v2768
        %3357 = vmatprep.subr.bf16.mxu0 %v2771
        %3358 = vmatpush1.bf16.msra.mxu0 %v2770
        %3359 = vmatprep.subr.bf16.mxu0 %v2773
        %3360 = vmatpush1.bf16.msra.mxu0 %v2772
        %3361 = vmatprep.mubr.bf16.mxu0 %v1813
        %3362 = vmatmul.mubr.bf16.gmra.mrb[0].mxu0 %v1812
        %v3363 = vpop.f32.mrb[0].mxu0
        %v3364 = vadd.f32 %v3321, %v3363
        %v3365 = vpop.f32.mrb[0].mxu0
        %v3366 = vadd.f32 %v3323, %v3365
        %v3367 = vpop.f32.mrb[0].mxu0
        %v3368 = vadd.f32 %v3325, %v3367
        %v3369 = vpop.f32.mrb[0].mxu0
        %v3370 = vadd.f32 %v3327, %v3369
        %3371 = vdwg.mxu0
        %3372 = vmatprep.subr.bf16.mxu0 %v2775
        %3373 = vmatpush1.bf16.msra.mxu0 %v2774
        %3374 = vmatprep.subr.bf16.mxu0 %v2777
        %3375 = vmatpush1.bf16.msra.mxu0 %v2776
        %3376 = vmatprep.subr.bf16.mxu0 %v2779
        %3377 = vmatpush1.bf16.msra.mxu0 %v2778
        %3378 = vmatprep.subr.bf16.mxu0 %v2781
        %3379 = vmatpush1.bf16.msra.mxu0 %v2780
        %3380 = vmatprep.subr.bf16.mxu0 %v2783
        %3381 = vmatpush1.bf16.msra.mxu0 %v2782
        %3382 = vmatprep.subr.bf16.mxu0 %v2785
        %3383 = vmatpush1.bf16.msra.mxu0 %v2784
        %3384 = vmatprep.subr.bf16.mxu0 %v2787
        %3385 = vmatpush1.bf16.msra.mxu0 %v2786
        %3386 = vmatprep.subr.bf16.mxu0 %v2789
        %3387 = vmatpush1.bf16.msra.mxu0 %v2788
        %3388 = vmatprep.subr.bf16.mxu0 %v2791
        %3389 = vmatpush1.bf16.msra.mxu0 %v2790
        %3390 = vmatprep.subr.bf16.mxu0 %v2793
        %3391 = vmatpush1.bf16.msra.mxu0 %v2792
        %3392 = vmatprep.subr.bf16.mxu0 %v2795
        %3393 = vmatpush1.bf16.msra.mxu0 %v2794
        %3394 = vmatprep.subr.bf16.mxu0 %v2797
        %3395 = vmatpush1.bf16.msra.mxu0 %v2796
        %3396 = vmatprep.subr.bf16.mxu0 %v2799
        %3397 = vmatpush1.bf16.msra.mxu0 %v2798
        %3398 = vmatprep.subr.bf16.mxu0 %v2801
        %3399 = vmatpush1.bf16.msra.mxu0 %v2800
        %3400 = vmatprep.subr.bf16.mxu0 %v2803
        %3401 = vmatpush1.bf16.msra.mxu0 %v2802
        %3402 = vmatprep.subr.bf16.mxu0 %v2805
        %3403 = vmatpush1.bf16.msra.mxu0 %v2804
        %3404 = vmatprep.mubr.bf16.mxu0 %v1815
        %3405 = vmatmul.mubr.bf16.gmra.mrb[0].mxu0 %v1814
        %v3406 = vpop.f32.mrb[0].mxu0
        %v3407 = vadd.f32 %v3364, %v3406
        %v3408 = vpop.f32.mrb[0].mxu0
        %v3409 = vadd.f32 %v3366, %v3408
        %v3410 = vpop.f32.mrb[0].mxu0
        %v3411 = vadd.f32 %v3368, %v3410
        %v3412 = vpop.f32.mrb[0].mxu0
        %v3413 = vadd.f32 %v3370, %v3412
        %3414 = vdwg.mxu0
        %3415 = vmatprep.subr.bf16.mxu0 %v2807
        %3416 = vmatpush1.bf16.msra.mxu0 %v2806
        %3417 = vmatprep.subr.bf16.mxu0 %v2809
        %3418 = vmatpush1.bf16.msra.mxu0 %v2808
        %3419 = vmatprep.subr.bf16.mxu0 %v2811
        %3420 = vmatpush1.bf16.msra.mxu0 %v2810
        %3421 = vmatprep.subr.bf16.mxu0 %v2813
        %3422 = vmatpush1.bf16.msra.mxu0 %v2812
        %3423 = vmatprep.subr.bf16.mxu0 %v2815
        %3424 = vmatpush1.bf16.msra.mxu0 %v2814
        %3425 = vmatprep.subr.bf16.mxu0 %v2817
        %3426 = vmatpush1.bf16.msra.mxu0 %v2816
        %3427 = vmatprep.subr.bf16.mxu0 %v2819
        %3428 = vmatpush1.bf16.msra.mxu0 %v2818
        %3429 = vmatprep.subr.bf16.mxu0 %v2821
        %3430 = vmatpush1.bf16.msra.mxu0 %v2820
        %3431 = vmatprep.subr.bf16.mxu0 %v2823
        %3432 = vmatpush1.bf16.msra.mxu0 %v2822
        %3433 = vmatprep.subr.bf16.mxu0 %v2825
        %3434 = vmatpush1.bf16.msra.mxu0 %v2824
        %3435 = vmatprep.subr.bf16.mxu0 %v2827
        %3436 = vmatpush1.bf16.msra.mxu0 %v2826
        %3437 = vmatprep.subr.bf16.mxu0 %v2829
        %3438 = vmatpush1.bf16.msra.mxu0 %v2828
        %3439 = vmatprep.subr.bf16.mxu0 %v2831
        %3440 = vmatpush1.bf16.msra.mxu0 %v2830
        %3441 = vmatprep.subr.bf16.mxu0 %v2833
        %3442 = vmatpush1.bf16.msra.mxu0 %v2832
        %3443 = vmatprep.subr.bf16.mxu0 %v2835
        %3444 = vmatpush1.bf16.msra.mxu0 %v2834
        %3445 = vmatprep.subr.bf16.mxu0 %v2837
        %3446 = vmatpush1.bf16.msra.mxu0 %v2836
        %3447 = vmatprep.mubr.bf16.mxu0 %v1817
        %3448 = vmatmul.mubr.bf16.gmra.mrb[0].mxu0 %v1816
        %v3449 = vpop.f32.mrb[0].mxu0
        %v3450 = vadd.f32 %v3407, %v3449
        %v3451 = vpop.f32.mrb[0].mxu0
        %v3452 = vadd.f32 %v3409, %v3451
        %v3453 = vpop.f32.mrb[0].mxu0
        %v3454 = vadd.f32 %v3411, %v3453
        %v3455 = vpop.f32.mrb[0].mxu0
        %v3456 = vadd.f32 %v3413, %v3455
        %3457 = vdwg.mxu0
        %3458 = vmatprep.subr.bf16.mxu0 %v2839
        %3459 = vmatpush1.bf16.msra.mxu0 %v2838
        %3460 = vmatprep.subr.bf16.mxu0 %v2841
        %3461 = vmatpush1.bf16.msra.mxu0 %v2840
        %3462 = vmatprep.subr.bf16.mxu0 %v2843
        %3463 = vmatpush1.bf16.msra.mxu0 %v2842
        %3464 = vmatprep.subr.bf16.mxu0 %v2845
        %3465 = vmatpush1.bf16.msra.mxu0 %v2844
        %3466 = vmatprep.subr.bf16.mxu0 %v2847
        %3467 = vmatpush1.bf16.msra.mxu0 %v2846
        %3468 = vmatprep.subr.bf16.mxu0 %v2849
        %3469 = vmatpush1.bf16.msra.mxu0 %v2848
        %3470 = vmatprep.subr.bf16.mxu0 %v2851
        %3471 = vmatpush1.bf16.msra.mxu0 %v2850
        %3472 = vmatprep.subr.bf16.mxu0 %v2853
        %3473 = vmatpush1.bf16.msra.mxu0 %v2852
        %3474 = vmatprep.subr.bf16.mxu0 %v2855
        %3475 = vmatpush1.bf16.msra.mxu0 %v2854
        %3476 = vmatprep.subr.bf16.mxu0 %v2857
        %3477 = vmatpush1.bf16.msra.mxu0 %v2856
        %3478 = vmatprep.subr.bf16.mxu0 %v2859
        %3479 = vmatpush1.bf16.msra.mxu0 %v2858
        %3480 = vmatprep.subr.bf16.mxu0 %v2861
        %3481 = vmatpush1.bf16.msra.mxu0 %v2860
        %3482 = vmatprep.subr.bf16.mxu0 %v2863
        %3483 = vmatpush1.bf16.msra.mxu0 %v2862
        %3484 = vmatprep.subr.bf16.mxu0 %v2865
        %3485 = vmatpush1.bf16.msra.mxu0 %v2864
        %3486 = vmatprep.subr.bf16.mxu0 %v2867
        %3487 = vmatpush1.bf16.msra.mxu0 %v2866
        %3488 = vmatprep.subr.bf16.mxu0 %v2869
        %3489 = vmatpush1.bf16.msra.mxu0 %v2868
        %3490 = vmatprep.mubr.bf16.mxu0 %v1819
        %3491 = vmatmul.mubr.bf16.gmra.mrb[0].mxu0 %v1818
        %v3492 = vpop.f32.mrb[0].mxu0
        %v3493 = vadd.f32 %v3450, %v3492
        %v3494 = vpop.f32.mrb[0].mxu0
        %v3495 = vadd.f32 %v3452, %v3494
        %v3496 = vpop.f32.mrb[0].mxu0
        %v3497 = vadd.f32 %v3454, %v3496
        %v3498 = vpop.f32.mrb[0].mxu0
        %v3499 = vadd.f32 %v3456, %v3498
        %3500 = vdwg.mxu0
        %3501 = vmatprep.subr.bf16.mxu0 %v2871
        %3502 = vmatpush1.bf16.msra.mxu0 %v2870
        %3503 = vmatprep.subr.bf16.mxu0 %v2873
        %3504 = vmatpush1.bf16.msra.mxu0 %v2872
        %3505 = vmatprep.subr.bf16.mxu0 %v2875
        %3506 = vmatpush1.bf16.msra.mxu0 %v2874
        %3507 = vmatprep.subr.bf16.mxu0 %v2877
        %3508 = vmatpush1.bf16.msra.mxu0 %v2876
        %3509 = vmatprep.subr.bf16.mxu0 %v2879
        %3510 = vmatpush1.bf16.msra.mxu0 %v2878
        %3511 = vmatprep.subr.bf16.mxu0 %v2881
        %3512 = vmatpush1.bf16.msra.mxu0 %v2880
        %3513 = vmatprep.subr.bf16.mxu0 %v2883
        %3514 = vmatpush1.bf16.msra.mxu0 %v2882
        %3515 = vmatprep.subr.bf16.mxu0 %v2885
        %3516 = vmatpush1.bf16.msra.mxu0 %v2884
        %3517 = vmatprep.subr.bf16.mxu0 %v2887
        %3518 = vmatpush1.bf16.msra.mxu0 %v2886
        %3519 = vmatprep.subr.bf16.mxu0 %v2889
        %3520 = vmatpush1.bf16.msra.mxu0 %v2888
        %3521 = vmatprep.subr.bf16.mxu0 %v2891
        %3522 = vmatpush1.bf16.msra.mxu0 %v2890
        %3523 = vmatprep.subr.bf16.mxu0 %v2893
        %3524 = vmatpush1.bf16.msra.mxu0 %v2892
        %3525 = vmatprep.subr.bf16.mxu0 %v2895
        %3526 = vmatpush1.bf16.msra.mxu0 %v2894
        %3527 = vmatprep.subr.bf16.mxu0 %v2897
        %3528 = vmatpush1.bf16.msra.mxu0 %v2896
        %3529 = vmatprep.subr.bf16.mxu0 %v2899
        %3530 = vmatpush1.bf16.msra.mxu0 %v2898
        %3531 = vmatprep.subr.bf16.mxu0 %v2901
        %3532 = vmatpush1.bf16.msra.mxu0 %v2900
        %3533 = vmatprep.mubr.bf16.mxu0 %v1821
        %3534 = vmatmul.mubr.bf16.gmra.mrb[0].mxu0 %v1820
        %v3535 = vpop.f32.mrb[0].mxu0
        %v3536 = vadd.f32 %v3493, %v3535
        %v3537 = vpop.f32.mrb[0].mxu0
        %v3538 = vadd.f32 %v3495, %v3537
        %v3539 = vpop.f32.mrb[0].mxu0
        %v3540 = vadd.f32 %v3497, %v3539
        %v3541 = vpop.f32.mrb[0].mxu0
        %v3542 = vadd.f32 %v3499, %v3541
        %3543 = vdwg.mxu0
        %3544 = vmatprep.subr.bf16.mxu0 %v2903
        %3545 = vmatpush1.bf16.msra.mxu0 %v2902
        %3546 = vmatprep.subr.bf16.mxu0 %v2905
        %3547 = vmatpush1.bf16.msra.mxu0 %v2904
        %3548 = vmatprep.subr.bf16.mxu0 %v2907
        %3549 = vmatpush1.bf16.msra.mxu0 %v2906
        %3550 = vmatprep.subr.bf16.mxu0 %v2909
        %3551 = vmatpush1.bf16.msra.mxu0 %v2908
        %3552 = vmatprep.subr.bf16.mxu0 %v2911
        %3553 = vmatpush1.bf16.msra.mxu0 %v2910
        %3554 = vmatprep.subr.bf16.mxu0 %v2913
        %3555 = vmatpush1.bf16.msra.mxu0 %v2912
        %3556 = vmatprep.subr.bf16.mxu0 %v2915
        %3557 = vmatpush1.bf16.msra.mxu0 %v2914
        %3558 = vmatprep.subr.bf16.mxu0 %v2917
        %3559 = vmatpush1.bf16.msra.mxu0 %v2916
        %3560 = vmatprep.subr.bf16.mxu0 %v2919
        %3561 = vmatpush1.bf16.msra.mxu0 %v2918
        %3562 = vmatprep.subr.bf16.mxu0 %v2921
        %3563 = vmatpush1.bf16.msra.mxu0 %v2920
        %3564 = vmatprep.subr.bf16.mxu0 %v2923
        %3565 = vmatpush1.bf16.msra.mxu0 %v2922
        %3566 = vmatprep.subr.bf16.mxu0 %v2925
        %3567 = vmatpush1.bf16.msra.mxu0 %v2924
        %3568 = vmatprep.subr.bf16.mxu0 %v2927
        %3569 = vmatpush1.bf16.msra.mxu0 %v2926
        %3570 = vmatprep.subr.bf16.mxu0 %v2929
        %3571 = vmatpush1.bf16.msra.mxu0 %v2928
        %3572 = vmatprep.subr.bf16.mxu0 %v2931
        %3573 = vmatpush1.bf16.msra.mxu0 %v2930
        %3574 = vmatprep.subr.bf16.mxu0 %v2933
        %3575 = vmatpush1.bf16.msra.mxu0 %v2932
        %3576 = vmatprep.mubr.bf16.mxu0 %v1823
        %3577 = vmatmul.mubr.bf16.gmra.mrb[0].mxu0 %v1822
        %v3578 = vpop.f32.mrb[0].mxu0
        %v3579 = vadd.f32 %v3536, %v3578
        %v3580 = vpop.f32.mrb[0].mxu0
        %v3581 = vadd.f32 %v3538, %v3580
        %v3582 = vpop.f32.mrb[0].mxu0
        %v3583 = vadd.f32 %v3540, %v3582
        %v3584 = vpop.f32.mrb[0].mxu0
        %v3585 = vadd.f32 %v3542, %v3584
        %3586 = vdwg.mxu0
        %3587 = vmatprep.subr.bf16.mxu0 %v2935
        %3588 = vmatpush1.bf16.msra.mxu0 %v2934
        %3589 = vmatprep.subr.bf16.mxu0 %v2937
        %3590 = vmatpush1.bf16.msra.mxu0 %v2936
        %3591 = vmatprep.subr.bf16.mxu0 %v2939
        %3592 = vmatpush1.bf16.msra.mxu0 %v2938
        %3593 = vmatprep.subr.bf16.mxu0 %v2941
        %3594 = vmatpush1.bf16.msra.mxu0 %v2940
        %3595 = vmatprep.subr.bf16.mxu0 %v2943
        %3596 = vmatpush1.bf16.msra.mxu0 %v2942
        %3597 = vmatprep.subr.bf16.mxu0 %v2945
        %3598 = vmatpush1.bf16.msra.mxu0 %v2944
        %3599 = vmatprep.subr.bf16.mxu0 %v2947
        %3600 = vmatpush1.bf16.msra.mxu0 %v2946
        %3601 = vmatprep.subr.bf16.mxu0 %v2949
        %3602 = vmatpush1.bf16.msra.mxu0 %v2948
        %3603 = vmatprep.subr.bf16.mxu0 %v2951
        %3604 = vmatpush1.bf16.msra.mxu0 %v2950
        %3605 = vmatprep.subr.bf16.mxu0 %v2953
        %3606 = vmatpush1.bf16.msra.mxu0 %v2952
        %3607 = vmatprep.subr.bf16.mxu0 %v2955
        %3608 = vmatpush1.bf16.msra.mxu0 %v2954
        %3609 = vmatprep.subr.bf16.mxu0 %v2957
        %3610 = vmatpush1.bf16.msra.mxu0 %v2956
        %3611 = vmatprep.subr.bf16.mxu0 %v2959
        %3612 = vmatpush1.bf16.msra.mxu0 %v2958
        %3613 = vmatprep.subr.bf16.mxu0 %v2961
        %3614 = vmatpush1.bf16.msra.mxu0 %v2960
        %3615 = vmatprep.subr.bf16.mxu0 %v2963
        %3616 = vmatpush1.bf16.msra.mxu0 %v2962
        %3617 = vmatprep.subr.bf16.mxu0 %v2965
        %3618 = vmatpush1.bf16.msra.mxu0 %v2964
        %3619 = vmatprep.mubr.bf16.mxu0 %v1825
        %3620 = vmatmul.mubr.bf16.gmra.mrb[0].mxu0 %v1824
        %v3621 = vpop.f32.mrb[0].mxu0
        %v3622 = vadd.f32 %v3579, %v3621
        %v3623 = vpop.f32.mrb[0].mxu0
        %v3624 = vadd.f32 %v3581, %v3623
        %v3625 = vpop.f32.mrb[0].mxu0
        %v3626 = vadd.f32 %v3583, %v3625
        %v3627 = vpop.f32.mrb[0].mxu0
        %v3628 = vadd.f32 %v3585, %v3627
        %3629 = vdwg.mxu0
        %3630 = vmatprep.subr.bf16.mxu0 %v2967
        %3631 = vmatpush1.bf16.msra.mxu0 %v2966
        %3632 = vmatprep.subr.bf16.mxu0 %v2969
        %3633 = vmatpush1.bf16.msra.mxu0 %v2968
        %3634 = vmatprep.subr.bf16.mxu0 %v2971
        %3635 = vmatpush1.bf16.msra.mxu0 %v2970
        %3636 = vmatprep.subr.bf16.mxu0 %v2973
        %3637 = vmatpush1.bf16.msra.mxu0 %v2972
        %3638 = vmatprep.subr.bf16.mxu0 %v2975
        %3639 = vmatpush1.bf16.msra.mxu0 %v2974
        %3640 = vmatprep.subr.bf16.mxu0 %v2977
        %3641 = vmatpush1.bf16.msra.mxu0 %v2976
        %3642 = vmatprep.subr.bf16.mxu0 %v2979
        %3643 = vmatpush1.bf16.msra.mxu0 %v2978
        %3644 = vmatprep.subr.bf16.mxu0 %v2981
        %3645 = vmatpush1.bf16.msra.mxu0 %v2980
        %3646 = vmatprep.subr.bf16.mxu0 %v2983
        %3647 = vmatpush1.bf16.msra.mxu0 %v2982
        %3648 = vmatprep.subr.bf16.mxu0 %v2985
        %3649 = vmatpush1.bf16.msra.mxu0 %v2984
        %3650 = vmatprep.subr.bf16.mxu0 %v2987
        %3651 = vmatpush1.bf16.msra.mxu0 %v2986
        %3652 = vmatprep.subr.bf16.mxu0 %v2989
        %3653 = vmatpush1.bf16.msra.mxu0 %v2988
        %3654 = vmatprep.subr.bf16.mxu0 %v2991
        %3655 = vmatpush1.bf16.msra.mxu0 %v2990
        %3656 = vmatprep.subr.bf16.mxu0 %v2993
        %3657 = vmatpush1.bf16.msra.mxu0 %v2992
        %3658 = vmatprep.subr.bf16.mxu0 %v2995
        %3659 = vmatpush1.bf16.msra.mxu0 %v2994
        %3660 = vmatprep.subr.bf16.mxu0 %v2997
        %3661 = vmatpush1.bf16.msra.mxu0 %v2996
        %3662 = vmatprep.mubr.bf16.mxu0 %v1827
        %3663 = vmatmul.mubr.bf16.gmra.mrb[0].mxu0 %v1826
        %v3664 = vpop.f32.mrb[0].mxu0
        %v3665 = vadd.f32 %v3622, %v3664
        %v3666 = vpop.f32.mrb[0].mxu0
        %v3667 = vadd.f32 %v3624, %v3666
        %v3668 = vpop.f32.mrb[0].mxu0
        %v3669 = vadd.f32 %v3626, %v3668
        %v3670 = vpop.f32.mrb[0].mxu0
        %v3671 = vadd.f32 %v3628, %v3670
        %3672 = vdwg.mxu0
        %v3673 = vadd.f32 %v1446, %v3665
        %v3674 = vadd.f32 %v1447, %v3667
        %v3675 = vadd.f32 %v1448, %v3669
        %v3676 = vadd.f32 %v1449, %v3671
        %3677 = vst [vmem:[#allocation2] sm:$0xff] %v3673
        %3678 = vst [vmem:[#allocation2 + $0x8] sm:$0xff] %v3674
        %3679 = vst [vmem:[#allocation2 + $0x10] sm:$0xff] %v3675
        %3680 = vst [vmem:[#allocation2 + $0x18] sm:$0xff] %v3676
        // Predicated region
        $region75: #{_lambda_.12} parent=65 // pred_check
          %p3681 = pneg %p1438
        $region76: #{_lambda_.12} parent=65 // pred_check_branch
          %3683 = sbr.rel (%p3681) target = $region78
        $region77: #{_lambda_.12} parent=65 // pred_region
          %v3684 = vld [vmem:[#allocation2] sm:$0xff]
          %v3685 = vld [vmem:[#allocation2 + $0x8] sm:$0xff]
          %v3686 = vld [vmem:[#allocation2 + $0x10] sm:$0xff]
          %v3687 = vld [vmem:[#allocation2 + $0x18] sm:$0xff]
          %v3688 = vld [vmem:[%s1434] sm:$0x3]
          %v3690 = vlaneseq
          %v3691 = vshrl.u32 %v3690, 7
          %v3692 = vsub.s32 0, %v3691
          %v3693 = vrot.slane %v3688, %v3692
          %v3694 = vlaneseq
          %v3695 = vshrl.u32 %v3694, 7
          %v3696 = vsub.s32 1, %v3695
          %v3697 = vrot.slane %v3688, %v3696
          %v3700 = vadd.f32 %v3684, %v3693
          %v3701 = vadd.f32 %v3685, %v3697
          %v3702 = vadd.f32 %v3686, %v3693
          %v3703 = vadd.f32 %v3687, %v3697
          %v3704 = vmax.f32 %v3700, 0.0
          %v3705 = vmax.f32 %v3701, 0.0
          %v3706 = vmax.f32 %v3702, 0.0
          %v3707 = vmax.f32 %v3703, 0.0
          %v3708 = vpack.c.bf16 %v3706, %v3704
          %v3709 = vpack.c.bf16 %v3707, %v3705
          %v3712 = vunpack.c.l.b16 %v3708
          %v3713 = vunpack.c.l.b16 %v3709
          %v3714 = vunpack.c.h.b16 %v3708
          %v3715 = vunpack.c.h.b16 %v3709
          %v3716 = vpack.c.b16 %v3713, %v3712
          %v3717 = vpack.c.b16 %v3715, %v3714
          %3720 = vst [vmem:[%s1416] sm:$0xff] %v3716
          %3721 = vst [vmem:[%s1416 + $0x8] sm:$0xff] %v3717
        $region78: #{_lambda_.12} parent=65 // pred_fallthru
          _
        %s3722 = sand.u32 %s125, 1
        %s3723 = sand.u32 %s125, 1
        %s3724 = smul.addr %s3723, 16
        %s3725 = scalar_lea.vmem [#allocation4], %s3724
        // Predicated region
        $region79: #{_lambda_.12} parent=65 // pred_check
          %p3726 = pneg %p135
        $region80: #{_lambda_.12} parent=65 // pred_check_branch
          %3728 = sbr.rel (%p3726) target = $region82
        $region81: #{_lambda_.12} parent=65 // pred_region
          %s3729 = smul.u32 2, %s19
          %s3730 = smul.u32 2, %s20
          %s3731 = smul.addr %s3729, 4
          %s3732 = sadd.s32 %s3730, %s3731
          %s3733 = smul.addr %s3732, 4
          %s3734 = scalar_lea.vmem %s3, %s3733
          // Predicated region
          $region83: #{_lambda_.12} parent=81 // pred_check
            _
          $region84: #{_lambda_.12} parent=81 // pred_check_branch
            %3736 = sbr.rel (0) target = $region86
          $region85: #{_lambda_.12} parent=81 // pred_region
            // Predicated region
            $region87: #{_lambda_.12} parent=85 // pred_check
              _
            $region88: #{_lambda_.12} parent=85 // pred_check_branch
              %3738 = sbr.rel (0) target = $region90
            $region89: #{_lambda_.12} parent=85 // pred_region
              // Predicated region
              $region102: #{_lambda_.12} parent=89 // pred_check
                _
              $region103: #{_lambda_.12} parent=89 // pred_check_branch
                %3755 = sbr.rel (0) target = $region105
              $region104: #{_lambda_.12} parent=89 // pred_region
                loop: start=0, step=1, limit=1
                $region106: #{_lambda_.12} parent=104 // loop_pre_header
                  _
                $region107: #{_lambda_.12} parent=104 // loop_header
                  %s3757 = sphi 0, %s3761
                  %p3758 = scmp.ge.s32.totalorder %s3757, 1
                  %s3762 = sphi %s3725, %s3725
                  %s3763 = sphi %s3734, %s3734
                $region108: #{_lambda_.12} parent=104 // loop_header_branch
                  %3760 = sbr.rel (%p3758) target = $region112
                $region109: #{_lambda_.12} parent=104 // loop_body
                  %v3764 = vld [vmem:[%s3762] sm:$0xff]
                  %3765 = vst [vmem:[%s3763] sm:$0xff] %v3764
                  %v3766 = vld [vmem:[%s3762 + $0x8] sm:$0xff]
                  %3767 = vst [vmem:[%s3763 + $0x10] sm:$0xff] %v3766
                $region110: #{_lambda_.12} parent=104 // loop_footer
                  %s3761 = sadd.s32 1, %s3757
                $region111: #{_lambda_.12} parent=104 // loop_footer_branch
                  %3756 = sbr.rel target = $region107
                $region112: #{_lambda_.12} parent=104 // loop_exit
                  _
              $region105: #{_lambda_.12} parent=89 // pred_fallthru
                _
              // Predicated region
              $region113: #{_lambda_.12} parent=89 // pred_check
                _
              $region114: #{_lambda_.12} parent=89 // pred_check_branch
                %3769 = sbr.rel target = $region116
              $region115: #{_lambda_.12} parent=89 // pred_region
                _
              $region116: #{_lambda_.12} parent=89 // pred_fallthru
                _
            $region90: #{_lambda_.12} parent=85 // pred_fallthru
              _
            // Predicated region
            $region91: #{_lambda_.12} parent=85 // pred_check
              _
            $region92: #{_lambda_.12} parent=85 // pred_check_branch
              %3740 = sbr.rel target = $region94
            $region93: #{_lambda_.12} parent=85 // pred_region
              loop: start=0, step=1, limit=1
              $region95: #{_lambda_.12} parent=93 // loop_pre_header
                _
              $region96: #{_lambda_.12} parent=93 // loop_header
                %s3743 = sphi 0, %s3747
                %p3744 = scmp.ge.s32.totalorder %s3743, 1
                %s3748 = sphi %s3725, %s3725
                %s3749 = sphi %s3734, %s3734
              $region97: #{_lambda_.12} parent=93 // loop_header_branch
                %3746 = sbr.rel (%p3744) target = $region101
              $region98: #{_lambda_.12} parent=93 // loop_body
                %v3750 = vld [vmem:[%s3748] sm:$0xff]
                %3751 = vst [vmem:[%s3749] sm:$0xff] %v3750
                %v3752 = vld [vmem:[%s3748 + $0x8] sm:$0xff]
                %3753 = vst [vmem:[%s3749 + $0x10] sm:$0xff] %v3752
              $region99: #{_lambda_.12} parent=93 // loop_footer
                %s3747 = sadd.s32 1, %s3743
              $region100: #{_lambda_.12} parent=93 // loop_footer_branch
                %3742 = sbr.rel target = $region96
              $region101: #{_lambda_.12} parent=93 // loop_exit
                _
            $region94: #{_lambda_.12} parent=85 // pred_fallthru
              _
          $region86: #{_lambda_.12} parent=81 // pred_fallthru
            _
          %3770 = vnop
        $region82: #{_lambda_.12} parent=65 // pred_fallthru
          _
      $region66: #{_lambda_.12} parent=5 // pred_fallthru
        _
      %p3771 = scmp.le.s32.totalorder 2, %s9
      // Predicated region
      $region117: #{_lambda_.12} parent=5 // pred_check
        %p3772 = pneg %p3771
      $region118: #{_lambda_.12} parent=5 // pred_check_branch
        %3774 = sbr.rel (%p3772) target = $region120
      $region119: #{_lambda_.12} parent=5 // pred_region
        %s3775 = ssub.s32 %s9, 2
        // Predicated region
        $region121: #{_lambda_.12} parent=119 // pred_check
          %p3776 = pneg %p141
        $region122: #{_lambda_.12} parent=119 // pred_check_branch
          %3778 = sbr.rel (%p3776) target = $region124
        $region123: #{_lambda_.12} parent=119 // pred_region
          %s3779 = sand.u32 %s126, 1
          %s3780 = sand.u32 %s126, 1
          %s3781 = smul.addr %s3780, 16
          %s3782 = scalar_lea.vmem [#allocation4], %s3781
        $region124: #{_lambda_.12} parent=119 // pred_fallthru
          _
      $region120: #{_lambda_.12} parent=5 // pred_fallthru
        _
    $region6: #{_lambda_.12} parent=1 // loop_footer
      %s13 = sadd.s32 1, %s9
    $region7: #{_lambda_.12} parent=1 // loop_footer_branch
      %8 = sbr.rel target = $region3
    $region8: #{_lambda_.12} parent=1 // loop_exit
      _

// kernel: tile.30
$region0: #{tile.30}
  #allocation0 [shape = 's32[1]{0}', space=sflag, size = 0x4, scoped, tag = 'scoped memory for tile.30']
  %s0 = inlined_call_operand.vmem [shape: f32[32], index: 0, kind: input, shape index: {}]
  %s1 = inlined_call_operand.vmem [shape: f32[4,32], index: 1, kind: output, shape index: {}]
  // Predicated region
  $region2: #{tile.30} parent=0 // pred_check
    _
  $region3: #{tile.30} parent=0 // pred_check_branch
    %3 = sbr.rel (0) target = $region5
  $region4: #{tile.30} parent=0 // pred_region
    _
  $region5: #{tile.30} parent=0 // pred_fallthru
    _
  %v4 = vld [vmem:[%s0] ss:$0 sm:$0xff]
  %5 = vst [vmem:[%s1] sm:$0xf] %v4

// kernel: tile.31
$region0: #{tile.31}
  %s0 = inlined_call_operand.vmem [shape: f32[4,32], index: 0, kind: input, shape index: {}]
  %s1 = inlined_call_operand.vmem [shape: f32[1,128], index: 1, kind: output, shape index: {}]
  $region1: #{tile.31} parent=0
    #allocation0 [shape = 'u8[4096]{0}', space=vmem, size = 0x1000, scoped, tag = 'scoped mem for output reshape']
    #allocation1 [shape = 'u8[4096]{0}', space=vmem, size = 0x1000, scoped, tag = 'scoped mem for input reshape']
    %s3 = sshllo.u32 0, 4
    %v4 = vld [vmem:[%s0] sm:%s3]
    %5 = vst [vmem:[#allocation1] sm:%s3] %v4
    %v6 = vld [vmem:[#allocation1] sm:$0x1]
    %vm7 = vcmask 261120
    %8 = vst.msk [vmem:[#allocation0] sm:$0x1] %vm7, %v6
    %s9 = scalar_lea.vmem [#allocation1], 3
    %v10 = vld [vmem:[%s9] sm:$0x1]
    %11 = vrot.lane.b32.xlu0 %v10, 96
    %v12 = vpop.permute.xlu0 %11
    %vm13 = vcmask 1048320
    %14 = vst.msk [vmem:[#allocation0] sm:$0x1] %vm13, %v12
    %s15 = scalar_lea.vmem [#allocation1], 2
    %v16 = vld [vmem:[%s15] sm:$0x1]
    %17 = vrot.lane.b32.xlu0 %v16, 64
    %v18 = vpop.permute.xlu0 %17
    %vm19 = vcmask 785920
    %20 = vst.msk [vmem:[#allocation0] sm:$0x1] %vm19, %v18
    %s21 = scalar_lea.vmem [#allocation1], 1
    %v22 = vld [vmem:[%s21] sm:$0x1]
    %23 = vrot.lane.b32.xlu0 %v22, 32
    %v24 = vpop.permute.xlu0 %23
    %vm25 = vcmask 523520
    %26 = vst.msk [vmem:[#allocation0] sm:$0x1] %vm25, %v24
    %s28 = sshllo.u32 0, 1
    %v30 = vld [vmem:[#allocation0] sm:%s28]
    %s31 = sshllo.u32 0, 1
    %32 = vst [vmem:[%s1] sm:%s31] %v30

// kernel: _lambda_.14
$region0: #{_lambda_.14}
  #allocation0 [shape = 'u32[]', space=smem, size = 0x4, offset = 0x4, fixed_abs, tag = 'smem constant byte address 0x4 - core index']
  #allocation1 [shape = 'u32[144,128]{1,0:T(1,128)}', space=vmem, size = 0x12000, scoped, tag = 'internal scratch']
  #allocation2 [shape = 'f32[16,128]{1,0:T(8,128)}', space=vmem, size = 0x2000, scoped, tag = 'scratch operand']
  %s0 = inlined_call_operand.vmem [shape: bf16[32,640], index: 0, kind: input, shape index: {}]
  %s1 = inlined_call_operand.vmem [shape: bf16[640,128], index: 1, kind: input, shape index: {}]
  %s2 = inlined_call_operand.vmem [shape: f32[1,128], index: 2, kind: input, shape index: {}]
  %s3 = inlined_call_operand.vmem [shape: bf16[32,128], index: 3, kind: output, shape index: {}]
  %s4 = sld [smem:[#allocation0]]
  $region53: #{_lambda_.14} parent=0
    _
  %s6 = ssub.s32 1, %s4
  %s7 = scalar_select 0, %s6, %s4
  loop: start=0, step=1, limit=4
  $region2: #{_lambda_.14} parent=0 // loop_pre_header
    _
  $region3: #{_lambda_.14} parent=0 // loop_header
    %s9 = sphi 0, %s13
    %p10 = scmp.ge.s32.totalorder %s9, 4
    %s16 = sphi 0, %s35
    %s17 = sphi 0, %s31
    %s18 = sphi 0, %s27
    %s19 = sphi 0, %s16
    %s20 = sphi 0, %s17
    %s21 = sphi 0, %s18
    %s22 = sphi 0, %s19
    %s23 = sphi 0, %s20
    %s24 = sphi 0, %s21
    %s40 = sphi 0, %s42
    %s43 = sphi 0, %s40
    %s44 = sphi 0, %s43
    %s60 = sphi 0, %s44
    %s68 = sphi 0, %s70
    %s71 = sphi 0, %s68
    %s72 = sphi 0, %s71
    %s88 = sphi 0, %s72
    %s94 = sphi 0, %s96
    %s97 = sphi 0, %s94
    %s98 = sphi 0, %s97
    %s114 = sphi 0, %s98
    %s122 = sphi 0, %s124
    %s125 = sphi 0, %s122
    %s126 = sphi 0, %s125
    %s142 = sphi 0, %s126
  $region4: #{_lambda_.14} parent=0 // loop_header_branch
    %12 = sbr.rel (%p10) target = $region8
  $region5: #{_lambda_.14} parent=0 // loop_body
    %s14 = ssub.s32 %s9, 1
    %s15 = ssub.s32 %s9, 2
    %s25 = sadd.s32 1, %s18
    %p26 = scmp.ge.s32.totalorder %s25, 1
    %s27 = scalar_select %p26, 0, %s25
    %s28 = sadd.s32 1, %s17
    %s29 = scalar_select %p26, %s28, %s17
    %p30 = scmp.ge.s32.totalorder %s29, 1
    %s31 = scalar_select %p30, 0, %s29
    %s32 = sadd.s32 1, %s16
    %s33 = scalar_select %p30, %s32, %s16
    %p34 = scmp.ge.s32.totalorder %s33, 2
    %s35 = scalar_select %p34, 0, %s33
    %s36 = ssub.s32 %s16, %s35
    %s37 = ssub.s32 %s18, %s27
    %s38 = sor.u32 %s36, %s37
    %p39 = scmp.eq.s32.totalorder %s38, 0
    %s41 = sadd.s32 %s40, 1
    %s42 = scalar_select %p39, %s40, %s41
    %p45 = pneg %p39
    %p46 = scmp.eq.s32.totalorder %s9, 1
    %p47 = por %p45, %p46
    %p48 = scmp.ne.s32.totalorder %s40, %s43
    %p49 = scmp.eq.s32.totalorder %s9, 0
    %p50 = por %p48, %p49
    %p51 = scmp.ne.s32.totalorder %s40, %s43
    %p52 = scmp.eq.s32.totalorder %s14, 1
    %p53 = por %p51, %p52
    %p54 = scmp.ne.s32.totalorder %s43, %s44
    %p55 = scmp.eq.s32.totalorder %s14, 0
    %p56 = por %p54, %p55
    %p57 = scmp.ne.s32.totalorder %s43, %s44
    %p58 = scmp.eq.s32.totalorder %s15, 1
    %p59 = por %p57, %p58
    %p61 = scmp.ne.s32.totalorder %s44, %s60
    %p62 = scmp.eq.s32.totalorder %s15, 0
    %p63 = por %p61, %p62
    %s64 = ssub.s32 %s18, %s27
    %s65 = ssub.s32 %s17, %s31
    %s66 = sor.u32 %s64, %s65
    %p67 = scmp.eq.s32.totalorder %s66, 0
    %s69 = sadd.s32 %s68, 1
    %s70 = scalar_select %p67, %s68, %s69
    %p73 = pneg %p67
    %p74 = scmp.eq.s32.totalorder %s9, 1
    %p75 = por %p73, %p74
    %p76 = scmp.ne.s32.totalorder %s68, %s71
    %p77 = scmp.eq.s32.totalorder %s9, 0
    %p78 = por %p76, %p77
    %p79 = scmp.ne.s32.totalorder %s68, %s71
    %p80 = scmp.eq.s32.totalorder %s14, 1
    %p81 = por %p79, %p80
    %p82 = scmp.ne.s32.totalorder %s71, %s72
    %p83 = scmp.eq.s32.totalorder %s14, 0
    %p84 = por %p82, %p83
    %p85 = scmp.ne.s32.totalorder %s71, %s72
    %p86 = scmp.eq.s32.totalorder %s15, 1
    %p87 = por %p85, %p86
    %p89 = scmp.ne.s32.totalorder %s72, %s88
    %p90 = scmp.eq.s32.totalorder %s15, 0
    %p91 = por %p89, %p90
    %s92 = ssub.s32 %s17, %s31
    %p93 = scmp.eq.s32.totalorder %s92, 0
    %s95 = sadd.s32 %s94, 1
    %s96 = scalar_select %p93, %s94, %s95
    %p99 = pneg %p93
    %p100 = scmp.eq.s32.totalorder %s9, 1
    %p101 = por %p99, %p100
    %p102 = scmp.ne.s32.totalorder %s94, %s97
    %p103 = scmp.eq.s32.totalorder %s9, 0
    %p104 = por %p102, %p103
    %p105 = scmp.ne.s32.totalorder %s94, %s97
    %p106 = scmp.eq.s32.totalorder %s14, 1
    %p107 = por %p105, %p106
    %p108 = scmp.ne.s32.totalorder %s97, %s98
    %p109 = scmp.eq.s32.totalorder %s14, 0
    %p110 = por %p108, %p109
    %p111 = scmp.ne.s32.totalorder %s97, %s98
    %p112 = scmp.eq.s32.totalorder %s15, 1
    %p113 = por %p111, %p112
    %p115 = scmp.ne.s32.totalorder %s98, %s114
    %p116 = scmp.eq.s32.totalorder %s15, 0
    %p117 = por %p115, %p116
    %s118 = ssub.s32 %s16, %s35
    %s119 = ssub.s32 %s17, %s31
    %s120 = sor.u32 %s118, %s119
    %p121 = scmp.eq.s32.totalorder %s120, 0
    %s123 = sadd.s32 %s122, 1
    %s124 = scalar_select %p121, %s122, %s123
    %p127 = pneg %p121
    %p128 = scmp.eq.s32.totalorder %s9, 1
    %p129 = por %p127, %p128
    %p130 = scmp.ne.s32.totalorder %s122, %s125
    %p131 = scmp.eq.s32.totalorder %s9, 0
    %p132 = por %p130, %p131
    %p133 = scmp.ne.s32.totalorder %s122, %s125
    %p134 = scmp.eq.s32.totalorder %s14, 1
    %p135 = por %p133, %p134
    %p136 = scmp.ne.s32.totalorder %s125, %s126
    %p137 = scmp.eq.s32.totalorder %s14, 0
    %p138 = por %p136, %p137
    %p139 = scmp.ne.s32.totalorder %s125, %s126
    %p140 = scmp.eq.s32.totalorder %s15, 1
    %p141 = por %p139, %p140
    %p143 = scmp.ne.s32.totalorder %s126, %s142
    %p144 = scmp.eq.s32.totalorder %s15, 0
    %p145 = por %p143, %p144
    %p146 = scmp.le.s32.totalorder 1, %s9
    %p147 = scmp.lt.s32.totalorder %s9, 3
    %p148 = pnand %p146, %p147
    %p149 = pneg %p148
    // Predicated region
    $region9: #{_lambda_.14} parent=5 // pred_check
      _
    $region10: #{_lambda_.14} parent=5 // pred_check_branch
      %151 = sbr.rel (%p148) target = $region12
    $region11: #{_lambda_.14} parent=5 // pred_region
      %s152 = ssub.s32 %s9, 1
      // Predicated region
      $region13: #{_lambda_.14} parent=11 // pred_check
        %p153 = pneg %p84
      $region14: #{_lambda_.14} parent=11 // pred_check_branch
        %155 = sbr.rel (%p153) target = $region16
      $region15: #{_lambda_.14} parent=11 // pred_region
        %s156 = smul.u32 80, %s21
        %p157 = scmp.lt.s32.totalorder %s156, 79
        %s158 = scalar_select %p157, %s156, 79
        %p159 = scmp.lt.s32.totalorder %s20, 0
        %s160 = scalar_select %p159, %s20, 0
        %s161 = sadd.s32 %s160, %s158
        %s162 = smul.addr %s161, 4
        %s163 = scalar_lea.vmem %s1, %s162
        %s164 = smul.u32 80, %s21
      $region16: #{_lambda_.14} parent=11 // pred_fallthru
        _
      // Predicated region
      $region17: #{_lambda_.14} parent=11 // pred_check
        %p165 = pneg %p110
      $region18: #{_lambda_.14} parent=11 // pred_check_branch
        %167 = sbr.rel (%p165) target = $region20
      $region19: #{_lambda_.14} parent=11 // pred_region
        %p168 = scmp.lt.s32.totalorder %s20, 0
        %s169 = scalar_select %p168, %s20, 0
        %s170 = scalar_lea.vmem %s2, %s169
      $region20: #{_lambda_.14} parent=11 // pred_fallthru
        _
    $region12: #{_lambda_.14} parent=5 // pred_fallthru
      _
    %p171 = scmp.lt.s32.totalorder %s9, 2
    // Predicated region
    $region21: #{_lambda_.14} parent=5 // pred_check
      %p172 = pneg %p171
    $region22: #{_lambda_.14} parent=5 // pred_check_branch
      %174 = sbr.rel (%p172) target = $region24
    $region23: #{_lambda_.14} parent=5 // pred_region
      // Predicated region
      $region25: #{_lambda_.14} parent=23 // pred_check
        %p175 = pneg %p50
      $region26: #{_lambda_.14} parent=23 // pred_check_branch
        %177 = sbr.rel (%p175) target = $region28
      $region27: #{_lambda_.14} parent=23 // pred_region
        %s178 = smul.u32 2, %s16
        %s179 = smul.u32 5, %s18
        %p180 = scmp.lt.s32.totalorder %s178, 3
        %s181 = scalar_select %p180, %s178, 3
        %p182 = scmp.lt.s32.totalorder %s179, 4
        %s183 = scalar_select %p182, %s179, 4
        %s184 = smul.addr %s181, 5
        %s185 = sadd.s32 %s183, %s184
        %s186 = smul.addr %s185, 4
        %s187 = scalar_lea.vmem %s0, %s186
        %s188 = smul.u32 2, %s16
        %s189 = smul.u32 5, %s18
      $region28: #{_lambda_.14} parent=23 // pred_fallthru
        _
    $region24: #{_lambda_.14} parent=5 // pred_fallthru
      _
    %p190 = scmp.le.s32.totalorder 1, %s9
    %p191 = scmp.lt.s32.totalorder %s9, 3
    %p192 = pnand %p190, %p191
    %p193 = pneg %p192
    // Predicated region
    $region29: #{_lambda_.14} parent=5 // pred_check
      _
    $region30: #{_lambda_.14} parent=5 // pred_check_branch
      %195 = sbr.rel (%p192) target = $region32
    $region31: #{_lambda_.14} parent=5 // pred_region
      %s196 = ssub.s32 %s9, 1
      %s197 = smul.u32 2, %s19
      %s198 = smul.u32 5, %s21
      %p199 = scmp.lt.s32.totalorder %s197, 3
      %s200 = scalar_select %p199, %s197, 3
      %p201 = scmp.lt.s32.totalorder %s198, 4
      %s202 = scalar_select %p201, %s198, 4
      %s203 = smul.addr %s200, 5
      %s204 = sadd.s32 %s202, %s203
      %s205 = smul.addr %s204, 4
      %s206 = scalar_lea.vmem %s0, %s205
      %p207 = pneg %p56
      %p208 = pneg %p53
      %s209 = smul.u32 80, %s21
      %p210 = scmp.lt.s32.totalorder %s209, 79
      %s211 = scalar_select %p210, %s209, 79
      %p212 = scmp.lt.s32.totalorder %s20, 0
      %s213 = scalar_select %p212, %s20, 0
      %s214 = sadd.s32 %s213, %s211
      %s215 = smul.addr %s214, 4
      %s216 = scalar_lea.vmem %s1, %s215
      %p217 = pneg %p84
      %p218 = pneg %p81
      %p219 = scmp.lt.s32.totalorder %s20, 0
      %s220 = scalar_select %p219, %s20, 0
      %s221 = scalar_lea.vmem %s2, %s220
      %p222 = pneg %p110
      %p223 = pneg %p107
      %p224 = pneg %p138
      %p225 = pneg %p135
      %s226 = smul.u32 2, %s19
      %p227 = scmp.lt.s32.totalorder %s226, 3
      %s228 = scalar_select %p227, %s226, 3
      %p229 = scmp.lt.s32.totalorder %s20, 0
      %s230 = scalar_select %p229, %s20, 0
      %s231 = sadd.s32 %s230, %s228
      %s232 = smul.addr %s231, 4
      %s233 = scalar_lea.vmem %s3, %s232
      %s234 = smul.u32 2, %s19
      %s235 = smul.u32 5, %s21
      %p236 = scmp.lt.s32.totalorder %s234, 3
      %s237 = scalar_select %p236, %s234, 3
      %p238 = scmp.lt.s32.totalorder %s235, 4
      %s239 = scalar_select %p238, %s235, 4
      %s240 = smul.addr %s237, 5
      %s241 = sadd.s32 %s239, %s240
      %s242 = smul.addr %s241, 4
      %s243 = scalar_lea.vmem %s0, %s242
      %s244 = smul.u32 2, %s19
      %s245 = smul.u32 5, %s21
      %s246 = smul.u32 80, %s21
      %p247 = scmp.lt.s32.totalorder %s246, 79
      %s248 = scalar_select %p247, %s246, 79
      %p249 = scmp.lt.s32.totalorder %s20, 0
      %s250 = scalar_select %p249, %s20, 0
      %s251 = sadd.s32 %s250, %s248
      %s252 = smul.addr %s251, 4
      %s253 = scalar_lea.vmem %s1, %s252
      %s254 = smul.u32 80, %s21
      %p255 = scmp.lt.s32.totalorder %s20, 0
      %s256 = scalar_select %p255, %s20, 0
      %s257 = scalar_lea.vmem %s2, %s256
      %s258 = smul.u32 2, %s19
      %p259 = scmp.lt.s32.totalorder %s258, 3
      %s260 = scalar_select %p259, %s258, 3
      %p261 = scmp.lt.s32.totalorder %s20, 0
      %s262 = scalar_select %p261, %s20, 0
      %s263 = sadd.s32 %s262, %s260
      %s264 = smul.addr %s263, 4
      %s265 = scalar_lea.vmem %s3, %s264
      %s266 = smul.u32 2, %s19
      %p268 = scmp.eq.s32.totalorder %s21, 0
      // Predicated region
      $region33: #{_lambda_.14} parent=31 // pred_check
        %p269 = pneg %p268
      $region34: #{_lambda_.14} parent=31 // pred_check_branch
        %271 = sbr.rel (%p269) target = $region36
      $region35: #{_lambda_.14} parent=31 // pred_region
        %272 = vst [vmem:[#allocation2] sm:$0xff] 0.0
        %273 = vst [vmem:[#allocation2 + $0x8] sm:$0xff] 0.0
      $region36: #{_lambda_.14} parent=31 // pred_fallthru
        _
      %v274 = vld [vmem:[#allocation2] sm:$0xff]
      %v275 = vld [vmem:[#allocation2 + $0x8] sm:$0xff]
      %v276 = vld [vmem:[%s243] sm:$0xff]
      %v277 = vld [vmem:[%s243 + $0x8] sm:$0xff]
      %v278 = vld [vmem:[%s243 + $0x10] sm:$0xf]
      %v279 = vld [vmem:[%s243 + $0x14] sm:$0xff]
      %v280 = vld [vmem:[%s243 + $0x1c] sm:$0xff]
      %v281 = vld [vmem:[%s243 + $0x24] sm:$0xf]
      %v282 = vld [vmem:[%s253] sm:$0xf]
      %v283 = vld [vmem:[%s253 + $0x4] sm:$0xf]
      %v284 = vld [vmem:[%s253 + $0x8] sm:$0xf]
      %v285 = vld [vmem:[%s253 + $0xc] sm:$0xf]
      %v286 = vld [vmem:[%s253 + $0x10] sm:$0xf]
      %v287 = vld [vmem:[%s253 + $0x14] sm:$0xf]
      %v288 = vld [vmem:[%s253 + $0x18] sm:$0xf]
      %v289 = vld [vmem:[%s253 + $0x1c] sm:$0xf]
      %v290 = vld [vmem:[%s253 + $0x20] sm:$0xf]
      %v291 = vld [vmem:[%s253 + $0x24] sm:$0xf]
      %v292 = vld [vmem:[%s253 + $0x28] sm:$0xf]
      %v293 = vld [vmem:[%s253 + $0x2c] sm:$0xf]
      %v294 = vld [vmem:[%s253 + $0x30] sm:$0xf]
      %v295 = vld [vmem:[%s253 + $0x34] sm:$0xf]
      %v296 = vld [vmem:[%s253 + $0x38] sm:$0xf]
      %v297 = vld [vmem:[%s253 + $0x3c] sm:$0xf]
      %v298 = vld [vmem:[%s253 + $0x40] sm:$0xf]
      %v299 = vld [vmem:[%s253 + $0x44] sm:$0xf]
      %v300 = vld [vmem:[%s253 + $0x48] sm:$0xf]
      %v301 = vld [vmem:[%s253 + $0x4c] sm:$0xf]
      %v302 = vld [vmem:[%s253 + $0x50] sm:$0xf]
      %v303 = vld [vmem:[%s253 + $0x54] sm:$0xf]
      %v304 = vld [vmem:[%s253 + $0x58] sm:$0xf]
      %v305 = vld [vmem:[%s253 + $0x5c] sm:$0xf]
      %v306 = vld [vmem:[%s253 + $0x60] sm:$0xf]
      %v307 = vld [vmem:[%s253 + $0x64] sm:$0xf]
      %v308 = vld [vmem:[%s253 + $0x68] sm:$0xf]
      %v309 = vld [vmem:[%s253 + $0x6c] sm:$0xf]
      %v310 = vld [vmem:[%s253 + $0x70] sm:$0xf]
      %v311 = vld [vmem:[%s253 + $0x74] sm:$0xf]
      %v312 = vld [vmem:[%s253 + $0x78] sm:$0xf]
      %v313 = vld [vmem:[%s253 + $0x7c] sm:$0xf]
      %v314 = vld [vmem:[%s253 + $0x80] sm:$0xf]
      %v315 = vld [vmem:[%s253 + $0x84] sm:$0xf]
      %v316 = vld [vmem:[%s253 + $0x88] sm:$0xf]
      %v317 = vld [vmem:[%s253 + $0x8c] sm:$0xf]
      %v318 = vld [vmem:[%s253 + $0x90] sm:$0xf]
      %v319 = vld [vmem:[%s253 + $0x94] sm:$0xf]
      %v320 = vld [vmem:[%s253 + $0x98] sm:$0xf]
      %v321 = vld [vmem:[%s253 + $0x9c] sm:$0xf]
      %v322 = vld [vmem:[%s253 + $0xa0] sm:$0xf]
      %v323 = vld [vmem:[%s253 + $0xa4] sm:$0xf]
      %v324 = vld [vmem:[%s253 + $0xa8] sm:$0xf]
      %v325 = vld [vmem:[%s253 + $0xac] sm:$0xf]
      %v326 = vld [vmem:[%s253 + $0xb0] sm:$0xf]
      %v327 = vld [vmem:[%s253 + $0xb4] sm:$0xf]
      %v328 = vld [vmem:[%s253 + $0xb8] sm:$0xf]
      %v329 = vld [vmem:[%s253 + $0xbc] sm:$0xf]
      %v330 = vld [vmem:[%s253 + $0xc0] sm:$0xf]
      %v331 = vld [vmem:[%s253 + $0xc4] sm:$0xf]
      %v332 = vld [vmem:[%s253 + $0xc8] sm:$0xf]
      %v333 = vld [vmem:[%s253 + $0xcc] sm:$0xf]
      %v334 = vld [vmem:[%s253 + $0xd0] sm:$0xf]
      %v335 = vld [vmem:[%s253 + $0xd4] sm:$0xf]
      %v336 = vld [vmem:[%s253 + $0xd8] sm:$0xf]
      %v337 = vld [vmem:[%s253 + $0xdc] sm:$0xf]
      %v338 = vld [vmem:[%s253 + $0xe0] sm:$0xf]
      %v339 = vld [vmem:[%s253 + $0xe4] sm:$0xf]
      %v340 = vld [vmem:[%s253 + $0xe8] sm:$0xf]
      %v341 = vld [vmem:[%s253 + $0xec] sm:$0xf]
      %v342 = vld [vmem:[%s253 + $0xf0] sm:$0xf]
      %v343 = vld [vmem:[%s253 + $0xf4] sm:$0xf]
      %v344 = vld [vmem:[%s253 + $0xf8] sm:$0xf]
      %v345 = vld [vmem:[%s253 + $0xfc] sm:$0xf]
      %v346 = vld [vmem:[%s253 + $0x100] sm:$0xf]
      %v347 = vld [vmem:[%s253 + $0x104] sm:$0xf]
      %v348 = vld [vmem:[%s253 + $0x108] sm:$0xf]
      %v349 = vld [vmem:[%s253 + $0x10c] sm:$0xf]
      %v350 = vld [vmem:[%s253 + $0x110] sm:$0xf]
      %v351 = vld [vmem:[%s253 + $0x114] sm:$0xf]
      %v352 = vld [vmem:[%s253 + $0x118] sm:$0xf]
      %v353 = vld [vmem:[%s253 + $0x11c] sm:$0xf]
      %v354 = vld [vmem:[%s253 + $0x120] sm:$0xf]
      %v355 = vld [vmem:[%s253 + $0x124] sm:$0xf]
      %v356 = vld [vmem:[%s253 + $0x128] sm:$0xf]
      %v357 = vld [vmem:[%s253 + $0x12c] sm:$0xf]
      %v358 = vld [vmem:[%s253 + $0x130] sm:$0xf]
      %v359 = vld [vmem:[%s253 + $0x134] sm:$0xf]
      %v360 = vld [vmem:[%s253 + $0x138] sm:$0xf]
      %v361 = vld [vmem:[%s253 + $0x13c] sm:$0xf]
      %v368 = vunpack.c.l.b16 %v276
      %v369 = vunpack.c.h.b16 %v276
      %v370 = vunpack.c.l.b16 %v277
      %v371 = vunpack.c.h.b16 %v277
      %v372 = vunpack.c.l.b16 %v278
      %v373 = vunpack.c.l.b16 %v279
      %v374 = vunpack.c.h.b16 %v279
      %v375 = vunpack.c.l.b16 %v280
      %v376 = vunpack.c.h.b16 %v280
      %v377 = vunpack.c.l.b16 %v281
      %v378 = vpack.c.b16 %v373, %v368
      %v379 = vpack.c.b16 %v374, %v369
      %v380 = vpack.c.b16 %v375, %v370
      %v381 = vpack.c.b16 %v376, %v371
      %v382 = vpack.c.b16 %v377, %v372
      %v468 = vunpack.c.l.b16 %v282
      %v469 = vunpack.c.l.b16 %v283
      %v470 = vunpack.c.l.b16 %v284
      %v471 = vunpack.c.l.b16 %v285
      %v472 = vunpack.c.l.b16 %v286
      %v473 = vunpack.c.l.b16 %v287
      %v474 = vunpack.c.l.b16 %v288
      %v475 = vunpack.c.l.b16 %v289
      %v476 = vunpack.c.l.b16 %v290
      %v477 = vunpack.c.l.b16 %v291
      %v478 = vunpack.c.l.b16 %v292
      %v479 = vunpack.c.l.b16 %v293
      %v480 = vunpack.c.l.b16 %v294
      %v481 = vunpack.c.l.b16 %v295
      %v482 = vunpack.c.l.b16 %v296
      %v483 = vunpack.c.l.b16 %v297
      %v484 = vunpack.c.l.b16 %v298
      %v485 = vunpack.c.l.b16 %v299
      %v486 = vunpack.c.l.b16 %v300
      %v487 = vunpack.c.l.b16 %v301
      %v488 = vunpack.c.l.b16 %v302
      %v489 = vunpack.c.l.b16 %v303
      %v490 = vunpack.c.l.b16 %v304
      %v491 = vunpack.c.l.b16 %v305
      %v492 = vunpack.c.l.b16 %v306
      %v493 = vunpack.c.l.b16 %v307
      %v494 = vunpack.c.l.b16 %v308
      %v495 = vunpack.c.l.b16 %v309
      %v496 = vunpack.c.l.b16 %v310
      %v497 = vunpack.c.l.b16 %v311
      %v498 = vunpack.c.l.b16 %v312
      %v499 = vunpack.c.l.b16 %v313
      %v500 = vunpack.c.l.b16 %v314
      %v501 = vunpack.c.l.b16 %v315
      %v502 = vunpack.c.l.b16 %v316
      %v503 = vunpack.c.l.b16 %v317
      %v504 = vunpack.c.l.b16 %v318
      %v505 = vunpack.c.l.b16 %v319
      %v506 = vunpack.c.l.b16 %v320
      %v507 = vunpack.c.l.b16 %v321
      %v508 = vunpack.c.l.b16 %v322
      %v509 = vunpack.c.l.b16 %v323
      %v510 = vunpack.c.l.b16 %v324
      %v511 = vunpack.c.l.b16 %v325
      %v512 = vunpack.c.l.b16 %v326
      %v513 = vunpack.c.l.b16 %v327
      %v514 = vunpack.c.l.b16 %v328
      %v515 = vunpack.c.l.b16 %v329
      %v516 = vunpack.c.l.b16 %v330
      %v517 = vunpack.c.l.b16 %v331
      %v518 = vunpack.c.l.b16 %v332
      %v519 = vunpack.c.l.b16 %v333
      %v520 = vunpack.c.l.b16 %v334
      %v521 = vunpack.c.l.b16 %v335
      %v522 = vunpack.c.l.b16 %v336
      %v523 = vunpack.c.l.b16 %v337
      %v524 = vunpack.c.l.b16 %v338
      %v525 = vunpack.c.l.b16 %v339
      %v526 = vunpack.c.l.b16 %v340
      %v527 = vunpack.c.l.b16 %v341
      %v528 = vunpack.c.l.b16 %v342
      %v529 = vunpack.c.l.b16 %v343
      %v530 = vunpack.c.l.b16 %v344
      %v531 = vunpack.c.l.b16 %v345
      %v532 = vunpack.c.l.b16 %v346
      %v533 = vunpack.c.l.b16 %v347
      %v534 = vunpack.c.l.b16 %v348
      %v535 = vunpack.c.l.b16 %v349
      %v536 = vunpack.c.l.b16 %v350
      %v537 = vunpack.c.l.b16 %v351
      %v538 = vunpack.c.l.b16 %v352
      %v539 = vunpack.c.l.b16 %v353
      %v540 = vunpack.c.l.b16 %v354
      %v541 = vunpack.c.l.b16 %v355
      %v542 = vunpack.c.l.b16 %v356
      %v543 = vunpack.c.l.b16 %v357
      %v544 = vunpack.c.l.b16 %v358
      %v545 = vunpack.c.l.b16 %v359
      %v546 = vunpack.c.l.b16 %v360
      %v547 = vunpack.c.l.b16 %v361
      %v548 = vpack.c.b16 %v469, %v468
      %v549 = vpack.c.b16 %v471, %v470
      %v550 = vpack.c.b16 %v473, %v472
      %v551 = vpack.c.b16 %v475, %v474
      %v552 = vpack.c.b16 %v477, %v476
      %v553 = vpack.c.b16 %v479, %v478
      %v554 = vpack.c.b16 %v481, %v480
      %v555 = vpack.c.b16 %v483, %v482
      %v556 = vpack.c.b16 %v485, %v484
      %v557 = vpack.c.b16 %v487, %v486
      %v558 = vpack.c.b16 %v489, %v488
      %v559 = vpack.c.b16 %v491, %v490
      %v560 = vpack.c.b16 %v493, %v492
      %v561 = vpack.c.b16 %v495, %v494
      %v562 = vpack.c.b16 %v497, %v496
      %v563 = vpack.c.b16 %v499, %v498
      %v564 = vpack.c.b16 %v501, %v500
      %v565 = vpack.c.b16 %v503, %v502
      %v566 = vpack.c.b16 %v505, %v504
      %v567 = vpack.c.b16 %v507, %v506
      %v568 = vpack.c.b16 %v509, %v508
      %v569 = vpack.c.b16 %v511, %v510
      %v570 = vpack.c.b16 %v513, %v512
      %v571 = vpack.c.b16 %v515, %v514
      %v572 = vpack.c.b16 %v517, %v516
      %v573 = vpack.c.b16 %v519, %v518
      %v574 = vpack.c.b16 %v521, %v520
      %v575 = vpack.c.b16 %v523, %v522
      %v576 = vpack.c.b16 %v525, %v524
      %v577 = vpack.c.b16 %v527, %v526
      %v578 = vpack.c.b16 %v529, %v528
      %v579 = vpack.c.b16 %v531, %v530
      %v580 = vpack.c.b16 %v533, %v532
      %v581 = vpack.c.b16 %v535, %v534
      %v582 = vpack.c.b16 %v537, %v536
      %v583 = vpack.c.b16 %v539, %v538
      %v584 = vpack.c.b16 %v541, %v540
      %v585 = vpack.c.b16 %v543, %v542
      %v586 = vpack.c.b16 %v545, %v544
      %v587 = vpack.c.b16 %v547, %v546
      %628 = vmatprep.subr.bf16.mxu0 0
      %629 = vmatpush1.bf16.msra.mxu0 %v548
      %630 = vmatprep.subr.bf16.mxu0 0
      %631 = vmatpush1.bf16.msra.mxu0 %v549
      %632 = vmatprep.subr.bf16.mxu0 0
      %633 = vmatpush1.bf16.msra.mxu0 %v550
      %634 = vmatprep.subr.bf16.mxu0 0
      %635 = vmatpush1.bf16.msra.mxu0 %v551
      %636 = vmatprep.subr.bf16.mxu0 0
      %637 = vmatpush1.bf16.msra.mxu0 %v552
      %638 = vmatprep.subr.bf16.mxu0 0
      %639 = vmatpush1.bf16.msra.mxu0 %v553
      %640 = vmatprep.subr.bf16.mxu0 0
      %641 = vmatpush1.bf16.msra.mxu0 %v554
      %642 = vmatprep.subr.bf16.mxu0 0
      %643 = vmatpush1.bf16.msra.mxu0 %v555
      %644 = vmatprep.subr.bf16.mxu0 0
      %645 = vmatpush1.bf16.msra.mxu0 %v556
      %646 = vmatprep.subr.bf16.mxu0 0
      %647 = vmatpush1.bf16.msra.mxu0 %v557
      %648 = vmatprep.subr.bf16.mxu0 0
      %649 = vmatpush1.bf16.msra.mxu0 %v558
      %650 = vmatprep.subr.bf16.mxu0 0
      %651 = vmatpush1.bf16.msra.mxu0 %v559
      %652 = vmatprep.subr.bf16.mxu0 0
      %653 = vmatpush1.bf16.msra.mxu0 %v560
      %654 = vmatprep.subr.bf16.mxu0 0
      %655 = vmatpush1.bf16.msra.mxu0 %v561
      %656 = vmatprep.subr.bf16.mxu0 0
      %657 = vmatpush1.bf16.msra.mxu0 %v562
      %658 = vmatprep.subr.bf16.mxu0 0
      %659 = vmatpush1.bf16.msra.mxu0 %v563
      %660 = vmatprep.mubr.bf16.mxu0 %v379
      %661 = vmatmul.mubr.bf16.gmra.mrb[0].mxu0 %v378
      %v662 = vpop.f32.mrb[0].mxu0
      %v663 = vadd.f32 0.0, %v662
      %v664 = vpop.f32.mrb[0].mxu0
      %v665 = vpop.f32.mrb[0].mxu0
      %v666 = vadd.f32 0.0, %v665
      %v667 = vpop.f32.mrb[0].mxu0
      %668 = vdwg.mxu0
      %669 = vmatprep.subr.bf16.mxu0 0
      %670 = vmatpush1.bf16.msra.mxu0 %v564
      %671 = vmatprep.subr.bf16.mxu0 0
      %672 = vmatpush1.bf16.msra.mxu0 %v565
      %673 = vmatprep.subr.bf16.mxu0 0
      %674 = vmatpush1.bf16.msra.mxu0 %v566
      %675 = vmatprep.subr.bf16.mxu0 0
      %676 = vmatpush1.bf16.msra.mxu0 %v567
      %677 = vmatprep.subr.bf16.mxu0 0
      %678 = vmatpush1.bf16.msra.mxu0 %v568
      %679 = vmatprep.subr.bf16.mxu0 0
      %680 = vmatpush1.bf16.msra.mxu0 %v569
      %681 = vmatprep.subr.bf16.mxu0 0
      %682 = vmatpush1.bf16.msra.mxu0 %v570
      %683 = vmatprep.subr.bf16.mxu0 0
      %684 = vmatpush1.bf16.msra.mxu0 %v571
      %685 = vmatprep.subr.bf16.mxu0 0
      %686 = vmatpush1.bf16.msra.mxu0 %v572
      %687 = vmatprep.subr.bf16.mxu0 0
      %688 = vmatpush1.bf16.msra.mxu0 %v573
      %689 = vmatprep.subr.bf16.mxu0 0
      %690 = vmatpush1.bf16.msra.mxu0 %v574
      %691 = vmatprep.subr.bf16.mxu0 0
      %692 = vmatpush1.bf16.msra.mxu0 %v575
      %693 = vmatprep.subr.bf16.mxu0 0
      %694 = vmatpush1.bf16.msra.mxu0 %v576
      %695 = vmatprep.subr.bf16.mxu0 0
      %696 = vmatpush1.bf16.msra.mxu0 %v577
      %697 = vmatprep.subr.bf16.mxu0 0
      %698 = vmatpush1.bf16.msra.mxu0 %v578
      %699 = vmatprep.subr.bf16.mxu0 0
      %700 = vmatpush1.bf16.msra.mxu0 %v579
      %701 = vmatprep.mubr.bf16.mxu0 %v381
      %702 = vmatmul.mubr.bf16.gmra.mrb[0].mxu0 %v380
      %v703 = vpop.f32.mrb[0].mxu0
      %v704 = vadd.f32 %v663, %v703
      %v705 = vpop.f32.mrb[0].mxu0
      %v706 = vpop.f32.mrb[0].mxu0
      %v707 = vadd.f32 %v666, %v706
      %v708 = vpop.f32.mrb[0].mxu0
      %709 = vdwg.mxu0
      %710 = vmatprep.subr.bf16.mxu0 0
      %711 = vmatpush1.bf16.msra.mxu0 %v580
      %712 = vmatprep.subr.bf16.mxu0 0
      %713 = vmatpush1.bf16.msra.mxu0 %v581
      %714 = vmatprep.subr.bf16.mxu0 0
      %715 = vmatpush1.bf16.msra.mxu0 %v582
      %716 = vmatprep.subr.bf16.mxu0 0
      %717 = vmatpush1.bf16.msra.mxu0 %v583
      %718 = vmatprep.subr.bf16.mxu0 0
      %719 = vmatpush1.bf16.msra.mxu0 %v584
      %720 = vmatprep.subr.bf16.mxu0 0
      %721 = vmatpush1.bf16.msra.mxu0 %v585
      %722 = vmatprep.subr.bf16.mxu0 0
      %723 = vmatpush1.bf16.msra.mxu0 %v586
      %724 = vmatprep.subr.bf16.mxu0 0
      %725 = vmatpush1.bf16.msra.mxu0 %v587
      %726 = vmatprep.subr.bf16.mxu0 0
      %727 = vmatpush1.bf16.msra.mxu0 0
      %728 = vmatprep.subr.bf16.mxu0 0
      %729 = vmatpush1.bf16.msra.mxu0 0
      %730 = vmatprep.subr.bf16.mxu0 0
      %731 = vmatpush1.bf16.msra.mxu0 0
      %732 = vmatprep.subr.bf16.mxu0 0
      %733 = vmatpush1.bf16.msra.mxu0 0
      %734 = vmatprep.subr.bf16.mxu0 0
      %735 = vmatpush1.bf16.msra.mxu0 0
      %736 = vmatprep.subr.bf16.mxu0 0
      %737 = vmatpush1.bf16.msra.mxu0 0
      %738 = vmatprep.subr.bf16.mxu0 0
      %739 = vmatpush1.bf16.msra.mxu0 0
      %740 = vmatprep.subr.bf16.mxu0 0
      %741 = vmatpush1.bf16.msra.mxu0 0
      %742 = vmatprep.mubr.bf16.mxu0 0
      %743 = vmatmul.mubr.bf16.gmra.mrb[0].mxu0 %v382
      %v744 = vpop.f32.mrb[0].mxu0
      %v745 = vadd.f32 %v704, %v744
      %v746 = vpop.f32.mrb[0].mxu0
      %v747 = vpop.f32.mrb[0].mxu0
      %v748 = vadd.f32 %v707, %v747
      %v749 = vpop.f32.mrb[0].mxu0
      %750 = vdwg.mxu0
      %v751 = vadd.f32 %v274, %v745
      %v752 = vadd.f32 %v275, %v748
      %753 = vst [vmem:[#allocation2] sm:$0xff] %v751
      %754 = vst [vmem:[#allocation2 + $0x8] sm:$0xff] %v752
      // Predicated region
      $region37: #{_lambda_.14} parent=31 // pred_check
        %p755 = pneg %p268
      $region38: #{_lambda_.14} parent=31 // pred_check_branch
        %757 = sbr.rel (%p755) target = $region40
      $region39: #{_lambda_.14} parent=31 // pred_region
        %v758 = vld [vmem:[#allocation2] sm:$0xff]
        %v759 = vld [vmem:[#allocation2 + $0x8] sm:$0xff]
        %v760 = vld [vmem:[%s257] sm:$0x1]
        %v762 = vlaneseq
        %v763 = vshrl.u32 %v762, 7
        %v764 = vsub.s32 0, %v763
        %v765 = vrot.slane %v760, %v764
        %v767 = vadd.f32 %v758, %v765
        %v768 = vadd.f32 %v759, %v765
        %v769 = vmax.f32 %v767, 0.0
        %v770 = vmax.f32 %v768, 0.0
        %v771 = vpack.c.bf16 %v770, %v769
        %v773 = vunpack.c.l.b16 %v771
        %v774 = vunpack.c.h.b16 %v771
        %v775 = vpack.c.b16 %v773, %v773
        %v776 = vpack.c.b16 %v774, %v774
        %779 = vst [vmem:[%s265] sm:$0xf] %v775
        %780 = vst [vmem:[%s265 + $0x4] sm:$0xf] %v776
      $region40: #{_lambda_.14} parent=31 // pred_fallthru
        _
      %s781 = smul.u32 2, %s19
      %p782 = scmp.lt.s32.totalorder %s781, 3
      %s783 = scalar_select %p782, %s781, 3
      %p784 = scmp.lt.s32.totalorder %s20, 0
      %s785 = scalar_select %p784, %s20, 0
      %s786 = sadd.s32 %s785, %s783
      %s787 = smul.addr %s786, 4
      %s788 = scalar_lea.vmem %s3, %s787
      // Predicated region
      $region41: #{_lambda_.14} parent=31 // pred_check
        %p789 = pneg %p135
      $region42: #{_lambda_.14} parent=31 // pred_check_branch
        %791 = sbr.rel (%p789) target = $region44
      $region43: #{_lambda_.14} parent=31 // pred_region
        %s792 = smul.u32 2, %s19
      $region44: #{_lambda_.14} parent=31 // pred_fallthru
        _
    $region32: #{_lambda_.14} parent=5 // pred_fallthru
      _
    %p793 = scmp.le.s32.totalorder 2, %s9
    // Predicated region
    $region45: #{_lambda_.14} parent=5 // pred_check
      %p794 = pneg %p793
    $region46: #{_lambda_.14} parent=5 // pred_check_branch
      %796 = sbr.rel (%p794) target = $region48
    $region47: #{_lambda_.14} parent=5 // pred_region
      %s797 = ssub.s32 %s9, 2
      // Predicated region
      $region49: #{_lambda_.14} parent=47 // pred_check
        %p798 = pneg %p141
      $region50: #{_lambda_.14} parent=47 // pred_check_branch
        %800 = sbr.rel (%p798) target = $region52
      $region51: #{_lambda_.14} parent=47 // pred_region
        %s801 = smul.u32 2, %s22
        %p802 = scmp.lt.s32.totalorder %s801, 3
        %s803 = scalar_select %p802, %s801, 3
        %p804 = scmp.lt.s32.totalorder %s23, 0
        %s805 = scalar_select %p804, %s23, 0
        %s806 = sadd.s32 %s805, %s803
        %s807 = smul.addr %s806, 4
        %s808 = scalar_lea.vmem %s3, %s807
      $region52: #{_lambda_.14} parent=47 // pred_fallthru
        _
    $region48: #{_lambda_.14} parent=5 // pred_fallthru
      _
  $region6: #{_lambda_.14} parent=0 // loop_footer
    %s13 = sadd.s32 1, %s9
  $region7: #{_lambda_.14} parent=0 // loop_footer_branch
    %8 = sbr.rel target = $region3
  $region8: #{_lambda_.14} parent=0 // loop_exit
    _

// kernel: tile.34
$region0: #{tile.34}
  #allocation0 [shape = 's32[1]{0}', space=sflag, size = 0x4, scoped, tag = 'scoped memory for tile.34']
  %s0 = inlined_call_operand.vmem [shape: f32[16], index: 0, kind: input, shape index: {}]
  %s1 = inlined_call_operand.vmem [shape: f32[4,16], index: 1, kind: output, shape index: {}]
  // Predicated region
  $region2: #{tile.34} parent=0 // pred_check
    _
  $region3: #{tile.34} parent=0 // pred_check_branch
    %3 = sbr.rel (0) target = $region5
  $region4: #{tile.34} parent=0 // pred_region
    _
  $region5: #{tile.34} parent=0 // pred_fallthru
    _
  %v4 = vld [vmem:[%s0] ss:$0 sm:$0xff]
  %5 = vst [vmem:[%s1] sm:$0xf] %v4

// kernel: tile.38
$region0: #{tile.38}
  %s0 = inlined_call_operand.vmem [shape: f32[4,16], index: 0, kind: input, shape index: {}]
  %s1 = inlined_call_operand.vmem [shape: f32[1,64], index: 1, kind: output, shape index: {}]
  $region1: #{tile.38} parent=0
    #allocation0 [shape = 'u8[4096]{0}', space=vmem, size = 0x1000, scoped, tag = 'scoped mem for output reshape']
    #allocation1 [shape = 'u8[4096]{0}', space=vmem, size = 0x1000, scoped, tag = 'scoped mem for input reshape']
    %s3 = sshllo.u32 0, 4
    %v4 = vld [vmem:[%s0] sm:%s3]
    %5 = vst [vmem:[#allocation1] sm:%s3] %v4
    %v6 = vld [vmem:[#allocation1] sm:$0x1]
    %vm7 = vcmask 130048
    %8 = vst.msk [vmem:[#allocation0] sm:$0x1] %vm7, %v6
    %s9 = scalar_lea.vmem [#allocation1], 3
    %v10 = vld [vmem:[%s9] sm:$0x1]
    %11 = vrot.lane.b32.xlu0 %v10, 48
    %v12 = vpop.permute.xlu0 %11
    %vm13 = vcmask 523648
    %14 = vst.msk [vmem:[#allocation0] sm:$0x1] %vm13, %v12
    %s15 = scalar_lea.vmem [#allocation1], 2
    %v16 = vld [vmem:[%s15] sm:$0x1]
    %17 = vrot.lane.b32.xlu0 %v16, 32
    %v18 = vpop.permute.xlu0 %17
    %vm19 = vcmask 392448
    %20 = vst.msk [vmem:[#allocation0] sm:$0x1] %vm19, %v18
    %s21 = scalar_lea.vmem [#allocation1], 1
    %v22 = vld [vmem:[%s21] sm:$0x1]
    %23 = vrot.lane.b32.xlu0 %v22, 16
    %v24 = vpop.permute.xlu0 %23
    %vm25 = vcmask 261248
    %26 = vst.msk [vmem:[#allocation0] sm:$0x1] %vm25, %v24
    %s28 = sshllo.u32 0, 1
    %v30 = vld [vmem:[#allocation0] sm:%s28]
    %s31 = sshllo.u32 0, 1
    %32 = vst [vmem:[%s1] sm:%s31] %v30

// kernel: tile.37
$region0: #{tile.37}
  #allocation0 [shape = 's32[1]{0}', space=sflag, size = 0x4, scoped, tag = 'scoped memory for tile.37']
  %s0 = inlined_call_operand.vmem [shape: f32[5], index: 0, kind: input, shape index: {}]
  %s1 = inlined_call_operand.vmem [shape: f32[4,5], index: 1, kind: output, shape index: {}]
  // Predicated region
  $region2: #{tile.37} parent=0 // pred_check
    _
  $region3: #{tile.37} parent=0 // pred_check_branch
    %3 = sbr.rel (0) target = $region5
  $region4: #{tile.37} parent=0 // pred_region
    _
  $region5: #{tile.37} parent=0 // pred_fallthru
    _
  %v4 = vld [vmem:[%s0] ss:$0 sm:$0xff]
  %5 = vst [vmem:[%s1] sm:$0xf] %v4

// kernel: tile.39
$region0: #{tile.39}
  %s0 = inlined_call_operand.vmem [shape: f32[4,5], index: 0, kind: input, shape index: {}]
  %s1 = inlined_call_operand.vmem [shape: f32[1,20], index: 1, kind: output, shape index: {}]
  $region1: #{tile.39} parent=0
    #allocation0 [shape = 'u8[4096]{0}', space=vmem, size = 0x1000, scoped, tag = 'scoped mem for output reshape']
    #allocation1 [shape = 'u8[4096]{0}', space=vmem, size = 0x1000, scoped, tag = 'scoped mem for input reshape']
    %s3 = sshllo.u32 0, 4
    %v4 = vld [vmem:[%s0] sm:%s3]
    %5 = vst [vmem:[#allocation1] sm:%s3] %v4
    %v6 = vld [vmem:[#allocation1] sm:$0x1]
    %vm7 = vcmask 39936
    %8 = vst.msk [vmem:[#allocation0] sm:$0x1] %vm7, %v6
    %s9 = scalar_lea.vmem [#allocation1], 3
    %v10 = vld [vmem:[%s9] sm:$0x1]
    %11 = vrot.lane.b32.xlu0 %v10, 15
    %v12 = vpop.permute.xlu0 %11
    %vm13 = vcmask 162936
    %14 = vst.msk [vmem:[#allocation0] sm:$0x1] %vm13, %v12
    %s15 = scalar_lea.vmem [#allocation1], 2
    %v16 = vld [vmem:[%s15] sm:$0x1]
    %17 = vrot.lane.b32.xlu0 %v16, 10
    %v18 = vpop.permute.xlu0 %17
    %vm19 = vcmask 121936
    %20 = vst.msk [vmem:[#allocation0] sm:$0x1] %vm19, %v18
    %s21 = scalar_lea.vmem [#allocation1], 1
    %v22 = vld [vmem:[%s21] sm:$0x1]
    %23 = vrot.lane.b32.xlu0 %v22, 5
    %v24 = vpop.permute.xlu0 %23
    %vm25 = vcmask 80936
    %26 = vst.msk [vmem:[#allocation0] sm:$0x1] %vm25, %v24
    %s28 = sshllo.u32 0, 1
    %v30 = vld [vmem:[#allocation0] sm:%s28]
    %s31 = sshllo.u32 0, 1
    %32 = vst [vmem:[%s1] sm:%s31] %v30

// kernel: _lambda_.15
$region0: #{_lambda_.15}
  #allocation0 [shape = 'u32[]', space=smem, size = 0x4, offset = 0x4, fixed_abs, tag = 'smem constant byte address 0x4 - core index']
  #allocation1 [shape = 'u32[144,128]{1,0:T(1,128)}', space=vmem, size = 0x12000, scoped, tag = 'internal scratch']
  #allocation2 [shape = 'f32[64,64]{1,0:T(8,128)}', space=vmem, size = 0x8000, scoped, tag = 'scratch operand']
  %s0 = inlined_call_operand.vmem [shape: bf16[128,384], index: 0, kind: input, shape index: {}]
  %s1 = inlined_call_operand.vmem [shape: bf16[384,64], index: 1, kind: input, shape index: {}]
  %s2 = inlined_call_operand.vmem [shape: f32[1,64], index: 2, kind: input, shape index: {}]
  %s3 = inlined_call_operand.vmem [shape: f32[64,20], index: 3, kind: input, shape index: {}]
  %s4 = inlined_call_operand.vmem [shape: f32[1,20], index: 4, kind: input, shape index: {}]
  %s5 = inlined_call_operand.vmem [shape: f32[128,20], index: 5, kind: output, shape index: {}]
  %s6 = sld [smem:[#allocation0]]
  $region61: #{_lambda_.15} parent=0
    _
  %s8 = ssub.s32 1, %s6
  %s9 = scalar_select 0, %s8, %s6
  loop: start=0, step=1, limit=4
  $region2: #{_lambda_.15} parent=0 // loop_pre_header
    _
  $region3: #{_lambda_.15} parent=0 // loop_header
    %s11 = sphi 0, %s15
    %p12 = scmp.ge.s32.totalorder %s11, 4
    %s18 = sphi 0, %s37
    %s19 = sphi 0, %s33
    %s20 = sphi 0, %s29
    %s21 = sphi 0, %s18
    %s22 = sphi 0, %s19
    %s23 = sphi 0, %s20
    %s24 = sphi 0, %s21
    %s25 = sphi 0, %s22
    %s26 = sphi 0, %s23
    %s42 = sphi 0, %s44
    %s45 = sphi 0, %s42
    %s46 = sphi 0, %s45
    %s62 = sphi 0, %s46
    %s70 = sphi 0, %s72
    %s73 = sphi 0, %s70
    %s74 = sphi 0, %s73
    %s90 = sphi 0, %s74
    %s96 = sphi 0, %s98
    %s99 = sphi 0, %s96
    %s100 = sphi 0, %s99
    %s116 = sphi 0, %s100
    %s120 = sphi 0, %s120
    %s122 = sphi 0, %s120
    %s123 = sphi 0, %s122
    %s137 = sphi 0, %s123
    %s141 = sphi 0, %s141
    %s143 = sphi 0, %s141
    %s144 = sphi 0, %s143
    %s158 = sphi 0, %s144
    %s164 = sphi 0, %s166
    %s167 = sphi 0, %s164
    %s168 = sphi 0, %s167
    %s184 = sphi 0, %s168
  $region4: #{_lambda_.15} parent=0 // loop_header_branch
    %14 = sbr.rel (%p12) target = $region8
  $region5: #{_lambda_.15} parent=0 // loop_body
    %s16 = ssub.s32 %s11, 1
    %s17 = ssub.s32 %s11, 2
    %s27 = sadd.s32 1, %s20
    %p28 = scmp.ge.s32.totalorder %s27, 1
    %s29 = scalar_select %p28, 0, %s27
    %s30 = sadd.s32 1, %s19
    %s31 = scalar_select %p28, %s30, %s19
    %p32 = scmp.ge.s32.totalorder %s31, 1
    %s33 = scalar_select %p32, 0, %s31
    %s34 = sadd.s32 1, %s18
    %s35 = scalar_select %p32, %s34, %s18
    %p36 = scmp.ge.s32.totalorder %s35, 2
    %s37 = scalar_select %p36, 0, %s35
    %s38 = ssub.s32 %s18, %s37
    %s39 = ssub.s32 %s20, %s29
    %s40 = sor.u32 %s38, %s39
    %p41 = scmp.eq.s32.totalorder %s40, 0
    %s43 = sadd.s32 %s42, 1
    %s44 = scalar_select %p41, %s42, %s43
    %p47 = pneg %p41
    %p48 = scmp.eq.s32.totalorder %s11, 1
    %p49 = por %p47, %p48
    %p50 = scmp.ne.s32.totalorder %s42, %s45
    %p51 = scmp.eq.s32.totalorder %s11, 0
    %p52 = por %p50, %p51
    %p53 = scmp.ne.s32.totalorder %s42, %s45
    %p54 = scmp.eq.s32.totalorder %s16, 1
    %p55 = por %p53, %p54
    %p56 = scmp.ne.s32.totalorder %s45, %s46
    %p57 = scmp.eq.s32.totalorder %s16, 0
    %p58 = por %p56, %p57
    %p59 = scmp.ne.s32.totalorder %s45, %s46
    %p60 = scmp.eq.s32.totalorder %s17, 1
    %p61 = por %p59, %p60
    %p63 = scmp.ne.s32.totalorder %s46, %s62
    %p64 = scmp.eq.s32.totalorder %s17, 0
    %p65 = por %p63, %p64
    %s66 = ssub.s32 %s20, %s29
    %s67 = ssub.s32 %s19, %s33
    %s68 = sor.u32 %s66, %s67
    %p69 = scmp.eq.s32.totalorder %s68, 0
    %s71 = sadd.s32 %s70, 1
    %s72 = scalar_select %p69, %s70, %s71
    %p75 = pneg %p69
    %p76 = scmp.eq.s32.totalorder %s11, 1
    %p77 = por %p75, %p76
    %p78 = scmp.ne.s32.totalorder %s70, %s73
    %p79 = scmp.eq.s32.totalorder %s11, 0
    %p80 = por %p78, %p79
    %p81 = scmp.ne.s32.totalorder %s70, %s73
    %p82 = scmp.eq.s32.totalorder %s16, 1
    %p83 = por %p81, %p82
    %p84 = scmp.ne.s32.totalorder %s73, %s74
    %p85 = scmp.eq.s32.totalorder %s16, 0
    %p86 = por %p84, %p85
    %p87 = scmp.ne.s32.totalorder %s73, %s74
    %p88 = scmp.eq.s32.totalorder %s17, 1
    %p89 = por %p87, %p88
    %p91 = scmp.ne.s32.totalorder %s74, %s90
    %p92 = scmp.eq.s32.totalorder %s17, 0
    %p93 = por %p91, %p92
    %s94 = ssub.s32 %s19, %s33
    %p95 = scmp.eq.s32.totalorder %s94, 0
    %s97 = sadd.s32 %s96, 1
    %s98 = scalar_select %p95, %s96, %s97
    %p101 = pneg %p95
    %p102 = scmp.eq.s32.totalorder %s11, 1
    %p103 = por %p101, %p102
    %p104 = scmp.ne.s32.totalorder %s96, %s99
    %p105 = scmp.eq.s32.totalorder %s11, 0
    %p106 = por %p104, %p105
    %p107 = scmp.ne.s32.totalorder %s96, %s99
    %p108 = scmp.eq.s32.totalorder %s16, 1
    %p109 = por %p107, %p108
    %p110 = scmp.ne.s32.totalorder %s99, %s100
    %p111 = scmp.eq.s32.totalorder %s16, 0
    %p112 = por %p110, %p111
    %p113 = scmp.ne.s32.totalorder %s99, %s100
    %p114 = scmp.eq.s32.totalorder %s17, 1
    %p115 = por %p113, %p114
    %p117 = scmp.ne.s32.totalorder %s100, %s116
    %p118 = scmp.eq.s32.totalorder %s17, 0
    %p119 = por %p117, %p118
    %s121 = sadd.s32 %s120, 1
    %p124 = scmp.eq.s32.totalorder %s11, 1
    %p125 = scmp.ne.s32.totalorder %s120, %s122
    %p126 = scmp.eq.s32.totalorder %s11, 0
    %p127 = por %p125, %p126
    %p128 = scmp.ne.s32.totalorder %s120, %s122
    %p129 = scmp.eq.s32.totalorder %s16, 1
    %p130 = por %p128, %p129
    %p131 = scmp.ne.s32.totalorder %s122, %s123
    %p132 = scmp.eq.s32.totalorder %s16, 0
    %p133 = por %p131, %p132
    %p134 = scmp.ne.s32.totalorder %s122, %s123
    %p135 = scmp.eq.s32.totalorder %s17, 1
    %p136 = por %p134, %p135
    %p138 = scmp.ne.s32.totalorder %s123, %s137
    %p139 = scmp.eq.s32.totalorder %s17, 0
    %p140 = por %p138, %p139
    %s142 = sadd.s32 %s141, 1
    %p145 = scmp.eq.s32.totalorder %s11, 1
    %p146 = scmp.ne.s32.totalorder %s141, %s143
    %p147 = scmp.eq.s32.totalorder %s11, 0
    %p148 = por %p146, %p147
    %p149 = scmp.ne.s32.totalorder %s141, %s143
    %p150 = scmp.eq.s32.totalorder %s16, 1
    %p151 = por %p149, %p150
    %p152 = scmp.ne.s32.totalorder %s143, %s144
    %p153 = scmp.eq.s32.totalorder %s16, 0
    %p154 = por %p152, %p153
    %p155 = scmp.ne.s32.totalorder %s143, %s144
    %p156 = scmp.eq.s32.totalorder %s17, 1
    %p157 = por %p155, %p156
    %p159 = scmp.ne.s32.totalorder %s144, %s158
    %p160 = scmp.eq.s32.totalorder %s17, 0
    %p161 = por %p159, %p160
    %s162 = ssub.s32 %s18, %s37
    %p163 = scmp.eq.s32.totalorder %s162, 0
    %s165 = sadd.s32 %s164, 1
    %s166 = scalar_select %p163, %s164, %s165
    %p169 = pneg %p163
    %p170 = scmp.eq.s32.totalorder %s11, 1
    %p171 = por %p169, %p170
    %p172 = scmp.ne.s32.totalorder %s164, %s167
    %p173 = scmp.eq.s32.totalorder %s11, 0
    %p174 = por %p172, %p173
    %p175 = scmp.ne.s32.totalorder %s164, %s167
    %p176 = scmp.eq.s32.totalorder %s16, 1
    %p177 = por %p175, %p176
    %p178 = scmp.ne.s32.totalorder %s167, %s168
    %p179 = scmp.eq.s32.totalorder %s16, 0
    %p180 = por %p178, %p179
    %p181 = scmp.ne.s32.totalorder %s167, %s168
    %p182 = scmp.eq.s32.totalorder %s17, 1
    %p183 = por %p181, %p182
    %p185 = scmp.ne.s32.totalorder %s168, %s184
    %p186 = scmp.eq.s32.totalorder %s17, 0
    %p187 = por %p185, %p186
    %p188 = scmp.le.s32.totalorder 1, %s11
    %p189 = scmp.lt.s32.totalorder %s11, 3
    %p190 = pnand %p188, %p189
    %p191 = pneg %p190
    // Predicated region
    $region9: #{_lambda_.15} parent=5 // pred_check
      _
    $region10: #{_lambda_.15} parent=5 // pred_check_branch
      %193 = sbr.rel (%p190) target = $region12
    $region11: #{_lambda_.15} parent=5 // pred_region
      %s194 = ssub.s32 %s11, 1
      // Predicated region
      $region13: #{_lambda_.15} parent=11 // pred_check
        %p195 = pneg %p86
      $region14: #{_lambda_.15} parent=11 // pred_check_branch
        %197 = sbr.rel (%p195) target = $region16
      $region15: #{_lambda_.15} parent=11 // pred_region
        %s198 = smul.u32 48, %s23
        %p199 = scmp.lt.s32.totalorder %s198, 47
        %s200 = scalar_select %p199, %s198, 47
        %p201 = scmp.lt.s32.totalorder %s22, 0
        %s202 = scalar_select %p201, %s22, 0
        %s203 = sadd.s32 %s202, %s200
        %s204 = smul.addr %s203, 4
        %s205 = scalar_lea.vmem %s1, %s204
        %s206 = smul.u32 48, %s23
      $region16: #{_lambda_.15} parent=11 // pred_fallthru
        _
      // Predicated region
      $region17: #{_lambda_.15} parent=11 // pred_check
        %p207 = pneg %p112
      $region18: #{_lambda_.15} parent=11 // pred_check_branch
        %209 = sbr.rel (%p207) target = $region20
      $region19: #{_lambda_.15} parent=11 // pred_region
        %p210 = scmp.lt.s32.totalorder %s22, 0
        %s211 = scalar_select %p210, %s22, 0
        %s212 = scalar_lea.vmem %s2, %s211
      $region20: #{_lambda_.15} parent=11 // pred_fallthru
        _
      // Predicated region
      $region21: #{_lambda_.15} parent=11 // pred_check
        %p213 = pneg %p133
      $region22: #{_lambda_.15} parent=11 // pred_check_branch
        %215 = sbr.rel (%p213) target = $region24
      $region23: #{_lambda_.15} parent=11 // pred_region
        _
      $region24: #{_lambda_.15} parent=11 // pred_fallthru
        _
      // Predicated region
      $region25: #{_lambda_.15} parent=11 // pred_check
        %p216 = pneg %p154
      $region26: #{_lambda_.15} parent=11 // pred_check_branch
        %218 = sbr.rel (%p216) target = $region28
      $region27: #{_lambda_.15} parent=11 // pred_region
        _
      $region28: #{_lambda_.15} parent=11 // pred_fallthru
        _
    $region12: #{_lambda_.15} parent=5 // pred_fallthru
      _
    %p219 = scmp.lt.s32.totalorder %s11, 2
    // Predicated region
    $region29: #{_lambda_.15} parent=5 // pred_check
      %p220 = pneg %p219
    $region30: #{_lambda_.15} parent=5 // pred_check_branch
      %222 = sbr.rel (%p220) target = $region32
    $region31: #{_lambda_.15} parent=5 // pred_region
      // Predicated region
      $region33: #{_lambda_.15} parent=31 // pred_check
        %p223 = pneg %p52
      $region34: #{_lambda_.15} parent=31 // pred_check_branch
        %225 = sbr.rel (%p223) target = $region36
      $region35: #{_lambda_.15} parent=31 // pred_region
        %s226 = smul.u32 8, %s18
        %s227 = smul.u32 3, %s20
        %p228 = scmp.lt.s32.totalorder %s226, 15
        %s229 = scalar_select %p228, %s226, 15
        %p230 = scmp.lt.s32.totalorder %s227, 2
        %s231 = scalar_select %p230, %s227, 2
        %s232 = smul.addr %s229, 3
        %s233 = sadd.s32 %s231, %s232
        %s234 = smul.addr %s233, 4
        %s235 = scalar_lea.vmem %s0, %s234
        %s236 = smul.u32 8, %s18
        %s237 = smul.u32 3, %s20
      $region36: #{_lambda_.15} parent=31 // pred_fallthru
        _
    $region32: #{_lambda_.15} parent=5 // pred_fallthru
      _
    %p238 = scmp.le.s32.totalorder 1, %s11
    %p239 = scmp.lt.s32.totalorder %s11, 3
    %p240 = pnand %p238, %p239
    %p241 = pneg %p240
    // Predicated region
    $region37: #{_lambda_.15} parent=5 // pred_check
      _
    $region38: #{_lambda_.15} parent=5 // pred_check_branch
      %243 = sbr.rel (%p240) target = $region40
    $region39: #{_lambda_.15} parent=5 // pred_region
      %s244 = ssub.s32 %s11, 1
      %s245 = smul.u32 8, %s21
      %s246 = smul.u32 3, %s23
      %p247 = scmp.lt.s32.totalorder %s245, 15
      %s248 = scalar_select %p247, %s245, 15
      %p249 = scmp.lt.s32.totalorder %s246, 2
      %s250 = scalar_select %p249, %s246, 2
      %s251 = smul.addr %s248, 3
      %s252 = sadd.s32 %s250, %s251
      %s253 = smul.addr %s252, 4
      %s254 = scalar_lea.vmem %s0, %s253
      %p255 = pneg %p58
      %p256 = pneg %p55
      %s257 = smul.u32 48, %s23
      %p258 = scmp.lt.s32.totalorder %s257, 47
      %s259 = scalar_select %p258, %s257, 47
      %p260 = scmp.lt.s32.totalorder %s22, 0
      %s261 = scalar_select %p260, %s22, 0
      %s262 = sadd.s32 %s261, %s259
      %s263 = smul.addr %s262, 4
      %s264 = scalar_lea.vmem %s1, %s263
      %p265 = pneg %p86
      %p266 = pneg %p83
      %p267 = scmp.lt.s32.totalorder %s22, 0
      %s268 = scalar_select %p267, %s22, 0
      %s269 = scalar_lea.vmem %s2, %s268
      %p270 = pneg %p112
      %p271 = pneg %p109
      %p272 = pneg %p133
      %p273 = pneg %p130
      %p274 = pneg %p154
      %p275 = pneg %p151
      %p276 = pneg %p180
      %p277 = pneg %p177
      %s278 = smul.u32 8, %s21
      %p279 = scmp.lt.s32.totalorder %s278, 15
      %s280 = scalar_select %p279, %s278, 15
      %s281 = smul.addr %s280, 8
      %s282 = scalar_lea.vmem %s5, %s281
      %s283 = smul.u32 8, %s21
      %s284 = smul.u32 3, %s23
      %p285 = scmp.lt.s32.totalorder %s283, 15
      %s286 = scalar_select %p285, %s283, 15
      %p287 = scmp.lt.s32.totalorder %s284, 2
      %s288 = scalar_select %p287, %s284, 2
      %s289 = smul.addr %s286, 3
      %s290 = sadd.s32 %s288, %s289
      %s291 = smul.addr %s290, 4
      %s292 = scalar_lea.vmem %s0, %s291
      %s293 = smul.u32 8, %s21
      %s294 = smul.u32 3, %s23
      %s295 = smul.u32 48, %s23
      %p296 = scmp.lt.s32.totalorder %s295, 47
      %s297 = scalar_select %p296, %s295, 47
      %p298 = scmp.lt.s32.totalorder %s22, 0
      %s299 = scalar_select %p298, %s22, 0
      %s300 = sadd.s32 %s299, %s297
      %s301 = smul.addr %s300, 4
      %s302 = scalar_lea.vmem %s1, %s301
      %s303 = smul.u32 48, %s23
      %p304 = scmp.lt.s32.totalorder %s22, 0
      %s305 = scalar_select %p304, %s22, 0
      %s306 = scalar_lea.vmem %s2, %s305
      %s307 = smul.u32 8, %s21
      %p308 = scmp.lt.s32.totalorder %s307, 15
      %s309 = scalar_select %p308, %s307, 15
      %s310 = smul.addr %s309, 8
      %s311 = scalar_lea.vmem %s5, %s310
      %s312 = smul.u32 8, %s21
      %p314 = scmp.eq.s32.totalorder %s23, 0
      // Predicated region
      $region41: #{_lambda_.15} parent=39 // pred_check
        %p315 = pneg %p314
      $region42: #{_lambda_.15} parent=39 // pred_check_branch
        %317 = sbr.rel (%p315) target = $region44
      $region43: #{_lambda_.15} parent=39 // pred_region
        %vm318 = vcmask 523264
        %319 = vst.msk [vmem:[#allocation2] sm:$0xff] %vm318, 0.0
        %320 = vst.msk [vmem:[#allocation2 + $0x8] sm:$0xff] %vm318, 0.0
        %321 = vst.msk [vmem:[#allocation2 + $0x10] sm:$0xff] %vm318, 0.0
        %322 = vst.msk [vmem:[#allocation2 + $0x18] sm:$0xff] %vm318, 0.0
        %323 = vst.msk [vmem:[#allocation2 + $0x20] sm:$0xff] %vm318, 0.0
        %324 = vst.msk [vmem:[#allocation2 + $0x28] sm:$0xff] %vm318, 0.0
        %325 = vst.msk [vmem:[#allocation2 + $0x30] sm:$0xff] %vm318, 0.0
        %326 = vst.msk [vmem:[#allocation2 + $0x38] sm:$0xff] %vm318, 0.0
      $region44: #{_lambda_.15} parent=39 // pred_fallthru
        _
      %v327 = vld [vmem:[#allocation2] sm:$0xff]
      %v328 = vld [vmem:[#allocation2 + $0x8] sm:$0xff]
      %v329 = vld [vmem:[#allocation2 + $0x10] sm:$0xff]
      %v330 = vld [vmem:[#allocation2 + $0x18] sm:$0xff]
      %v331 = vld [vmem:[#allocation2 + $0x20] sm:$0xff]
      %v332 = vld [vmem:[#allocation2 + $0x28] sm:$0xff]
      %v333 = vld [vmem:[#allocation2 + $0x30] sm:$0xff]
      %v334 = vld [vmem:[#allocation2 + $0x38] sm:$0xff]
      %v335 = vld [vmem:[%s292] sm:$0xff]
      %v336 = vld [vmem:[%s292 + $0x8] sm:$0xf]
      %v337 = vld [vmem:[%s292 + $0xc] sm:$0xff]
      %v338 = vld [vmem:[%s292 + $0x14] sm:$0xf]
      %v339 = vld [vmem:[%s292 + $0x18] sm:$0xff]
      %v340 = vld [vmem:[%s292 + $0x20] sm:$0xf]
      %v341 = vld [vmem:[%s292 + $0x24] sm:$0xff]
      %v342 = vld [vmem:[%s292 + $0x2c] sm:$0xf]
      %v343 = vld [vmem:[%s292 + $0x30] sm:$0xff]
      %v344 = vld [vmem:[%s292 + $0x38] sm:$0xf]
      %v345 = vld [vmem:[%s292 + $0x3c] sm:$0xff]
      %v346 = vld [vmem:[%s292 + $0x44] sm:$0xf]
      %v347 = vld [vmem:[%s292 + $0x48] sm:$0xff]
      %v348 = vld [vmem:[%s292 + $0x50] sm:$0xf]
      %v349 = vld [vmem:[%s292 + $0x54] sm:$0xff]
      %v350 = vld [vmem:[%s292 + $0x5c] sm:$0xf]
      %v351 = vld [vmem:[%s302] sm:$0xf]
      %v352 = vld [vmem:[%s302 + $0x4] sm:$0xf]
      %v353 = vld [vmem:[%s302 + $0x8] sm:$0xf]
      %v354 = vld [vmem:[%s302 + $0xc] sm:$0xf]
      %v355 = vld [vmem:[%s302 + $0x10] sm:$0xf]
      %v356 = vld [vmem:[%s302 + $0x14] sm:$0xf]
      %v357 = vld [vmem:[%s302 + $0x18] sm:$0xf]
      %v358 = vld [vmem:[%s302 + $0x1c] sm:$0xf]
      %v359 = vld [vmem:[%s302 + $0x20] sm:$0xf]
      %v360 = vld [vmem:[%s302 + $0x24] sm:$0xf]
      %v361 = vld [vmem:[%s302 + $0x28] sm:$0xf]
      %v362 = vld [vmem:[%s302 + $0x2c] sm:$0xf]
      %v363 = vld [vmem:[%s302 + $0x30] sm:$0xf]
      %v364 = vld [vmem:[%s302 + $0x34] sm:$0xf]
      %v365 = vld [vmem:[%s302 + $0x38] sm:$0xf]
      %v366 = vld [vmem:[%s302 + $0x3c] sm:$0xf]
      %v367 = vld [vmem:[%s302 + $0x40] sm:$0xf]
      %v368 = vld [vmem:[%s302 + $0x44] sm:$0xf]
      %v369 = vld [vmem:[%s302 + $0x48] sm:$0xf]
      %v370 = vld [vmem:[%s302 + $0x4c] sm:$0xf]
      %v371 = vld [vmem:[%s302 + $0x50] sm:$0xf]
      %v372 = vld [vmem:[%s302 + $0x54] sm:$0xf]
      %v373 = vld [vmem:[%s302 + $0x58] sm:$0xf]
      %v374 = vld [vmem:[%s302 + $0x5c] sm:$0xf]
      %v375 = vld [vmem:[%s302 + $0x60] sm:$0xf]
      %v376 = vld [vmem:[%s302 + $0x64] sm:$0xf]
      %v377 = vld [vmem:[%s302 + $0x68] sm:$0xf]
      %v378 = vld [vmem:[%s302 + $0x6c] sm:$0xf]
      %v379 = vld [vmem:[%s302 + $0x70] sm:$0xf]
      %v380 = vld [vmem:[%s302 + $0x74] sm:$0xf]
      %v381 = vld [vmem:[%s302 + $0x78] sm:$0xf]
      %v382 = vld [vmem:[%s302 + $0x7c] sm:$0xf]
      %v383 = vld [vmem:[%s302 + $0x80] sm:$0xf]
      %v384 = vld [vmem:[%s302 + $0x84] sm:$0xf]
      %v385 = vld [vmem:[%s302 + $0x88] sm:$0xf]
      %v386 = vld [vmem:[%s302 + $0x8c] sm:$0xf]
      %v387 = vld [vmem:[%s302 + $0x90] sm:$0xf]
      %v388 = vld [vmem:[%s302 + $0x94] sm:$0xf]
      %v389 = vld [vmem:[%s302 + $0x98] sm:$0xf]
      %v390 = vld [vmem:[%s302 + $0x9c] sm:$0xf]
      %v391 = vld [vmem:[%s302 + $0xa0] sm:$0xf]
      %v392 = vld [vmem:[%s302 + $0xa4] sm:$0xf]
      %v393 = vld [vmem:[%s302 + $0xa8] sm:$0xf]
      %v394 = vld [vmem:[%s302 + $0xac] sm:$0xf]
      %v395 = vld [vmem:[%s302 + $0xb0] sm:$0xf]
      %v396 = vld [vmem:[%s302 + $0xb4] sm:$0xf]
      %v397 = vld [vmem:[%s302 + $0xb8] sm:$0xf]
      %v398 = vld [vmem:[%s302 + $0xbc] sm:$0xf]
      %v415 = vunpack.c.l.b16 %v335
      %v416 = vunpack.c.h.b16 %v335
      %v417 = vunpack.c.l.b16 %v336
      %v418 = vunpack.c.l.b16 %v337
      %v419 = vunpack.c.h.b16 %v337
      %v420 = vunpack.c.l.b16 %v338
      %v421 = vunpack.c.l.b16 %v339
      %v422 = vunpack.c.h.b16 %v339
      %v423 = vunpack.c.l.b16 %v340
      %v424 = vunpack.c.l.b16 %v341
      %v425 = vunpack.c.h.b16 %v341
      %v426 = vunpack.c.l.b16 %v342
      %v427 = vunpack.c.l.b16 %v343
      %v428 = vunpack.c.h.b16 %v343
      %v429 = vunpack.c.l.b16 %v344
      %v430 = vunpack.c.l.b16 %v345
      %v431 = vunpack.c.h.b16 %v345
      %v432 = vunpack.c.l.b16 %v346
      %v433 = vunpack.c.l.b16 %v347
      %v434 = vunpack.c.h.b16 %v347
      %v435 = vunpack.c.l.b16 %v348
      %v436 = vunpack.c.l.b16 %v349
      %v437 = vunpack.c.h.b16 %v349
      %v438 = vunpack.c.l.b16 %v350
      %v439 = vpack.c.b16 %v418, %v415
      %v440 = vpack.c.b16 %v419, %v416
      %v441 = vpack.c.b16 %v420, %v417
      %v442 = vpack.c.b16 %v424, %v421
      %v443 = vpack.c.b16 %v425, %v422
      %v444 = vpack.c.b16 %v426, %v423
      %v445 = vpack.c.b16 %v430, %v427
      %v446 = vpack.c.b16 %v431, %v428
      %v447 = vpack.c.b16 %v432, %v429
      %v448 = vpack.c.b16 %v436, %v433
      %v449 = vpack.c.b16 %v437, %v434
      %v450 = vpack.c.b16 %v438, %v435
      %v511 = vunpack.c.l.b16 %v351
      %v512 = vunpack.c.l.b16 %v352
      %v513 = vunpack.c.l.b16 %v353
      %v514 = vunpack.c.l.b16 %v354
      %v515 = vunpack.c.l.b16 %v355
      %v516 = vunpack.c.l.b16 %v356
      %v517 = vunpack.c.l.b16 %v357
      %v518 = vunpack.c.l.b16 %v358
      %v519 = vunpack.c.l.b16 %v359
      %v520 = vunpack.c.l.b16 %v360
      %v521 = vunpack.c.l.b16 %v361
      %v522 = vunpack.c.l.b16 %v362
      %v523 = vunpack.c.l.b16 %v363
      %v524 = vunpack.c.l.b16 %v364
      %v525 = vunpack.c.l.b16 %v365
      %v526 = vunpack.c.l.b16 %v366
      %v527 = vunpack.c.l.b16 %v367
      %v528 = vunpack.c.l.b16 %v368
      %v529 = vunpack.c.l.b16 %v369
      %v530 = vunpack.c.l.b16 %v370
      %v531 = vunpack.c.l.b16 %v371
      %v532 = vunpack.c.l.b16 %v372
      %v533 = vunpack.c.l.b16 %v373
      %v534 = vunpack.c.l.b16 %v374
      %v535 = vunpack.c.l.b16 %v375
      %v536 = vunpack.c.l.b16 %v376
      %v537 = vunpack.c.l.b16 %v377
      %v538 = vunpack.c.l.b16 %v378
      %v539 = vunpack.c.l.b16 %v379
      %v540 = vunpack.c.l.b16 %v380
      %v541 = vunpack.c.l.b16 %v381
      %v542 = vunpack.c.l.b16 %v382
      %v543 = vunpack.c.l.b16 %v383
      %v544 = vunpack.c.l.b16 %v384
      %v545 = vunpack.c.l.b16 %v385
      %v546 = vunpack.c.l.b16 %v386
      %v547 = vunpack.c.l.b16 %v387
      %v548 = vunpack.c.l.b16 %v388
      %v549 = vunpack.c.l.b16 %v389
      %v550 = vunpack.c.l.b16 %v390
      %v551 = vunpack.c.l.b16 %v391
      %v552 = vunpack.c.l.b16 %v392
      %v553 = vunpack.c.l.b16 %v393
      %v554 = vunpack.c.l.b16 %v394
      %v555 = vunpack.c.l.b16 %v395
      %v556 = vunpack.c.l.b16 %v396
      %v557 = vunpack.c.l.b16 %v397
      %v558 = vunpack.c.l.b16 %v398
      %v559 = vpack.c.b16 %v512, %v511
      %v560 = vpack.c.b16 %v514, %v513
      %v561 = vpack.c.b16 %v516, %v515
      %v562 = vpack.c.b16 %v518, %v517
      %v563 = vpack.c.b16 %v520, %v519
      %v564 = vpack.c.b16 %v522, %v521
      %v565 = vpack.c.b16 %v524, %v523
      %v566 = vpack.c.b16 %v526, %v525
      %v567 = vpack.c.b16 %v528, %v527
      %v568 = vpack.c.b16 %v530, %v529
      %v569 = vpack.c.b16 %v532, %v531
      %v570 = vpack.c.b16 %v534, %v533
      %v571 = vpack.c.b16 %v536, %v535
      %v572 = vpack.c.b16 %v538, %v537
      %v573 = vpack.c.b16 %v540, %v539
      %v574 = vpack.c.b16 %v542, %v541
      %v575 = vpack.c.b16 %v544, %v543
      %v576 = vpack.c.b16 %v546, %v545
      %v577 = vpack.c.b16 %v548, %v547
      %v578 = vpack.c.b16 %v550, %v549
      %v579 = vpack.c.b16 %v552, %v551
      %v580 = vpack.c.b16 %v554, %v553
      %v581 = vpack.c.b16 %v556, %v555
      %v582 = vpack.c.b16 %v558, %v557
      %607 = vmatprep.subr.bf16.mxu0 0
      %608 = vmatpush1.bf16.msra.mxu0 %v559
      %609 = vmatprep.subr.bf16.mxu0 0
      %610 = vmatpush1.bf16.msra.mxu0 %v560
      %611 = vmatprep.subr.bf16.mxu0 0
      %612 = vmatpush1.bf16.msra.mxu0 %v561
      %613 = vmatprep.subr.bf16.mxu0 0
      %614 = vmatpush1.bf16.msra.mxu0 %v562
      %615 = vmatprep.subr.bf16.mxu0 0
      %616 = vmatpush1.bf16.msra.mxu0 %v563
      %617 = vmatprep.subr.bf16.mxu0 0
      %618 = vmatpush1.bf16.msra.mxu0 %v564
      %619 = vmatprep.subr.bf16.mxu0 0
      %620 = vmatpush1.bf16.msra.mxu0 %v565
      %621 = vmatprep.subr.bf16.mxu0 0
      %622 = vmatpush1.bf16.msra.mxu0 %v566
      %623 = vmatprep.subr.bf16.mxu0 0
      %624 = vmatpush1.bf16.msra.mxu0 %v567
      %625 = vmatprep.subr.bf16.mxu0 0
      %626 = vmatpush1.bf16.msra.mxu0 %v568
      %627 = vmatprep.subr.bf16.mxu0 0
      %628 = vmatpush1.bf16.msra.mxu0 %v569
      %629 = vmatprep.subr.bf16.mxu0 0
      %630 = vmatpush1.bf16.msra.mxu0 %v570
      %631 = vmatprep.subr.bf16.mxu0 0
      %632 = vmatpush1.bf16.msra.mxu0 %v571
      %633 = vmatprep.subr.bf16.mxu0 0
      %634 = vmatpush1.bf16.msra.mxu0 %v572
      %635 = vmatprep.subr.bf16.mxu0 0
      %636 = vmatpush1.bf16.msra.mxu0 %v573
      %637 = vmatprep.subr.bf16.mxu0 0
      %638 = vmatpush1.bf16.msra.mxu0 %v574
      %639 = vmatprep.mubr.bf16.mxu0 %v440
      %640 = vmatmul.mubr.bf16.gmra.mrb[0].mxu0 %v439
      %v641 = vpop.f32.mrb[0].mxu0
      %v642 = vadd.f32 0.0, %v641
      %v643 = vpop.f32.mrb[0].mxu0
      %v644 = vpop.f32.mrb[0].mxu0
      %v645 = vadd.f32 0.0, %v644
      %v646 = vpop.f32.mrb[0].mxu0
      %647 = vmatprep.mubr.bf16.mxu0 %v443
      %648 = vmatmul.mubr.bf16.gmra.mrb[0].mxu0 %v442
      %v649 = vpop.f32.mrb[0].mxu0
      %v650 = vadd.f32 0.0, %v649
      %v651 = vpop.f32.mrb[0].mxu0
      %v652 = vpop.f32.mrb[0].mxu0
      %v653 = vadd.f32 0.0, %v652
      %v654 = vpop.f32.mrb[0].mxu0
      %655 = vmatprep.mubr.bf16.mxu0 %v446
      %656 = vmatmul.mubr.bf16.gmra.mrb[0].mxu0 %v445
      %v657 = vpop.f32.mrb[0].mxu0
      %v658 = vadd.f32 0.0, %v657
      %v659 = vpop.f32.mrb[0].mxu0
      %v660 = vpop.f32.mrb[0].mxu0
      %v661 = vadd.f32 0.0, %v660
      %v662 = vpop.f32.mrb[0].mxu0
      %663 = vmatprep.mubr.bf16.mxu0 %v449
      %664 = vmatmul.mubr.bf16.gmra.mrb[0].mxu0 %v448
      %v665 = vpop.f32.mrb[0].mxu0
      %v666 = vadd.f32 0.0, %v665
      %v667 = vpop.f32.mrb[0].mxu0
      %v668 = vpop.f32.mrb[0].mxu0
      %v669 = vadd.f32 0.0, %v668
      %v670 = vpop.f32.mrb[0].mxu0
      %671 = vdwg.mxu0
      %672 = vmatprep.subr.bf16.mxu0 0
      %673 = vmatpush1.bf16.msra.mxu0 %v575
      %674 = vmatprep.subr.bf16.mxu0 0
      %675 = vmatpush1.bf16.msra.mxu0 %v576
      %676 = vmatprep.subr.bf16.mxu0 0
      %677 = vmatpush1.bf16.msra.mxu0 %v577
      %678 = vmatprep.subr.bf16.mxu0 0
      %679 = vmatpush1.bf16.msra.mxu0 %v578
      %680 = vmatprep.subr.bf16.mxu0 0
      %681 = vmatpush1.bf16.msra.mxu0 %v579
      %682 = vmatprep.subr.bf16.mxu0 0
      %683 = vmatpush1.bf16.msra.mxu0 %v580
      %684 = vmatprep.subr.bf16.mxu0 0
      %685 = vmatpush1.bf16.msra.mxu0 %v581
      %686 = vmatprep.subr.bf16.mxu0 0
      %687 = vmatpush1.bf16.msra.mxu0 %v582
      %688 = vmatprep.subr.bf16.mxu0 0
      %689 = vmatpush1.bf16.msra.mxu0 0
      %690 = vmatprep.subr.bf16.mxu0 0
      %691 = vmatpush1.bf16.msra.mxu0 0
      %692 = vmatprep.subr.bf16.mxu0 0
      %693 = vmatpush1.bf16.msra.mxu0 0
      %694 = vmatprep.subr.bf16.mxu0 0
      %695 = vmatpush1.bf16.msra.mxu0 0
      %696 = vmatprep.subr.bf16.mxu0 0
      %697 = vmatpush1.bf16.msra.mxu0 0
      %698 = vmatprep.subr.bf16.mxu0 0
      %699 = vmatpush1.bf16.msra.mxu0 0
      %700 = vmatprep.subr.bf16.mxu0 0
      %701 = vmatpush1.bf16.msra.mxu0 0
      %702 = vmatprep.subr.bf16.mxu0 0
      %703 = vmatpush1.bf16.msra.mxu0 0
      %704 = vmatprep.mubr.bf16.mxu0 0
      %705 = vmatmul.mubr.bf16.gmra.mrb[0].mxu0 %v441
      %v706 = vpop.f32.mrb[0].mxu0
      %v707 = vadd.f32 %v642, %v706
      %v708 = vpop.f32.mrb[0].mxu0
      %v709 = vpop.f32.mrb[0].mxu0
      %v710 = vadd.f32 %v645, %v709
      %v711 = vpop.f32.mrb[0].mxu0
      %712 = vmatprep.mubr.bf16.mxu0 0
      %713 = vmatmul.mubr.bf16.gmra.mrb[0].mxu0 %v444
      %v714 = vpop.f32.mrb[0].mxu0
      %v715 = vadd.f32 %v650, %v714
      %v716 = vpop.f32.mrb[0].mxu0
      %v717 = vpop.f32.mrb[0].mxu0
      %v718 = vadd.f32 %v653, %v717
      %v719 = vpop.f32.mrb[0].mxu0
      %720 = vmatprep.mubr.bf16.mxu0 0
      %721 = vmatmul.mubr.bf16.gmra.mrb[0].mxu0 %v447
      %v722 = vpop.f32.mrb[0].mxu0
      %v723 = vadd.f32 %v658, %v722
      %v724 = vpop.f32.mrb[0].mxu0
      %v725 = vpop.f32.mrb[0].mxu0
      %v726 = vadd.f32 %v661, %v725
      %v727 = vpop.f32.mrb[0].mxu0
      %728 = vmatprep.mubr.bf16.mxu0 0
      %729 = vmatmul.mubr.bf16.gmra.mrb[0].mxu0 %v450
      %v730 = vpop.f32.mrb[0].mxu0
      %v731 = vadd.f32 %v666, %v730
      %v732 = vpop.f32.mrb[0].mxu0
      %v733 = vpop.f32.mrb[0].mxu0
      %v734 = vadd.f32 %v669, %v733
      %v735 = vpop.f32.mrb[0].mxu0
      %736 = vdwg.mxu0
      %v737 = vadd.f32 %v327, %v707
      %v738 = vadd.f32 %v328, %v710
      %v739 = vadd.f32 %v329, %v715
      %v740 = vadd.f32 %v330, %v718
      %v741 = vadd.f32 %v331, %v723
      %v742 = vadd.f32 %v332, %v726
      %v743 = vadd.f32 %v333, %v731
      %v744 = vadd.f32 %v334, %v734
      %vm745 = vcmask 523264
      %746 = vst.msk [vmem:[#allocation2] sm:$0xff] %vm745, %v737
      %747 = vst.msk [vmem:[#allocation2 + $0x8] sm:$0xff] %vm745, %v738
      %748 = vst.msk [vmem:[#allocation2 + $0x10] sm:$0xff] %vm745, %v739
      %749 = vst.msk [vmem:[#allocation2 + $0x18] sm:$0xff] %vm745, %v740
      %750 = vst.msk [vmem:[#allocation2 + $0x20] sm:$0xff] %vm745, %v741
      %751 = vst.msk [vmem:[#allocation2 + $0x28] sm:$0xff] %vm745, %v742
      %752 = vst.msk [vmem:[#allocation2 + $0x30] sm:$0xff] %vm745, %v743
      %753 = vst.msk [vmem:[#allocation2 + $0x38] sm:$0xff] %vm745, %v744
      // Predicated region
      $region45: #{_lambda_.15} parent=39 // pred_check
        %p754 = pneg %p314
      $region46: #{_lambda_.15} parent=39 // pred_check_branch
        %756 = sbr.rel (%p754) target = $region48
      $region47: #{_lambda_.15} parent=39 // pred_region
        %v757 = vld [vmem:[#allocation2] sm:$0xff]
        %v758 = vld [vmem:[#allocation2 + $0x8] sm:$0xff]
        %v759 = vld [vmem:[#allocation2 + $0x10] sm:$0xff]
        %v760 = vld [vmem:[#allocation2 + $0x18] sm:$0xff]
        %v761 = vld [vmem:[#allocation2 + $0x20] sm:$0xff]
        %v762 = vld [vmem:[#allocation2 + $0x28] sm:$0xff]
        %v763 = vld [vmem:[#allocation2 + $0x30] sm:$0xff]
        %v764 = vld [vmem:[#allocation2 + $0x38] sm:$0xff]
        %v765 = vld [vmem:[%s306] sm:$0x1]
        %v767 = vlaneseq
        %v768 = vshrl.u32 %v767, 7
        %v769 = vsub.s32 0, %v768
        %v770 = vrot.slane %v765, %v769
        %v772 = vadd.f32 %v757, %v770
        %v773 = vadd.f32 %v758, %v770
        %v774 = vadd.f32 %v759, %v770
        %v775 = vadd.f32 %v760, %v770
        %v776 = vadd.f32 %v761, %v770
        %v777 = vadd.f32 %v762, %v770
        %v778 = vadd.f32 %v763, %v770
        %v779 = vadd.f32 %v764, %v770
        %v780 = vmax.f32 %v772, 0.0
        %v781 = vmax.f32 %v773, 0.0
        %v782 = vmax.f32 %v774, 0.0
        %v783 = vmax.f32 %v775, 0.0
        %v784 = vmax.f32 %v776, 0.0
        %v785 = vmax.f32 %v777, 0.0
        %v786 = vmax.f32 %v778, 0.0
        %v787 = vmax.f32 %v779, 0.0
        %v788 = vld [vmem:[%s3] sm:$0xff]
        %v789 = vld [vmem:[%s3 + $0x8] sm:$0xff]
        %v790 = vld [vmem:[%s3 + $0x10] sm:$0xff]
        %v791 = vld [vmem:[%s3 + $0x18] sm:$0xff]
        %v792 = vld [vmem:[%s3 + $0x20] sm:$0xff]
        %v793 = vld [vmem:[%s3 + $0x28] sm:$0xff]
        %v794 = vld [vmem:[%s3 + $0x30] sm:$0xff]
        %v795 = vld [vmem:[%s3 + $0x38] sm:$0xff]
        %v796 = vld [vmem:[%s4] sm:$0x1]
        %v798 = vlaneseq
        %v799 = vshrl.u32 %v798, 7
        %v800 = vsub.s32 0, %v799
        %v801 = vrot.slane %v796, %v800
        %v804 = vsel %vm745, %v780, 0
        %v807 = vsel %vm745, %v781, 0
        %v810 = vsel %vm745, %v782, 0
        %v813 = vsel %vm745, %v783, 0
        %v816 = vsel %vm745, %v784, 0
        %v819 = vsel %vm745, %v785, 0
        %v822 = vsel %vm745, %v786, 0
        %v825 = vsel %vm745, %v787, 0
        %827 = vmatprep.subr.mxu0 0.0
        %828 = vmatpush1.msra.mxu0 %v788
        %829 = vmatprep.subr.mxu0 0.0
        %830 = vmatpush1.msra.mxu0 %v789
        %831 = vmatprep.subr.mxu0 0.0
        %832 = vmatpush1.msra.mxu0 %v790
        %833 = vmatprep.subr.mxu0 0.0
        %834 = vmatpush1.msra.mxu0 %v791
        %835 = vmatprep.subr.mxu0 0.0
        %836 = vmatpush1.msra.mxu0 %v792
        %837 = vmatprep.subr.mxu0 0.0
        %838 = vmatpush1.msra.mxu0 %v793
        %839 = vmatprep.subr.mxu0 0.0
        %840 = vmatpush1.msra.mxu0 %v794
        %841 = vmatprep.subr.mxu0 0.0
        %842 = vmatpush1.msra.mxu0 %v795
        %843 = vmatprep.subr.mxu0 0.0
        %844 = vmatpush1.msra.mxu0 0.0
        %845 = vmatprep.subr.mxu0 0.0
        %846 = vmatpush1.msra.mxu0 0.0
        %847 = vmatprep.subr.mxu0 0.0
        %848 = vmatpush1.msra.mxu0 0.0
        %849 = vmatprep.subr.mxu0 0.0
        %850 = vmatpush1.msra.mxu0 0.0
        %851 = vmatprep.subr.mxu0 0.0
        %852 = vmatpush1.msra.mxu0 0.0
        %853 = vmatprep.subr.mxu0 0.0
        %854 = vmatpush1.msra.mxu0 0.0
        %855 = vmatprep.subr.mxu0 0.0
        %856 = vmatpush1.msra.mxu0 0.0
        %857 = vmatprep.subr.mxu0 0.0
        %858 = vmatpush1.msra.mxu0 0.0
        %859 = vmatprep.subr.mxu0 0.0
        %860 = vmatpush1.msra.mxu0 0.0
        %861 = vmatprep.subr.mxu0 0.0
        %862 = vmatpush1.msra.mxu0 0.0
        %863 = vmatprep.subr.mxu0 0.0
        %864 = vmatpush1.msra.mxu0 0.0
        %865 = vmatprep.subr.mxu0 0.0
        %866 = vmatpush1.msra.mxu0 0.0
        %867 = vmatprep.subr.mxu0 0.0
        %868 = vmatpush1.msra.mxu0 0.0
        %869 = vmatprep.subr.mxu0 0.0
        %870 = vmatpush1.msra.mxu0 0.0
        %871 = vmatprep.subr.mxu0 0.0
        %872 = vmatpush1.msra.mxu0 0.0
        %873 = vmatprep.subr.mxu0 0.0
        %874 = vmatpush1.msra.mxu0 0.0
        %875 = vmatprep.subr.mxu0 0.0
        %876 = vmatpush1.msra.mxu0 0.0
        %877 = vmatprep.subr.mxu0 0.0
        %878 = vmatpush1.msra.mxu0 0.0
        %879 = vmatprep.subr.mxu0 0.0
        %880 = vmatpush1.msra.mxu0 0.0
        %881 = vmatprep.subr.mxu0 0.0
        %882 = vmatpush1.msra.mxu0 0.0
        %883 = vmatprep.subr.mxu0 0.0
        %884 = vmatpush1.msra.mxu0 0.0
        %885 = vmatprep.subr.mxu0 0.0
        %886 = vmatpush1.msra.mxu0 0.0
        %887 = vmatprep.subr.mxu0 0.0
        %888 = vmatpush1.msra.mxu0 0.0
        %889 = vmatprep.subr.mxu0 0.0
        %890 = vmatpush1.msra.mxu0 0.0
        %891 = vmatprep.mubr.f32.mxu0 0.0
        %892 = vmatmul.mubr.f32.gmra.mrb[0].mxu0 %v804
        %v893 = vpop.f32.mrb[0].mxu0
        %v894 = vadd.f32 %v801, %v893
        %v895 = vpop.f32.mrb[0].mxu0
        %896 = vmatprep.mubr.f32.mxu0 0.0
        %897 = vmatmul.mubr.f32.gmra.mrb[0].mxu0 %v807
        %v898 = vpop.f32.mrb[0].mxu0
        %v899 = vadd.f32 %v801, %v898
        %v900 = vpop.f32.mrb[0].mxu0
        %901 = vmatprep.mubr.f32.mxu0 0.0
        %902 = vmatmul.mubr.f32.gmra.mrb[0].mxu0 %v810
        %v903 = vpop.f32.mrb[0].mxu0
        %v904 = vadd.f32 %v801, %v903
        %v905 = vpop.f32.mrb[0].mxu0
        %906 = vmatprep.mubr.f32.mxu0 0.0
        %907 = vmatmul.mubr.f32.gmra.mrb[0].mxu0 %v813
        %v908 = vpop.f32.mrb[0].mxu0
        %v909 = vadd.f32 %v801, %v908
        %v910 = vpop.f32.mrb[0].mxu0
        %911 = vmatprep.mubr.f32.mxu0 0.0
        %912 = vmatmul.mubr.f32.gmra.mrb[0].mxu0 %v816
        %v913 = vpop.f32.mrb[0].mxu0
        %v914 = vadd.f32 %v801, %v913
        %v915 = vpop.f32.mrb[0].mxu0
        %916 = vmatprep.mubr.f32.mxu0 0.0
        %917 = vmatmul.mubr.f32.gmra.mrb[0].mxu0 %v819
        %v918 = vpop.f32.mrb[0].mxu0
        %v919 = vadd.f32 %v801, %v918
        %v920 = vpop.f32.mrb[0].mxu0
        %921 = vmatprep.mubr.f32.mxu0 0.0
        %922 = vmatmul.mubr.f32.gmra.mrb[0].mxu0 %v822
        %v923 = vpop.f32.mrb[0].mxu0
        %v924 = vadd.f32 %v801, %v923
        %v925 = vpop.f32.mrb[0].mxu0
        %926 = vmatprep.mubr.f32.mxu0 0.0
        %927 = vmatmul.mubr.f32.gmra.mrb[0].mxu0 %v825
        %v928 = vpop.f32.mrb[0].mxu0
        %v929 = vadd.f32 %v801, %v928
        %v930 = vpop.f32.mrb[0].mxu0
        %931 = vdwg.mxu0
        %vm932 = vcmask 162816
        %933 = vst.msk [vmem:[%s311] sm:$0xff] %vm932, %v894
        %934 = vst.msk [vmem:[%s311 + $0x8] sm:$0xff] %vm932, %v899
        %935 = vst.msk [vmem:[%s311 + $0x10] sm:$0xff] %vm932, %v904
        %936 = vst.msk [vmem:[%s311 + $0x18] sm:$0xff] %vm932, %v909
        %937 = vst.msk [vmem:[%s311 + $0x20] sm:$0xff] %vm932, %v914
        %938 = vst.msk [vmem:[%s311 + $0x28] sm:$0xff] %vm932, %v919
        %939 = vst.msk [vmem:[%s311 + $0x30] sm:$0xff] %vm932, %v924
        %940 = vst.msk [vmem:[%s311 + $0x38] sm:$0xff] %vm932, %v929
      $region48: #{_lambda_.15} parent=39 // pred_fallthru
        _
      %s941 = smul.u32 8, %s21
      %p942 = scmp.lt.s32.totalorder %s941, 15
      %s943 = scalar_select %p942, %s941, 15
      %s944 = smul.addr %s943, 8
      %s945 = scalar_lea.vmem %s5, %s944
      // Predicated region
      $region49: #{_lambda_.15} parent=39 // pred_check
        %p946 = pneg %p177
      $region50: #{_lambda_.15} parent=39 // pred_check_branch
        %948 = sbr.rel (%p946) target = $region52
      $region51: #{_lambda_.15} parent=39 // pred_region
        %s949 = smul.u32 8, %s21
      $region52: #{_lambda_.15} parent=39 // pred_fallthru
        _
    $region40: #{_lambda_.15} parent=5 // pred_fallthru
      _
    %p950 = scmp.le.s32.totalorder 2, %s11
    // Predicated region
    $region53: #{_lambda_.15} parent=5 // pred_check
      %p951 = pneg %p950
    $region54: #{_lambda_.15} parent=5 // pred_check_branch
      %953 = sbr.rel (%p951) target = $region56
    $region55: #{_lambda_.15} parent=5 // pred_region
      %s954 = ssub.s32 %s11, 2
      // Predicated region
      $region57: #{_lambda_.15} parent=55 // pred_check
        %p955 = pneg %p183
      $region58: #{_lambda_.15} parent=55 // pred_check_branch
        %957 = sbr.rel (%p955) target = $region60
      $region59: #{_lambda_.15} parent=55 // pred_region
        %s958 = smul.u32 8, %s24
        %p959 = scmp.lt.s32.totalorder %s958, 15
        %s960 = scalar_select %p959, %s958, 15
        %s961 = smul.addr %s960, 8
        %s962 = scalar_lea.vmem %s5, %s961
      $region60: #{_lambda_.15} parent=55 // pred_fallthru
        _
    $region56: #{_lambda_.15} parent=5 // pred_fallthru
      _
  $region6: #{_lambda_.15} parent=0 // loop_footer
    %s15 = sadd.s32 1, %s11
  $region7: #{_lambda_.15} parent=0 // loop_footer_branch
    %10 = sbr.rel target = $region3
  $region8: #{_lambda_.15} parent=0 // loop_exit
    _

</llo_original>
